<compile_context>
chip_gen: v7x
topology: tpu7x:2x2x1
jax: 0.10.0
libtpu: 0.0.40
codegen_flags: <defaults>
</compile_context>

<pallas_src>
import functools

import jax
import jax.numpy as jnp
from jax import lax
from jax.experimental import pallas as pl
from jax.experimental.pallas import tpu as pltpu


def _round_up(x, m):
    return (x + m - 1) // m * m


def _pick_row_tile(m, cap=2048):
    # Largest divisor of m that is a multiple of 8 and <= cap, else m itself
    # (a block equal to the full dim is always legal).
    for d in range(min(m, cap), 7, -1):
        if m % d == 0 and d % 8 == 0:
            return d
    return m


def _k1_vmem_bytes(tile_h, width, cin, cpad):
    # Rough per-step VMEM estimate for kernel 1 (double-buffered BlockSpecs
    # plus in-kernel f32 accumulator / LHS temporaries).
    mrows = tile_h * width
    xblk = 2 * (tile_h + 1) * width * 4 * cin * 2      # bf16 K-fused LHS tile
    wblk = 2 * 2 * 4 * cin * cpad * 2                  # bf16 resident weights
    yblk = 2 * 2 * mrows * cpad * 2                    # bf16 activation tile
    sblk = 2 * cpad * 4                                # BN partial stats
    tmp = mrows * cpad * 4 + mrows * 4 * cin * 2       # acc + lhs temporaries
    return 2 * (xblk + wblk + yblk + sblk) + tmp


def _pick_tile_h(h, width, cin, cpad, n_batch, row_target=1024,
                 budget=28 * 1024 * 1024):
    best = 1
    for th in range(1, h + 1):
        if h % th:
            continue
        if th * width > row_target and th != 1:
            continue
        if _k1_vmem_bytes(th, width, cin, cpad) > budget:
            continue
        best = th
    # Prefer an even (N * H-tiles) grid so both v7x TensorCores get work.
    if (n_batch * (h // best)) % 2 == 1 and best % 2 == 0:
        best //= 2
    return best


def _deconv_bn_kernel(x_ref, w_ref, y_ref, stats_ref, *, mrows, width, cpad):
    """One (batch, H-tile) block.  The 4 conv-transpose taps are pre-folded
    into the contraction dim (K = 4*Cin), so each output-pixel parity class
    is a single MXU matmul (bf16 in, f32 accumulate).  BatchNorm partial
    sums / sums-of-squares are taken from the live f32 accumulator so the
    activation is never re-read for statistics."""
    ssum = jnp.zeros((1, cpad), jnp.float32)
    ssq = jnp.zeros((1, cpad), jnp.float32)
    for p in (0, 1):                 # output row parity
        for q in (0, 1):             # output col parity
            lhs = x_ref[0, 0, q, pl.ds(p * width, mrows), :]      # (M, 4*Cin)
            acc = jnp.dot(lhs, w_ref[p, q],
                          preferred_element_type=jnp.float32)     # (M, cpad)
            y_ref[0, 0, p, q, :, :] = acc.astype(y_ref.dtype)
            ssum = ssum + jnp.sum(acc, axis=0, keepdims=True)
            ssq = ssq + jnp.sum(acc * acc, axis=0, keepdims=True)
    stats_ref[0, 0, 0:1, :] = ssum
    stats_ref[0, 0, 1:2, :] = ssq


def _bn_lrelu_kernel(y_ref, scale_ref, shift_ref, o_ref, *, slope):
    z = y_ref[...].astype(jnp.float32) * scale_ref[...] + shift_ref[...]
    z = jnp.where(z >= 0, z, slope * z)
    # Channel-unpadded bf16 writeback (cpad -> Cout slice is a no-op when
    # Cout is already a multiple of 128).
    o_ref[...] = z[:, :o_ref.shape[-1]].astype(o_ref.dtype)


@functools.partial(jax.jit, static_argnames=("eps", "slope"))
def deconv4x4_forward(x_nchw, skip_nchw, weight, gamma, beta, *,
                      eps=1e-5, slope=0.1):
    """weight: (Cin, Cout, 4, 4) — same layout as torch ConvTranspose2d."""
    N, Cin, H, W = x_nchw.shape
    Cout = weight.shape[1]
    cpad = _round_up(Cout, 128)                # lane-dense MXU output channels
    kdim = 4 * Cin                             # taps folded into contraction

    tile_h = _pick_tile_h(H, W, Cin, cpad, N)
    hb = H // tile_h
    mrows = tile_h * W

    # ---- XLA prep: per-column-parity 2x2 tap unfold -> K = 4*Cin ------------
    x_nhwc = jnp.transpose(x_nchw, (0, 2, 3, 1)).astype(jnp.bfloat16)
    xp = jnp.pad(x_nhwc, ((0, 0), (1, 1), (1, 1), (0, 0)))   # (N, H+2, W+2, C)
    # xq[n, q, i, w, (a,b,c)] = xp[n, i+a, w+q+b, c]
    xq = jnp.stack(
        [jnp.concatenate([xp[:, a:a + H + 1, q + b:q + b + W, :]
                          for a in (0, 1) for b in (0, 1)], axis=-1)
         for q in (0, 1)], axis=1)                            # (N, 2, H+1, W, 4Cin)
    xtil = jnp.stack([xq[:, :, t * tile_h:t * tile_h + tile_h + 1]
                      for t in range(hb)], axis=1)            # (N, hb, 2, th+1, W, 4Cin)
    xcol = xtil.reshape(N, hb, 2, (tile_h + 1) * W, kdim)

    # Weight stack indexed [row parity p, col parity q, K=(a,b,cin), cout].
    wl = [jnp.concatenate([weight[:, :, 3 - 2 * a - p, 3 - 2 * b - q]
                           for a in (0, 1) for b in (0, 1)], axis=0)
          for p in (0, 1) for q in (0, 1)]
    wstack = jnp.stack(wl, axis=0).reshape(2, 2, kdim, Cout)
    wstack = jnp.pad(wstack, ((0, 0), (0, 0), (0, 0), (0, cpad - Cout))
                     ).astype(jnp.bfloat16)

    vmem1 = int(min(max(1.5 * _k1_vmem_bytes(tile_h, W, Cin, cpad),
                        32 * 1024 * 1024), 60 * 1024 * 1024))

    # ---- kernel 1: deconv matmuls (one dot per parity) + fused BN stats -----
    y, stats = pl.pallas_call(
        functools.partial(_deconv_bn_kernel, mrows=mrows, width=W, cpad=cpad),
        out_shape=(
            jax.ShapeDtypeStruct((N, hb, 2, 2, mrows, cpad), jnp.bfloat16),
            jax.ShapeDtypeStruct((N, hb, 2, cpad), jnp.float32),
        ),
        grid=(N, hb),
        in_specs=[
            pl.BlockSpec((1, 1, 2, (tile_h + 1) * W, kdim),
                         lambda n, t: (n, t, 0, 0, 0)),
            # Constant index_map -> weights stay resident in VMEM.
            # TODO(synk): pipeline_mode=pl.Buffered(1) to drop the 2nd buffer.
            pl.BlockSpec((2, 2, kdim, cpad), lambda n, t: (0, 0, 0, 0)),
        ],
        out_specs=(
            pl.BlockSpec((1, 1, 2, 2, mrows, cpad),
                         lambda n, t: (n, t, 0, 0, 0, 0)),
            pl.BlockSpec((1, 1, 2, cpad), lambda n, t: (n, t, 0, 0)),
        ),
        compiler_params=pltpu.CompilerParams(
            dimension_semantics=("parallel", "parallel"),
            vmem_limit_bytes=vmem1),
    )(xcol, wstack)

    # ---- tiny XLA combine of the per-block BN statistics ---------------------
    cnt = jnp.float32(N * H * W * 4)
    tot = jnp.sum(stats, axis=(0, 1))                    # (2, cpad)
    mean = tot[0] / cnt
    var = jnp.maximum(tot[1] / cnt - mean * mean, 0.0)   # biased (training-mode)
    inv = lax.rsqrt(var + eps)
    scale = jnp.pad(gamma.astype(jnp.float32), (0, cpad - Cout)) * inv
    shift = jnp.pad(beta.astype(jnp.float32), (0, cpad - Cout)) - mean * scale
    scale_row = scale.reshape(1, cpad)
    shift_row = shift.reshape(1, cpad)

    # ---- kernel 2: normalize + LeakyReLU; bf16, channel-unpadded writeback --
    m2 = N * hb * 4 * mrows
    tm2 = _pick_row_tile(m2, 2048)
    yf = y.reshape(m2, cpad)
    zf = pl.pallas_call(
        functools.partial(_bn_lrelu_kernel, slope=slope),
        out_shape=jax.ShapeDtypeStruct((m2, Cout), jnp.bfloat16),
        grid=(m2 // tm2,),
        in_specs=[pl.BlockSpec((tm2, cpad), lambda i: (i, 0)),
                  pl.BlockSpec((1, cpad), lambda i: (0, 0)),
                  pl.BlockSpec((1, cpad), lambda i: (0, 0))],
        out_specs=pl.BlockSpec((tm2, Cout), lambda i: (i, 0)),
        compiler_params=pltpu.CompilerParams(
            dimension_semantics=("parallel",)),
    )(yf, scale_row, shift_row)

    # ---- single remaining XLA layout pass: parity interleave -> NCHW (forced
    # by the torch interface), cast to f32 and concat with skip.
    # TODO(synk): fold this into kernel 2's out_specs (needs an in-kernel
    # lane->sublane channel transpose) to save one output-sized HBM pass.
    z6 = zf.reshape(N, hb, 2, 2, tile_h, W, Cout)
    z_nchw = jnp.transpose(z6, (0, 6, 1, 4, 2, 5, 3)).reshape(
        N, Cout, 2 * H, 2 * W).astype(jnp.float32)
    return jnp.concatenate([z_nchw, skip_nchw.astype(jnp.float32)], axis=1)


def _reference(x, skip, weight, gamma, beta, eps=1e-5, slope=0.1):
    # Pure-JAX f32 reference matching torch semantics.
    w = jnp.transpose(jnp.flip(weight, axis=(2, 3)), (1, 0, 2, 3))  # OIHW
    y = lax.conv_general_dilated(
        x.astype(jnp.float32), w, window_strides=(1, 1),
        padding=[(2, 2), (2, 2)], lhs_dilation=(2, 2),
        dimension_numbers=('NCHW', 'OIHW', 'NCHW'))
    mean = jnp.mean(y, axis=(0, 2, 3), keepdims=True)
    var = jnp.mean((y - mean) ** 2, axis=(0, 2, 3), keepdims=True)
    z = (y - mean) * lax.rsqrt(var + eps)
    z = z * gamma[None, :, None, None] + beta[None, :, None, None]
    z = jnp.where(z >= 0, z, slope * z)
    return jnp.concatenate([z, skip.astype(jnp.float32)], axis=1)


if __name__ == "__main__":
    key = jax.random.PRNGKey(0)
    N, Cin, Cout, H, W = 2, 8, 8, 32, 32
    k1, k2, k3, k4, k5 = jax.random.split(key, 5)

    x = jax.random.normal(k1, (N, Cin, H, W), jnp.float32)
    skip = jax.random.normal(k2, (N, Cout, 2 * H, 2 * W), jnp.float32)
    weight = 0.1 * jax.random.normal(k3, (Cin, Cout, 4, 4), jnp.float32)
    gamma = 1.0 + 0.1 * jax.random.normal(k4, (Cout,), jnp.float32)
    beta = 0.1 * jax.random.normal(k5, (Cout,), jnp.float32)

    out = jax.block_until_ready(deconv4x4_forward(x, skip, weight, gamma, beta))
    ref = jax.block_until_ready(_reference(x, skip, weight, gamma, beta))

    assert out.shape == (N, 2 * Cout, 2 * H, 2 * W), out.shape
    max_err = float(jnp.max(jnp.abs(out - ref)))
    # bf16 MXU inputs, bf16 intermediate activation and bf16 normalized
    # writeback (f32 accumulation / stats) -> looser tolerance than pure f32.
    assert jnp.allclose(out, ref, atol=5e-2, rtol=5e-2), max_err
    print("KERNEL_OK")
</pallas_src>

<mosaic_0001>
module attributes {stable_mosaic.version = 11 : i64} {
  func.func @_deconv_bn_kernel(%arg0: i32, %arg1: i32, %arg2: memref<1x1x2x1056x32xbf16, #tpu.memory_space<vmem>>, %arg3: memref<2x2x32x128xbf16, #tpu.memory_space<vmem>>, %arg4: memref<1x1x2x2x1024x128xbf16, #tpu.memory_space<vmem>>, %arg5: memref<1x1x2x128xf32, #tpu.memory_space<vmem>>) attributes {dimension_semantics = [#tpu.dimension_semantics<parallel>, #tpu.dimension_semantics<parallel>], iteration_bounds = array<i64: 2, 1>, scalar_prefetch = 0 : i64, scratch_operands = 0 : i64, tpu.core_type = #tpu.core_type<tc>, window_params = [{transform_indices = @transform_0, window_bounds = array<i64: 1, 1, 2, 1056, 32>}, {pipeline_mode = #tpu.pipeline_mode<synchronous>, transform_indices = @transform_1, window_bounds = array<i64: 2, 2, 32, 128>}, {transform_indices = @transform_2, window_bounds = array<i64: 1, 1, 2, 2, 1024, 128>}, {transform_indices = @transform_3, window_bounds = array<i64: 1, 1, 2, 128>}]} {
    %cst = arith.constant 0.000000e+00 : f32
    %0 = vector.broadcast %cst : f32 to vector<1x128xf32>
    %cst_0 = arith.constant 0.000000e+00 : f32
    %1 = vector.broadcast %cst_0 : f32 to vector<1x128xf32>
    %c0 = arith.constant 0 : index
    %c0_1 = arith.constant 0 : index
    %c0_2 = arith.constant 0 : index
    %c0_3 = arith.constant 0 : index
    %c0_4 = arith.constant 0 : index
    %2 = vector.load %arg2[%c0, %c0_1, %c0_2, %c0_3, %c0_4] : memref<1x1x2x1056x32xbf16, #tpu.memory_space<vmem>>, vector<1x1x1x1024x32xbf16>
    %3 = vector.shape_cast %2 : vector<1x1x1x1024x32xbf16> to vector<1024x32xbf16>
    %c0_5 = arith.constant 0 : index
    %c0_6 = arith.constant 0 : index
    %c0_7 = arith.constant 0 : index
    %c0_8 = arith.constant 0 : index
    %4 = vector.load %arg3[%c0_5, %c0_6, %c0_7, %c0_8] : memref<2x2x32x128xbf16, #tpu.memory_space<vmem>>, vector<1x1x32x128xbf16>
    %5 = vector.shape_cast %4 : vector<1x1x32x128xbf16> to vector<32x128xbf16>
    %cst_9 = arith.constant dense<0.000000e+00> : vector<1024x128xf32>
    %6 = tpu.matmul %3, %5, %cst_9 {dimension_numbers = #tpu.dot_dimension_numbers<[1], [0], [0], [1], [0, 0, 1, 1], [], []>} : vector<1024x32xbf16>, vector<32x128xbf16>, vector<1024x128xf32> -> vector<1024x128xf32>
    %7 = arith.truncf %6 : vector<1024x128xf32> to vector<1024x128xbf16>
    %c0_10 = arith.constant 0 : index
    %c0_11 = arith.constant 0 : index
    %c0_12 = arith.constant 0 : index
    %c0_13 = arith.constant 0 : index
    %c0_14 = arith.constant 0 : index
    %c0_15 = arith.constant 0 : index
    %8 = vector.load %arg4[%c0_10, %c0_11, %c0_12, %c0_13, %c0_14, %c0_15] : memref<1x1x2x2x1024x128xbf16, #tpu.memory_space<vmem>>, vector<1x1x1x1x1024x128xbf16>
    %9 = vector.shape_cast %8 : vector<1x1x1x1x1024x128xbf16> to vector<1024x128xbf16>
    %10 = vector.shape_cast %7 : vector<1024x128xbf16> to vector<1x1x1x1x1024x128xbf16>
    tpu.vector_store %arg4[%c0_10, %c0_11, %c0_12, %c0_13, %c0_14, %c0_15], %10 {strides = array<i32>} : memref<1x1x2x2x1024x128xbf16, #tpu.memory_space<vmem>>, vector<1x1x1x1x1024x128xbf16>,
    %cst_16 = arith.constant dense<0.000000e+00> : vector<128xf32>
    %11 = vector.multi_reduction <add>, %6, %cst_16 [0] : vector<1024x128xf32> to vector<128xf32>
    %12 = vector.shape_cast %11 : vector<128xf32> to vector<1x128xf32>
    %13 = arith.addf %0, %12 : vector<1x128xf32>
    %14 = arith.mulf %6, %6 : vector<1024x128xf32>
    %cst_17 = arith.constant dense<0.000000e+00> : vector<128xf32>
    %15 = vector.multi_reduction <add>, %14, %cst_17 [0] : vector<1024x128xf32> to vector<128xf32>
    %16 = vector.shape_cast %15 : vector<128xf32> to vector<1x128xf32>
    %17 = arith.addf %1, %16 : vector<1x128xf32>
    %c0_18 = arith.constant 0 : index
    %c0_19 = arith.constant 0 : index
    %c1 = arith.constant 1 : index
    %c0_20 = arith.constant 0 : index
    %c0_21 = arith.constant 0 : index
    %18 = vector.load %arg2[%c0_18, %c0_19, %c1, %c0_20, %c0_21] : memref<1x1x2x1056x32xbf16, #tpu.memory_space<vmem>>, vector<1x1x1x1024x32xbf16>
    %19 = vector.shape_cast %18 : vector<1x1x1x1024x32xbf16> to vector<1024x32xbf16>
    %c0_22 = arith.constant 0 : index
    %c1_23 = arith.constant 1 : index
    %c0_24 = arith.constant 0 : index
    %c0_25 = arith.constant 0 : index
    %20 = vector.load %arg3[%c0_22, %c1_23, %c0_24, %c0_25] : memref<2x2x32x128xbf16, #tpu.memory_space<vmem>>, vector<1x1x32x128xbf16>
    %21 = vector.shape_cast %20 : vector<1x1x32x128xbf16> to vector<32x128xbf16>
    %cst_26 = arith.constant dense<0.000000e+00> : vector<1024x128xf32>
    %22 = tpu.matmul %19, %21, %cst_26 {dimension_numbers = #tpu.dot_dimension_numbers<[1], [0], [0], [1], [0, 0, 1, 1], [], []>} : vector<1024x32xbf16>, vector<32x128xbf16>, vector<1024x128xf32> -> vector<1024x128xf32>
    %23 = arith.truncf %22 : vector<1024x128xf32> to vector<1024x128xbf16>
    %c0_27 = arith.constant 0 : index
    %c0_28 = arith.constant 0 : index
    %c0_29 = arith.constant 0 : index
    %c1_30 = arith.constant 1 : index
    %c0_31 = arith.constant 0 : index
    %c0_32 = arith.constant 0 : index
    %24 = vector.load %arg4[%c0_27, %c0_28, %c0_29, %c1_30, %c0_31, %c0_32] : memref<1x1x2x2x1024x128xbf16, #tpu.memory_space<vmem>>, vector<1x1x1x1x1024x128xbf16>
    %25 = vector.shape_cast %24 : vector<1x1x1x1x1024x128xbf16> to vector<1024x128xbf16>
    %26 = vector.shape_cast %23 : vector<1024x128xbf16> to vector<1x1x1x1x1024x128xbf16>
    tpu.vector_store %arg4[%c0_27, %c0_28, %c0_29, %c1_30, %c0_31, %c0_32], %26 {strides = array<i32>} : memref<1x1x2x2x1024x128xbf16, #tpu.memory_space<vmem>>, vector<1x1x1x1x1024x128xbf16>,
    %cst_33 = arith.constant dense<0.000000e+00> : vector<128xf32>
    %27 = vector.multi_reduction <add>, %22, %cst_33 [0] : vector<1024x128xf32> to vector<128xf32>
    %28 = vector.shape_cast %27 : vector<128xf32> to vector<1x128xf32>
    %29 = arith.addf %13, %28 : vector<1x128xf32>
    %30 = arith.mulf %22, %22 : vector<1024x128xf32>
    %cst_34 = arith.constant dense<0.000000e+00> : vector<128xf32>
    %31 = vector.multi_reduction <add>, %30, %cst_34 [0] : vector<1024x128xf32> to vector<128xf32>
    %32 = vector.shape_cast %31 : vector<128xf32> to vector<1x128xf32>
    %33 = arith.addf %17, %32 : vector<1x128xf32>
    %c0_35 = arith.constant 0 : index
    %c0_36 = arith.constant 0 : index
    %c0_37 = arith.constant 0 : index
    %c32 = arith.constant 32 : index
    %c0_38 = arith.constant 0 : index
    %34 = vector.load %arg2[%c0_35, %c0_36, %c0_37, %c32, %c0_38] : memref<1x1x2x1056x32xbf16, #tpu.memory_space<vmem>>, vector<1x1x1x1024x32xbf16>
    %35 = vector.shape_cast %34 : vector<1x1x1x1024x32xbf16> to vector<1024x32xbf16>
    %c1_39 = arith.constant 1 : index
    %c0_40 = arith.constant 0 : index
    %c0_41 = arith.constant 0 : index
    %c0_42 = arith.constant 0 : index
    %36 = vector.load %arg3[%c1_39, %c0_40, %c0_41, %c0_42] : memref<2x2x32x128xbf16, #tpu.memory_space<vmem>>, vector<1x1x32x128xbf16>
    %37 = vector.shape_cast %36 : vector<1x1x32x128xbf16> to vector<32x128xbf16>
    %cst_43 = arith.constant dense<0.000000e+00> : vector<1024x128xf32>
    %38 = tpu.matmul %35, %37, %cst_43 {dimension_numbers = #tpu.dot_dimension_numbers<[1], [0], [0], [1], [0, 0, 1, 1], [], []>} : vector<1024x32xbf16>, vector<32x128xbf16>, vector<1024x128xf32> -> vector<1024x128xf32>
    %39 = arith.truncf %38 : vector<1024x128xf32> to vector<1024x128xbf16>
    %c0_44 = arith.constant 0 : index
    %c0_45 = arith.constant 0 : index
    %c1_46 = arith.constant 1 : index
    %c0_47 = arith.constant 0 : index
    %c0_48 = arith.constant 0 : index
    %c0_49 = arith.constant 0 : index
    %40 = vector.load %arg4[%c0_44, %c0_45, %c1_46, %c0_47, %c0_48, %c0_49] : memref<1x1x2x2x1024x128xbf16, #tpu.memory_space<vmem>>, vector<1x1x1x1x1024x128xbf16>
    %41 = vector.shape_cast %40 : vector<1x1x1x1x1024x128xbf16> to vector<1024x128xbf16>
    %42 = vector.shape_cast %39 : vector<1024x128xbf16> to vector<1x1x1x1x1024x128xbf16>
    tpu.vector_store %arg4[%c0_44, %c0_45, %c1_46, %c0_47, %c0_48, %c0_49], %42 {strides = array<i32>} : memref<1x1x2x2x1024x128xbf16, #tpu.memory_space<vmem>>, vector<1x1x1x1x1024x128xbf16>,
    %cst_50 = arith.constant dense<0.000000e+00> : vector<128xf32>
    %43 = vector.multi_reduction <add>, %38, %cst_50 [0] : vector<1024x128xf32> to vector<128xf32>
    %44 = vector.shape_cast %43 : vector<128xf32> to vector<1x128xf32>
    %45 = arith.addf %29, %44 : vector<1x128xf32>
    %46 = arith.mulf %38, %38 : vector<1024x128xf32>
    %cst_51 = arith.constant dense<0.000000e+00> : vector<128xf32>
    %47 = vector.multi_reduction <add>, %46, %cst_51 [0] : vector<1024x128xf32> to vector<128xf32>
    %48 = vector.shape_cast %47 : vector<128xf32> to vector<1x128xf32>
    %49 = arith.addf %33, %48 : vector<1x128xf32>
    %c0_52 = arith.constant 0 : index
    %c0_53 = arith.constant 0 : index
    %c1_54 = arith.constant 1 : index
    %c32_55 = arith.constant 32 : index
    %c0_56 = arith.constant 0 : index
    %50 = vector.load %arg2[%c0_52, %c0_53, %c1_54, %c32_55, %c0_56] : memref<1x1x2x1056x32xbf16, #tpu.memory_space<vmem>>, vector<1x1x1x1024x32xbf16>
    %51 = vector.shape_cast %50 : vector<1x1x1x1024x32xbf16> to vector<1024x32xbf16>
    %c1_57 = arith.constant 1 : index
    %c1_58 = arith.constant 1 : index
    %c0_59 = arith.constant 0 : index
    %c0_60 = arith.constant 0 : index
    %52 = vector.load %arg3[%c1_57, %c1_58, %c0_59, %c0_60] : memref<2x2x32x128xbf16, #tpu.memory_space<vmem>>, vector<1x1x32x128xbf16>
    %53 = vector.shape_cast %52 : vector<1x1x32x128xbf16> to vector<32x128xbf16>
    %cst_61 = arith.constant dense<0.000000e+00> : vector<1024x128xf32>
    %54 = tpu.matmul %51, %53, %cst_61 {dimension_numbers = #tpu.dot_dimension_numbers<[1], [0], [0], [1], [0, 0, 1, 1], [], []>} : vector<1024x32xbf16>, vector<32x128xbf16>, vector<1024x128xf32> -> vector<1024x128xf32>
    %55 = arith.truncf %54 : vector<1024x128xf32> to vector<1024x128xbf16>
    %c0_62 = arith.constant 0 : index
    %c0_63 = arith.constant 0 : index
    %c1_64 = arith.constant 1 : index
    %c1_65 = arith.constant 1 : index
    %c0_66 = arith.constant 0 : index
    %c0_67 = arith.constant 0 : index
    %56 = vector.load %arg4[%c0_62, %c0_63, %c1_64, %c1_65, %c0_66, %c0_67] : memref<1x1x2x2x1024x128xbf16, #tpu.memory_space<vmem>>, vector<1x1x1x1x1024x128xbf16>
    %57 = vector.shape_cast %56 : vector<1x1x1x1x1024x128xbf16> to vector<1024x128xbf16>
    %58 = vector.shape_cast %55 : vector<1024x128xbf16> to vector<1x1x1x1x1024x128xbf16>
    tpu.vector_store %arg4[%c0_62, %c0_63, %c1_64, %c1_65, %c0_66, %c0_67], %58 {strides = array<i32>} : memref<1x1x2x2x1024x128xbf16, #tpu.memory_space<vmem>>, vector<1x1x1x1x1024x128xbf16>,
    %cst_68 = arith.constant dense<0.000000e+00> : vector<128xf32>
    %59 = vector.multi_reduction <add>, %54, %cst_68 [0] : vector<1024x128xf32> to vector<128xf32>
    %60 = vector.shape_cast %59 : vector<128xf32> to vector<1x128xf32>
    %61 = arith.addf %45, %60 : vector<1x128xf32>
    %62 = arith.mulf %54, %54 : vector<1024x128xf32>
    %cst_69 = arith.constant dense<0.000000e+00> : vector<128xf32>
    %63 = vector.multi_reduction <add>, %62, %cst_69 [0] : vector<1024x128xf32> to vector<128xf32>
    %64 = vector.shape_cast %63 : vector<128xf32> to vector<1x128xf32>
    %65 = arith.addf %49, %64 : vector<1x128xf32>
    %c0_70 = arith.constant 0 : index
    %c0_71 = arith.constant 0 : index
    %c0_72 = arith.constant 0 : index
    %c0_73 = arith.constant 0 : index
    %66 = vector.load %arg5[%c0_70, %c0_71, %c0_72, %c0_73] : memref<1x1x2x128xf32, #tpu.memory_space<vmem>>, vector<1x1x1x128xf32>
    %67 = vector.shape_cast %66 : vector<1x1x1x128xf32> to vector<1x128xf32>
    %68 = vector.shape_cast %61 : vector<1x128xf32> to vector<1x1x1x128xf32>
    tpu.vector_store %arg5[%c0_70, %c0_71, %c0_72, %c0_73], %68 {strides = array<i32>} : memref<1x1x2x128xf32, #tpu.memory_space<vmem>>, vector<1x1x1x128xf32>,
    %c0_74 = arith.constant 0 : index
    %c0_75 = arith.constant 0 : index
    %c1_76 = arith.constant 1 : index
    %c0_77 = arith.constant 0 : index
    %69 = vector.load %arg5[%c0_74, %c0_75, %c1_76, %c0_77] : memref<1x1x2x128xf32, #tpu.memory_space<vmem>>, vector<1x1x1x128xf32>
    %70 = vector.shape_cast %69 : vector<1x1x1x128xf32> to vector<1x128xf32>
    %71 = vector.shape_cast %65 : vector<1x128xf32> to vector<1x1x1x128xf32>
    tpu.vector_store %arg5[%c0_74, %c0_75, %c1_76, %c0_77], %71 {strides = array<i32>} : memref<1x1x2x128xf32, #tpu.memory_space<vmem>>, vector<1x1x1x128xf32>,
    return
  }
  func.func @transform_0(%arg0: i32, %arg1: i32) -> (i32, i32, i32, i32, i32) {
    %c0_i32 = arith.constant 0 : i32
    %c0_i32_0 = arith.constant 0 : i32
    %c0_i32_1 = arith.constant 0 : i32
    %c0_i32_2 = arith.constant 0 : i32
    return %arg0, %arg1, %c0_i32, %c0_i32_0, %c0_i32_1 : i32, i32, i32, i32, i32
  }
  func.func @transform_1(%arg0: i32, %arg1: i32) -> (i32, i32, i32, i32) {
    %c0_i32 = arith.constant 0 : i32
    %c0_i32_0 = arith.constant 0 : i32
    %c0_i32_1 = arith.constant 0 : i32
    %c0_i32_2 = arith.constant 0 : i32
    %c0_i32_3 = arith.constant 0 : i32
    return %c0_i32, %c0_i32_0, %c0_i32_1, %c0_i32_2 : i32, i32, i32, i32
  }
  func.func @transform_2(%arg0: i32, %arg1: i32) -> (i32, i32, i32, i32, i32, i32) {
    %c0_i32 = arith.constant 0 : i32
    %c0_i32_0 = arith.constant 0 : i32
    %c0_i32_1 = arith.constant 0 : i32
    %c0_i32_2 = arith.constant 0 : i32
    %c0_i32_3 = arith.constant 0 : i32
    return %arg0, %arg1, %c0_i32, %c0_i32_0, %c0_i32_1, %c0_i32_2 : i32, i32, i32, i32, i32, i32
  }
  func.func @transform_3(%arg0: i32, %arg1: i32) -> (i32, i32, i32, i32) {
    %c0_i32 = arith.constant 0 : i32
    %c0_i32_0 = arith.constant 0 : i32
    %c0_i32_1 = arith.constant 0 : i32
    return %arg0, %arg1, %c0_i32, %c0_i32_0 : i32, i32, i32, i32
  }
}

module attributes {stable_mosaic.version = 11 : i64} {
  func.func @_bn_lrelu_kernel(%arg0: i32, %arg1: memref<2048x128xbf16, #tpu.memory_space<vmem>>, %arg2: memref<1x128xf32, #tpu.memory_space<vmem>>, %arg3: memref<1x128xf32, #tpu.memory_space<vmem>>, %arg4: memref<2048x8xbf16, #tpu.memory_space<vmem>>) attributes {dimension_semantics = [#tpu.dimension_semantics<parallel>], iteration_bounds = array<i64: 4>, scalar_prefetch = 0 : i64, scratch_operands = 0 : i64, tpu.core_type = #tpu.core_type<tc>, window_params = [{transform_indices = @transform_0, window_bounds = array<i64: 2048, 128>}, {pipeline_mode = #tpu.pipeline_mode<synchronous>, transform_indices = @transform_1, window_bounds = array<i64: 1, 128>}, {pipeline_mode = #tpu.pipeline_mode<synchronous>, transform_indices = @transform_2, window_bounds = array<i64: 1, 128>}, {transform_indices = @transform_3, window_bounds = array<i64: 2048, 8>}]} {
    %c0 = arith.constant 0 : index
    %c0_0 = arith.constant 0 : index
    %0 = vector.load %arg1[%c0, %c0_0] : memref<2048x128xbf16, #tpu.memory_space<vmem>>, vector<2048x128xbf16>
    %1 = arith.extf %0 : vector<2048x128xbf16> to vector<2048x128xf32>
    %c0_1 = arith.constant 0 : index
    %c0_2 = arith.constant 0 : index
    %2 = vector.load %arg2[%c0_1, %c0_2] : memref<1x128xf32, #tpu.memory_space<vmem>>, vector<1x128xf32>
    %3 = vector.broadcast %2 : vector<1x128xf32> to vector<2048x128xf32>
    %4 = arith.mulf %1, %3 : vector<2048x128xf32>
    %c0_3 = arith.constant 0 : index
    %c0_4 = arith.constant 0 : index
    %5 = vector.load %arg3[%c0_3, %c0_4] : memref<1x128xf32, #tpu.memory_space<vmem>>, vector<1x128xf32>
    %6 = vector.broadcast %5 : vector<1x128xf32> to vector<2048x128xf32>
    %7 = arith.addf %4, %6 : vector<2048x128xf32>
    %cst = arith.constant 0.000000e+00 : f32
    %8 = vector.broadcast %cst : f32 to vector<2048x128xf32>
    %9 = arith.cmpf oge, %7, %8 : vector<2048x128xf32>
    %cst_5 = arith.constant 1.000000e-01 : f32
    %10 = vector.broadcast %cst_5 : f32 to vector<2048x128xf32>
    %11 = arith.mulf %10, %7 : vector<2048x128xf32>
    %12 = arith.select %9, %7, %11 : vector<2048x128xi1>, vector<2048x128xf32>
    %13 = vector.extract_strided_slice %12 {offsets = [0, 0], sizes = [2048, 8], strides = [1, 1]} : vector<2048x128xf32> to vector<2048x8xf32>
    %14 = arith.truncf %13 : vector<2048x8xf32> to vector<2048x8xbf16>
    %c0_6 = arith.constant 0 : index
    %c0_7 = arith.constant 0 : index
    %15 = vector.load %arg4[%c0_6, %c0_7] : memref<2048x8xbf16, #tpu.memory_space<vmem>>, vector<2048x8xbf16>
    tpu.vector_store %arg4[%c0_6, %c0_7], %14 {strides = array<i32>} : memref<2048x8xbf16, #tpu.memory_space<vmem>>, vector<2048x8xbf16>,
    return
  }
  func.func @transform_0(%arg0: i32) -> (i32, i32) {
    %c0_i32 = arith.constant 0 : i32
    %c0_i32_0 = arith.constant 0 : i32
    return %arg0, %c0_i32 : i32, i32
  }
  func.func @transform_1(%arg0: i32) -> (i32, i32) {
    %c0_i32 = arith.constant 0 : i32
    %c0_i32_0 = arith.constant 0 : i32
    %c0_i32_1 = arith.constant 0 : i32
    return %c0_i32, %c0_i32_0 : i32, i32
  }
  func.func @transform_2(%arg0: i32) -> (i32, i32) {
    %c0_i32 = arith.constant 0 : i32
    %c0_i32_0 = arith.constant 0 : i32
    %c0_i32_1 = arith.constant 0 : i32
    return %c0_i32, %c0_i32_0 : i32, i32
  }
  func.func @transform_3(%arg0: i32) -> (i32, i32) {
    %c0_i32 = arith.constant 0 : i32
    %c0_i32_0 = arith.constant 0 : i32
    return %arg0, %c0_i32 : i32, i32
  }
}

</mosaic_0001>

<llo_original>
// kernel: deconv4x4_forward.3
$region0: #{deconv4x4_forward.3}
  #allocation0 [shape = 'u32[]', space=smem, size = 0x4, offset = 0x4, fixed_abs, tag = 'smem constant byte address 0x4 - core index']
  #allocation1 [shape = 'u32[144,128]{1,0:T(1,128)}', space=vmem, size = 0x12000, scoped, tag = 'internal scratch']
  %s0 = inlined_call_operand.vmem [shape: bf16[8192,128], index: 0, kind: input, shape index: {}]
  %s1 = inlined_call_operand.vmem [shape: f32[1,128], index: 1, kind: input, shape index: {}]
  %s2 = inlined_call_operand.vmem [shape: f32[1,128], index: 2, kind: input, shape index: {}]
  %s3 = inlined_call_operand.vmem [shape: bf16[8192,8], index: 3, kind: output, shape index: {}]
  %s4 = sld [smem:[#allocation0]]
  $region45: #{deconv4x4_forward.3} parent=0
    _
  %s6 = ssub.s32 1, %s4
  %s7 = scalar_select 0, %s6, %s4
  loop: start=0, step=1, limit=6
  $region2: #{deconv4x4_forward.3} parent=0 // loop_pre_header
    _
  $region3: #{deconv4x4_forward.3} parent=0 // loop_header
    %s9 = sphi 0, %s13
    %p10 = scmp.ge.s32.totalorder %s9, 6
    %s19 = sphi 0, %s21
    %s22 = sphi 0, %s19
    %s23 = sphi 0, %s22
    %s39 = sphi 0, %s23
    %s43 = sphi 0, %s43
    %s45 = sphi 0, %s43
    %s46 = sphi 0, %s45
    %s60 = sphi 0, %s46
    %s64 = sphi 0, %s64
    %s66 = sphi 0, %s64
    %s67 = sphi 0, %s66
    %s81 = sphi 0, %s67
    %s87 = sphi 0, %s89
    %s90 = sphi 0, %s87
    %s91 = sphi 0, %s90
    %s107 = sphi 0, %s91
  $region4: #{deconv4x4_forward.3} parent=0 // loop_header_branch
    %12 = sbr.rel (%p10) target = $region8
  $region5: #{deconv4x4_forward.3} parent=0 // loop_body
    %s14 = ssub.s32 %s9, 1
    %s15 = ssub.s32 %s9, 2
    %s16 = sadd.s32 %s9, 1
    %s17 = ssub.s32 %s9, %s16
    %p18 = scmp.eq.s32.totalorder %s17, 0
    %s20 = sadd.s32 %s19, 1
    %s21 = scalar_select %p18, %s19, %s20
    %p24 = pneg %p18
    %p25 = scmp.eq.s32.totalorder %s9, 3
    %p26 = por %p24, %p25
    %p27 = scmp.ne.s32.totalorder %s19, %s22
    %p28 = scmp.eq.s32.totalorder %s9, 0
    %p29 = por %p27, %p28
    %p30 = scmp.ne.s32.totalorder %s19, %s22
    %p31 = scmp.eq.s32.totalorder %s14, 3
    %p32 = por %p30, %p31
    %p33 = scmp.ne.s32.totalorder %s22, %s23
    %p34 = scmp.eq.s32.totalorder %s14, 0
    %p35 = por %p33, %p34
    %p36 = scmp.ne.s32.totalorder %s22, %s23
    %p37 = scmp.eq.s32.totalorder %s15, 3
    %p38 = por %p36, %p37
    %p40 = scmp.ne.s32.totalorder %s23, %s39
    %p41 = scmp.eq.s32.totalorder %s15, 0
    %p42 = por %p40, %p41
    %s44 = sadd.s32 %s43, 1
    %p47 = scmp.eq.s32.totalorder %s9, 3
    %p48 = scmp.ne.s32.totalorder %s43, %s45
    %p49 = scmp.eq.s32.totalorder %s9, 0
    %p50 = por %p48, %p49
    %p51 = scmp.ne.s32.totalorder %s43, %s45
    %p52 = scmp.eq.s32.totalorder %s14, 3
    %p53 = por %p51, %p52
    %p54 = scmp.ne.s32.totalorder %s45, %s46
    %p55 = scmp.eq.s32.totalorder %s14, 0
    %p56 = por %p54, %p55
    %p57 = scmp.ne.s32.totalorder %s45, %s46
    %p58 = scmp.eq.s32.totalorder %s15, 3
    %p59 = por %p57, %p58
    %p61 = scmp.ne.s32.totalorder %s46, %s60
    %p62 = scmp.eq.s32.totalorder %s15, 0
    %p63 = por %p61, %p62
    %s65 = sadd.s32 %s64, 1
    %p68 = scmp.eq.s32.totalorder %s9, 3
    %p69 = scmp.ne.s32.totalorder %s64, %s66
    %p70 = scmp.eq.s32.totalorder %s9, 0
    %p71 = por %p69, %p70
    %p72 = scmp.ne.s32.totalorder %s64, %s66
    %p73 = scmp.eq.s32.totalorder %s14, 3
    %p74 = por %p72, %p73
    %p75 = scmp.ne.s32.totalorder %s66, %s67
    %p76 = scmp.eq.s32.totalorder %s14, 0
    %p77 = por %p75, %p76
    %p78 = scmp.ne.s32.totalorder %s66, %s67
    %p79 = scmp.eq.s32.totalorder %s15, 3
    %p80 = por %p78, %p79
    %p82 = scmp.ne.s32.totalorder %s67, %s81
    %p83 = scmp.eq.s32.totalorder %s15, 0
    %p84 = por %p82, %p83
    %s85 = ssub.s32 %s9, %s16
    %p86 = scmp.eq.s32.totalorder %s85, 0
    %s88 = sadd.s32 %s87, 1
    %s89 = scalar_select %p86, %s87, %s88
    %p92 = pneg %p86
    %p93 = scmp.eq.s32.totalorder %s9, 3
    %p94 = por %p92, %p93
    %p95 = scmp.ne.s32.totalorder %s87, %s90
    %p96 = scmp.eq.s32.totalorder %s9, 0
    %p97 = por %p95, %p96
    %p98 = scmp.ne.s32.totalorder %s87, %s90
    %p99 = scmp.eq.s32.totalorder %s14, 3
    %p100 = por %p98, %p99
    %p101 = scmp.ne.s32.totalorder %s90, %s91
    %p102 = scmp.eq.s32.totalorder %s14, 0
    %p103 = por %p101, %p102
    %p104 = scmp.ne.s32.totalorder %s90, %s91
    %p105 = scmp.eq.s32.totalorder %s15, 3
    %p106 = por %p104, %p105
    %p108 = scmp.ne.s32.totalorder %s91, %s107
    %p109 = scmp.eq.s32.totalorder %s15, 0
    %p110 = por %p108, %p109
    %p111 = scmp.le.s32.totalorder 1, %s9
    %p112 = scmp.lt.s32.totalorder %s9, 5
    %p113 = pnand %p111, %p112
    %p114 = pneg %p113
    // Predicated region
    $region9: #{deconv4x4_forward.3} parent=5 // pred_check
      _
    $region10: #{deconv4x4_forward.3} parent=5 // pred_check_branch
      %116 = sbr.rel (%p113) target = $region12
    $region11: #{deconv4x4_forward.3} parent=5 // pred_region
      %s117 = ssub.s32 %s9, 1
      // Predicated region
      $region13: #{deconv4x4_forward.3} parent=11 // pred_check
        %p118 = pneg %p56
      $region14: #{deconv4x4_forward.3} parent=11 // pred_check_branch
        %120 = sbr.rel (%p118) target = $region16
      $region15: #{deconv4x4_forward.3} parent=11 // pred_region
        _
      $region16: #{deconv4x4_forward.3} parent=11 // pred_fallthru
        _
      // Predicated region
      $region17: #{deconv4x4_forward.3} parent=11 // pred_check
        %p121 = pneg %p77
      $region18: #{deconv4x4_forward.3} parent=11 // pred_check_branch
        %123 = sbr.rel (%p121) target = $region20
      $region19: #{deconv4x4_forward.3} parent=11 // pred_region
        _
      $region20: #{deconv4x4_forward.3} parent=11 // pred_fallthru
        _
    $region12: #{deconv4x4_forward.3} parent=5 // pred_fallthru
      _
    %p124 = scmp.lt.s32.totalorder %s9, 4
    // Predicated region
    $region21: #{deconv4x4_forward.3} parent=5 // pred_check
      %p125 = pneg %p124
    $region22: #{deconv4x4_forward.3} parent=5 // pred_check_branch
      %127 = sbr.rel (%p125) target = $region24
    $region23: #{deconv4x4_forward.3} parent=5 // pred_region
      // Predicated region
      $region25: #{deconv4x4_forward.3} parent=23 // pred_check
        %p128 = pneg %p29
      $region26: #{deconv4x4_forward.3} parent=23 // pred_check_branch
        %130 = sbr.rel (%p128) target = $region28
      $region27: #{deconv4x4_forward.3} parent=23 // pred_region
        %s131 = smul.u32 256, %s9
        %p132 = scmp.lt.s32.totalorder %s131, 1023
        %s133 = scalar_select %p132, %s131, 1023
        %s134 = smul.addr %s133, 4
        %s135 = scalar_lea.vmem %s0, %s134
        %s136 = smul.u32 256, %s9
      $region28: #{deconv4x4_forward.3} parent=23 // pred_fallthru
        _
    $region24: #{deconv4x4_forward.3} parent=5 // pred_fallthru
      _
    %p137 = scmp.le.s32.totalorder 1, %s9
    %p138 = scmp.lt.s32.totalorder %s9, 5
    %p139 = pnand %p137, %p138
    %p140 = pneg %p139
    // Predicated region
    $region29: #{deconv4x4_forward.3} parent=5 // pred_check
      _
    $region30: #{deconv4x4_forward.3} parent=5 // pred_check_branch
      %142 = sbr.rel (%p139) target = $region32
    $region31: #{deconv4x4_forward.3} parent=5 // pred_region
      %s143 = ssub.s32 %s9, 1
      %s144 = smul.u32 256, %s14
      %p145 = scmp.lt.s32.totalorder %s144, 1023
      %s146 = scalar_select %p145, %s144, 1023
      %s147 = smul.addr %s146, 4
      %s148 = scalar_lea.vmem %s0, %s147
      %p149 = pneg %p35
      %p150 = pneg %p32
      %p151 = pneg %p56
      %p152 = pneg %p53
      %p153 = pneg %p77
      %p154 = pneg %p74
      %p155 = pneg %p103
      %p156 = pneg %p100
      %s157 = smul.u32 256, %s14
      %p158 = scmp.lt.s32.totalorder %s157, 1023
      %s159 = scalar_select %p158, %s157, 1023
      %s160 = smul.addr %s159, 4
      %s161 = scalar_lea.vmem %s3, %s160
      %s162 = smul.u32 256, %s14
      %p163 = scmp.lt.s32.totalorder %s162, 1023
      %s164 = scalar_select %p163, %s162, 1023
      %s165 = smul.addr %s164, 4
      %s166 = scalar_lea.vmem %s0, %s165
      %s167 = smul.u32 256, %s14
      %s168 = smul.u32 256, %s14
      %p169 = scmp.lt.s32.totalorder %s168, 1023
      %s170 = scalar_select %p169, %s168, 1023
      %s171 = smul.addr %s170, 4
      %s172 = scalar_lea.vmem %s3, %s171
      %s173 = smul.u32 256, %s14
      %v174 = vld [vmem:[%s166] sm:$0xf]
      %v175 = vld [vmem:[%s166 + $0x4] sm:$0xf]
      %v176 = vld [vmem:[%s166 + $0x8] sm:$0xf]
      %v177 = vld [vmem:[%s166 + $0xc] sm:$0xf]
      %v178 = vld [vmem:[%s166 + $0x10] sm:$0xf]
      %v179 = vld [vmem:[%s166 + $0x14] sm:$0xf]
      %v180 = vld [vmem:[%s166 + $0x18] sm:$0xf]
      %v181 = vld [vmem:[%s166 + $0x1c] sm:$0xf]
      %v182 = vld [vmem:[%s166 + $0x20] sm:$0xf]
      %v183 = vld [vmem:[%s166 + $0x24] sm:$0xf]
      %v184 = vld [vmem:[%s166 + $0x28] sm:$0xf]
      %v185 = vld [vmem:[%s166 + $0x2c] sm:$0xf]
      %v186 = vld [vmem:[%s166 + $0x30] sm:$0xf]
      %v187 = vld [vmem:[%s166 + $0x34] sm:$0xf]
      %v188 = vld [vmem:[%s166 + $0x38] sm:$0xf]
      %v189 = vld [vmem:[%s166 + $0x3c] sm:$0xf]
      %v190 = vld [vmem:[%s166 + $0x40] sm:$0xf]
      %v191 = vld [vmem:[%s166 + $0x44] sm:$0xf]
      %v192 = vld [vmem:[%s166 + $0x48] sm:$0xf]
      %v193 = vld [vmem:[%s166 + $0x4c] sm:$0xf]
      %v194 = vld [vmem:[%s166 + $0x50] sm:$0xf]
      %v195 = vld [vmem:[%s166 + $0x54] sm:$0xf]
      %v196 = vld [vmem:[%s166 + $0x58] sm:$0xf]
      %v197 = vld [vmem:[%s166 + $0x5c] sm:$0xf]
      %v198 = vld [vmem:[%s166 + $0x60] sm:$0xf]
      %v199 = vld [vmem:[%s166 + $0x64] sm:$0xf]
      %v200 = vld [vmem:[%s166 + $0x68] sm:$0xf]
      %v201 = vld [vmem:[%s166 + $0x6c] sm:$0xf]
      %v202 = vld [vmem:[%s166 + $0x70] sm:$0xf]
      %v203 = vld [vmem:[%s166 + $0x74] sm:$0xf]
      %v204 = vld [vmem:[%s166 + $0x78] sm:$0xf]
      %v205 = vld [vmem:[%s166 + $0x7c] sm:$0xf]
      %v206 = vld [vmem:[%s166 + $0x80] sm:$0xf]
      %v207 = vld [vmem:[%s166 + $0x84] sm:$0xf]
      %v208 = vld [vmem:[%s166 + $0x88] sm:$0xf]
      %v209 = vld [vmem:[%s166 + $0x8c] sm:$0xf]
      %v210 = vld [vmem:[%s166 + $0x90] sm:$0xf]
      %v211 = vld [vmem:[%s166 + $0x94] sm:$0xf]
      %v212 = vld [vmem:[%s166 + $0x98] sm:$0xf]
      %v213 = vld [vmem:[%s166 + $0x9c] sm:$0xf]
      %v214 = vld [vmem:[%s166 + $0xa0] sm:$0xf]
      %v215 = vld [vmem:[%s166 + $0xa4] sm:$0xf]
      %v216 = vld [vmem:[%s166 + $0xa8] sm:$0xf]
      %v217 = vld [vmem:[%s166 + $0xac] sm:$0xf]
      %v218 = vld [vmem:[%s166 + $0xb0] sm:$0xf]
      %v219 = vld [vmem:[%s166 + $0xb4] sm:$0xf]
      %v220 = vld [vmem:[%s166 + $0xb8] sm:$0xf]
      %v221 = vld [vmem:[%s166 + $0xbc] sm:$0xf]
      %v222 = vld [vmem:[%s166 + $0xc0] sm:$0xf]
      %v223 = vld [vmem:[%s166 + $0xc4] sm:$0xf]
      %v224 = vld [vmem:[%s166 + $0xc8] sm:$0xf]
      %v225 = vld [vmem:[%s166 + $0xcc] sm:$0xf]
      %v226 = vld [vmem:[%s166 + $0xd0] sm:$0xf]
      %v227 = vld [vmem:[%s166 + $0xd4] sm:$0xf]
      %v228 = vld [vmem:[%s166 + $0xd8] sm:$0xf]
      %v229 = vld [vmem:[%s166 + $0xdc] sm:$0xf]
      %v230 = vld [vmem:[%s166 + $0xe0] sm:$0xf]
      %v231 = vld [vmem:[%s166 + $0xe4] sm:$0xf]
      %v232 = vld [vmem:[%s166 + $0xe8] sm:$0xf]
      %v233 = vld [vmem:[%s166 + $0xec] sm:$0xf]
      %v234 = vld [vmem:[%s166 + $0xf0] sm:$0xf]
      %v235 = vld [vmem:[%s166 + $0xf4] sm:$0xf]
      %v236 = vld [vmem:[%s166 + $0xf8] sm:$0xf]
      %v237 = vld [vmem:[%s166 + $0xfc] sm:$0xf]
      %v238 = vld [vmem:[%s166 + $0x100] sm:$0xf]
      %v239 = vld [vmem:[%s166 + $0x104] sm:$0xf]
      %v240 = vld [vmem:[%s166 + $0x108] sm:$0xf]
      %v241 = vld [vmem:[%s166 + $0x10c] sm:$0xf]
      %v242 = vld [vmem:[%s166 + $0x110] sm:$0xf]
      %v243 = vld [vmem:[%s166 + $0x114] sm:$0xf]
      %v244 = vld [vmem:[%s166 + $0x118] sm:$0xf]
      %v245 = vld [vmem:[%s166 + $0x11c] sm:$0xf]
      %v246 = vld [vmem:[%s166 + $0x120] sm:$0xf]
      %v247 = vld [vmem:[%s166 + $0x124] sm:$0xf]
      %v248 = vld [vmem:[%s166 + $0x128] sm:$0xf]
      %v249 = vld [vmem:[%s166 + $0x12c] sm:$0xf]
      %v250 = vld [vmem:[%s166 + $0x130] sm:$0xf]
      %v251 = vld [vmem:[%s166 + $0x134] sm:$0xf]
      %v252 = vld [vmem:[%s166 + $0x138] sm:$0xf]
      %v253 = vld [vmem:[%s166 + $0x13c] sm:$0xf]
      %v254 = vld [vmem:[%s166 + $0x140] sm:$0xf]
      %v255 = vld [vmem:[%s166 + $0x144] sm:$0xf]
      %v256 = vld [vmem:[%s166 + $0x148] sm:$0xf]
      %v257 = vld [vmem:[%s166 + $0x14c] sm:$0xf]
      %v258 = vld [vmem:[%s166 + $0x150] sm:$0xf]
      %v259 = vld [vmem:[%s166 + $0x154] sm:$0xf]
      %v260 = vld [vmem:[%s166 + $0x158] sm:$0xf]
      %v261 = vld [vmem:[%s166 + $0x15c] sm:$0xf]
      %v262 = vld [vmem:[%s166 + $0x160] sm:$0xf]
      %v263 = vld [vmem:[%s166 + $0x164] sm:$0xf]
      %v264 = vld [vmem:[%s166 + $0x168] sm:$0xf]
      %v265 = vld [vmem:[%s166 + $0x16c] sm:$0xf]
      %v266 = vld [vmem:[%s166 + $0x170] sm:$0xf]
      %v267 = vld [vmem:[%s166 + $0x174] sm:$0xf]
      %v268 = vld [vmem:[%s166 + $0x178] sm:$0xf]
      %v269 = vld [vmem:[%s166 + $0x17c] sm:$0xf]
      %v270 = vld [vmem:[%s166 + $0x180] sm:$0xf]
      %v271 = vld [vmem:[%s166 + $0x184] sm:$0xf]
      %v272 = vld [vmem:[%s166 + $0x188] sm:$0xf]
      %v273 = vld [vmem:[%s166 + $0x18c] sm:$0xf]
      %v274 = vld [vmem:[%s166 + $0x190] sm:$0xf]
      %v275 = vld [vmem:[%s166 + $0x194] sm:$0xf]
      %v276 = vld [vmem:[%s166 + $0x198] sm:$0xf]
      %v277 = vld [vmem:[%s166 + $0x19c] sm:$0xf]
      %v278 = vld [vmem:[%s166 + $0x1a0] sm:$0xf]
      %v279 = vld [vmem:[%s166 + $0x1a4] sm:$0xf]
      %v280 = vld [vmem:[%s166 + $0x1a8] sm:$0xf]
      %v281 = vld [vmem:[%s166 + $0x1ac] sm:$0xf]
      %v282 = vld [vmem:[%s166 + $0x1b0] sm:$0xf]
      %v283 = vld [vmem:[%s166 + $0x1b4] sm:$0xf]
      %v284 = vld [vmem:[%s166 + $0x1b8] sm:$0xf]
      %v285 = vld [vmem:[%s166 + $0x1bc] sm:$0xf]
      %v286 = vld [vmem:[%s166 + $0x1c0] sm:$0xf]
      %v287 = vld [vmem:[%s166 + $0x1c4] sm:$0xf]
      %v288 = vld [vmem:[%s166 + $0x1c8] sm:$0xf]
      %v289 = vld [vmem:[%s166 + $0x1cc] sm:$0xf]
      %v290 = vld [vmem:[%s166 + $0x1d0] sm:$0xf]
      %v291 = vld [vmem:[%s166 + $0x1d4] sm:$0xf]
      %v292 = vld [vmem:[%s166 + $0x1d8] sm:$0xf]
      %v293 = vld [vmem:[%s166 + $0x1dc] sm:$0xf]
      %v294 = vld [vmem:[%s166 + $0x1e0] sm:$0xf]
      %v295 = vld [vmem:[%s166 + $0x1e4] sm:$0xf]
      %v296 = vld [vmem:[%s166 + $0x1e8] sm:$0xf]
      %v297 = vld [vmem:[%s166 + $0x1ec] sm:$0xf]
      %v298 = vld [vmem:[%s166 + $0x1f0] sm:$0xf]
      %v299 = vld [vmem:[%s166 + $0x1f4] sm:$0xf]
      %v300 = vld [vmem:[%s166 + $0x1f8] sm:$0xf]
      %v301 = vld [vmem:[%s166 + $0x1fc] sm:$0xf]
      %v302 = vld [vmem:[%s166 + $0x200] sm:$0xf]
      %v303 = vld [vmem:[%s166 + $0x204] sm:$0xf]
      %v304 = vld [vmem:[%s166 + $0x208] sm:$0xf]
      %v305 = vld [vmem:[%s166 + $0x20c] sm:$0xf]
      %v306 = vld [vmem:[%s166 + $0x210] sm:$0xf]
      %v307 = vld [vmem:[%s166 + $0x214] sm:$0xf]
      %v308 = vld [vmem:[%s166 + $0x218] sm:$0xf]
      %v309 = vld [vmem:[%s166 + $0x21c] sm:$0xf]
      %v310 = vld [vmem:[%s166 + $0x220] sm:$0xf]
      %v311 = vld [vmem:[%s166 + $0x224] sm:$0xf]
      %v312 = vld [vmem:[%s166 + $0x228] sm:$0xf]
      %v313 = vld [vmem:[%s166 + $0x22c] sm:$0xf]
      %v314 = vld [vmem:[%s166 + $0x230] sm:$0xf]
      %v315 = vld [vmem:[%s166 + $0x234] sm:$0xf]
      %v316 = vld [vmem:[%s166 + $0x238] sm:$0xf]
      %v317 = vld [vmem:[%s166 + $0x23c] sm:$0xf]
      %v318 = vld [vmem:[%s166 + $0x240] sm:$0xf]
      %v319 = vld [vmem:[%s166 + $0x244] sm:$0xf]
      %v320 = vld [vmem:[%s166 + $0x248] sm:$0xf]
      %v321 = vld [vmem:[%s166 + $0x24c] sm:$0xf]
      %v322 = vld [vmem:[%s166 + $0x250] sm:$0xf]
      %v323 = vld [vmem:[%s166 + $0x254] sm:$0xf]
      %v324 = vld [vmem:[%s166 + $0x258] sm:$0xf]
      %v325 = vld [vmem:[%s166 + $0x25c] sm:$0xf]
      %v326 = vld [vmem:[%s166 + $0x260] sm:$0xf]
      %v327 = vld [vmem:[%s166 + $0x264] sm:$0xf]
      %v328 = vld [vmem:[%s166 + $0x268] sm:$0xf]
      %v329 = vld [vmem:[%s166 + $0x26c] sm:$0xf]
      %v330 = vld [vmem:[%s166 + $0x270] sm:$0xf]
      %v331 = vld [vmem:[%s166 + $0x274] sm:$0xf]
      %v332 = vld [vmem:[%s166 + $0x278] sm:$0xf]
      %v333 = vld [vmem:[%s166 + $0x27c] sm:$0xf]
      %v334 = vld [vmem:[%s166 + $0x280] sm:$0xf]
      %v335 = vld [vmem:[%s166 + $0x284] sm:$0xf]
      %v336 = vld [vmem:[%s166 + $0x288] sm:$0xf]
      %v337 = vld [vmem:[%s166 + $0x28c] sm:$0xf]
      %v338 = vld [vmem:[%s166 + $0x290] sm:$0xf]
      %v339 = vld [vmem:[%s166 + $0x294] sm:$0xf]
      %v340 = vld [vmem:[%s166 + $0x298] sm:$0xf]
      %v341 = vld [vmem:[%s166 + $0x29c] sm:$0xf]
      %v342 = vld [vmem:[%s166 + $0x2a0] sm:$0xf]
      %v343 = vld [vmem:[%s166 + $0x2a4] sm:$0xf]
      %v344 = vld [vmem:[%s166 + $0x2a8] sm:$0xf]
      %v345 = vld [vmem:[%s166 + $0x2ac] sm:$0xf]
      %v346 = vld [vmem:[%s166 + $0x2b0] sm:$0xf]
      %v347 = vld [vmem:[%s166 + $0x2b4] sm:$0xf]
      %v348 = vld [vmem:[%s166 + $0x2b8] sm:$0xf]
      %v349 = vld [vmem:[%s166 + $0x2bc] sm:$0xf]
      %v350 = vld [vmem:[%s166 + $0x2c0] sm:$0xf]
      %v351 = vld [vmem:[%s166 + $0x2c4] sm:$0xf]
      %v352 = vld [vmem:[%s166 + $0x2c8] sm:$0xf]
      %v353 = vld [vmem:[%s166 + $0x2cc] sm:$0xf]
      %v354 = vld [vmem:[%s166 + $0x2d0] sm:$0xf]
      %v355 = vld [vmem:[%s166 + $0x2d4] sm:$0xf]
      %v356 = vld [vmem:[%s166 + $0x2d8] sm:$0xf]
      %v357 = vld [vmem:[%s166 + $0x2dc] sm:$0xf]
      %v358 = vld [vmem:[%s166 + $0x2e0] sm:$0xf]
      %v359 = vld [vmem:[%s166 + $0x2e4] sm:$0xf]
      %v360 = vld [vmem:[%s166 + $0x2e8] sm:$0xf]
      %v361 = vld [vmem:[%s166 + $0x2ec] sm:$0xf]
      %v362 = vld [vmem:[%s166 + $0x2f0] sm:$0xf]
      %v363 = vld [vmem:[%s166 + $0x2f4] sm:$0xf]
      %v364 = vld [vmem:[%s166 + $0x2f8] sm:$0xf]
      %v365 = vld [vmem:[%s166 + $0x2fc] sm:$0xf]
      %v366 = vld [vmem:[%s166 + $0x300] sm:$0xf]
      %v367 = vld [vmem:[%s166 + $0x304] sm:$0xf]
      %v368 = vld [vmem:[%s166 + $0x308] sm:$0xf]
      %v369 = vld [vmem:[%s166 + $0x30c] sm:$0xf]
      %v370 = vld [vmem:[%s166 + $0x310] sm:$0xf]
      %v371 = vld [vmem:[%s166 + $0x314] sm:$0xf]
      %v372 = vld [vmem:[%s166 + $0x318] sm:$0xf]
      %v373 = vld [vmem:[%s166 + $0x31c] sm:$0xf]
      %v374 = vld [vmem:[%s166 + $0x320] sm:$0xf]
      %v375 = vld [vmem:[%s166 + $0x324] sm:$0xf]
      %v376 = vld [vmem:[%s166 + $0x328] sm:$0xf]
      %v377 = vld [vmem:[%s166 + $0x32c] sm:$0xf]
      %v378 = vld [vmem:[%s166 + $0x330] sm:$0xf]
      %v379 = vld [vmem:[%s166 + $0x334] sm:$0xf]
      %v380 = vld [vmem:[%s166 + $0x338] sm:$0xf]
      %v381 = vld [vmem:[%s166 + $0x33c] sm:$0xf]
      %v382 = vld [vmem:[%s166 + $0x340] sm:$0xf]
      %v383 = vld [vmem:[%s166 + $0x344] sm:$0xf]
      %v384 = vld [vmem:[%s166 + $0x348] sm:$0xf]
      %v385 = vld [vmem:[%s166 + $0x34c] sm:$0xf]
      %v386 = vld [vmem:[%s166 + $0x350] sm:$0xf]
      %v387 = vld [vmem:[%s166 + $0x354] sm:$0xf]
      %v388 = vld [vmem:[%s166 + $0x358] sm:$0xf]
      %v389 = vld [vmem:[%s166 + $0x35c] sm:$0xf]
      %v390 = vld [vmem:[%s166 + $0x360] sm:$0xf]
      %v391 = vld [vmem:[%s166 + $0x364] sm:$0xf]
      %v392 = vld [vmem:[%s166 + $0x368] sm:$0xf]
      %v393 = vld [vmem:[%s166 + $0x36c] sm:$0xf]
      %v394 = vld [vmem:[%s166 + $0x370] sm:$0xf]
      %v395 = vld [vmem:[%s166 + $0x374] sm:$0xf]
      %v396 = vld [vmem:[%s166 + $0x378] sm:$0xf]
      %v397 = vld [vmem:[%s166 + $0x37c] sm:$0xf]
      %v398 = vld [vmem:[%s166 + $0x380] sm:$0xf]
      %v399 = vld [vmem:[%s166 + $0x384] sm:$0xf]
      %v400 = vld [vmem:[%s166 + $0x388] sm:$0xf]
      %v401 = vld [vmem:[%s166 + $0x38c] sm:$0xf]
      %v402 = vld [vmem:[%s166 + $0x390] sm:$0xf]
      %v403 = vld [vmem:[%s166 + $0x394] sm:$0xf]
      %v404 = vld [vmem:[%s166 + $0x398] sm:$0xf]
      %v405 = vld [vmem:[%s166 + $0x39c] sm:$0xf]
      %v406 = vld [vmem:[%s166 + $0x3a0] sm:$0xf]
      %v407 = vld [vmem:[%s166 + $0x3a4] sm:$0xf]
      %v408 = vld [vmem:[%s166 + $0x3a8] sm:$0xf]
      %v409 = vld [vmem:[%s166 + $0x3ac] sm:$0xf]
      %v410 = vld [vmem:[%s166 + $0x3b0] sm:$0xf]
      %v411 = vld [vmem:[%s166 + $0x3b4] sm:$0xf]
      %v412 = vld [vmem:[%s166 + $0x3b8] sm:$0xf]
      %v413 = vld [vmem:[%s166 + $0x3bc] sm:$0xf]
      %v414 = vld [vmem:[%s166 + $0x3c0] sm:$0xf]
      %v415 = vld [vmem:[%s166 + $0x3c4] sm:$0xf]
      %v416 = vld [vmem:[%s166 + $0x3c8] sm:$0xf]
      %v417 = vld [vmem:[%s166 + $0x3cc] sm:$0xf]
      %v418 = vld [vmem:[%s166 + $0x3d0] sm:$0xf]
      %v419 = vld [vmem:[%s166 + $0x3d4] sm:$0xf]
      %v420 = vld [vmem:[%s166 + $0x3d8] sm:$0xf]
      %v421 = vld [vmem:[%s166 + $0x3dc] sm:$0xf]
      %v422 = vld [vmem:[%s166 + $0x3e0] sm:$0xf]
      %v423 = vld [vmem:[%s166 + $0x3e4] sm:$0xf]
      %v424 = vld [vmem:[%s166 + $0x3e8] sm:$0xf]
      %v425 = vld [vmem:[%s166 + $0x3ec] sm:$0xf]
      %v426 = vld [vmem:[%s166 + $0x3f0] sm:$0xf]
      %v427 = vld [vmem:[%s166 + $0x3f4] sm:$0xf]
      %v428 = vld [vmem:[%s166 + $0x3f8] sm:$0xf]
      %v429 = vld [vmem:[%s166 + $0x3fc] sm:$0xf]
      %v430 = vunpack.c.l.bf16 %v174
      %v431 = vunpack.c.l.bf16 %v175
      %v432 = vunpack.c.l.bf16 %v176
      %v433 = vunpack.c.l.bf16 %v177
      %v434 = vunpack.c.l.bf16 %v178
      %v435 = vunpack.c.l.bf16 %v179
      %v436 = vunpack.c.l.bf16 %v180
      %v437 = vunpack.c.l.bf16 %v181
      %v438 = vunpack.c.l.bf16 %v182
      %v439 = vunpack.c.l.bf16 %v183
      %v440 = vunpack.c.l.bf16 %v184
      %v441 = vunpack.c.l.bf16 %v185
      %v442 = vunpack.c.l.bf16 %v186
      %v443 = vunpack.c.l.bf16 %v187
      %v444 = vunpack.c.l.bf16 %v188
      %v445 = vunpack.c.l.bf16 %v189
      %v446 = vunpack.c.l.bf16 %v190
      %v447 = vunpack.c.l.bf16 %v191
      %v448 = vunpack.c.l.bf16 %v192
      %v449 = vunpack.c.l.bf16 %v193
      %v450 = vunpack.c.l.bf16 %v194
      %v451 = vunpack.c.l.bf16 %v195
      %v452 = vunpack.c.l.bf16 %v196
      %v453 = vunpack.c.l.bf16 %v197
      %v454 = vunpack.c.l.bf16 %v198
      %v455 = vunpack.c.l.bf16 %v199
      %v456 = vunpack.c.l.bf16 %v200
      %v457 = vunpack.c.l.bf16 %v201
      %v458 = vunpack.c.l.bf16 %v202
      %v459 = vunpack.c.l.bf16 %v203
      %v460 = vunpack.c.l.bf16 %v204
      %v461 = vunpack.c.l.bf16 %v205
      %v462 = vunpack.c.l.bf16 %v206
      %v463 = vunpack.c.l.bf16 %v207
      %v464 = vunpack.c.l.bf16 %v208
      %v465 = vunpack.c.l.bf16 %v209
      %v466 = vunpack.c.l.bf16 %v210
      %v467 = vunpack.c.l.bf16 %v211
      %v468 = vunpack.c.l.bf16 %v212
      %v469 = vunpack.c.l.bf16 %v213
      %v470 = vunpack.c.l.bf16 %v214
      %v471 = vunpack.c.l.bf16 %v215
      %v472 = vunpack.c.l.bf16 %v216
      %v473 = vunpack.c.l.bf16 %v217
      %v474 = vunpack.c.l.bf16 %v218
      %v475 = vunpack.c.l.bf16 %v219
      %v476 = vunpack.c.l.bf16 %v220
      %v477 = vunpack.c.l.bf16 %v221
      %v478 = vunpack.c.l.bf16 %v222
      %v479 = vunpack.c.l.bf16 %v223
      %v480 = vunpack.c.l.bf16 %v224
      %v481 = vunpack.c.l.bf16 %v225
      %v482 = vunpack.c.l.bf16 %v226
      %v483 = vunpack.c.l.bf16 %v227
      %v484 = vunpack.c.l.bf16 %v228
      %v485 = vunpack.c.l.bf16 %v229
      %v486 = vunpack.c.l.bf16 %v230
      %v487 = vunpack.c.l.bf16 %v231
      %v488 = vunpack.c.l.bf16 %v232
      %v489 = vunpack.c.l.bf16 %v233
      %v490 = vunpack.c.l.bf16 %v234
      %v491 = vunpack.c.l.bf16 %v235
      %v492 = vunpack.c.l.bf16 %v236
      %v493 = vunpack.c.l.bf16 %v237
      %v494 = vunpack.c.l.bf16 %v238
      %v495 = vunpack.c.l.bf16 %v239
      %v496 = vunpack.c.l.bf16 %v240
      %v497 = vunpack.c.l.bf16 %v241
      %v498 = vunpack.c.l.bf16 %v242
      %v499 = vunpack.c.l.bf16 %v243
      %v500 = vunpack.c.l.bf16 %v244
      %v501 = vunpack.c.l.bf16 %v245
      %v502 = vunpack.c.l.bf16 %v246
      %v503 = vunpack.c.l.bf16 %v247
      %v504 = vunpack.c.l.bf16 %v248
      %v505 = vunpack.c.l.bf16 %v249
      %v506 = vunpack.c.l.bf16 %v250
      %v507 = vunpack.c.l.bf16 %v251
      %v508 = vunpack.c.l.bf16 %v252
      %v509 = vunpack.c.l.bf16 %v253
      %v510 = vunpack.c.l.bf16 %v254
      %v511 = vunpack.c.l.bf16 %v255
      %v512 = vunpack.c.l.bf16 %v256
      %v513 = vunpack.c.l.bf16 %v257
      %v514 = vunpack.c.l.bf16 %v258
      %v515 = vunpack.c.l.bf16 %v259
      %v516 = vunpack.c.l.bf16 %v260
      %v517 = vunpack.c.l.bf16 %v261
      %v518 = vunpack.c.l.bf16 %v262
      %v519 = vunpack.c.l.bf16 %v263
      %v520 = vunpack.c.l.bf16 %v264
      %v521 = vunpack.c.l.bf16 %v265
      %v522 = vunpack.c.l.bf16 %v266
      %v523 = vunpack.c.l.bf16 %v267
      %v524 = vunpack.c.l.bf16 %v268
      %v525 = vunpack.c.l.bf16 %v269
      %v526 = vunpack.c.l.bf16 %v270
      %v527 = vunpack.c.l.bf16 %v271
      %v528 = vunpack.c.l.bf16 %v272
      %v529 = vunpack.c.l.bf16 %v273
      %v530 = vunpack.c.l.bf16 %v274
      %v531 = vunpack.c.l.bf16 %v275
      %v532 = vunpack.c.l.bf16 %v276
      %v533 = vunpack.c.l.bf16 %v277
      %v534 = vunpack.c.l.bf16 %v278
      %v535 = vunpack.c.l.bf16 %v279
      %v536 = vunpack.c.l.bf16 %v280
      %v537 = vunpack.c.l.bf16 %v281
      %v538 = vunpack.c.l.bf16 %v282
      %v539 = vunpack.c.l.bf16 %v283
      %v540 = vunpack.c.l.bf16 %v284
      %v541 = vunpack.c.l.bf16 %v285
      %v542 = vunpack.c.l.bf16 %v286
      %v543 = vunpack.c.l.bf16 %v287
      %v544 = vunpack.c.l.bf16 %v288
      %v545 = vunpack.c.l.bf16 %v289
      %v546 = vunpack.c.l.bf16 %v290
      %v547 = vunpack.c.l.bf16 %v291
      %v548 = vunpack.c.l.bf16 %v292
      %v549 = vunpack.c.l.bf16 %v293
      %v550 = vunpack.c.l.bf16 %v294
      %v551 = vunpack.c.l.bf16 %v295
      %v552 = vunpack.c.l.bf16 %v296
      %v553 = vunpack.c.l.bf16 %v297
      %v554 = vunpack.c.l.bf16 %v298
      %v555 = vunpack.c.l.bf16 %v299
      %v556 = vunpack.c.l.bf16 %v300
      %v557 = vunpack.c.l.bf16 %v301
      %v558 = vunpack.c.l.bf16 %v302
      %v559 = vunpack.c.l.bf16 %v303
      %v560 = vunpack.c.l.bf16 %v304
      %v561 = vunpack.c.l.bf16 %v305
      %v562 = vunpack.c.l.bf16 %v306
      %v563 = vunpack.c.l.bf16 %v307
      %v564 = vunpack.c.l.bf16 %v308
      %v565 = vunpack.c.l.bf16 %v309
      %v566 = vunpack.c.l.bf16 %v310
      %v567 = vunpack.c.l.bf16 %v311
      %v568 = vunpack.c.l.bf16 %v312
      %v569 = vunpack.c.l.bf16 %v313
      %v570 = vunpack.c.l.bf16 %v314
      %v571 = vunpack.c.l.bf16 %v315
      %v572 = vunpack.c.l.bf16 %v316
      %v573 = vunpack.c.l.bf16 %v317
      %v574 = vunpack.c.l.bf16 %v318
      %v575 = vunpack.c.l.bf16 %v319
      %v576 = vunpack.c.l.bf16 %v320
      %v577 = vunpack.c.l.bf16 %v321
      %v578 = vunpack.c.l.bf16 %v322
      %v579 = vunpack.c.l.bf16 %v323
      %v580 = vunpack.c.l.bf16 %v324
      %v581 = vunpack.c.l.bf16 %v325
      %v582 = vunpack.c.l.bf16 %v326
      %v583 = vunpack.c.l.bf16 %v327
      %v584 = vunpack.c.l.bf16 %v328
      %v585 = vunpack.c.l.bf16 %v329
      %v586 = vunpack.c.l.bf16 %v330
      %v587 = vunpack.c.l.bf16 %v331
      %v588 = vunpack.c.l.bf16 %v332
      %v589 = vunpack.c.l.bf16 %v333
      %v590 = vunpack.c.l.bf16 %v334
      %v591 = vunpack.c.l.bf16 %v335
      %v592 = vunpack.c.l.bf16 %v336
      %v593 = vunpack.c.l.bf16 %v337
      %v594 = vunpack.c.l.bf16 %v338
      %v595 = vunpack.c.l.bf16 %v339
      %v596 = vunpack.c.l.bf16 %v340
      %v597 = vunpack.c.l.bf16 %v341
      %v598 = vunpack.c.l.bf16 %v342
      %v599 = vunpack.c.l.bf16 %v343
      %v600 = vunpack.c.l.bf16 %v344
      %v601 = vunpack.c.l.bf16 %v345
      %v602 = vunpack.c.l.bf16 %v346
      %v603 = vunpack.c.l.bf16 %v347
      %v604 = vunpack.c.l.bf16 %v348
      %v605 = vunpack.c.l.bf16 %v349
      %v606 = vunpack.c.l.bf16 %v350
      %v607 = vunpack.c.l.bf16 %v351
      %v608 = vunpack.c.l.bf16 %v352
      %v609 = vunpack.c.l.bf16 %v353
      %v610 = vunpack.c.l.bf16 %v354
      %v611 = vunpack.c.l.bf16 %v355
      %v612 = vunpack.c.l.bf16 %v356
      %v613 = vunpack.c.l.bf16 %v357
      %v614 = vunpack.c.l.bf16 %v358
      %v615 = vunpack.c.l.bf16 %v359
      %v616 = vunpack.c.l.bf16 %v360
      %v617 = vunpack.c.l.bf16 %v361
      %v618 = vunpack.c.l.bf16 %v362
      %v619 = vunpack.c.l.bf16 %v363
      %v620 = vunpack.c.l.bf16 %v364
      %v621 = vunpack.c.l.bf16 %v365
      %v622 = vunpack.c.l.bf16 %v366
      %v623 = vunpack.c.l.bf16 %v367
      %v624 = vunpack.c.l.bf16 %v368
      %v625 = vunpack.c.l.bf16 %v369
      %v626 = vunpack.c.l.bf16 %v370
      %v627 = vunpack.c.l.bf16 %v371
      %v628 = vunpack.c.l.bf16 %v372
      %v629 = vunpack.c.l.bf16 %v373
      %v630 = vunpack.c.l.bf16 %v374
      %v631 = vunpack.c.l.bf16 %v375
      %v632 = vunpack.c.l.bf16 %v376
      %v633 = vunpack.c.l.bf16 %v377
      %v634 = vunpack.c.l.bf16 %v378
      %v635 = vunpack.c.l.bf16 %v379
      %v636 = vunpack.c.l.bf16 %v380
      %v637 = vunpack.c.l.bf16 %v381
      %v638 = vunpack.c.l.bf16 %v382
      %v639 = vunpack.c.l.bf16 %v383
      %v640 = vunpack.c.l.bf16 %v384
      %v641 = vunpack.c.l.bf16 %v385
      %v642 = vunpack.c.l.bf16 %v386
      %v643 = vunpack.c.l.bf16 %v387
      %v644 = vunpack.c.l.bf16 %v388
      %v645 = vunpack.c.l.bf16 %v389
      %v646 = vunpack.c.l.bf16 %v390
      %v647 = vunpack.c.l.bf16 %v391
      %v648 = vunpack.c.l.bf16 %v392
      %v649 = vunpack.c.l.bf16 %v393
      %v650 = vunpack.c.l.bf16 %v394
      %v651 = vunpack.c.l.bf16 %v395
      %v652 = vunpack.c.l.bf16 %v396
      %v653 = vunpack.c.l.bf16 %v397
      %v654 = vunpack.c.l.bf16 %v398
      %v655 = vunpack.c.l.bf16 %v399
      %v656 = vunpack.c.l.bf16 %v400
      %v657 = vunpack.c.l.bf16 %v401
      %v658 = vunpack.c.l.bf16 %v402
      %v659 = vunpack.c.l.bf16 %v403
      %v660 = vunpack.c.l.bf16 %v404
      %v661 = vunpack.c.l.bf16 %v405
      %v662 = vunpack.c.l.bf16 %v406
      %v663 = vunpack.c.l.bf16 %v407
      %v664 = vunpack.c.l.bf16 %v408
      %v665 = vunpack.c.l.bf16 %v409
      %v666 = vunpack.c.l.bf16 %v410
      %v667 = vunpack.c.l.bf16 %v411
      %v668 = vunpack.c.l.bf16 %v412
      %v669 = vunpack.c.l.bf16 %v413
      %v670 = vunpack.c.l.bf16 %v414
      %v671 = vunpack.c.l.bf16 %v415
      %v672 = vunpack.c.l.bf16 %v416
      %v673 = vunpack.c.l.bf16 %v417
      %v674 = vunpack.c.l.bf16 %v418
      %v675 = vunpack.c.l.bf16 %v419
      %v676 = vunpack.c.l.bf16 %v420
      %v677 = vunpack.c.l.bf16 %v421
      %v678 = vunpack.c.l.bf16 %v422
      %v679 = vunpack.c.l.bf16 %v423
      %v680 = vunpack.c.l.bf16 %v424
      %v681 = vunpack.c.l.bf16 %v425
      %v682 = vunpack.c.l.bf16 %v426
      %v683 = vunpack.c.l.bf16 %v427
      %v684 = vunpack.c.l.bf16 %v428
      %v685 = vunpack.c.l.bf16 %v429
      %v686 = vld [vmem:[%s1] sm:$0x1]
      %v688 = vlaneseq
      %v689 = vshrl.u32 %v688, 7
      %v690 = vsub.s32 0, %v689
      %v691 = vrot.slane %v686, %v690
      %v693 = vmul.f32 %v430, %v691
      %v694 = vmul.f32 %v431, %v691
      %v695 = vmul.f32 %v432, %v691
      %v696 = vmul.f32 %v433, %v691
      %v697 = vmul.f32 %v434, %v691
      %v698 = vmul.f32 %v435, %v691
      %v699 = vmul.f32 %v436, %v691
      %v700 = vmul.f32 %v437, %v691
      %v701 = vmul.f32 %v438, %v691
      %v702 = vmul.f32 %v439, %v691
      %v703 = vmul.f32 %v440, %v691
      %v704 = vmul.f32 %v441, %v691
      %v705 = vmul.f32 %v442, %v691
      %v706 = vmul.f32 %v443, %v691
      %v707 = vmul.f32 %v444, %v691
      %v708 = vmul.f32 %v445, %v691
      %v709 = vmul.f32 %v446, %v691
      %v710 = vmul.f32 %v447, %v691
      %v711 = vmul.f32 %v448, %v691
      %v712 = vmul.f32 %v449, %v691
      %v713 = vmul.f32 %v450, %v691
      %v714 = vmul.f32 %v451, %v691
      %v715 = vmul.f32 %v452, %v691
      %v716 = vmul.f32 %v453, %v691
      %v717 = vmul.f32 %v454, %v691
      %v718 = vmul.f32 %v455, %v691
      %v719 = vmul.f32 %v456, %v691
      %v720 = vmul.f32 %v457, %v691
      %v721 = vmul.f32 %v458, %v691
      %v722 = vmul.f32 %v459, %v691
      %v723 = vmul.f32 %v460, %v691
      %v724 = vmul.f32 %v461, %v691
      %v725 = vmul.f32 %v462, %v691
      %v726 = vmul.f32 %v463, %v691
      %v727 = vmul.f32 %v464, %v691
      %v728 = vmul.f32 %v465, %v691
      %v729 = vmul.f32 %v466, %v691
      %v730 = vmul.f32 %v467, %v691
      %v731 = vmul.f32 %v468, %v691
      %v732 = vmul.f32 %v469, %v691
      %v733 = vmul.f32 %v470, %v691
      %v734 = vmul.f32 %v471, %v691
      %v735 = vmul.f32 %v472, %v691
      %v736 = vmul.f32 %v473, %v691
      %v737 = vmul.f32 %v474, %v691
      %v738 = vmul.f32 %v475, %v691
      %v739 = vmul.f32 %v476, %v691
      %v740 = vmul.f32 %v477, %v691
      %v741 = vmul.f32 %v478, %v691
      %v742 = vmul.f32 %v479, %v691
      %v743 = vmul.f32 %v480, %v691
      %v744 = vmul.f32 %v481, %v691
      %v745 = vmul.f32 %v482, %v691
      %v746 = vmul.f32 %v483, %v691
      %v747 = vmul.f32 %v484, %v691
      %v748 = vmul.f32 %v485, %v691
      %v749 = vmul.f32 %v486, %v691
      %v750 = vmul.f32 %v487, %v691
      %v751 = vmul.f32 %v488, %v691
      %v752 = vmul.f32 %v489, %v691
      %v753 = vmul.f32 %v490, %v691
      %v754 = vmul.f32 %v491, %v691
      %v755 = vmul.f32 %v492, %v691
      %v756 = vmul.f32 %v493, %v691
      %v757 = vmul.f32 %v494, %v691
      %v758 = vmul.f32 %v495, %v691
      %v759 = vmul.f32 %v496, %v691
      %v760 = vmul.f32 %v497, %v691
      %v761 = vmul.f32 %v498, %v691
      %v762 = vmul.f32 %v499, %v691
      %v763 = vmul.f32 %v500, %v691
      %v764 = vmul.f32 %v501, %v691
      %v765 = vmul.f32 %v502, %v691
      %v766 = vmul.f32 %v503, %v691
      %v767 = vmul.f32 %v504, %v691
      %v768 = vmul.f32 %v505, %v691
      %v769 = vmul.f32 %v506, %v691
      %v770 = vmul.f32 %v507, %v691
      %v771 = vmul.f32 %v508, %v691
      %v772 = vmul.f32 %v509, %v691
      %v773 = vmul.f32 %v510, %v691
      %v774 = vmul.f32 %v511, %v691
      %v775 = vmul.f32 %v512, %v691
      %v776 = vmul.f32 %v513, %v691
      %v777 = vmul.f32 %v514, %v691
      %v778 = vmul.f32 %v515, %v691
      %v779 = vmul.f32 %v516, %v691
      %v780 = vmul.f32 %v517, %v691
      %v781 = vmul.f32 %v518, %v691
      %v782 = vmul.f32 %v519, %v691
      %v783 = vmul.f32 %v520, %v691
      %v784 = vmul.f32 %v521, %v691
      %v785 = vmul.f32 %v522, %v691
      %v786 = vmul.f32 %v523, %v691
      %v787 = vmul.f32 %v524, %v691
      %v788 = vmul.f32 %v525, %v691
      %v789 = vmul.f32 %v526, %v691
      %v790 = vmul.f32 %v527, %v691
      %v791 = vmul.f32 %v528, %v691
      %v792 = vmul.f32 %v529, %v691
      %v793 = vmul.f32 %v530, %v691
      %v794 = vmul.f32 %v531, %v691
      %v795 = vmul.f32 %v532, %v691
      %v796 = vmul.f32 %v533, %v691
      %v797 = vmul.f32 %v534, %v691
      %v798 = vmul.f32 %v535, %v691
      %v799 = vmul.f32 %v536, %v691
      %v800 = vmul.f32 %v537, %v691
      %v801 = vmul.f32 %v538, %v691
      %v802 = vmul.f32 %v539, %v691
      %v803 = vmul.f32 %v540, %v691
      %v804 = vmul.f32 %v541, %v691
      %v805 = vmul.f32 %v542, %v691
      %v806 = vmul.f32 %v543, %v691
      %v807 = vmul.f32 %v544, %v691
      %v808 = vmul.f32 %v545, %v691
      %v809 = vmul.f32 %v546, %v691
      %v810 = vmul.f32 %v547, %v691
      %v811 = vmul.f32 %v548, %v691
      %v812 = vmul.f32 %v549, %v691
      %v813 = vmul.f32 %v550, %v691
      %v814 = vmul.f32 %v551, %v691
      %v815 = vmul.f32 %v552, %v691
      %v816 = vmul.f32 %v553, %v691
      %v817 = vmul.f32 %v554, %v691
      %v818 = vmul.f32 %v555, %v691
      %v819 = vmul.f32 %v556, %v691
      %v820 = vmul.f32 %v557, %v691
      %v821 = vmul.f32 %v558, %v691
      %v822 = vmul.f32 %v559, %v691
      %v823 = vmul.f32 %v560, %v691
      %v824 = vmul.f32 %v561, %v691
      %v825 = vmul.f32 %v562, %v691
      %v826 = vmul.f32 %v563, %v691
      %v827 = vmul.f32 %v564, %v691
      %v828 = vmul.f32 %v565, %v691
      %v829 = vmul.f32 %v566, %v691
      %v830 = vmul.f32 %v567, %v691
      %v831 = vmul.f32 %v568, %v691
      %v832 = vmul.f32 %v569, %v691
      %v833 = vmul.f32 %v570, %v691
      %v834 = vmul.f32 %v571, %v691
      %v835 = vmul.f32 %v572, %v691
      %v836 = vmul.f32 %v573, %v691
      %v837 = vmul.f32 %v574, %v691
      %v838 = vmul.f32 %v575, %v691
      %v839 = vmul.f32 %v576, %v691
      %v840 = vmul.f32 %v577, %v691
      %v841 = vmul.f32 %v578, %v691
      %v842 = vmul.f32 %v579, %v691
      %v843 = vmul.f32 %v580, %v691
      %v844 = vmul.f32 %v581, %v691
      %v845 = vmul.f32 %v582, %v691
      %v846 = vmul.f32 %v583, %v691
      %v847 = vmul.f32 %v584, %v691
      %v848 = vmul.f32 %v585, %v691
      %v849 = vmul.f32 %v586, %v691
      %v850 = vmul.f32 %v587, %v691
      %v851 = vmul.f32 %v588, %v691
      %v852 = vmul.f32 %v589, %v691
      %v853 = vmul.f32 %v590, %v691
      %v854 = vmul.f32 %v591, %v691
      %v855 = vmul.f32 %v592, %v691
      %v856 = vmul.f32 %v593, %v691
      %v857 = vmul.f32 %v594, %v691
      %v858 = vmul.f32 %v595, %v691
      %v859 = vmul.f32 %v596, %v691
      %v860 = vmul.f32 %v597, %v691
      %v861 = vmul.f32 %v598, %v691
      %v862 = vmul.f32 %v599, %v691
      %v863 = vmul.f32 %v600, %v691
      %v864 = vmul.f32 %v601, %v691
      %v865 = vmul.f32 %v602, %v691
      %v866 = vmul.f32 %v603, %v691
      %v867 = vmul.f32 %v604, %v691
      %v868 = vmul.f32 %v605, %v691
      %v869 = vmul.f32 %v606, %v691
      %v870 = vmul.f32 %v607, %v691
      %v871 = vmul.f32 %v608, %v691
      %v872 = vmul.f32 %v609, %v691
      %v873 = vmul.f32 %v610, %v691
      %v874 = vmul.f32 %v611, %v691
      %v875 = vmul.f32 %v612, %v691
      %v876 = vmul.f32 %v613, %v691
      %v877 = vmul.f32 %v614, %v691
      %v878 = vmul.f32 %v615, %v691
      %v879 = vmul.f32 %v616, %v691
      %v880 = vmul.f32 %v617, %v691
      %v881 = vmul.f32 %v618, %v691
      %v882 = vmul.f32 %v619, %v691
      %v883 = vmul.f32 %v620, %v691
      %v884 = vmul.f32 %v621, %v691
      %v885 = vmul.f32 %v622, %v691
      %v886 = vmul.f32 %v623, %v691
      %v887 = vmul.f32 %v624, %v691
      %v888 = vmul.f32 %v625, %v691
      %v889 = vmul.f32 %v626, %v691
      %v890 = vmul.f32 %v627, %v691
      %v891 = vmul.f32 %v628, %v691
      %v892 = vmul.f32 %v629, %v691
      %v893 = vmul.f32 %v630, %v691
      %v894 = vmul.f32 %v631, %v691
      %v895 = vmul.f32 %v632, %v691
      %v896 = vmul.f32 %v633, %v691
      %v897 = vmul.f32 %v634, %v691
      %v898 = vmul.f32 %v635, %v691
      %v899 = vmul.f32 %v636, %v691
      %v900 = vmul.f32 %v637, %v691
      %v901 = vmul.f32 %v638, %v691
      %v902 = vmul.f32 %v639, %v691
      %v903 = vmul.f32 %v640, %v691
      %v904 = vmul.f32 %v641, %v691
      %v905 = vmul.f32 %v642, %v691
      %v906 = vmul.f32 %v643, %v691
      %v907 = vmul.f32 %v644, %v691
      %v908 = vmul.f32 %v645, %v691
      %v909 = vmul.f32 %v646, %v691
      %v910 = vmul.f32 %v647, %v691
      %v911 = vmul.f32 %v648, %v691
      %v912 = vmul.f32 %v649, %v691
      %v913 = vmul.f32 %v650, %v691
      %v914 = vmul.f32 %v651, %v691
      %v915 = vmul.f32 %v652, %v691
      %v916 = vmul.f32 %v653, %v691
      %v917 = vmul.f32 %v654, %v691
      %v918 = vmul.f32 %v655, %v691
      %v919 = vmul.f32 %v656, %v691
      %v920 = vmul.f32 %v657, %v691
      %v921 = vmul.f32 %v658, %v691
      %v922 = vmul.f32 %v659, %v691
      %v923 = vmul.f32 %v660, %v691
      %v924 = vmul.f32 %v661, %v691
      %v925 = vmul.f32 %v662, %v691
      %v926 = vmul.f32 %v663, %v691
      %v927 = vmul.f32 %v664, %v691
      %v928 = vmul.f32 %v665, %v691
      %v929 = vmul.f32 %v666, %v691
      %v930 = vmul.f32 %v667, %v691
      %v931 = vmul.f32 %v668, %v691
      %v932 = vmul.f32 %v669, %v691
      %v933 = vmul.f32 %v670, %v691
      %v934 = vmul.f32 %v671, %v691
      %v935 = vmul.f32 %v672, %v691
      %v936 = vmul.f32 %v673, %v691
      %v937 = vmul.f32 %v674, %v691
      %v938 = vmul.f32 %v675, %v691
      %v939 = vmul.f32 %v676, %v691
      %v940 = vmul.f32 %v677, %v691
      %v941 = vmul.f32 %v678, %v691
      %v942 = vmul.f32 %v679, %v691
      %v943 = vmul.f32 %v680, %v691
      %v944 = vmul.f32 %v681, %v691
      %v945 = vmul.f32 %v682, %v691
      %v946 = vmul.f32 %v683, %v691
      %v947 = vmul.f32 %v684, %v691
      %v948 = vmul.f32 %v685, %v691
      %v949 = vld [vmem:[%s2] sm:$0x1]
      %v951 = vlaneseq
      %v952 = vshrl.u32 %v951, 7
      %v953 = vsub.s32 0, %v952
      %v954 = vrot.slane %v949, %v953
      %v956 = vadd.f32 %v693, %v954
      %v957 = vadd.f32 %v694, %v954
      %v958 = vadd.f32 %v695, %v954
      %v959 = vadd.f32 %v696, %v954
      %v960 = vadd.f32 %v697, %v954
      %v961 = vadd.f32 %v698, %v954
      %v962 = vadd.f32 %v699, %v954
      %v963 = vadd.f32 %v700, %v954
      %v964 = vadd.f32 %v701, %v954
      %v965 = vadd.f32 %v702, %v954
      %v966 = vadd.f32 %v703, %v954
      %v967 = vadd.f32 %v704, %v954
      %v968 = vadd.f32 %v705, %v954
      %v969 = vadd.f32 %v706, %v954
      %v970 = vadd.f32 %v707, %v954
      %v971 = vadd.f32 %v708, %v954
      %v972 = vadd.f32 %v709, %v954
      %v973 = vadd.f32 %v710, %v954
      %v974 = vadd.f32 %v711, %v954
      %v975 = vadd.f32 %v712, %v954
      %v976 = vadd.f32 %v713, %v954
      %v977 = vadd.f32 %v714, %v954
      %v978 = vadd.f32 %v715, %v954
      %v979 = vadd.f32 %v716, %v954
      %v980 = vadd.f32 %v717, %v954
      %v981 = vadd.f32 %v718, %v954
      %v982 = vadd.f32 %v719, %v954
      %v983 = vadd.f32 %v720, %v954
      %v984 = vadd.f32 %v721, %v954
      %v985 = vadd.f32 %v722, %v954
      %v986 = vadd.f32 %v723, %v954
      %v987 = vadd.f32 %v724, %v954
      %v988 = vadd.f32 %v725, %v954
      %v989 = vadd.f32 %v726, %v954
      %v990 = vadd.f32 %v727, %v954
      %v991 = vadd.f32 %v728, %v954
      %v992 = vadd.f32 %v729, %v954
      %v993 = vadd.f32 %v730, %v954
      %v994 = vadd.f32 %v731, %v954
      %v995 = vadd.f32 %v732, %v954
      %v996 = vadd.f32 %v733, %v954
      %v997 = vadd.f32 %v734, %v954
      %v998 = vadd.f32 %v735, %v954
      %v999 = vadd.f32 %v736, %v954
      %v1000 = vadd.f32 %v737, %v954
      %v1001 = vadd.f32 %v738, %v954
      %v1002 = vadd.f32 %v739, %v954
      %v1003 = vadd.f32 %v740, %v954
      %v1004 = vadd.f32 %v741, %v954
      %v1005 = vadd.f32 %v742, %v954
      %v1006 = vadd.f32 %v743, %v954
      %v1007 = vadd.f32 %v744, %v954
      %v1008 = vadd.f32 %v745, %v954
      %v1009 = vadd.f32 %v746, %v954
      %v1010 = vadd.f32 %v747, %v954
      %v1011 = vadd.f32 %v748, %v954
      %v1012 = vadd.f32 %v749, %v954
      %v1013 = vadd.f32 %v750, %v954
      %v1014 = vadd.f32 %v751, %v954
      %v1015 = vadd.f32 %v752, %v954
      %v1016 = vadd.f32 %v753, %v954
      %v1017 = vadd.f32 %v754, %v954
      %v1018 = vadd.f32 %v755, %v954
      %v1019 = vadd.f32 %v756, %v954
      %v1020 = vadd.f32 %v757, %v954
      %v1021 = vadd.f32 %v758, %v954
      %v1022 = vadd.f32 %v759, %v954
      %v1023 = vadd.f32 %v760, %v954
      %v1024 = vadd.f32 %v761, %v954
      %v1025 = vadd.f32 %v762, %v954
      %v1026 = vadd.f32 %v763, %v954
      %v1027 = vadd.f32 %v764, %v954
      %v1028 = vadd.f32 %v765, %v954
      %v1029 = vadd.f32 %v766, %v954
      %v1030 = vadd.f32 %v767, %v954
      %v1031 = vadd.f32 %v768, %v954
      %v1032 = vadd.f32 %v769, %v954
      %v1033 = vadd.f32 %v770, %v954
      %v1034 = vadd.f32 %v771, %v954
      %v1035 = vadd.f32 %v772, %v954
      %v1036 = vadd.f32 %v773, %v954
      %v1037 = vadd.f32 %v774, %v954
      %v1038 = vadd.f32 %v775, %v954
      %v1039 = vadd.f32 %v776, %v954
      %v1040 = vadd.f32 %v777, %v954
      %v1041 = vadd.f32 %v778, %v954
      %v1042 = vadd.f32 %v779, %v954
      %v1043 = vadd.f32 %v780, %v954
      %v1044 = vadd.f32 %v781, %v954
      %v1045 = vadd.f32 %v782, %v954
      %v1046 = vadd.f32 %v783, %v954
      %v1047 = vadd.f32 %v784, %v954
      %v1048 = vadd.f32 %v785, %v954
      %v1049 = vadd.f32 %v786, %v954
      %v1050 = vadd.f32 %v787, %v954
      %v1051 = vadd.f32 %v788, %v954
      %v1052 = vadd.f32 %v789, %v954
      %v1053 = vadd.f32 %v790, %v954
      %v1054 = vadd.f32 %v791, %v954
      %v1055 = vadd.f32 %v792, %v954
      %v1056 = vadd.f32 %v793, %v954
      %v1057 = vadd.f32 %v794, %v954
      %v1058 = vadd.f32 %v795, %v954
      %v1059 = vadd.f32 %v796, %v954
      %v1060 = vadd.f32 %v797, %v954
      %v1061 = vadd.f32 %v798, %v954
      %v1062 = vadd.f32 %v799, %v954
      %v1063 = vadd.f32 %v800, %v954
      %v1064 = vadd.f32 %v801, %v954
      %v1065 = vadd.f32 %v802, %v954
      %v1066 = vadd.f32 %v803, %v954
      %v1067 = vadd.f32 %v804, %v954
      %v1068 = vadd.f32 %v805, %v954
      %v1069 = vadd.f32 %v806, %v954
      %v1070 = vadd.f32 %v807, %v954
      %v1071 = vadd.f32 %v808, %v954
      %v1072 = vadd.f32 %v809, %v954
      %v1073 = vadd.f32 %v810, %v954
      %v1074 = vadd.f32 %v811, %v954
      %v1075 = vadd.f32 %v812, %v954
      %v1076 = vadd.f32 %v813, %v954
      %v1077 = vadd.f32 %v814, %v954
      %v1078 = vadd.f32 %v815, %v954
      %v1079 = vadd.f32 %v816, %v954
      %v1080 = vadd.f32 %v817, %v954
      %v1081 = vadd.f32 %v818, %v954
      %v1082 = vadd.f32 %v819, %v954
      %v1083 = vadd.f32 %v820, %v954
      %v1084 = vadd.f32 %v821, %v954
      %v1085 = vadd.f32 %v822, %v954
      %v1086 = vadd.f32 %v823, %v954
      %v1087 = vadd.f32 %v824, %v954
      %v1088 = vadd.f32 %v825, %v954
      %v1089 = vadd.f32 %v826, %v954
      %v1090 = vadd.f32 %v827, %v954
      %v1091 = vadd.f32 %v828, %v954
      %v1092 = vadd.f32 %v829, %v954
      %v1093 = vadd.f32 %v830, %v954
      %v1094 = vadd.f32 %v831, %v954
      %v1095 = vadd.f32 %v832, %v954
      %v1096 = vadd.f32 %v833, %v954
      %v1097 = vadd.f32 %v834, %v954
      %v1098 = vadd.f32 %v835, %v954
      %v1099 = vadd.f32 %v836, %v954
      %v1100 = vadd.f32 %v837, %v954
      %v1101 = vadd.f32 %v838, %v954
      %v1102 = vadd.f32 %v839, %v954
      %v1103 = vadd.f32 %v840, %v954
      %v1104 = vadd.f32 %v841, %v954
      %v1105 = vadd.f32 %v842, %v954
      %v1106 = vadd.f32 %v843, %v954
      %v1107 = vadd.f32 %v844, %v954
      %v1108 = vadd.f32 %v845, %v954
      %v1109 = vadd.f32 %v846, %v954
      %v1110 = vadd.f32 %v847, %v954
      %v1111 = vadd.f32 %v848, %v954
      %v1112 = vadd.f32 %v849, %v954
      %v1113 = vadd.f32 %v850, %v954
      %v1114 = vadd.f32 %v851, %v954
      %v1115 = vadd.f32 %v852, %v954
      %v1116 = vadd.f32 %v853, %v954
      %v1117 = vadd.f32 %v854, %v954
      %v1118 = vadd.f32 %v855, %v954
      %v1119 = vadd.f32 %v856, %v954
      %v1120 = vadd.f32 %v857, %v954
      %v1121 = vadd.f32 %v858, %v954
      %v1122 = vadd.f32 %v859, %v954
      %v1123 = vadd.f32 %v860, %v954
      %v1124 = vadd.f32 %v861, %v954
      %v1125 = vadd.f32 %v862, %v954
      %v1126 = vadd.f32 %v863, %v954
      %v1127 = vadd.f32 %v864, %v954
      %v1128 = vadd.f32 %v865, %v954
      %v1129 = vadd.f32 %v866, %v954
      %v1130 = vadd.f32 %v867, %v954
      %v1131 = vadd.f32 %v868, %v954
      %v1132 = vadd.f32 %v869, %v954
      %v1133 = vadd.f32 %v870, %v954
      %v1134 = vadd.f32 %v871, %v954
      %v1135 = vadd.f32 %v872, %v954
      %v1136 = vadd.f32 %v873, %v954
      %v1137 = vadd.f32 %v874, %v954
      %v1138 = vadd.f32 %v875, %v954
      %v1139 = vadd.f32 %v876, %v954
      %v1140 = vadd.f32 %v877, %v954
      %v1141 = vadd.f32 %v878, %v954
      %v1142 = vadd.f32 %v879, %v954
      %v1143 = vadd.f32 %v880, %v954
      %v1144 = vadd.f32 %v881, %v954
      %v1145 = vadd.f32 %v882, %v954
      %v1146 = vadd.f32 %v883, %v954
      %v1147 = vadd.f32 %v884, %v954
      %v1148 = vadd.f32 %v885, %v954
      %v1149 = vadd.f32 %v886, %v954
      %v1150 = vadd.f32 %v887, %v954
      %v1151 = vadd.f32 %v888, %v954
      %v1152 = vadd.f32 %v889, %v954
      %v1153 = vadd.f32 %v890, %v954
      %v1154 = vadd.f32 %v891, %v954
      %v1155 = vadd.f32 %v892, %v954
      %v1156 = vadd.f32 %v893, %v954
      %v1157 = vadd.f32 %v894, %v954
      %v1158 = vadd.f32 %v895, %v954
      %v1159 = vadd.f32 %v896, %v954
      %v1160 = vadd.f32 %v897, %v954
      %v1161 = vadd.f32 %v898, %v954
      %v1162 = vadd.f32 %v899, %v954
      %v1163 = vadd.f32 %v900, %v954
      %v1164 = vadd.f32 %v901, %v954
      %v1165 = vadd.f32 %v902, %v954
      %v1166 = vadd.f32 %v903, %v954
      %v1167 = vadd.f32 %v904, %v954
      %v1168 = vadd.f32 %v905, %v954
      %v1169 = vadd.f32 %v906, %v954
      %v1170 = vadd.f32 %v907, %v954
      %v1171 = vadd.f32 %v908, %v954
      %v1172 = vadd.f32 %v909, %v954
      %v1173 = vadd.f32 %v910, %v954
      %v1174 = vadd.f32 %v911, %v954
      %v1175 = vadd.f32 %v912, %v954
      %v1176 = vadd.f32 %v913, %v954
      %v1177 = vadd.f32 %v914, %v954
      %v1178 = vadd.f32 %v915, %v954
      %v1179 = vadd.f32 %v916, %v954
      %v1180 = vadd.f32 %v917, %v954
      %v1181 = vadd.f32 %v918, %v954
      %v1182 = vadd.f32 %v919, %v954
      %v1183 = vadd.f32 %v920, %v954
      %v1184 = vadd.f32 %v921, %v954
      %v1185 = vadd.f32 %v922, %v954
      %v1186 = vadd.f32 %v923, %v954
      %v1187 = vadd.f32 %v924, %v954
      %v1188 = vadd.f32 %v925, %v954
      %v1189 = vadd.f32 %v926, %v954
      %v1190 = vadd.f32 %v927, %v954
      %v1191 = vadd.f32 %v928, %v954
      %v1192 = vadd.f32 %v929, %v954
      %v1193 = vadd.f32 %v930, %v954
      %v1194 = vadd.f32 %v931, %v954
      %v1195 = vadd.f32 %v932, %v954
      %v1196 = vadd.f32 %v933, %v954
      %v1197 = vadd.f32 %v934, %v954
      %v1198 = vadd.f32 %v935, %v954
      %v1199 = vadd.f32 %v936, %v954
      %v1200 = vadd.f32 %v937, %v954
      %v1201 = vadd.f32 %v938, %v954
      %v1202 = vadd.f32 %v939, %v954
      %v1203 = vadd.f32 %v940, %v954
      %v1204 = vadd.f32 %v941, %v954
      %v1205 = vadd.f32 %v942, %v954
      %v1206 = vadd.f32 %v943, %v954
      %v1207 = vadd.f32 %v944, %v954
      %v1208 = vadd.f32 %v945, %v954
      %v1209 = vadd.f32 %v946, %v954
      %v1210 = vadd.f32 %v947, %v954
      %v1211 = vadd.f32 %v948, %v954
      %vm1212 = vcmp.ge.f32.partialorder %v956, 0.0
      %vm1213 = vcmp.ge.f32.partialorder %v957, 0.0
      %vm1214 = vcmp.ge.f32.partialorder %v958, 0.0
      %vm1215 = vcmp.ge.f32.partialorder %v959, 0.0
      %vm1216 = vcmp.ge.f32.partialorder %v960, 0.0
      %vm1217 = vcmp.ge.f32.partialorder %v961, 0.0
      %vm1218 = vcmp.ge.f32.partialorder %v962, 0.0
      %vm1219 = vcmp.ge.f32.partialorder %v963, 0.0
      %vm1220 = vcmp.ge.f32.partialorder %v964, 0.0
      %vm1221 = vcmp.ge.f32.partialorder %v965, 0.0
      %vm1222 = vcmp.ge.f32.partialorder %v966, 0.0
      %vm1223 = vcmp.ge.f32.partialorder %v967, 0.0
      %vm1224 = vcmp.ge.f32.partialorder %v968, 0.0
      %vm1225 = vcmp.ge.f32.partialorder %v969, 0.0
      %vm1226 = vcmp.ge.f32.partialorder %v970, 0.0
      %vm1227 = vcmp.ge.f32.partialorder %v971, 0.0
      %vm1228 = vcmp.ge.f32.partialorder %v972, 0.0
      %vm1229 = vcmp.ge.f32.partialorder %v973, 0.0
      %vm1230 = vcmp.ge.f32.partialorder %v974, 0.0
      %vm1231 = vcmp.ge.f32.partialorder %v975, 0.0
      %vm1232 = vcmp.ge.f32.partialorder %v976, 0.0
      %vm1233 = vcmp.ge.f32.partialorder %v977, 0.0
      %vm1234 = vcmp.ge.f32.partialorder %v978, 0.0
      %vm1235 = vcmp.ge.f32.partialorder %v979, 0.0
      %vm1236 = vcmp.ge.f32.partialorder %v980, 0.0
      %vm1237 = vcmp.ge.f32.partialorder %v981, 0.0
      %vm1238 = vcmp.ge.f32.partialorder %v982, 0.0
      %vm1239 = vcmp.ge.f32.partialorder %v983, 0.0
      %vm1240 = vcmp.ge.f32.partialorder %v984, 0.0
      %vm1241 = vcmp.ge.f32.partialorder %v985, 0.0
      %vm1242 = vcmp.ge.f32.partialorder %v986, 0.0
      %vm1243 = vcmp.ge.f32.partialorder %v987, 0.0
      %vm1244 = vcmp.ge.f32.partialorder %v988, 0.0
      %vm1245 = vcmp.ge.f32.partialorder %v989, 0.0
      %vm1246 = vcmp.ge.f32.partialorder %v990, 0.0
      %vm1247 = vcmp.ge.f32.partialorder %v991, 0.0
      %vm1248 = vcmp.ge.f32.partialorder %v992, 0.0
      %vm1249 = vcmp.ge.f32.partialorder %v993, 0.0
      %vm1250 = vcmp.ge.f32.partialorder %v994, 0.0
      %vm1251 = vcmp.ge.f32.partialorder %v995, 0.0
      %vm1252 = vcmp.ge.f32.partialorder %v996, 0.0
      %vm1253 = vcmp.ge.f32.partialorder %v997, 0.0
      %vm1254 = vcmp.ge.f32.partialorder %v998, 0.0
      %vm1255 = vcmp.ge.f32.partialorder %v999, 0.0
      %vm1256 = vcmp.ge.f32.partialorder %v1000, 0.0
      %vm1257 = vcmp.ge.f32.partialorder %v1001, 0.0
      %vm1258 = vcmp.ge.f32.partialorder %v1002, 0.0
      %vm1259 = vcmp.ge.f32.partialorder %v1003, 0.0
      %vm1260 = vcmp.ge.f32.partialorder %v1004, 0.0
      %vm1261 = vcmp.ge.f32.partialorder %v1005, 0.0
      %vm1262 = vcmp.ge.f32.partialorder %v1006, 0.0
      %vm1263 = vcmp.ge.f32.partialorder %v1007, 0.0
      %vm1264 = vcmp.ge.f32.partialorder %v1008, 0.0
      %vm1265 = vcmp.ge.f32.partialorder %v1009, 0.0
      %vm1266 = vcmp.ge.f32.partialorder %v1010, 0.0
      %vm1267 = vcmp.ge.f32.partialorder %v1011, 0.0
      %vm1268 = vcmp.ge.f32.partialorder %v1012, 0.0
      %vm1269 = vcmp.ge.f32.partialorder %v1013, 0.0
      %vm1270 = vcmp.ge.f32.partialorder %v1014, 0.0
      %vm1271 = vcmp.ge.f32.partialorder %v1015, 0.0
      %vm1272 = vcmp.ge.f32.partialorder %v1016, 0.0
      %vm1273 = vcmp.ge.f32.partialorder %v1017, 0.0
      %vm1274 = vcmp.ge.f32.partialorder %v1018, 0.0
      %vm1275 = vcmp.ge.f32.partialorder %v1019, 0.0
      %vm1276 = vcmp.ge.f32.partialorder %v1020, 0.0
      %vm1277 = vcmp.ge.f32.partialorder %v1021, 0.0
      %vm1278 = vcmp.ge.f32.partialorder %v1022, 0.0
      %vm1279 = vcmp.ge.f32.partialorder %v1023, 0.0
      %vm1280 = vcmp.ge.f32.partialorder %v1024, 0.0
      %vm1281 = vcmp.ge.f32.partialorder %v1025, 0.0
      %vm1282 = vcmp.ge.f32.partialorder %v1026, 0.0
      %vm1283 = vcmp.ge.f32.partialorder %v1027, 0.0
      %vm1284 = vcmp.ge.f32.partialorder %v1028, 0.0
      %vm1285 = vcmp.ge.f32.partialorder %v1029, 0.0
      %vm1286 = vcmp.ge.f32.partialorder %v1030, 0.0
      %vm1287 = vcmp.ge.f32.partialorder %v1031, 0.0
      %vm1288 = vcmp.ge.f32.partialorder %v1032, 0.0
      %vm1289 = vcmp.ge.f32.partialorder %v1033, 0.0
      %vm1290 = vcmp.ge.f32.partialorder %v1034, 0.0
      %vm1291 = vcmp.ge.f32.partialorder %v1035, 0.0
      %vm1292 = vcmp.ge.f32.partialorder %v1036, 0.0
      %vm1293 = vcmp.ge.f32.partialorder %v1037, 0.0
      %vm1294 = vcmp.ge.f32.partialorder %v1038, 0.0
      %vm1295 = vcmp.ge.f32.partialorder %v1039, 0.0
      %vm1296 = vcmp.ge.f32.partialorder %v1040, 0.0
      %vm1297 = vcmp.ge.f32.partialorder %v1041, 0.0
      %vm1298 = vcmp.ge.f32.partialorder %v1042, 0.0
      %vm1299 = vcmp.ge.f32.partialorder %v1043, 0.0
      %vm1300 = vcmp.ge.f32.partialorder %v1044, 0.0
      %vm1301 = vcmp.ge.f32.partialorder %v1045, 0.0
      %vm1302 = vcmp.ge.f32.partialorder %v1046, 0.0
      %vm1303 = vcmp.ge.f32.partialorder %v1047, 0.0
      %vm1304 = vcmp.ge.f32.partialorder %v1048, 0.0
      %vm1305 = vcmp.ge.f32.partialorder %v1049, 0.0
      %vm1306 = vcmp.ge.f32.partialorder %v1050, 0.0
      %vm1307 = vcmp.ge.f32.partialorder %v1051, 0.0
      %vm1308 = vcmp.ge.f32.partialorder %v1052, 0.0
      %vm1309 = vcmp.ge.f32.partialorder %v1053, 0.0
      %vm1310 = vcmp.ge.f32.partialorder %v1054, 0.0
      %vm1311 = vcmp.ge.f32.partialorder %v1055, 0.0
      %vm1312 = vcmp.ge.f32.partialorder %v1056, 0.0
      %vm1313 = vcmp.ge.f32.partialorder %v1057, 0.0
      %vm1314 = vcmp.ge.f32.partialorder %v1058, 0.0
      %vm1315 = vcmp.ge.f32.partialorder %v1059, 0.0
      %vm1316 = vcmp.ge.f32.partialorder %v1060, 0.0
      %vm1317 = vcmp.ge.f32.partialorder %v1061, 0.0
      %vm1318 = vcmp.ge.f32.partialorder %v1062, 0.0
      %vm1319 = vcmp.ge.f32.partialorder %v1063, 0.0
      %vm1320 = vcmp.ge.f32.partialorder %v1064, 0.0
      %vm1321 = vcmp.ge.f32.partialorder %v1065, 0.0
      %vm1322 = vcmp.ge.f32.partialorder %v1066, 0.0
      %vm1323 = vcmp.ge.f32.partialorder %v1067, 0.0
      %vm1324 = vcmp.ge.f32.partialorder %v1068, 0.0
      %vm1325 = vcmp.ge.f32.partialorder %v1069, 0.0
      %vm1326 = vcmp.ge.f32.partialorder %v1070, 0.0
      %vm1327 = vcmp.ge.f32.partialorder %v1071, 0.0
      %vm1328 = vcmp.ge.f32.partialorder %v1072, 0.0
      %vm1329 = vcmp.ge.f32.partialorder %v1073, 0.0
      %vm1330 = vcmp.ge.f32.partialorder %v1074, 0.0
      %vm1331 = vcmp.ge.f32.partialorder %v1075, 0.0
      %vm1332 = vcmp.ge.f32.partialorder %v1076, 0.0
      %vm1333 = vcmp.ge.f32.partialorder %v1077, 0.0
      %vm1334 = vcmp.ge.f32.partialorder %v1078, 0.0
      %vm1335 = vcmp.ge.f32.partialorder %v1079, 0.0
      %vm1336 = vcmp.ge.f32.partialorder %v1080, 0.0
      %vm1337 = vcmp.ge.f32.partialorder %v1081, 0.0
      %vm1338 = vcmp.ge.f32.partialorder %v1082, 0.0
      %vm1339 = vcmp.ge.f32.partialorder %v1083, 0.0
      %vm1340 = vcmp.ge.f32.partialorder %v1084, 0.0
      %vm1341 = vcmp.ge.f32.partialorder %v1085, 0.0
      %vm1342 = vcmp.ge.f32.partialorder %v1086, 0.0
      %vm1343 = vcmp.ge.f32.partialorder %v1087, 0.0
      %vm1344 = vcmp.ge.f32.partialorder %v1088, 0.0
      %vm1345 = vcmp.ge.f32.partialorder %v1089, 0.0
      %vm1346 = vcmp.ge.f32.partialorder %v1090, 0.0
      %vm1347 = vcmp.ge.f32.partialorder %v1091, 0.0
      %vm1348 = vcmp.ge.f32.partialorder %v1092, 0.0
      %vm1349 = vcmp.ge.f32.partialorder %v1093, 0.0
      %vm1350 = vcmp.ge.f32.partialorder %v1094, 0.0
      %vm1351 = vcmp.ge.f32.partialorder %v1095, 0.0
      %vm1352 = vcmp.ge.f32.partialorder %v1096, 0.0
      %vm1353 = vcmp.ge.f32.partialorder %v1097, 0.0
      %vm1354 = vcmp.ge.f32.partialorder %v1098, 0.0
      %vm1355 = vcmp.ge.f32.partialorder %v1099, 0.0
      %vm1356 = vcmp.ge.f32.partialorder %v1100, 0.0
      %vm1357 = vcmp.ge.f32.partialorder %v1101, 0.0
      %vm1358 = vcmp.ge.f32.partialorder %v1102, 0.0
      %vm1359 = vcmp.ge.f32.partialorder %v1103, 0.0
      %vm1360 = vcmp.ge.f32.partialorder %v1104, 0.0
      %vm1361 = vcmp.ge.f32.partialorder %v1105, 0.0
      %vm1362 = vcmp.ge.f32.partialorder %v1106, 0.0
      %vm1363 = vcmp.ge.f32.partialorder %v1107, 0.0
      %vm1364 = vcmp.ge.f32.partialorder %v1108, 0.0
      %vm1365 = vcmp.ge.f32.partialorder %v1109, 0.0
      %vm1366 = vcmp.ge.f32.partialorder %v1110, 0.0
      %vm1367 = vcmp.ge.f32.partialorder %v1111, 0.0
      %vm1368 = vcmp.ge.f32.partialorder %v1112, 0.0
      %vm1369 = vcmp.ge.f32.partialorder %v1113, 0.0
      %vm1370 = vcmp.ge.f32.partialorder %v1114, 0.0
      %vm1371 = vcmp.ge.f32.partialorder %v1115, 0.0
      %vm1372 = vcmp.ge.f32.partialorder %v1116, 0.0
      %vm1373 = vcmp.ge.f32.partialorder %v1117, 0.0
      %vm1374 = vcmp.ge.f32.partialorder %v1118, 0.0
      %vm1375 = vcmp.ge.f32.partialorder %v1119, 0.0
      %vm1376 = vcmp.ge.f32.partialorder %v1120, 0.0
      %vm1377 = vcmp.ge.f32.partialorder %v1121, 0.0
      %vm1378 = vcmp.ge.f32.partialorder %v1122, 0.0
      %vm1379 = vcmp.ge.f32.partialorder %v1123, 0.0
      %vm1380 = vcmp.ge.f32.partialorder %v1124, 0.0
      %vm1381 = vcmp.ge.f32.partialorder %v1125, 0.0
      %vm1382 = vcmp.ge.f32.partialorder %v1126, 0.0
      %vm1383 = vcmp.ge.f32.partialorder %v1127, 0.0
      %vm1384 = vcmp.ge.f32.partialorder %v1128, 0.0
      %vm1385 = vcmp.ge.f32.partialorder %v1129, 0.0
      %vm1386 = vcmp.ge.f32.partialorder %v1130, 0.0
      %vm1387 = vcmp.ge.f32.partialorder %v1131, 0.0
      %vm1388 = vcmp.ge.f32.partialorder %v1132, 0.0
      %vm1389 = vcmp.ge.f32.partialorder %v1133, 0.0
      %vm1390 = vcmp.ge.f32.partialorder %v1134, 0.0
      %vm1391 = vcmp.ge.f32.partialorder %v1135, 0.0
      %vm1392 = vcmp.ge.f32.partialorder %v1136, 0.0
      %vm1393 = vcmp.ge.f32.partialorder %v1137, 0.0
      %vm1394 = vcmp.ge.f32.partialorder %v1138, 0.0
      %vm1395 = vcmp.ge.f32.partialorder %v1139, 0.0
      %vm1396 = vcmp.ge.f32.partialorder %v1140, 0.0
      %vm1397 = vcmp.ge.f32.partialorder %v1141, 0.0
      %vm1398 = vcmp.ge.f32.partialorder %v1142, 0.0
      %vm1399 = vcmp.ge.f32.partialorder %v1143, 0.0
      %vm1400 = vcmp.ge.f32.partialorder %v1144, 0.0
      %vm1401 = vcmp.ge.f32.partialorder %v1145, 0.0
      %vm1402 = vcmp.ge.f32.partialorder %v1146, 0.0
      %vm1403 = vcmp.ge.f32.partialorder %v1147, 0.0
      %vm1404 = vcmp.ge.f32.partialorder %v1148, 0.0
      %vm1405 = vcmp.ge.f32.partialorder %v1149, 0.0
      %vm1406 = vcmp.ge.f32.partialorder %v1150, 0.0
      %vm1407 = vcmp.ge.f32.partialorder %v1151, 0.0
      %vm1408 = vcmp.ge.f32.partialorder %v1152, 0.0
      %vm1409 = vcmp.ge.f32.partialorder %v1153, 0.0
      %vm1410 = vcmp.ge.f32.partialorder %v1154, 0.0
      %vm1411 = vcmp.ge.f32.partialorder %v1155, 0.0
      %vm1412 = vcmp.ge.f32.partialorder %v1156, 0.0
      %vm1413 = vcmp.ge.f32.partialorder %v1157, 0.0
      %vm1414 = vcmp.ge.f32.partialorder %v1158, 0.0
      %vm1415 = vcmp.ge.f32.partialorder %v1159, 0.0
      %vm1416 = vcmp.ge.f32.partialorder %v1160, 0.0
      %vm1417 = vcmp.ge.f32.partialorder %v1161, 0.0
      %vm1418 = vcmp.ge.f32.partialorder %v1162, 0.0
      %vm1419 = vcmp.ge.f32.partialorder %v1163, 0.0
      %vm1420 = vcmp.ge.f32.partialorder %v1164, 0.0
      %vm1421 = vcmp.ge.f32.partialorder %v1165, 0.0
      %vm1422 = vcmp.ge.f32.partialorder %v1166, 0.0
      %vm1423 = vcmp.ge.f32.partialorder %v1167, 0.0
      %vm1424 = vcmp.ge.f32.partialorder %v1168, 0.0
      %vm1425 = vcmp.ge.f32.partialorder %v1169, 0.0
      %vm1426 = vcmp.ge.f32.partialorder %v1170, 0.0
      %vm1427 = vcmp.ge.f32.partialorder %v1171, 0.0
      %vm1428 = vcmp.ge.f32.partialorder %v1172, 0.0
      %vm1429 = vcmp.ge.f32.partialorder %v1173, 0.0
      %vm1430 = vcmp.ge.f32.partialorder %v1174, 0.0
      %vm1431 = vcmp.ge.f32.partialorder %v1175, 0.0
      %vm1432 = vcmp.ge.f32.partialorder %v1176, 0.0
      %vm1433 = vcmp.ge.f32.partialorder %v1177, 0.0
      %vm1434 = vcmp.ge.f32.partialorder %v1178, 0.0
      %vm1435 = vcmp.ge.f32.partialorder %v1179, 0.0
      %vm1436 = vcmp.ge.f32.partialorder %v1180, 0.0
      %vm1437 = vcmp.ge.f32.partialorder %v1181, 0.0
      %vm1438 = vcmp.ge.f32.partialorder %v1182, 0.0
      %vm1439 = vcmp.ge.f32.partialorder %v1183, 0.0
      %vm1440 = vcmp.ge.f32.partialorder %v1184, 0.0
      %vm1441 = vcmp.ge.f32.partialorder %v1185, 0.0
      %vm1442 = vcmp.ge.f32.partialorder %v1186, 0.0
      %vm1443 = vcmp.ge.f32.partialorder %v1187, 0.0
      %vm1444 = vcmp.ge.f32.partialorder %v1188, 0.0
      %vm1445 = vcmp.ge.f32.partialorder %v1189, 0.0
      %vm1446 = vcmp.ge.f32.partialorder %v1190, 0.0
      %vm1447 = vcmp.ge.f32.partialorder %v1191, 0.0
      %vm1448 = vcmp.ge.f32.partialorder %v1192, 0.0
      %vm1449 = vcmp.ge.f32.partialorder %v1193, 0.0
      %vm1450 = vcmp.ge.f32.partialorder %v1194, 0.0
      %vm1451 = vcmp.ge.f32.partialorder %v1195, 0.0
      %vm1452 = vcmp.ge.f32.partialorder %v1196, 0.0
      %vm1453 = vcmp.ge.f32.partialorder %v1197, 0.0
      %vm1454 = vcmp.ge.f32.partialorder %v1198, 0.0
      %vm1455 = vcmp.ge.f32.partialorder %v1199, 0.0
      %vm1456 = vcmp.ge.f32.partialorder %v1200, 0.0
      %vm1457 = vcmp.ge.f32.partialorder %v1201, 0.0
      %vm1458 = vcmp.ge.f32.partialorder %v1202, 0.0
      %vm1459 = vcmp.ge.f32.partialorder %v1203, 0.0
      %vm1460 = vcmp.ge.f32.partialorder %v1204, 0.0
      %vm1461 = vcmp.ge.f32.partialorder %v1205, 0.0
      %vm1462 = vcmp.ge.f32.partialorder %v1206, 0.0
      %vm1463 = vcmp.ge.f32.partialorder %v1207, 0.0
      %vm1464 = vcmp.ge.f32.partialorder %v1208, 0.0
      %vm1465 = vcmp.ge.f32.partialorder %v1209, 0.0
      %vm1466 = vcmp.ge.f32.partialorder %v1210, 0.0
      %vm1467 = vcmp.ge.f32.partialorder %v1211, 0.0
      %v1468 = vmul.f32 %v956, 0.1
      %v1469 = vmul.f32 %v957, 0.1
      %v1470 = vmul.f32 %v958, 0.1
      %v1471 = vmul.f32 %v959, 0.1
      %v1472 = vmul.f32 %v960, 0.1
      %v1473 = vmul.f32 %v961, 0.1
      %v1474 = vmul.f32 %v962, 0.1
      %v1475 = vmul.f32 %v963, 0.1
      %v1476 = vmul.f32 %v964, 0.1
      %v1477 = vmul.f32 %v965, 0.1
      %v1478 = vmul.f32 %v966, 0.1
      %v1479 = vmul.f32 %v967, 0.1
      %v1480 = vmul.f32 %v968, 0.1
      %v1481 = vmul.f32 %v969, 0.1
      %v1482 = vmul.f32 %v970, 0.1
      %v1483 = vmul.f32 %v971, 0.1
      %v1484 = vmul.f32 %v972, 0.1
      %v1485 = vmul.f32 %v973, 0.1
      %v1486 = vmul.f32 %v974, 0.1
      %v1487 = vmul.f32 %v975, 0.1
      %v1488 = vmul.f32 %v976, 0.1
      %v1489 = vmul.f32 %v977, 0.1
      %v1490 = vmul.f32 %v978, 0.1
      %v1491 = vmul.f32 %v979, 0.1
      %v1492 = vmul.f32 %v980, 0.1
      %v1493 = vmul.f32 %v981, 0.1
      %v1494 = vmul.f32 %v982, 0.1
      %v1495 = vmul.f32 %v983, 0.1
      %v1496 = vmul.f32 %v984, 0.1
      %v1497 = vmul.f32 %v985, 0.1
      %v1498 = vmul.f32 %v986, 0.1
      %v1499 = vmul.f32 %v987, 0.1
      %v1500 = vmul.f32 %v988, 0.1
      %v1501 = vmul.f32 %v989, 0.1
      %v1502 = vmul.f32 %v990, 0.1
      %v1503 = vmul.f32 %v991, 0.1
      %v1504 = vmul.f32 %v992, 0.1
      %v1505 = vmul.f32 %v993, 0.1
      %v1506 = vmul.f32 %v994, 0.1
      %v1507 = vmul.f32 %v995, 0.1
      %v1508 = vmul.f32 %v996, 0.1
      %v1509 = vmul.f32 %v997, 0.1
      %v1510 = vmul.f32 %v998, 0.1
      %v1511 = vmul.f32 %v999, 0.1
      %v1512 = vmul.f32 %v1000, 0.1
      %v1513 = vmul.f32 %v1001, 0.1
      %v1514 = vmul.f32 %v1002, 0.1
      %v1515 = vmul.f32 %v1003, 0.1
      %v1516 = vmul.f32 %v1004, 0.1
      %v1517 = vmul.f32 %v1005, 0.1
      %v1518 = vmul.f32 %v1006, 0.1
      %v1519 = vmul.f32 %v1007, 0.1
      %v1520 = vmul.f32 %v1008, 0.1
      %v1521 = vmul.f32 %v1009, 0.1
      %v1522 = vmul.f32 %v1010, 0.1
      %v1523 = vmul.f32 %v1011, 0.1
      %v1524 = vmul.f32 %v1012, 0.1
      %v1525 = vmul.f32 %v1013, 0.1
      %v1526 = vmul.f32 %v1014, 0.1
      %v1527 = vmul.f32 %v1015, 0.1
      %v1528 = vmul.f32 %v1016, 0.1
      %v1529 = vmul.f32 %v1017, 0.1
      %v1530 = vmul.f32 %v1018, 0.1
      %v1531 = vmul.f32 %v1019, 0.1
      %v1532 = vmul.f32 %v1020, 0.1
      %v1533 = vmul.f32 %v1021, 0.1
      %v1534 = vmul.f32 %v1022, 0.1
      %v1535 = vmul.f32 %v1023, 0.1
      %v1536 = vmul.f32 %v1024, 0.1
      %v1537 = vmul.f32 %v1025, 0.1
      %v1538 = vmul.f32 %v1026, 0.1
      %v1539 = vmul.f32 %v1027, 0.1
      %v1540 = vmul.f32 %v1028, 0.1
      %v1541 = vmul.f32 %v1029, 0.1
      %v1542 = vmul.f32 %v1030, 0.1
      %v1543 = vmul.f32 %v1031, 0.1
      %v1544 = vmul.f32 %v1032, 0.1
      %v1545 = vmul.f32 %v1033, 0.1
      %v1546 = vmul.f32 %v1034, 0.1
      %v1547 = vmul.f32 %v1035, 0.1
      %v1548 = vmul.f32 %v1036, 0.1
      %v1549 = vmul.f32 %v1037, 0.1
      %v1550 = vmul.f32 %v1038, 0.1
      %v1551 = vmul.f32 %v1039, 0.1
      %v1552 = vmul.f32 %v1040, 0.1
      %v1553 = vmul.f32 %v1041, 0.1
      %v1554 = vmul.f32 %v1042, 0.1
      %v1555 = vmul.f32 %v1043, 0.1
      %v1556 = vmul.f32 %v1044, 0.1
      %v1557 = vmul.f32 %v1045, 0.1
      %v1558 = vmul.f32 %v1046, 0.1
      %v1559 = vmul.f32 %v1047, 0.1
      %v1560 = vmul.f32 %v1048, 0.1
      %v1561 = vmul.f32 %v1049, 0.1
      %v1562 = vmul.f32 %v1050, 0.1
      %v1563 = vmul.f32 %v1051, 0.1
      %v1564 = vmul.f32 %v1052, 0.1
      %v1565 = vmul.f32 %v1053, 0.1
      %v1566 = vmul.f32 %v1054, 0.1
      %v1567 = vmul.f32 %v1055, 0.1
      %v1568 = vmul.f32 %v1056, 0.1
      %v1569 = vmul.f32 %v1057, 0.1
      %v1570 = vmul.f32 %v1058, 0.1
      %v1571 = vmul.f32 %v1059, 0.1
      %v1572 = vmul.f32 %v1060, 0.1
      %v1573 = vmul.f32 %v1061, 0.1
      %v1574 = vmul.f32 %v1062, 0.1
      %v1575 = vmul.f32 %v1063, 0.1
      %v1576 = vmul.f32 %v1064, 0.1
      %v1577 = vmul.f32 %v1065, 0.1
      %v1578 = vmul.f32 %v1066, 0.1
      %v1579 = vmul.f32 %v1067, 0.1
      %v1580 = vmul.f32 %v1068, 0.1
      %v1581 = vmul.f32 %v1069, 0.1
      %v1582 = vmul.f32 %v1070, 0.1
      %v1583 = vmul.f32 %v1071, 0.1
      %v1584 = vmul.f32 %v1072, 0.1
      %v1585 = vmul.f32 %v1073, 0.1
      %v1586 = vmul.f32 %v1074, 0.1
      %v1587 = vmul.f32 %v1075, 0.1
      %v1588 = vmul.f32 %v1076, 0.1
      %v1589 = vmul.f32 %v1077, 0.1
      %v1590 = vmul.f32 %v1078, 0.1
      %v1591 = vmul.f32 %v1079, 0.1
      %v1592 = vmul.f32 %v1080, 0.1
      %v1593 = vmul.f32 %v1081, 0.1
      %v1594 = vmul.f32 %v1082, 0.1
      %v1595 = vmul.f32 %v1083, 0.1
      %v1596 = vmul.f32 %v1084, 0.1
      %v1597 = vmul.f32 %v1085, 0.1
      %v1598 = vmul.f32 %v1086, 0.1
      %v1599 = vmul.f32 %v1087, 0.1
      %v1600 = vmul.f32 %v1088, 0.1
      %v1601 = vmul.f32 %v1089, 0.1
      %v1602 = vmul.f32 %v1090, 0.1
      %v1603 = vmul.f32 %v1091, 0.1
      %v1604 = vmul.f32 %v1092, 0.1
      %v1605 = vmul.f32 %v1093, 0.1
      %v1606 = vmul.f32 %v1094, 0.1
      %v1607 = vmul.f32 %v1095, 0.1
      %v1608 = vmul.f32 %v1096, 0.1
      %v1609 = vmul.f32 %v1097, 0.1
      %v1610 = vmul.f32 %v1098, 0.1
      %v1611 = vmul.f32 %v1099, 0.1
      %v1612 = vmul.f32 %v1100, 0.1
      %v1613 = vmul.f32 %v1101, 0.1
      %v1614 = vmul.f32 %v1102, 0.1
      %v1615 = vmul.f32 %v1103, 0.1
      %v1616 = vmul.f32 %v1104, 0.1
      %v1617 = vmul.f32 %v1105, 0.1
      %v1618 = vmul.f32 %v1106, 0.1
      %v1619 = vmul.f32 %v1107, 0.1
      %v1620 = vmul.f32 %v1108, 0.1
      %v1621 = vmul.f32 %v1109, 0.1
      %v1622 = vmul.f32 %v1110, 0.1
      %v1623 = vmul.f32 %v1111, 0.1
      %v1624 = vmul.f32 %v1112, 0.1
      %v1625 = vmul.f32 %v1113, 0.1
      %v1626 = vmul.f32 %v1114, 0.1
      %v1627 = vmul.f32 %v1115, 0.1
      %v1628 = vmul.f32 %v1116, 0.1
      %v1629 = vmul.f32 %v1117, 0.1
      %v1630 = vmul.f32 %v1118, 0.1
      %v1631 = vmul.f32 %v1119, 0.1
      %v1632 = vmul.f32 %v1120, 0.1
      %v1633 = vmul.f32 %v1121, 0.1
      %v1634 = vmul.f32 %v1122, 0.1
      %v1635 = vmul.f32 %v1123, 0.1
      %v1636 = vmul.f32 %v1124, 0.1
      %v1637 = vmul.f32 %v1125, 0.1
      %v1638 = vmul.f32 %v1126, 0.1
      %v1639 = vmul.f32 %v1127, 0.1
      %v1640 = vmul.f32 %v1128, 0.1
      %v1641 = vmul.f32 %v1129, 0.1
      %v1642 = vmul.f32 %v1130, 0.1
      %v1643 = vmul.f32 %v1131, 0.1
      %v1644 = vmul.f32 %v1132, 0.1
      %v1645 = vmul.f32 %v1133, 0.1
      %v1646 = vmul.f32 %v1134, 0.1
      %v1647 = vmul.f32 %v1135, 0.1
      %v1648 = vmul.f32 %v1136, 0.1
      %v1649 = vmul.f32 %v1137, 0.1
      %v1650 = vmul.f32 %v1138, 0.1
      %v1651 = vmul.f32 %v1139, 0.1
      %v1652 = vmul.f32 %v1140, 0.1
      %v1653 = vmul.f32 %v1141, 0.1
      %v1654 = vmul.f32 %v1142, 0.1
      %v1655 = vmul.f32 %v1143, 0.1
      %v1656 = vmul.f32 %v1144, 0.1
      %v1657 = vmul.f32 %v1145, 0.1
      %v1658 = vmul.f32 %v1146, 0.1
      %v1659 = vmul.f32 %v1147, 0.1
      %v1660 = vmul.f32 %v1148, 0.1
      %v1661 = vmul.f32 %v1149, 0.1
      %v1662 = vmul.f32 %v1150, 0.1
      %v1663 = vmul.f32 %v1151, 0.1
      %v1664 = vmul.f32 %v1152, 0.1
      %v1665 = vmul.f32 %v1153, 0.1
      %v1666 = vmul.f32 %v1154, 0.1
      %v1667 = vmul.f32 %v1155, 0.1
      %v1668 = vmul.f32 %v1156, 0.1
      %v1669 = vmul.f32 %v1157, 0.1
      %v1670 = vmul.f32 %v1158, 0.1
      %v1671 = vmul.f32 %v1159, 0.1
      %v1672 = vmul.f32 %v1160, 0.1
      %v1673 = vmul.f32 %v1161, 0.1
      %v1674 = vmul.f32 %v1162, 0.1
      %v1675 = vmul.f32 %v1163, 0.1
      %v1676 = vmul.f32 %v1164, 0.1
      %v1677 = vmul.f32 %v1165, 0.1
      %v1678 = vmul.f32 %v1166, 0.1
      %v1679 = vmul.f32 %v1167, 0.1
      %v1680 = vmul.f32 %v1168, 0.1
      %v1681 = vmul.f32 %v1169, 0.1
      %v1682 = vmul.f32 %v1170, 0.1
      %v1683 = vmul.f32 %v1171, 0.1
      %v1684 = vmul.f32 %v1172, 0.1
      %v1685 = vmul.f32 %v1173, 0.1
      %v1686 = vmul.f32 %v1174, 0.1
      %v1687 = vmul.f32 %v1175, 0.1
      %v1688 = vmul.f32 %v1176, 0.1
      %v1689 = vmul.f32 %v1177, 0.1
      %v1690 = vmul.f32 %v1178, 0.1
      %v1691 = vmul.f32 %v1179, 0.1
      %v1692 = vmul.f32 %v1180, 0.1
      %v1693 = vmul.f32 %v1181, 0.1
      %v1694 = vmul.f32 %v1182, 0.1
      %v1695 = vmul.f32 %v1183, 0.1
      %v1696 = vmul.f32 %v1184, 0.1
      %v1697 = vmul.f32 %v1185, 0.1
      %v1698 = vmul.f32 %v1186, 0.1
      %v1699 = vmul.f32 %v1187, 0.1
      %v1700 = vmul.f32 %v1188, 0.1
      %v1701 = vmul.f32 %v1189, 0.1
      %v1702 = vmul.f32 %v1190, 0.1
      %v1703 = vmul.f32 %v1191, 0.1
      %v1704 = vmul.f32 %v1192, 0.1
      %v1705 = vmul.f32 %v1193, 0.1
      %v1706 = vmul.f32 %v1194, 0.1
      %v1707 = vmul.f32 %v1195, 0.1
      %v1708 = vmul.f32 %v1196, 0.1
      %v1709 = vmul.f32 %v1197, 0.1
      %v1710 = vmul.f32 %v1198, 0.1
      %v1711 = vmul.f32 %v1199, 0.1
      %v1712 = vmul.f32 %v1200, 0.1
      %v1713 = vmul.f32 %v1201, 0.1
      %v1714 = vmul.f32 %v1202, 0.1
      %v1715 = vmul.f32 %v1203, 0.1
      %v1716 = vmul.f32 %v1204, 0.1
      %v1717 = vmul.f32 %v1205, 0.1
      %v1718 = vmul.f32 %v1206, 0.1
      %v1719 = vmul.f32 %v1207, 0.1
      %v1720 = vmul.f32 %v1208, 0.1
      %v1721 = vmul.f32 %v1209, 0.1
      %v1722 = vmul.f32 %v1210, 0.1
      %v1723 = vmul.f32 %v1211, 0.1
      %v1724 = vsel %vm1212, %v956, %v1468
      %v1725 = vsel %vm1213, %v957, %v1469
      %v1726 = vsel %vm1214, %v958, %v1470
      %v1727 = vsel %vm1215, %v959, %v1471
      %v1728 = vsel %vm1216, %v960, %v1472
      %v1729 = vsel %vm1217, %v961, %v1473
      %v1730 = vsel %vm1218, %v962, %v1474
      %v1731 = vsel %vm1219, %v963, %v1475
      %v1732 = vsel %vm1220, %v964, %v1476
      %v1733 = vsel %vm1221, %v965, %v1477
      %v1734 = vsel %vm1222, %v966, %v1478
      %v1735 = vsel %vm1223, %v967, %v1479
      %v1736 = vsel %vm1224, %v968, %v1480
      %v1737 = vsel %vm1225, %v969, %v1481
      %v1738 = vsel %vm1226, %v970, %v1482
      %v1739 = vsel %vm1227, %v971, %v1483
      %v1740 = vsel %vm1228, %v972, %v1484
      %v1741 = vsel %vm1229, %v973, %v1485
      %v1742 = vsel %vm1230, %v974, %v1486
      %v1743 = vsel %vm1231, %v975, %v1487
      %v1744 = vsel %vm1232, %v976, %v1488
      %v1745 = vsel %vm1233, %v977, %v1489
      %v1746 = vsel %vm1234, %v978, %v1490
      %v1747 = vsel %vm1235, %v979, %v1491
      %v1748 = vsel %vm1236, %v980, %v1492
      %v1749 = vsel %vm1237, %v981, %v1493
      %v1750 = vsel %vm1238, %v982, %v1494
      %v1751 = vsel %vm1239, %v983, %v1495
      %v1752 = vsel %vm1240, %v984, %v1496
      %v1753 = vsel %vm1241, %v985, %v1497
      %v1754 = vsel %vm1242, %v986, %v1498
      %v1755 = vsel %vm1243, %v987, %v1499
      %v1756 = vsel %vm1244, %v988, %v1500
      %v1757 = vsel %vm1245, %v989, %v1501
      %v1758 = vsel %vm1246, %v990, %v1502
      %v1759 = vsel %vm1247, %v991, %v1503
      %v1760 = vsel %vm1248, %v992, %v1504
      %v1761 = vsel %vm1249, %v993, %v1505
      %v1762 = vsel %vm1250, %v994, %v1506
      %v1763 = vsel %vm1251, %v995, %v1507
      %v1764 = vsel %vm1252, %v996, %v1508
      %v1765 = vsel %vm1253, %v997, %v1509
      %v1766 = vsel %vm1254, %v998, %v1510
      %v1767 = vsel %vm1255, %v999, %v1511
      %v1768 = vsel %vm1256, %v1000, %v1512
      %v1769 = vsel %vm1257, %v1001, %v1513
      %v1770 = vsel %vm1258, %v1002, %v1514
      %v1771 = vsel %vm1259, %v1003, %v1515
      %v1772 = vsel %vm1260, %v1004, %v1516
      %v1773 = vsel %vm1261, %v1005, %v1517
      %v1774 = vsel %vm1262, %v1006, %v1518
      %v1775 = vsel %vm1263, %v1007, %v1519
      %v1776 = vsel %vm1264, %v1008, %v1520
      %v1777 = vsel %vm1265, %v1009, %v1521
      %v1778 = vsel %vm1266, %v1010, %v1522
      %v1779 = vsel %vm1267, %v1011, %v1523
      %v1780 = vsel %vm1268, %v1012, %v1524
      %v1781 = vsel %vm1269, %v1013, %v1525
      %v1782 = vsel %vm1270, %v1014, %v1526
      %v1783 = vsel %vm1271, %v1015, %v1527
      %v1784 = vsel %vm1272, %v1016, %v1528
      %v1785 = vsel %vm1273, %v1017, %v1529
      %v1786 = vsel %vm1274, %v1018, %v1530
      %v1787 = vsel %vm1275, %v1019, %v1531
      %v1788 = vsel %vm1276, %v1020, %v1532
      %v1789 = vsel %vm1277, %v1021, %v1533
      %v1790 = vsel %vm1278, %v1022, %v1534
      %v1791 = vsel %vm1279, %v1023, %v1535
      %v1792 = vsel %vm1280, %v1024, %v1536
      %v1793 = vsel %vm1281, %v1025, %v1537
      %v1794 = vsel %vm1282, %v1026, %v1538
      %v1795 = vsel %vm1283, %v1027, %v1539
      %v1796 = vsel %vm1284, %v1028, %v1540
      %v1797 = vsel %vm1285, %v1029, %v1541
      %v1798 = vsel %vm1286, %v1030, %v1542
      %v1799 = vsel %vm1287, %v1031, %v1543
      %v1800 = vsel %vm1288, %v1032, %v1544
      %v1801 = vsel %vm1289, %v1033, %v1545
      %v1802 = vsel %vm1290, %v1034, %v1546
      %v1803 = vsel %vm1291, %v1035, %v1547
      %v1804 = vsel %vm1292, %v1036, %v1548
      %v1805 = vsel %vm1293, %v1037, %v1549
      %v1806 = vsel %vm1294, %v1038, %v1550
      %v1807 = vsel %vm1295, %v1039, %v1551
      %v1808 = vsel %vm1296, %v1040, %v1552
      %v1809 = vsel %vm1297, %v1041, %v1553
      %v1810 = vsel %vm1298, %v1042, %v1554
      %v1811 = vsel %vm1299, %v1043, %v1555
      %v1812 = vsel %vm1300, %v1044, %v1556
      %v1813 = vsel %vm1301, %v1045, %v1557
      %v1814 = vsel %vm1302, %v1046, %v1558
      %v1815 = vsel %vm1303, %v1047, %v1559
      %v1816 = vsel %vm1304, %v1048, %v1560
      %v1817 = vsel %vm1305, %v1049, %v1561
      %v1818 = vsel %vm1306, %v1050, %v1562
      %v1819 = vsel %vm1307, %v1051, %v1563
      %v1820 = vsel %vm1308, %v1052, %v1564
      %v1821 = vsel %vm1309, %v1053, %v1565
      %v1822 = vsel %vm1310, %v1054, %v1566
      %v1823 = vsel %vm1311, %v1055, %v1567
      %v1824 = vsel %vm1312, %v1056, %v1568
      %v1825 = vsel %vm1313, %v1057, %v1569
      %v1826 = vsel %vm1314, %v1058, %v1570
      %v1827 = vsel %vm1315, %v1059, %v1571
      %v1828 = vsel %vm1316, %v1060, %v1572
      %v1829 = vsel %vm1317, %v1061, %v1573
      %v1830 = vsel %vm1318, %v1062, %v1574
      %v1831 = vsel %vm1319, %v1063, %v1575
      %v1832 = vsel %vm1320, %v1064, %v1576
      %v1833 = vsel %vm1321, %v1065, %v1577
      %v1834 = vsel %vm1322, %v1066, %v1578
      %v1835 = vsel %vm1323, %v1067, %v1579
      %v1836 = vsel %vm1324, %v1068, %v1580
      %v1837 = vsel %vm1325, %v1069, %v1581
      %v1838 = vsel %vm1326, %v1070, %v1582
      %v1839 = vsel %vm1327, %v1071, %v1583
      %v1840 = vsel %vm1328, %v1072, %v1584
      %v1841 = vsel %vm1329, %v1073, %v1585
      %v1842 = vsel %vm1330, %v1074, %v1586
      %v1843 = vsel %vm1331, %v1075, %v1587
      %v1844 = vsel %vm1332, %v1076, %v1588
      %v1845 = vsel %vm1333, %v1077, %v1589
      %v1846 = vsel %vm1334, %v1078, %v1590
      %v1847 = vsel %vm1335, %v1079, %v1591
      %v1848 = vsel %vm1336, %v1080, %v1592
      %v1849 = vsel %vm1337, %v1081, %v1593
      %v1850 = vsel %vm1338, %v1082, %v1594
      %v1851 = vsel %vm1339, %v1083, %v1595
      %v1852 = vsel %vm1340, %v1084, %v1596
      %v1853 = vsel %vm1341, %v1085, %v1597
      %v1854 = vsel %vm1342, %v1086, %v1598
      %v1855 = vsel %vm1343, %v1087, %v1599
      %v1856 = vsel %vm1344, %v1088, %v1600
      %v1857 = vsel %vm1345, %v1089, %v1601
      %v1858 = vsel %vm1346, %v1090, %v1602
      %v1859 = vsel %vm1347, %v1091, %v1603
      %v1860 = vsel %vm1348, %v1092, %v1604
      %v1861 = vsel %vm1349, %v1093, %v1605
      %v1862 = vsel %vm1350, %v1094, %v1606
      %v1863 = vsel %vm1351, %v1095, %v1607
      %v1864 = vsel %vm1352, %v1096, %v1608
      %v1865 = vsel %vm1353, %v1097, %v1609
      %v1866 = vsel %vm1354, %v1098, %v1610
      %v1867 = vsel %vm1355, %v1099, %v1611
      %v1868 = vsel %vm1356, %v1100, %v1612
      %v1869 = vsel %vm1357, %v1101, %v1613
      %v1870 = vsel %vm1358, %v1102, %v1614
      %v1871 = vsel %vm1359, %v1103, %v1615
      %v1872 = vsel %vm1360, %v1104, %v1616
      %v1873 = vsel %vm1361, %v1105, %v1617
      %v1874 = vsel %vm1362, %v1106, %v1618
      %v1875 = vsel %vm1363, %v1107, %v1619
      %v1876 = vsel %vm1364, %v1108, %v1620
      %v1877 = vsel %vm1365, %v1109, %v1621
      %v1878 = vsel %vm1366, %v1110, %v1622
      %v1879 = vsel %vm1367, %v1111, %v1623
      %v1880 = vsel %vm1368, %v1112, %v1624
      %v1881 = vsel %vm1369, %v1113, %v1625
      %v1882 = vsel %vm1370, %v1114, %v1626
      %v1883 = vsel %vm1371, %v1115, %v1627
      %v1884 = vsel %vm1372, %v1116, %v1628
      %v1885 = vsel %vm1373, %v1117, %v1629
      %v1886 = vsel %vm1374, %v1118, %v1630
      %v1887 = vsel %vm1375, %v1119, %v1631
      %v1888 = vsel %vm1376, %v1120, %v1632
      %v1889 = vsel %vm1377, %v1121, %v1633
      %v1890 = vsel %vm1378, %v1122, %v1634
      %v1891 = vsel %vm1379, %v1123, %v1635
      %v1892 = vsel %vm1380, %v1124, %v1636
      %v1893 = vsel %vm1381, %v1125, %v1637
      %v1894 = vsel %vm1382, %v1126, %v1638
      %v1895 = vsel %vm1383, %v1127, %v1639
      %v1896 = vsel %vm1384, %v1128, %v1640
      %v1897 = vsel %vm1385, %v1129, %v1641
      %v1898 = vsel %vm1386, %v1130, %v1642
      %v1899 = vsel %vm1387, %v1131, %v1643
      %v1900 = vsel %vm1388, %v1132, %v1644
      %v1901 = vsel %vm1389, %v1133, %v1645
      %v1902 = vsel %vm1390, %v1134, %v1646
      %v1903 = vsel %vm1391, %v1135, %v1647
      %v1904 = vsel %vm1392, %v1136, %v1648
      %v1905 = vsel %vm1393, %v1137, %v1649
      %v1906 = vsel %vm1394, %v1138, %v1650
      %v1907 = vsel %vm1395, %v1139, %v1651
      %v1908 = vsel %vm1396, %v1140, %v1652
      %v1909 = vsel %vm1397, %v1141, %v1653
      %v1910 = vsel %vm1398, %v1142, %v1654
      %v1911 = vsel %vm1399, %v1143, %v1655
      %v1912 = vsel %vm1400, %v1144, %v1656
      %v1913 = vsel %vm1401, %v1145, %v1657
      %v1914 = vsel %vm1402, %v1146, %v1658
      %v1915 = vsel %vm1403, %v1147, %v1659
      %v1916 = vsel %vm1404, %v1148, %v1660
      %v1917 = vsel %vm1405, %v1149, %v1661
      %v1918 = vsel %vm1406, %v1150, %v1662
      %v1919 = vsel %vm1407, %v1151, %v1663
      %v1920 = vsel %vm1408, %v1152, %v1664
      %v1921 = vsel %vm1409, %v1153, %v1665
      %v1922 = vsel %vm1410, %v1154, %v1666
      %v1923 = vsel %vm1411, %v1155, %v1667
      %v1924 = vsel %vm1412, %v1156, %v1668
      %v1925 = vsel %vm1413, %v1157, %v1669
      %v1926 = vsel %vm1414, %v1158, %v1670
      %v1927 = vsel %vm1415, %v1159, %v1671
      %v1928 = vsel %vm1416, %v1160, %v1672
      %v1929 = vsel %vm1417, %v1161, %v1673
      %v1930 = vsel %vm1418, %v1162, %v1674
      %v1931 = vsel %vm1419, %v1163, %v1675
      %v1932 = vsel %vm1420, %v1164, %v1676
      %v1933 = vsel %vm1421, %v1165, %v1677
      %v1934 = vsel %vm1422, %v1166, %v1678
      %v1935 = vsel %vm1423, %v1167, %v1679
      %v1936 = vsel %vm1424, %v1168, %v1680
      %v1937 = vsel %vm1425, %v1169, %v1681
      %v1938 = vsel %vm1426, %v1170, %v1682
      %v1939 = vsel %vm1427, %v1171, %v1683
      %v1940 = vsel %vm1428, %v1172, %v1684
      %v1941 = vsel %vm1429, %v1173, %v1685
      %v1942 = vsel %vm1430, %v1174, %v1686
      %v1943 = vsel %vm1431, %v1175, %v1687
      %v1944 = vsel %vm1432, %v1176, %v1688
      %v1945 = vsel %vm1433, %v1177, %v1689
      %v1946 = vsel %vm1434, %v1178, %v1690
      %v1947 = vsel %vm1435, %v1179, %v1691
      %v1948 = vsel %vm1436, %v1180, %v1692
      %v1949 = vsel %vm1437, %v1181, %v1693
      %v1950 = vsel %vm1438, %v1182, %v1694
      %v1951 = vsel %vm1439, %v1183, %v1695
      %v1952 = vsel %vm1440, %v1184, %v1696
      %v1953 = vsel %vm1441, %v1185, %v1697
      %v1954 = vsel %vm1442, %v1186, %v1698
      %v1955 = vsel %vm1443, %v1187, %v1699
      %v1956 = vsel %vm1444, %v1188, %v1700
      %v1957 = vsel %vm1445, %v1189, %v1701
      %v1958 = vsel %vm1446, %v1190, %v1702
      %v1959 = vsel %vm1447, %v1191, %v1703
      %v1960 = vsel %vm1448, %v1192, %v1704
      %v1961 = vsel %vm1449, %v1193, %v1705
      %v1962 = vsel %vm1450, %v1194, %v1706
      %v1963 = vsel %vm1451, %v1195, %v1707
      %v1964 = vsel %vm1452, %v1196, %v1708
      %v1965 = vsel %vm1453, %v1197, %v1709
      %v1966 = vsel %vm1454, %v1198, %v1710
      %v1967 = vsel %vm1455, %v1199, %v1711
      %v1968 = vsel %vm1456, %v1200, %v1712
      %v1969 = vsel %vm1457, %v1201, %v1713
      %v1970 = vsel %vm1458, %v1202, %v1714
      %v1971 = vsel %vm1459, %v1203, %v1715
      %v1972 = vsel %vm1460, %v1204, %v1716
      %v1973 = vsel %vm1461, %v1205, %v1717
      %v1974 = vsel %vm1462, %v1206, %v1718
      %v1975 = vsel %vm1463, %v1207, %v1719
      %v1976 = vsel %vm1464, %v1208, %v1720
      %v1977 = vsel %vm1465, %v1209, %v1721
      %v1978 = vsel %vm1466, %v1210, %v1722
      %v1979 = vsel %vm1467, %v1211, %v1723
      %v1980 = vpack.c.bf16 %v1725, %v1724
      %v1981 = vpack.c.bf16 %v1727, %v1726
      %v1982 = vpack.c.bf16 %v1729, %v1728
      %v1983 = vpack.c.bf16 %v1731, %v1730
      %v1984 = vpack.c.bf16 %v1733, %v1732
      %v1985 = vpack.c.bf16 %v1735, %v1734
      %v1986 = vpack.c.bf16 %v1737, %v1736
      %v1987 = vpack.c.bf16 %v1739, %v1738
      %v1988 = vpack.c.bf16 %v1741, %v1740
      %v1989 = vpack.c.bf16 %v1743, %v1742
      %v1990 = vpack.c.bf16 %v1745, %v1744
      %v1991 = vpack.c.bf16 %v1747, %v1746
      %v1992 = vpack.c.bf16 %v1749, %v1748
      %v1993 = vpack.c.bf16 %v1751, %v1750
      %v1994 = vpack.c.bf16 %v1753, %v1752
      %v1995 = vpack.c.bf16 %v1755, %v1754
      %v1996 = vpack.c.bf16 %v1757, %v1756
      %v1997 = vpack.c.bf16 %v1759, %v1758
      %v1998 = vpack.c.bf16 %v1761, %v1760
      %v1999 = vpack.c.bf16 %v1763, %v1762
      %v2000 = vpack.c.bf16 %v1765, %v1764
      %v2001 = vpack.c.bf16 %v1767, %v1766
      %v2002 = vpack.c.bf16 %v1769, %v1768
      %v2003 = vpack.c.bf16 %v1771, %v1770
      %v2004 = vpack.c.bf16 %v1773, %v1772
      %v2005 = vpack.c.bf16 %v1775, %v1774
      %v2006 = vpack.c.bf16 %v1777, %v1776
      %v2007 = vpack.c.bf16 %v1779, %v1778
      %v2008 = vpack.c.bf16 %v1781, %v1780
      %v2009 = vpack.c.bf16 %v1783, %v1782
      %v2010 = vpack.c.bf16 %v1785, %v1784
      %v2011 = vpack.c.bf16 %v1787, %v1786
      %v2012 = vpack.c.bf16 %v1789, %v1788
      %v2013 = vpack.c.bf16 %v1791, %v1790
      %v2014 = vpack.c.bf16 %v1793, %v1792
      %v2015 = vpack.c.bf16 %v1795, %v1794
      %v2016 = vpack.c.bf16 %v1797, %v1796
      %v2017 = vpack.c.bf16 %v1799, %v1798
      %v2018 = vpack.c.bf16 %v1801, %v1800
      %v2019 = vpack.c.bf16 %v1803, %v1802
      %v2020 = vpack.c.bf16 %v1805, %v1804
      %v2021 = vpack.c.bf16 %v1807, %v1806
      %v2022 = vpack.c.bf16 %v1809, %v1808
      %v2023 = vpack.c.bf16 %v1811, %v1810
      %v2024 = vpack.c.bf16 %v1813, %v1812
      %v2025 = vpack.c.bf16 %v1815, %v1814
      %v2026 = vpack.c.bf16 %v1817, %v1816
      %v2027 = vpack.c.bf16 %v1819, %v1818
      %v2028 = vpack.c.bf16 %v1821, %v1820
      %v2029 = vpack.c.bf16 %v1823, %v1822
      %v2030 = vpack.c.bf16 %v1825, %v1824
      %v2031 = vpack.c.bf16 %v1827, %v1826
      %v2032 = vpack.c.bf16 %v1829, %v1828
      %v2033 = vpack.c.bf16 %v1831, %v1830
      %v2034 = vpack.c.bf16 %v1833, %v1832
      %v2035 = vpack.c.bf16 %v1835, %v1834
      %v2036 = vpack.c.bf16 %v1837, %v1836
      %v2037 = vpack.c.bf16 %v1839, %v1838
      %v2038 = vpack.c.bf16 %v1841, %v1840
      %v2039 = vpack.c.bf16 %v1843, %v1842
      %v2040 = vpack.c.bf16 %v1845, %v1844
      %v2041 = vpack.c.bf16 %v1847, %v1846
      %v2042 = vpack.c.bf16 %v1849, %v1848
      %v2043 = vpack.c.bf16 %v1851, %v1850
      %v2044 = vpack.c.bf16 %v1853, %v1852
      %v2045 = vpack.c.bf16 %v1855, %v1854
      %v2046 = vpack.c.bf16 %v1857, %v1856
      %v2047 = vpack.c.bf16 %v1859, %v1858
      %v2048 = vpack.c.bf16 %v1861, %v1860
      %v2049 = vpack.c.bf16 %v1863, %v1862
      %v2050 = vpack.c.bf16 %v1865, %v1864
      %v2051 = vpack.c.bf16 %v1867, %v1866
      %v2052 = vpack.c.bf16 %v1869, %v1868
      %v2053 = vpack.c.bf16 %v1871, %v1870
      %v2054 = vpack.c.bf16 %v1873, %v1872
      %v2055 = vpack.c.bf16 %v1875, %v1874
      %v2056 = vpack.c.bf16 %v1877, %v1876
      %v2057 = vpack.c.bf16 %v1879, %v1878
      %v2058 = vpack.c.bf16 %v1881, %v1880
      %v2059 = vpack.c.bf16 %v1883, %v1882
      %v2060 = vpack.c.bf16 %v1885, %v1884
      %v2061 = vpack.c.bf16 %v1887, %v1886
      %v2062 = vpack.c.bf16 %v1889, %v1888
      %v2063 = vpack.c.bf16 %v1891, %v1890
      %v2064 = vpack.c.bf16 %v1893, %v1892
      %v2065 = vpack.c.bf16 %v1895, %v1894
      %v2066 = vpack.c.bf16 %v1897, %v1896
      %v2067 = vpack.c.bf16 %v1899, %v1898
      %v2068 = vpack.c.bf16 %v1901, %v1900
      %v2069 = vpack.c.bf16 %v1903, %v1902
      %v2070 = vpack.c.bf16 %v1905, %v1904
      %v2071 = vpack.c.bf16 %v1907, %v1906
      %v2072 = vpack.c.bf16 %v1909, %v1908
      %v2073 = vpack.c.bf16 %v1911, %v1910
      %v2074 = vpack.c.bf16 %v1913, %v1912
      %v2075 = vpack.c.bf16 %v1915, %v1914
      %v2076 = vpack.c.bf16 %v1917, %v1916
      %v2077 = vpack.c.bf16 %v1919, %v1918
      %v2078 = vpack.c.bf16 %v1921, %v1920
      %v2079 = vpack.c.bf16 %v1923, %v1922
      %v2080 = vpack.c.bf16 %v1925, %v1924
      %v2081 = vpack.c.bf16 %v1927, %v1926
      %v2082 = vpack.c.bf16 %v1929, %v1928
      %v2083 = vpack.c.bf16 %v1931, %v1930
      %v2084 = vpack.c.bf16 %v1933, %v1932
      %v2085 = vpack.c.bf16 %v1935, %v1934
      %v2086 = vpack.c.bf16 %v1937, %v1936
      %v2087 = vpack.c.bf16 %v1939, %v1938
      %v2088 = vpack.c.bf16 %v1941, %v1940
      %v2089 = vpack.c.bf16 %v1943, %v1942
      %v2090 = vpack.c.bf16 %v1945, %v1944
      %v2091 = vpack.c.bf16 %v1947, %v1946
      %v2092 = vpack.c.bf16 %v1949, %v1948
      %v2093 = vpack.c.bf16 %v1951, %v1950
      %v2094 = vpack.c.bf16 %v1953, %v1952
      %v2095 = vpack.c.bf16 %v1955, %v1954
      %v2096 = vpack.c.bf16 %v1957, %v1956
      %v2097 = vpack.c.bf16 %v1959, %v1958
      %v2098 = vpack.c.bf16 %v1961, %v1960
      %v2099 = vpack.c.bf16 %v1963, %v1962
      %v2100 = vpack.c.bf16 %v1965, %v1964
      %v2101 = vpack.c.bf16 %v1967, %v1966
      %v2102 = vpack.c.bf16 %v1969, %v1968
      %v2103 = vpack.c.bf16 %v1971, %v1970
      %v2104 = vpack.c.bf16 %v1973, %v1972
      %v2105 = vpack.c.bf16 %v1975, %v1974
      %v2106 = vpack.c.bf16 %v1977, %v1976
      %v2107 = vpack.c.bf16 %v1979, %v1978
      %v2236 = vunpack.c.l.b16 %v1980
      %v2237 = vunpack.c.h.b16 %v1980
      %v2238 = vunpack.c.l.b16 %v1981
      %v2239 = vunpack.c.h.b16 %v1981
      %v2240 = vunpack.c.l.b16 %v1982
      %v2241 = vunpack.c.h.b16 %v1982
      %v2242 = vunpack.c.l.b16 %v1983
      %v2243 = vunpack.c.h.b16 %v1983
      %v2244 = vunpack.c.l.b16 %v1984
      %v2245 = vunpack.c.h.b16 %v1984
      %v2246 = vunpack.c.l.b16 %v1985
      %v2247 = vunpack.c.h.b16 %v1985
      %v2248 = vunpack.c.l.b16 %v1986
      %v2249 = vunpack.c.h.b16 %v1986
      %v2250 = vunpack.c.l.b16 %v1987
      %v2251 = vunpack.c.h.b16 %v1987
      %v2252 = vunpack.c.l.b16 %v1988
      %v2253 = vunpack.c.h.b16 %v1988
      %v2254 = vunpack.c.l.b16 %v1989
      %v2255 = vunpack.c.h.b16 %v1989
      %v2256 = vunpack.c.l.b16 %v1990
      %v2257 = vunpack.c.h.b16 %v1990
      %v2258 = vunpack.c.l.b16 %v1991
      %v2259 = vunpack.c.h.b16 %v1991
      %v2260 = vunpack.c.l.b16 %v1992
      %v2261 = vunpack.c.h.b16 %v1992
      %v2262 = vunpack.c.l.b16 %v1993
      %v2263 = vunpack.c.h.b16 %v1993
      %v2264 = vunpack.c.l.b16 %v1994
      %v2265 = vunpack.c.h.b16 %v1994
      %v2266 = vunpack.c.l.b16 %v1995
      %v2267 = vunpack.c.h.b16 %v1995
      %v2268 = vunpack.c.l.b16 %v1996
      %v2269 = vunpack.c.h.b16 %v1996
      %v2270 = vunpack.c.l.b16 %v1997
      %v2271 = vunpack.c.h.b16 %v1997
      %v2272 = vunpack.c.l.b16 %v1998
      %v2273 = vunpack.c.h.b16 %v1998
      %v2274 = vunpack.c.l.b16 %v1999
      %v2275 = vunpack.c.h.b16 %v1999
      %v2276 = vunpack.c.l.b16 %v2000
      %v2277 = vunpack.c.h.b16 %v2000
      %v2278 = vunpack.c.l.b16 %v2001
      %v2279 = vunpack.c.h.b16 %v2001
      %v2280 = vunpack.c.l.b16 %v2002
      %v2281 = vunpack.c.h.b16 %v2002
      %v2282 = vunpack.c.l.b16 %v2003
      %v2283 = vunpack.c.h.b16 %v2003
      %v2284 = vunpack.c.l.b16 %v2004
      %v2285 = vunpack.c.h.b16 %v2004
      %v2286 = vunpack.c.l.b16 %v2005
      %v2287 = vunpack.c.h.b16 %v2005
      %v2288 = vunpack.c.l.b16 %v2006
      %v2289 = vunpack.c.h.b16 %v2006
      %v2290 = vunpack.c.l.b16 %v2007
      %v2291 = vunpack.c.h.b16 %v2007
      %v2292 = vunpack.c.l.b16 %v2008
      %v2293 = vunpack.c.h.b16 %v2008
      %v2294 = vunpack.c.l.b16 %v2009
      %v2295 = vunpack.c.h.b16 %v2009
      %v2296 = vunpack.c.l.b16 %v2010
      %v2297 = vunpack.c.h.b16 %v2010
      %v2298 = vunpack.c.l.b16 %v2011
      %v2299 = vunpack.c.h.b16 %v2011
      %v2300 = vunpack.c.l.b16 %v2012
      %v2301 = vunpack.c.h.b16 %v2012
      %v2302 = vunpack.c.l.b16 %v2013
      %v2303 = vunpack.c.h.b16 %v2013
      %v2304 = vunpack.c.l.b16 %v2014
      %v2305 = vunpack.c.h.b16 %v2014
      %v2306 = vunpack.c.l.b16 %v2015
      %v2307 = vunpack.c.h.b16 %v2015
      %v2308 = vunpack.c.l.b16 %v2016
      %v2309 = vunpack.c.h.b16 %v2016
      %v2310 = vunpack.c.l.b16 %v2017
      %v2311 = vunpack.c.h.b16 %v2017
      %v2312 = vunpack.c.l.b16 %v2018
      %v2313 = vunpack.c.h.b16 %v2018
      %v2314 = vunpack.c.l.b16 %v2019
      %v2315 = vunpack.c.h.b16 %v2019
      %v2316 = vunpack.c.l.b16 %v2020
      %v2317 = vunpack.c.h.b16 %v2020
      %v2318 = vunpack.c.l.b16 %v2021
      %v2319 = vunpack.c.h.b16 %v2021
      %v2320 = vunpack.c.l.b16 %v2022
      %v2321 = vunpack.c.h.b16 %v2022
      %v2322 = vunpack.c.l.b16 %v2023
      %v2323 = vunpack.c.h.b16 %v2023
      %v2324 = vunpack.c.l.b16 %v2024
      %v2325 = vunpack.c.h.b16 %v2024
      %v2326 = vunpack.c.l.b16 %v2025
      %v2327 = vunpack.c.h.b16 %v2025
      %v2328 = vunpack.c.l.b16 %v2026
      %v2329 = vunpack.c.h.b16 %v2026
      %v2330 = vunpack.c.l.b16 %v2027
      %v2331 = vunpack.c.h.b16 %v2027
      %v2332 = vunpack.c.l.b16 %v2028
      %v2333 = vunpack.c.h.b16 %v2028
      %v2334 = vunpack.c.l.b16 %v2029
      %v2335 = vunpack.c.h.b16 %v2029
      %v2336 = vunpack.c.l.b16 %v2030
      %v2337 = vunpack.c.h.b16 %v2030
      %v2338 = vunpack.c.l.b16 %v2031
      %v2339 = vunpack.c.h.b16 %v2031
      %v2340 = vunpack.c.l.b16 %v2032
      %v2341 = vunpack.c.h.b16 %v2032
      %v2342 = vunpack.c.l.b16 %v2033
      %v2343 = vunpack.c.h.b16 %v2033
      %v2344 = vunpack.c.l.b16 %v2034
      %v2345 = vunpack.c.h.b16 %v2034
      %v2346 = vunpack.c.l.b16 %v2035
      %v2347 = vunpack.c.h.b16 %v2035
      %v2348 = vunpack.c.l.b16 %v2036
      %v2349 = vunpack.c.h.b16 %v2036
      %v2350 = vunpack.c.l.b16 %v2037
      %v2351 = vunpack.c.h.b16 %v2037
      %v2352 = vunpack.c.l.b16 %v2038
      %v2353 = vunpack.c.h.b16 %v2038
      %v2354 = vunpack.c.l.b16 %v2039
      %v2355 = vunpack.c.h.b16 %v2039
      %v2356 = vunpack.c.l.b16 %v2040
      %v2357 = vunpack.c.h.b16 %v2040
      %v2358 = vunpack.c.l.b16 %v2041
      %v2359 = vunpack.c.h.b16 %v2041
      %v2360 = vunpack.c.l.b16 %v2042
      %v2361 = vunpack.c.h.b16 %v2042
      %v2362 = vunpack.c.l.b16 %v2043
      %v2363 = vunpack.c.h.b16 %v2043
      %v2364 = vunpack.c.l.b16 %v2044
      %v2365 = vunpack.c.h.b16 %v2044
      %v2366 = vunpack.c.l.b16 %v2045
      %v2367 = vunpack.c.h.b16 %v2045
      %v2368 = vunpack.c.l.b16 %v2046
      %v2369 = vunpack.c.h.b16 %v2046
      %v2370 = vunpack.c.l.b16 %v2047
      %v2371 = vunpack.c.h.b16 %v2047
      %v2372 = vunpack.c.l.b16 %v2048
      %v2373 = vunpack.c.h.b16 %v2048
      %v2374 = vunpack.c.l.b16 %v2049
      %v2375 = vunpack.c.h.b16 %v2049
      %v2376 = vunpack.c.l.b16 %v2050
      %v2377 = vunpack.c.h.b16 %v2050
      %v2378 = vunpack.c.l.b16 %v2051
      %v2379 = vunpack.c.h.b16 %v2051
      %v2380 = vunpack.c.l.b16 %v2052
      %v2381 = vunpack.c.h.b16 %v2052
      %v2382 = vunpack.c.l.b16 %v2053
      %v2383 = vunpack.c.h.b16 %v2053
      %v2384 = vunpack.c.l.b16 %v2054
      %v2385 = vunpack.c.h.b16 %v2054
      %v2386 = vunpack.c.l.b16 %v2055
      %v2387 = vunpack.c.h.b16 %v2055
      %v2388 = vunpack.c.l.b16 %v2056
      %v2389 = vunpack.c.h.b16 %v2056
      %v2390 = vunpack.c.l.b16 %v2057
      %v2391 = vunpack.c.h.b16 %v2057
      %v2392 = vunpack.c.l.b16 %v2058
      %v2393 = vunpack.c.h.b16 %v2058
      %v2394 = vunpack.c.l.b16 %v2059
      %v2395 = vunpack.c.h.b16 %v2059
      %v2396 = vunpack.c.l.b16 %v2060
      %v2397 = vunpack.c.h.b16 %v2060
      %v2398 = vunpack.c.l.b16 %v2061
      %v2399 = vunpack.c.h.b16 %v2061
      %v2400 = vunpack.c.l.b16 %v2062
      %v2401 = vunpack.c.h.b16 %v2062
      %v2402 = vunpack.c.l.b16 %v2063
      %v2403 = vunpack.c.h.b16 %v2063
      %v2404 = vunpack.c.l.b16 %v2064
      %v2405 = vunpack.c.h.b16 %v2064
      %v2406 = vunpack.c.l.b16 %v2065
      %v2407 = vunpack.c.h.b16 %v2065
      %v2408 = vunpack.c.l.b16 %v2066
      %v2409 = vunpack.c.h.b16 %v2066
      %v2410 = vunpack.c.l.b16 %v2067
      %v2411 = vunpack.c.h.b16 %v2067
      %v2412 = vunpack.c.l.b16 %v2068
      %v2413 = vunpack.c.h.b16 %v2068
      %v2414 = vunpack.c.l.b16 %v2069
      %v2415 = vunpack.c.h.b16 %v2069
      %v2416 = vunpack.c.l.b16 %v2070
      %v2417 = vunpack.c.h.b16 %v2070
      %v2418 = vunpack.c.l.b16 %v2071
      %v2419 = vunpack.c.h.b16 %v2071
      %v2420 = vunpack.c.l.b16 %v2072
      %v2421 = vunpack.c.h.b16 %v2072
      %v2422 = vunpack.c.l.b16 %v2073
      %v2423 = vunpack.c.h.b16 %v2073
      %v2424 = vunpack.c.l.b16 %v2074
      %v2425 = vunpack.c.h.b16 %v2074
      %v2426 = vunpack.c.l.b16 %v2075
      %v2427 = vunpack.c.h.b16 %v2075
      %v2428 = vunpack.c.l.b16 %v2076
      %v2429 = vunpack.c.h.b16 %v2076
      %v2430 = vunpack.c.l.b16 %v2077
      %v2431 = vunpack.c.h.b16 %v2077
      %v2432 = vunpack.c.l.b16 %v2078
      %v2433 = vunpack.c.h.b16 %v2078
      %v2434 = vunpack.c.l.b16 %v2079
      %v2435 = vunpack.c.h.b16 %v2079
      %v2436 = vunpack.c.l.b16 %v2080
      %v2437 = vunpack.c.h.b16 %v2080
      %v2438 = vunpack.c.l.b16 %v2081
      %v2439 = vunpack.c.h.b16 %v2081
      %v2440 = vunpack.c.l.b16 %v2082
      %v2441 = vunpack.c.h.b16 %v2082
      %v2442 = vunpack.c.l.b16 %v2083
      %v2443 = vunpack.c.h.b16 %v2083
      %v2444 = vunpack.c.l.b16 %v2084
      %v2445 = vunpack.c.h.b16 %v2084
      %v2446 = vunpack.c.l.b16 %v2085
      %v2447 = vunpack.c.h.b16 %v2085
      %v2448 = vunpack.c.l.b16 %v2086
      %v2449 = vunpack.c.h.b16 %v2086
      %v2450 = vunpack.c.l.b16 %v2087
      %v2451 = vunpack.c.h.b16 %v2087
      %v2452 = vunpack.c.l.b16 %v2088
      %v2453 = vunpack.c.h.b16 %v2088
      %v2454 = vunpack.c.l.b16 %v2089
      %v2455 = vunpack.c.h.b16 %v2089
      %v2456 = vunpack.c.l.b16 %v2090
      %v2457 = vunpack.c.h.b16 %v2090
      %v2458 = vunpack.c.l.b16 %v2091
      %v2459 = vunpack.c.h.b16 %v2091
      %v2460 = vunpack.c.l.b16 %v2092
      %v2461 = vunpack.c.h.b16 %v2092
      %v2462 = vunpack.c.l.b16 %v2093
      %v2463 = vunpack.c.h.b16 %v2093
      %v2464 = vunpack.c.l.b16 %v2094
      %v2465 = vunpack.c.h.b16 %v2094
      %v2466 = vunpack.c.l.b16 %v2095
      %v2467 = vunpack.c.h.b16 %v2095
      %v2468 = vunpack.c.l.b16 %v2096
      %v2469 = vunpack.c.h.b16 %v2096
      %v2470 = vunpack.c.l.b16 %v2097
      %v2471 = vunpack.c.h.b16 %v2097
      %v2472 = vunpack.c.l.b16 %v2098
      %v2473 = vunpack.c.h.b16 %v2098
      %v2474 = vunpack.c.l.b16 %v2099
      %v2475 = vunpack.c.h.b16 %v2099
      %v2476 = vunpack.c.l.b16 %v2100
      %v2477 = vunpack.c.h.b16 %v2100
      %v2478 = vunpack.c.l.b16 %v2101
      %v2479 = vunpack.c.h.b16 %v2101
      %v2480 = vunpack.c.l.b16 %v2102
      %v2481 = vunpack.c.h.b16 %v2102
      %v2482 = vunpack.c.l.b16 %v2103
      %v2483 = vunpack.c.h.b16 %v2103
      %v2484 = vunpack.c.l.b16 %v2104
      %v2485 = vunpack.c.h.b16 %v2104
      %v2486 = vunpack.c.l.b16 %v2105
      %v2487 = vunpack.c.h.b16 %v2105
      %v2488 = vunpack.c.l.b16 %v2106
      %v2489 = vunpack.c.h.b16 %v2106
      %v2490 = vunpack.c.l.b16 %v2107
      %v2491 = vunpack.c.h.b16 %v2107
      %v2492 = vpack.c.b16 %v2236, %v2236
      %v2493 = vpack.c.b16 %v2237, %v2237
      %v2494 = vpack.c.b16 %v2238, %v2238
      %v2495 = vpack.c.b16 %v2239, %v2239
      %v2496 = vpack.c.b16 %v2240, %v2240
      %v2497 = vpack.c.b16 %v2241, %v2241
      %v2498 = vpack.c.b16 %v2242, %v2242
      %v2499 = vpack.c.b16 %v2243, %v2243
      %v2500 = vpack.c.b16 %v2244, %v2244
      %v2501 = vpack.c.b16 %v2245, %v2245
      %v2502 = vpack.c.b16 %v2246, %v2246
      %v2503 = vpack.c.b16 %v2247, %v2247
      %v2504 = vpack.c.b16 %v2248, %v2248
      %v2505 = vpack.c.b16 %v2249, %v2249
      %v2506 = vpack.c.b16 %v2250, %v2250
      %v2507 = vpack.c.b16 %v2251, %v2251
      %v2508 = vpack.c.b16 %v2252, %v2252
      %v2509 = vpack.c.b16 %v2253, %v2253
      %v2510 = vpack.c.b16 %v2254, %v2254
      %v2511 = vpack.c.b16 %v2255, %v2255
      %v2512 = vpack.c.b16 %v2256, %v2256
      %v2513 = vpack.c.b16 %v2257, %v2257
      %v2514 = vpack.c.b16 %v2258, %v2258
      %v2515 = vpack.c.b16 %v2259, %v2259
      %v2516 = vpack.c.b16 %v2260, %v2260
      %v2517 = vpack.c.b16 %v2261, %v2261
      %v2518 = vpack.c.b16 %v2262, %v2262
      %v2519 = vpack.c.b16 %v2263, %v2263
      %v2520 = vpack.c.b16 %v2264, %v2264
      %v2521 = vpack.c.b16 %v2265, %v2265
      %v2522 = vpack.c.b16 %v2266, %v2266
      %v2523 = vpack.c.b16 %v2267, %v2267
      %v2524 = vpack.c.b16 %v2268, %v2268
      %v2525 = vpack.c.b16 %v2269, %v2269
      %v2526 = vpack.c.b16 %v2270, %v2270
      %v2527 = vpack.c.b16 %v2271, %v2271
      %v2528 = vpack.c.b16 %v2272, %v2272
      %v2529 = vpack.c.b16 %v2273, %v2273
      %v2530 = vpack.c.b16 %v2274, %v2274
      %v2531 = vpack.c.b16 %v2275, %v2275
      %v2532 = vpack.c.b16 %v2276, %v2276
      %v2533 = vpack.c.b16 %v2277, %v2277
      %v2534 = vpack.c.b16 %v2278, %v2278
      %v2535 = vpack.c.b16 %v2279, %v2279
      %v2536 = vpack.c.b16 %v2280, %v2280
      %v2537 = vpack.c.b16 %v2281, %v2281
      %v2538 = vpack.c.b16 %v2282, %v2282
      %v2539 = vpack.c.b16 %v2283, %v2283
      %v2540 = vpack.c.b16 %v2284, %v2284
      %v2541 = vpack.c.b16 %v2285, %v2285
      %v2542 = vpack.c.b16 %v2286, %v2286
      %v2543 = vpack.c.b16 %v2287, %v2287
      %v2544 = vpack.c.b16 %v2288, %v2288
      %v2545 = vpack.c.b16 %v2289, %v2289
      %v2546 = vpack.c.b16 %v2290, %v2290
      %v2547 = vpack.c.b16 %v2291, %v2291
      %v2548 = vpack.c.b16 %v2292, %v2292
      %v2549 = vpack.c.b16 %v2293, %v2293
      %v2550 = vpack.c.b16 %v2294, %v2294
      %v2551 = vpack.c.b16 %v2295, %v2295
      %v2552 = vpack.c.b16 %v2296, %v2296
      %v2553 = vpack.c.b16 %v2297, %v2297
      %v2554 = vpack.c.b16 %v2298, %v2298
      %v2555 = vpack.c.b16 %v2299, %v2299
      %v2556 = vpack.c.b16 %v2300, %v2300
      %v2557 = vpack.c.b16 %v2301, %v2301
      %v2558 = vpack.c.b16 %v2302, %v2302
      %v2559 = vpack.c.b16 %v2303, %v2303
      %v2560 = vpack.c.b16 %v2304, %v2304
      %v2561 = vpack.c.b16 %v2305, %v2305
      %v2562 = vpack.c.b16 %v2306, %v2306
      %v2563 = vpack.c.b16 %v2307, %v2307
      %v2564 = vpack.c.b16 %v2308, %v2308
      %v2565 = vpack.c.b16 %v2309, %v2309
      %v2566 = vpack.c.b16 %v2310, %v2310
      %v2567 = vpack.c.b16 %v2311, %v2311
      %v2568 = vpack.c.b16 %v2312, %v2312
      %v2569 = vpack.c.b16 %v2313, %v2313
      %v2570 = vpack.c.b16 %v2314, %v2314
      %v2571 = vpack.c.b16 %v2315, %v2315
      %v2572 = vpack.c.b16 %v2316, %v2316
      %v2573 = vpack.c.b16 %v2317, %v2317
      %v2574 = vpack.c.b16 %v2318, %v2318
      %v2575 = vpack.c.b16 %v2319, %v2319
      %v2576 = vpack.c.b16 %v2320, %v2320
      %v2577 = vpack.c.b16 %v2321, %v2321
      %v2578 = vpack.c.b16 %v2322, %v2322
      %v2579 = vpack.c.b16 %v2323, %v2323
      %v2580 = vpack.c.b16 %v2324, %v2324
      %v2581 = vpack.c.b16 %v2325, %v2325
      %v2582 = vpack.c.b16 %v2326, %v2326
      %v2583 = vpack.c.b16 %v2327, %v2327
      %v2584 = vpack.c.b16 %v2328, %v2328
      %v2585 = vpack.c.b16 %v2329, %v2329
      %v2586 = vpack.c.b16 %v2330, %v2330
      %v2587 = vpack.c.b16 %v2331, %v2331
      %v2588 = vpack.c.b16 %v2332, %v2332
      %v2589 = vpack.c.b16 %v2333, %v2333
      %v2590 = vpack.c.b16 %v2334, %v2334
      %v2591 = vpack.c.b16 %v2335, %v2335
      %v2592 = vpack.c.b16 %v2336, %v2336
      %v2593 = vpack.c.b16 %v2337, %v2337
      %v2594 = vpack.c.b16 %v2338, %v2338
      %v2595 = vpack.c.b16 %v2339, %v2339
      %v2596 = vpack.c.b16 %v2340, %v2340
      %v2597 = vpack.c.b16 %v2341, %v2341
      %v2598 = vpack.c.b16 %v2342, %v2342
      %v2599 = vpack.c.b16 %v2343, %v2343
      %v2600 = vpack.c.b16 %v2344, %v2344
      %v2601 = vpack.c.b16 %v2345, %v2345
      %v2602 = vpack.c.b16 %v2346, %v2346
      %v2603 = vpack.c.b16 %v2347, %v2347
      %v2604 = vpack.c.b16 %v2348, %v2348
      %v2605 = vpack.c.b16 %v2349, %v2349
      %v2606 = vpack.c.b16 %v2350, %v2350
      %v2607 = vpack.c.b16 %v2351, %v2351
      %v2608 = vpack.c.b16 %v2352, %v2352
      %v2609 = vpack.c.b16 %v2353, %v2353
      %v2610 = vpack.c.b16 %v2354, %v2354
      %v2611 = vpack.c.b16 %v2355, %v2355
      %v2612 = vpack.c.b16 %v2356, %v2356
      %v2613 = vpack.c.b16 %v2357, %v2357
      %v2614 = vpack.c.b16 %v2358, %v2358
      %v2615 = vpack.c.b16 %v2359, %v2359
      %v2616 = vpack.c.b16 %v2360, %v2360
      %v2617 = vpack.c.b16 %v2361, %v2361
      %v2618 = vpack.c.b16 %v2362, %v2362
      %v2619 = vpack.c.b16 %v2363, %v2363
      %v2620 = vpack.c.b16 %v2364, %v2364
      %v2621 = vpack.c.b16 %v2365, %v2365
      %v2622 = vpack.c.b16 %v2366, %v2366
      %v2623 = vpack.c.b16 %v2367, %v2367
      %v2624 = vpack.c.b16 %v2368, %v2368
      %v2625 = vpack.c.b16 %v2369, %v2369
      %v2626 = vpack.c.b16 %v2370, %v2370
      %v2627 = vpack.c.b16 %v2371, %v2371
      %v2628 = vpack.c.b16 %v2372, %v2372
      %v2629 = vpack.c.b16 %v2373, %v2373
      %v2630 = vpack.c.b16 %v2374, %v2374
      %v2631 = vpack.c.b16 %v2375, %v2375
      %v2632 = vpack.c.b16 %v2376, %v2376
      %v2633 = vpack.c.b16 %v2377, %v2377
      %v2634 = vpack.c.b16 %v2378, %v2378
      %v2635 = vpack.c.b16 %v2379, %v2379
      %v2636 = vpack.c.b16 %v2380, %v2380
      %v2637 = vpack.c.b16 %v2381, %v2381
      %v2638 = vpack.c.b16 %v2382, %v2382
      %v2639 = vpack.c.b16 %v2383, %v2383
      %v2640 = vpack.c.b16 %v2384, %v2384
      %v2641 = vpack.c.b16 %v2385, %v2385
      %v2642 = vpack.c.b16 %v2386, %v2386
      %v2643 = vpack.c.b16 %v2387, %v2387
      %v2644 = vpack.c.b16 %v2388, %v2388
      %v2645 = vpack.c.b16 %v2389, %v2389
      %v2646 = vpack.c.b16 %v2390, %v2390
      %v2647 = vpack.c.b16 %v2391, %v2391
      %v2648 = vpack.c.b16 %v2392, %v2392
      %v2649 = vpack.c.b16 %v2393, %v2393
      %v2650 = vpack.c.b16 %v2394, %v2394
      %v2651 = vpack.c.b16 %v2395, %v2395
      %v2652 = vpack.c.b16 %v2396, %v2396
      %v2653 = vpack.c.b16 %v2397, %v2397
      %v2654 = vpack.c.b16 %v2398, %v2398
      %v2655 = vpack.c.b16 %v2399, %v2399
      %v2656 = vpack.c.b16 %v2400, %v2400
      %v2657 = vpack.c.b16 %v2401, %v2401
      %v2658 = vpack.c.b16 %v2402, %v2402
      %v2659 = vpack.c.b16 %v2403, %v2403
      %v2660 = vpack.c.b16 %v2404, %v2404
      %v2661 = vpack.c.b16 %v2405, %v2405
      %v2662 = vpack.c.b16 %v2406, %v2406
      %v2663 = vpack.c.b16 %v2407, %v2407
      %v2664 = vpack.c.b16 %v2408, %v2408
      %v2665 = vpack.c.b16 %v2409, %v2409
      %v2666 = vpack.c.b16 %v2410, %v2410
      %v2667 = vpack.c.b16 %v2411, %v2411
      %v2668 = vpack.c.b16 %v2412, %v2412
      %v2669 = vpack.c.b16 %v2413, %v2413
      %v2670 = vpack.c.b16 %v2414, %v2414
      %v2671 = vpack.c.b16 %v2415, %v2415
      %v2672 = vpack.c.b16 %v2416, %v2416
      %v2673 = vpack.c.b16 %v2417, %v2417
      %v2674 = vpack.c.b16 %v2418, %v2418
      %v2675 = vpack.c.b16 %v2419, %v2419
      %v2676 = vpack.c.b16 %v2420, %v2420
      %v2677 = vpack.c.b16 %v2421, %v2421
      %v2678 = vpack.c.b16 %v2422, %v2422
      %v2679 = vpack.c.b16 %v2423, %v2423
      %v2680 = vpack.c.b16 %v2424, %v2424
      %v2681 = vpack.c.b16 %v2425, %v2425
      %v2682 = vpack.c.b16 %v2426, %v2426
      %v2683 = vpack.c.b16 %v2427, %v2427
      %v2684 = vpack.c.b16 %v2428, %v2428
      %v2685 = vpack.c.b16 %v2429, %v2429
      %v2686 = vpack.c.b16 %v2430, %v2430
      %v2687 = vpack.c.b16 %v2431, %v2431
      %v2688 = vpack.c.b16 %v2432, %v2432
      %v2689 = vpack.c.b16 %v2433, %v2433
      %v2690 = vpack.c.b16 %v2434, %v2434
      %v2691 = vpack.c.b16 %v2435, %v2435
      %v2692 = vpack.c.b16 %v2436, %v2436
      %v2693 = vpack.c.b16 %v2437, %v2437
      %v2694 = vpack.c.b16 %v2438, %v2438
      %v2695 = vpack.c.b16 %v2439, %v2439
      %v2696 = vpack.c.b16 %v2440, %v2440
      %v2697 = vpack.c.b16 %v2441, %v2441
      %v2698 = vpack.c.b16 %v2442, %v2442
      %v2699 = vpack.c.b16 %v2443, %v2443
      %v2700 = vpack.c.b16 %v2444, %v2444
      %v2701 = vpack.c.b16 %v2445, %v2445
      %v2702 = vpack.c.b16 %v2446, %v2446
      %v2703 = vpack.c.b16 %v2447, %v2447
      %v2704 = vpack.c.b16 %v2448, %v2448
      %v2705 = vpack.c.b16 %v2449, %v2449
      %v2706 = vpack.c.b16 %v2450, %v2450
      %v2707 = vpack.c.b16 %v2451, %v2451
      %v2708 = vpack.c.b16 %v2452, %v2452
      %v2709 = vpack.c.b16 %v2453, %v2453
      %v2710 = vpack.c.b16 %v2454, %v2454
      %v2711 = vpack.c.b16 %v2455, %v2455
      %v2712 = vpack.c.b16 %v2456, %v2456
      %v2713 = vpack.c.b16 %v2457, %v2457
      %v2714 = vpack.c.b16 %v2458, %v2458
      %v2715 = vpack.c.b16 %v2459, %v2459
      %v2716 = vpack.c.b16 %v2460, %v2460
      %v2717 = vpack.c.b16 %v2461, %v2461
      %v2718 = vpack.c.b16 %v2462, %v2462
      %v2719 = vpack.c.b16 %v2463, %v2463
      %v2720 = vpack.c.b16 %v2464, %v2464
      %v2721 = vpack.c.b16 %v2465, %v2465
      %v2722 = vpack.c.b16 %v2466, %v2466
      %v2723 = vpack.c.b16 %v2467, %v2467
      %v2724 = vpack.c.b16 %v2468, %v2468
      %v2725 = vpack.c.b16 %v2469, %v2469
      %v2726 = vpack.c.b16 %v2470, %v2470
      %v2727 = vpack.c.b16 %v2471, %v2471
      %v2728 = vpack.c.b16 %v2472, %v2472
      %v2729 = vpack.c.b16 %v2473, %v2473
      %v2730 = vpack.c.b16 %v2474, %v2474
      %v2731 = vpack.c.b16 %v2475, %v2475
      %v2732 = vpack.c.b16 %v2476, %v2476
      %v2733 = vpack.c.b16 %v2477, %v2477
      %v2734 = vpack.c.b16 %v2478, %v2478
      %v2735 = vpack.c.b16 %v2479, %v2479
      %v2736 = vpack.c.b16 %v2480, %v2480
      %v2737 = vpack.c.b16 %v2481, %v2481
      %v2738 = vpack.c.b16 %v2482, %v2482
      %v2739 = vpack.c.b16 %v2483, %v2483
      %v2740 = vpack.c.b16 %v2484, %v2484
      %v2741 = vpack.c.b16 %v2485, %v2485
      %v2742 = vpack.c.b16 %v2486, %v2486
      %v2743 = vpack.c.b16 %v2487, %v2487
      %v2744 = vpack.c.b16 %v2488, %v2488
      %v2745 = vpack.c.b16 %v2489, %v2489
      %v2746 = vpack.c.b16 %v2490, %v2490
      %v2747 = vpack.c.b16 %v2491, %v2491
      %vm3004 = vcmask 60416
      %3005 = vst.msk [vmem:[%s172] sm:$0xf] %vm3004, %v2492
      %3006 = vst.msk [vmem:[%s172 + $0x4] sm:$0xf] %vm3004, %v2493
      %3007 = vst.msk [vmem:[%s172 + $0x8] sm:$0xf] %vm3004, %v2494
      %3008 = vst.msk [vmem:[%s172 + $0xc] sm:$0xf] %vm3004, %v2495
      %3009 = vst.msk [vmem:[%s172 + $0x10] sm:$0xf] %vm3004, %v2496
      %3010 = vst.msk [vmem:[%s172 + $0x14] sm:$0xf] %vm3004, %v2497
      %3011 = vst.msk [vmem:[%s172 + $0x18] sm:$0xf] %vm3004, %v2498
      %3012 = vst.msk [vmem:[%s172 + $0x1c] sm:$0xf] %vm3004, %v2499
      %3013 = vst.msk [vmem:[%s172 + $0x20] sm:$0xf] %vm3004, %v2500
      %3014 = vst.msk [vmem:[%s172 + $0x24] sm:$0xf] %vm3004, %v2501
      %3015 = vst.msk [vmem:[%s172 + $0x28] sm:$0xf] %vm3004, %v2502
      %3016 = vst.msk [vmem:[%s172 + $0x2c] sm:$0xf] %vm3004, %v2503
      %3017 = vst.msk [vmem:[%s172 + $0x30] sm:$0xf] %vm3004, %v2504
      %3018 = vst.msk [vmem:[%s172 + $0x34] sm:$0xf] %vm3004, %v2505
      %3019 = vst.msk [vmem:[%s172 + $0x38] sm:$0xf] %vm3004, %v2506
      %3020 = vst.msk [vmem:[%s172 + $0x3c] sm:$0xf] %vm3004, %v2507
      %3021 = vst.msk [vmem:[%s172 + $0x40] sm:$0xf] %vm3004, %v2508
      %3022 = vst.msk [vmem:[%s172 + $0x44] sm:$0xf] %vm3004, %v2509
      %3023 = vst.msk [vmem:[%s172 + $0x48] sm:$0xf] %vm3004, %v2510
      %3024 = vst.msk [vmem:[%s172 + $0x4c] sm:$0xf] %vm3004, %v2511
      %3025 = vst.msk [vmem:[%s172 + $0x50] sm:$0xf] %vm3004, %v2512
      %3026 = vst.msk [vmem:[%s172 + $0x54] sm:$0xf] %vm3004, %v2513
      %3027 = vst.msk [vmem:[%s172 + $0x58] sm:$0xf] %vm3004, %v2514
      %3028 = vst.msk [vmem:[%s172 + $0x5c] sm:$0xf] %vm3004, %v2515
      %3029 = vst.msk [vmem:[%s172 + $0x60] sm:$0xf] %vm3004, %v2516
      %3030 = vst.msk [vmem:[%s172 + $0x64] sm:$0xf] %vm3004, %v2517
      %3031 = vst.msk [vmem:[%s172 + $0x68] sm:$0xf] %vm3004, %v2518
      %3032 = vst.msk [vmem:[%s172 + $0x6c] sm:$0xf] %vm3004, %v2519
      %3033 = vst.msk [vmem:[%s172 + $0x70] sm:$0xf] %vm3004, %v2520
      %3034 = vst.msk [vmem:[%s172 + $0x74] sm:$0xf] %vm3004, %v2521
      %3035 = vst.msk [vmem:[%s172 + $0x78] sm:$0xf] %vm3004, %v2522
      %3036 = vst.msk [vmem:[%s172 + $0x7c] sm:$0xf] %vm3004, %v2523
      %3037 = vst.msk [vmem:[%s172 + $0x80] sm:$0xf] %vm3004, %v2524
      %3038 = vst.msk [vmem:[%s172 + $0x84] sm:$0xf] %vm3004, %v2525
      %3039 = vst.msk [vmem:[%s172 + $0x88] sm:$0xf] %vm3004, %v2526
      %3040 = vst.msk [vmem:[%s172 + $0x8c] sm:$0xf] %vm3004, %v2527
      %3041 = vst.msk [vmem:[%s172 + $0x90] sm:$0xf] %vm3004, %v2528
      %3042 = vst.msk [vmem:[%s172 + $0x94] sm:$0xf] %vm3004, %v2529
      %3043 = vst.msk [vmem:[%s172 + $0x98] sm:$0xf] %vm3004, %v2530
      %3044 = vst.msk [vmem:[%s172 + $0x9c] sm:$0xf] %vm3004, %v2531
      %3045 = vst.msk [vmem:[%s172 + $0xa0] sm:$0xf] %vm3004, %v2532
      %3046 = vst.msk [vmem:[%s172 + $0xa4] sm:$0xf] %vm3004, %v2533
      %3047 = vst.msk [vmem:[%s172 + $0xa8] sm:$0xf] %vm3004, %v2534
      %3048 = vst.msk [vmem:[%s172 + $0xac] sm:$0xf] %vm3004, %v2535
      %3049 = vst.msk [vmem:[%s172 + $0xb0] sm:$0xf] %vm3004, %v2536
      %3050 = vst.msk [vmem:[%s172 + $0xb4] sm:$0xf] %vm3004, %v2537
      %3051 = vst.msk [vmem:[%s172 + $0xb8] sm:$0xf] %vm3004, %v2538
      %3052 = vst.msk [vmem:[%s172 + $0xbc] sm:$0xf] %vm3004, %v2539
      %3053 = vst.msk [vmem:[%s172 + $0xc0] sm:$0xf] %vm3004, %v2540
      %3054 = vst.msk [vmem:[%s172 + $0xc4] sm:$0xf] %vm3004, %v2541
      %3055 = vst.msk [vmem:[%s172 + $0xc8] sm:$0xf] %vm3004, %v2542
      %3056 = vst.msk [vmem:[%s172 + $0xcc] sm:$0xf] %vm3004, %v2543
      %3057 = vst.msk [vmem:[%s172 + $0xd0] sm:$0xf] %vm3004, %v2544
      %3058 = vst.msk [vmem:[%s172 + $0xd4] sm:$0xf] %vm3004, %v2545
      %3059 = vst.msk [vmem:[%s172 + $0xd8] sm:$0xf] %vm3004, %v2546
      %3060 = vst.msk [vmem:[%s172 + $0xdc] sm:$0xf] %vm3004, %v2547
      %3061 = vst.msk [vmem:[%s172 + $0xe0] sm:$0xf] %vm3004, %v2548
      %3062 = vst.msk [vmem:[%s172 + $0xe4] sm:$0xf] %vm3004, %v2549
      %3063 = vst.msk [vmem:[%s172 + $0xe8] sm:$0xf] %vm3004, %v2550
      %3064 = vst.msk [vmem:[%s172 + $0xec] sm:$0xf] %vm3004, %v2551
      %3065 = vst.msk [vmem:[%s172 + $0xf0] sm:$0xf] %vm3004, %v2552
      %3066 = vst.msk [vmem:[%s172 + $0xf4] sm:$0xf] %vm3004, %v2553
      %3067 = vst.msk [vmem:[%s172 + $0xf8] sm:$0xf] %vm3004, %v2554
      %3068 = vst.msk [vmem:[%s172 + $0xfc] sm:$0xf] %vm3004, %v2555
      %3069 = vst.msk [vmem:[%s172 + $0x100] sm:$0xf] %vm3004, %v2556
      %3070 = vst.msk [vmem:[%s172 + $0x104] sm:$0xf] %vm3004, %v2557
      %3071 = vst.msk [vmem:[%s172 + $0x108] sm:$0xf] %vm3004, %v2558
      %3072 = vst.msk [vmem:[%s172 + $0x10c] sm:$0xf] %vm3004, %v2559
      %3073 = vst.msk [vmem:[%s172 + $0x110] sm:$0xf] %vm3004, %v2560
      %3074 = vst.msk [vmem:[%s172 + $0x114] sm:$0xf] %vm3004, %v2561
      %3075 = vst.msk [vmem:[%s172 + $0x118] sm:$0xf] %vm3004, %v2562
      %3076 = vst.msk [vmem:[%s172 + $0x11c] sm:$0xf] %vm3004, %v2563
      %3077 = vst.msk [vmem:[%s172 + $0x120] sm:$0xf] %vm3004, %v2564
      %3078 = vst.msk [vmem:[%s172 + $0x124] sm:$0xf] %vm3004, %v2565
      %3079 = vst.msk [vmem:[%s172 + $0x128] sm:$0xf] %vm3004, %v2566
      %3080 = vst.msk [vmem:[%s172 + $0x12c] sm:$0xf] %vm3004, %v2567
      %3081 = vst.msk [vmem:[%s172 + $0x130] sm:$0xf] %vm3004, %v2568
      %3082 = vst.msk [vmem:[%s172 + $0x134] sm:$0xf] %vm3004, %v2569
      %3083 = vst.msk [vmem:[%s172 + $0x138] sm:$0xf] %vm3004, %v2570
      %3084 = vst.msk [vmem:[%s172 + $0x13c] sm:$0xf] %vm3004, %v2571
      %3085 = vst.msk [vmem:[%s172 + $0x140] sm:$0xf] %vm3004, %v2572
      %3086 = vst.msk [vmem:[%s172 + $0x144] sm:$0xf] %vm3004, %v2573
      %3087 = vst.msk [vmem:[%s172 + $0x148] sm:$0xf] %vm3004, %v2574
      %3088 = vst.msk [vmem:[%s172 + $0x14c] sm:$0xf] %vm3004, %v2575
      %3089 = vst.msk [vmem:[%s172 + $0x150] sm:$0xf] %vm3004, %v2576
      %3090 = vst.msk [vmem:[%s172 + $0x154] sm:$0xf] %vm3004, %v2577
      %3091 = vst.msk [vmem:[%s172 + $0x158] sm:$0xf] %vm3004, %v2578
      %3092 = vst.msk [vmem:[%s172 + $0x15c] sm:$0xf] %vm3004, %v2579
      %3093 = vst.msk [vmem:[%s172 + $0x160] sm:$0xf] %vm3004, %v2580
      %3094 = vst.msk [vmem:[%s172 + $0x164] sm:$0xf] %vm3004, %v2581
      %3095 = vst.msk [vmem:[%s172 + $0x168] sm:$0xf] %vm3004, %v2582
      %3096 = vst.msk [vmem:[%s172 + $0x16c] sm:$0xf] %vm3004, %v2583
      %3097 = vst.msk [vmem:[%s172 + $0x170] sm:$0xf] %vm3004, %v2584
      %3098 = vst.msk [vmem:[%s172 + $0x174] sm:$0xf] %vm3004, %v2585
      %3099 = vst.msk [vmem:[%s172 + $0x178] sm:$0xf] %vm3004, %v2586
      %3100 = vst.msk [vmem:[%s172 + $0x17c] sm:$0xf] %vm3004, %v2587
      %3101 = vst.msk [vmem:[%s172 + $0x180] sm:$0xf] %vm3004, %v2588
      %3102 = vst.msk [vmem:[%s172 + $0x184] sm:$0xf] %vm3004, %v2589
      %3103 = vst.msk [vmem:[%s172 + $0x188] sm:$0xf] %vm3004, %v2590
      %3104 = vst.msk [vmem:[%s172 + $0x18c] sm:$0xf] %vm3004, %v2591
      %3105 = vst.msk [vmem:[%s172 + $0x190] sm:$0xf] %vm3004, %v2592
      %3106 = vst.msk [vmem:[%s172 + $0x194] sm:$0xf] %vm3004, %v2593
      %3107 = vst.msk [vmem:[%s172 + $0x198] sm:$0xf] %vm3004, %v2594
      %3108 = vst.msk [vmem:[%s172 + $0x19c] sm:$0xf] %vm3004, %v2595
      %3109 = vst.msk [vmem:[%s172 + $0x1a0] sm:$0xf] %vm3004, %v2596
      %3110 = vst.msk [vmem:[%s172 + $0x1a4] sm:$0xf] %vm3004, %v2597
      %3111 = vst.msk [vmem:[%s172 + $0x1a8] sm:$0xf] %vm3004, %v2598
      %3112 = vst.msk [vmem:[%s172 + $0x1ac] sm:$0xf] %vm3004, %v2599
      %3113 = vst.msk [vmem:[%s172 + $0x1b0] sm:$0xf] %vm3004, %v2600
      %3114 = vst.msk [vmem:[%s172 + $0x1b4] sm:$0xf] %vm3004, %v2601
      %3115 = vst.msk [vmem:[%s172 + $0x1b8] sm:$0xf] %vm3004, %v2602
      %3116 = vst.msk [vmem:[%s172 + $0x1bc] sm:$0xf] %vm3004, %v2603
      %3117 = vst.msk [vmem:[%s172 + $0x1c0] sm:$0xf] %vm3004, %v2604
      %3118 = vst.msk [vmem:[%s172 + $0x1c4] sm:$0xf] %vm3004, %v2605
      %3119 = vst.msk [vmem:[%s172 + $0x1c8] sm:$0xf] %vm3004, %v2606
      %3120 = vst.msk [vmem:[%s172 + $0x1cc] sm:$0xf] %vm3004, %v2607
      %3121 = vst.msk [vmem:[%s172 + $0x1d0] sm:$0xf] %vm3004, %v2608
      %3122 = vst.msk [vmem:[%s172 + $0x1d4] sm:$0xf] %vm3004, %v2609
      %3123 = vst.msk [vmem:[%s172 + $0x1d8] sm:$0xf] %vm3004, %v2610
      %3124 = vst.msk [vmem:[%s172 + $0x1dc] sm:$0xf] %vm3004, %v2611
      %3125 = vst.msk [vmem:[%s172 + $0x1e0] sm:$0xf] %vm3004, %v2612
      %3126 = vst.msk [vmem:[%s172 + $0x1e4] sm:$0xf] %vm3004, %v2613
      %3127 = vst.msk [vmem:[%s172 + $0x1e8] sm:$0xf] %vm3004, %v2614
      %3128 = vst.msk [vmem:[%s172 + $0x1ec] sm:$0xf] %vm3004, %v2615
      %3129 = vst.msk [vmem:[%s172 + $0x1f0] sm:$0xf] %vm3004, %v2616
      %3130 = vst.msk [vmem:[%s172 + $0x1f4] sm:$0xf] %vm3004, %v2617
      %3131 = vst.msk [vmem:[%s172 + $0x1f8] sm:$0xf] %vm3004, %v2618
      %3132 = vst.msk [vmem:[%s172 + $0x1fc] sm:$0xf] %vm3004, %v2619
      %3133 = vst.msk [vmem:[%s172 + $0x200] sm:$0xf] %vm3004, %v2620
      %3134 = vst.msk [vmem:[%s172 + $0x204] sm:$0xf] %vm3004, %v2621
      %3135 = vst.msk [vmem:[%s172 + $0x208] sm:$0xf] %vm3004, %v2622
      %3136 = vst.msk [vmem:[%s172 + $0x20c] sm:$0xf] %vm3004, %v2623
      %3137 = vst.msk [vmem:[%s172 + $0x210] sm:$0xf] %vm3004, %v2624
      %3138 = vst.msk [vmem:[%s172 + $0x214] sm:$0xf] %vm3004, %v2625
      %3139 = vst.msk [vmem:[%s172 + $0x218] sm:$0xf] %vm3004, %v2626
      %3140 = vst.msk [vmem:[%s172 + $0x21c] sm:$0xf] %vm3004, %v2627
      %3141 = vst.msk [vmem:[%s172 + $0x220] sm:$0xf] %vm3004, %v2628
      %3142 = vst.msk [vmem:[%s172 + $0x224] sm:$0xf] %vm3004, %v2629
      %3143 = vst.msk [vmem:[%s172 + $0x228] sm:$0xf] %vm3004, %v2630
      %3144 = vst.msk [vmem:[%s172 + $0x22c] sm:$0xf] %vm3004, %v2631
      %3145 = vst.msk [vmem:[%s172 + $0x230] sm:$0xf] %vm3004, %v2632
      %3146 = vst.msk [vmem:[%s172 + $0x234] sm:$0xf] %vm3004, %v2633
      %3147 = vst.msk [vmem:[%s172 + $0x238] sm:$0xf] %vm3004, %v2634
      %3148 = vst.msk [vmem:[%s172 + $0x23c] sm:$0xf] %vm3004, %v2635
      %3149 = vst.msk [vmem:[%s172 + $0x240] sm:$0xf] %vm3004, %v2636
      %3150 = vst.msk [vmem:[%s172 + $0x244] sm:$0xf] %vm3004, %v2637
      %3151 = vst.msk [vmem:[%s172 + $0x248] sm:$0xf] %vm3004, %v2638
      %3152 = vst.msk [vmem:[%s172 + $0x24c] sm:$0xf] %vm3004, %v2639
      %3153 = vst.msk [vmem:[%s172 + $0x250] sm:$0xf] %vm3004, %v2640
      %3154 = vst.msk [vmem:[%s172 + $0x254] sm:$0xf] %vm3004, %v2641
      %3155 = vst.msk [vmem:[%s172 + $0x258] sm:$0xf] %vm3004, %v2642
      %3156 = vst.msk [vmem:[%s172 + $0x25c] sm:$0xf] %vm3004, %v2643
      %3157 = vst.msk [vmem:[%s172 + $0x260] sm:$0xf] %vm3004, %v2644
      %3158 = vst.msk [vmem:[%s172 + $0x264] sm:$0xf] %vm3004, %v2645
      %3159 = vst.msk [vmem:[%s172 + $0x268] sm:$0xf] %vm3004, %v2646
      %3160 = vst.msk [vmem:[%s172 + $0x26c] sm:$0xf] %vm3004, %v2647
      %3161 = vst.msk [vmem:[%s172 + $0x270] sm:$0xf] %vm3004, %v2648
      %3162 = vst.msk [vmem:[%s172 + $0x274] sm:$0xf] %vm3004, %v2649
      %3163 = vst.msk [vmem:[%s172 + $0x278] sm:$0xf] %vm3004, %v2650
      %3164 = vst.msk [vmem:[%s172 + $0x27c] sm:$0xf] %vm3004, %v2651
      %3165 = vst.msk [vmem:[%s172 + $0x280] sm:$0xf] %vm3004, %v2652
      %3166 = vst.msk [vmem:[%s172 + $0x284] sm:$0xf] %vm3004, %v2653
      %3167 = vst.msk [vmem:[%s172 + $0x288] sm:$0xf] %vm3004, %v2654
      %3168 = vst.msk [vmem:[%s172 + $0x28c] sm:$0xf] %vm3004, %v2655
      %3169 = vst.msk [vmem:[%s172 + $0x290] sm:$0xf] %vm3004, %v2656
      %3170 = vst.msk [vmem:[%s172 + $0x294] sm:$0xf] %vm3004, %v2657
      %3171 = vst.msk [vmem:[%s172 + $0x298] sm:$0xf] %vm3004, %v2658
      %3172 = vst.msk [vmem:[%s172 + $0x29c] sm:$0xf] %vm3004, %v2659
      %3173 = vst.msk [vmem:[%s172 + $0x2a0] sm:$0xf] %vm3004, %v2660
      %3174 = vst.msk [vmem:[%s172 + $0x2a4] sm:$0xf] %vm3004, %v2661
      %3175 = vst.msk [vmem:[%s172 + $0x2a8] sm:$0xf] %vm3004, %v2662
      %3176 = vst.msk [vmem:[%s172 + $0x2ac] sm:$0xf] %vm3004, %v2663
      %3177 = vst.msk [vmem:[%s172 + $0x2b0] sm:$0xf] %vm3004, %v2664
      %3178 = vst.msk [vmem:[%s172 + $0x2b4] sm:$0xf] %vm3004, %v2665
      %3179 = vst.msk [vmem:[%s172 + $0x2b8] sm:$0xf] %vm3004, %v2666
      %3180 = vst.msk [vmem:[%s172 + $0x2bc] sm:$0xf] %vm3004, %v2667
      %3181 = vst.msk [vmem:[%s172 + $0x2c0] sm:$0xf] %vm3004, %v2668
      %3182 = vst.msk [vmem:[%s172 + $0x2c4] sm:$0xf] %vm3004, %v2669
      %3183 = vst.msk [vmem:[%s172 + $0x2c8] sm:$0xf] %vm3004, %v2670
      %3184 = vst.msk [vmem:[%s172 + $0x2cc] sm:$0xf] %vm3004, %v2671
      %3185 = vst.msk [vmem:[%s172 + $0x2d0] sm:$0xf] %vm3004, %v2672
      %3186 = vst.msk [vmem:[%s172 + $0x2d4] sm:$0xf] %vm3004, %v2673
      %3187 = vst.msk [vmem:[%s172 + $0x2d8] sm:$0xf] %vm3004, %v2674
      %3188 = vst.msk [vmem:[%s172 + $0x2dc] sm:$0xf] %vm3004, %v2675
      %3189 = vst.msk [vmem:[%s172 + $0x2e0] sm:$0xf] %vm3004, %v2676
      %3190 = vst.msk [vmem:[%s172 + $0x2e4] sm:$0xf] %vm3004, %v2677
      %3191 = vst.msk [vmem:[%s172 + $0x2e8] sm:$0xf] %vm3004, %v2678
      %3192 = vst.msk [vmem:[%s172 + $0x2ec] sm:$0xf] %vm3004, %v2679
      %3193 = vst.msk [vmem:[%s172 + $0x2f0] sm:$0xf] %vm3004, %v2680
      %3194 = vst.msk [vmem:[%s172 + $0x2f4] sm:$0xf] %vm3004, %v2681
      %3195 = vst.msk [vmem:[%s172 + $0x2f8] sm:$0xf] %vm3004, %v2682
      %3196 = vst.msk [vmem:[%s172 + $0x2fc] sm:$0xf] %vm3004, %v2683
      %3197 = vst.msk [vmem:[%s172 + $0x300] sm:$0xf] %vm3004, %v2684
      %3198 = vst.msk [vmem:[%s172 + $0x304] sm:$0xf] %vm3004, %v2685
      %3199 = vst.msk [vmem:[%s172 + $0x308] sm:$0xf] %vm3004, %v2686
      %3200 = vst.msk [vmem:[%s172 + $0x30c] sm:$0xf] %vm3004, %v2687
      %3201 = vst.msk [vmem:[%s172 + $0x310] sm:$0xf] %vm3004, %v2688
      %3202 = vst.msk [vmem:[%s172 + $0x314] sm:$0xf] %vm3004, %v2689
      %3203 = vst.msk [vmem:[%s172 + $0x318] sm:$0xf] %vm3004, %v2690
      %3204 = vst.msk [vmem:[%s172 + $0x31c] sm:$0xf] %vm3004, %v2691
      %3205 = vst.msk [vmem:[%s172 + $0x320] sm:$0xf] %vm3004, %v2692
      %3206 = vst.msk [vmem:[%s172 + $0x324] sm:$0xf] %vm3004, %v2693
      %3207 = vst.msk [vmem:[%s172 + $0x328] sm:$0xf] %vm3004, %v2694
      %3208 = vst.msk [vmem:[%s172 + $0x32c] sm:$0xf] %vm3004, %v2695
      %3209 = vst.msk [vmem:[%s172 + $0x330] sm:$0xf] %vm3004, %v2696
      %3210 = vst.msk [vmem:[%s172 + $0x334] sm:$0xf] %vm3004, %v2697
      %3211 = vst.msk [vmem:[%s172 + $0x338] sm:$0xf] %vm3004, %v2698
      %3212 = vst.msk [vmem:[%s172 + $0x33c] sm:$0xf] %vm3004, %v2699
      %3213 = vst.msk [vmem:[%s172 + $0x340] sm:$0xf] %vm3004, %v2700
      %3214 = vst.msk [vmem:[%s172 + $0x344] sm:$0xf] %vm3004, %v2701
      %3215 = vst.msk [vmem:[%s172 + $0x348] sm:$0xf] %vm3004, %v2702
      %3216 = vst.msk [vmem:[%s172 + $0x34c] sm:$0xf] %vm3004, %v2703
      %3217 = vst.msk [vmem:[%s172 + $0x350] sm:$0xf] %vm3004, %v2704
      %3218 = vst.msk [vmem:[%s172 + $0x354] sm:$0xf] %vm3004, %v2705
      %3219 = vst.msk [vmem:[%s172 + $0x358] sm:$0xf] %vm3004, %v2706
      %3220 = vst.msk [vmem:[%s172 + $0x35c] sm:$0xf] %vm3004, %v2707
      %3221 = vst.msk [vmem:[%s172 + $0x360] sm:$0xf] %vm3004, %v2708
      %3222 = vst.msk [vmem:[%s172 + $0x364] sm:$0xf] %vm3004, %v2709
      %3223 = vst.msk [vmem:[%s172 + $0x368] sm:$0xf] %vm3004, %v2710
      %3224 = vst.msk [vmem:[%s172 + $0x36c] sm:$0xf] %vm3004, %v2711
      %3225 = vst.msk [vmem:[%s172 + $0x370] sm:$0xf] %vm3004, %v2712
      %3226 = vst.msk [vmem:[%s172 + $0x374] sm:$0xf] %vm3004, %v2713
      %3227 = vst.msk [vmem:[%s172 + $0x378] sm:$0xf] %vm3004, %v2714
      %3228 = vst.msk [vmem:[%s172 + $0x37c] sm:$0xf] %vm3004, %v2715
      %3229 = vst.msk [vmem:[%s172 + $0x380] sm:$0xf] %vm3004, %v2716
      %3230 = vst.msk [vmem:[%s172 + $0x384] sm:$0xf] %vm3004, %v2717
      %3231 = vst.msk [vmem:[%s172 + $0x388] sm:$0xf] %vm3004, %v2718
      %3232 = vst.msk [vmem:[%s172 + $0x38c] sm:$0xf] %vm3004, %v2719
      %3233 = vst.msk [vmem:[%s172 + $0x390] sm:$0xf] %vm3004, %v2720
      %3234 = vst.msk [vmem:[%s172 + $0x394] sm:$0xf] %vm3004, %v2721
      %3235 = vst.msk [vmem:[%s172 + $0x398] sm:$0xf] %vm3004, %v2722
      %3236 = vst.msk [vmem:[%s172 + $0x39c] sm:$0xf] %vm3004, %v2723
      %3237 = vst.msk [vmem:[%s172 + $0x3a0] sm:$0xf] %vm3004, %v2724
      %3238 = vst.msk [vmem:[%s172 + $0x3a4] sm:$0xf] %vm3004, %v2725
      %3239 = vst.msk [vmem:[%s172 + $0x3a8] sm:$0xf] %vm3004, %v2726
      %3240 = vst.msk [vmem:[%s172 + $0x3ac] sm:$0xf] %vm3004, %v2727
      %3241 = vst.msk [vmem:[%s172 + $0x3b0] sm:$0xf] %vm3004, %v2728
      %3242 = vst.msk [vmem:[%s172 + $0x3b4] sm:$0xf] %vm3004, %v2729
      %3243 = vst.msk [vmem:[%s172 + $0x3b8] sm:$0xf] %vm3004, %v2730
      %3244 = vst.msk [vmem:[%s172 + $0x3bc] sm:$0xf] %vm3004, %v2731
      %3245 = vst.msk [vmem:[%s172 + $0x3c0] sm:$0xf] %vm3004, %v2732
      %3246 = vst.msk [vmem:[%s172 + $0x3c4] sm:$0xf] %vm3004, %v2733
      %3247 = vst.msk [vmem:[%s172 + $0x3c8] sm:$0xf] %vm3004, %v2734
      %3248 = vst.msk [vmem:[%s172 + $0x3cc] sm:$0xf] %vm3004, %v2735
      %3249 = vst.msk [vmem:[%s172 + $0x3d0] sm:$0xf] %vm3004, %v2736
      %3250 = vst.msk [vmem:[%s172 + $0x3d4] sm:$0xf] %vm3004, %v2737
      %3251 = vst.msk [vmem:[%s172 + $0x3d8] sm:$0xf] %vm3004, %v2738
      %3252 = vst.msk [vmem:[%s172 + $0x3dc] sm:$0xf] %vm3004, %v2739
      %3253 = vst.msk [vmem:[%s172 + $0x3e0] sm:$0xf] %vm3004, %v2740
      %3254 = vst.msk [vmem:[%s172 + $0x3e4] sm:$0xf] %vm3004, %v2741
      %3255 = vst.msk [vmem:[%s172 + $0x3e8] sm:$0xf] %vm3004, %v2742
      %3256 = vst.msk [vmem:[%s172 + $0x3ec] sm:$0xf] %vm3004, %v2743
      %3257 = vst.msk [vmem:[%s172 + $0x3f0] sm:$0xf] %vm3004, %v2744
      %3258 = vst.msk [vmem:[%s172 + $0x3f4] sm:$0xf] %vm3004, %v2745
      %3259 = vst.msk [vmem:[%s172 + $0x3f8] sm:$0xf] %vm3004, %v2746
      %3260 = vst.msk [vmem:[%s172 + $0x3fc] sm:$0xf] %vm3004, %v2747
      %s3261 = smul.u32 256, %s14
      %p3262 = scmp.lt.s32.totalorder %s3261, 1023
      %s3263 = scalar_select %p3262, %s3261, 1023
      %s3264 = smul.addr %s3263, 4
      %s3265 = scalar_lea.vmem %s3, %s3264
      // Predicated region
      $region33: #{deconv4x4_forward.3} parent=31 // pred_check
        %p3266 = pneg %p100
      $region34: #{deconv4x4_forward.3} parent=31 // pred_check_branch
        %3268 = sbr.rel (%p3266) target = $region36
      $region35: #{deconv4x4_forward.3} parent=31 // pred_region
        %s3269 = smul.u32 256, %s14
      $region36: #{deconv4x4_forward.3} parent=31 // pred_fallthru
        _
    $region32: #{deconv4x4_forward.3} parent=5 // pred_fallthru
      _
    %p3270 = scmp.le.s32.totalorder 2, %s9
    // Predicated region
    $region37: #{deconv4x4_forward.3} parent=5 // pred_check
      %p3271 = pneg %p3270
    $region38: #{deconv4x4_forward.3} parent=5 // pred_check_branch
      %3273 = sbr.rel (%p3271) target = $region40
    $region39: #{deconv4x4_forward.3} parent=5 // pred_region
      %s3274 = ssub.s32 %s9, 2
      // Predicated region
      $region41: #{deconv4x4_forward.3} parent=39 // pred_check
        %p3275 = pneg %p106
      $region42: #{deconv4x4_forward.3} parent=39 // pred_check_branch
        %3277 = sbr.rel (%p3275) target = $region44
      $region43: #{deconv4x4_forward.3} parent=39 // pred_region
        %s3278 = smul.u32 256, %s15
        %p3279 = scmp.lt.s32.totalorder %s3278, 1023
        %s3280 = scalar_select %p3279, %s3278, 1023
        %s3281 = smul.addr %s3280, 4
        %s3282 = scalar_lea.vmem %s3, %s3281
      $region44: #{deconv4x4_forward.3} parent=39 // pred_fallthru
        _
    $region40: #{deconv4x4_forward.3} parent=5 // pred_fallthru
      _
  $region6: #{deconv4x4_forward.3} parent=0 // loop_footer
    %s13 = sadd.s32 1, %s9
  $region7: #{deconv4x4_forward.3} parent=0 // loop_footer_branch
    %8 = sbr.rel target = $region3
  $region8: #{deconv4x4_forward.3} parent=0 // loop_exit
    _

// kernel: deconv4x4_forward.2
$region0: #{deconv4x4_forward.2}
  #allocation0 [shape = 'u32[]', space=smem, size = 0x4, offset = 0x4, fixed_abs, tag = 'smem constant byte address 0x4 - core index']
  #allocation1 [shape = 'u32[144,128]{1,0:T(1,128)}', space=vmem, size = 0x12000, scoped, tag = 'internal scratch']
  %s0 = inlined_call_operand.vmem [shape: bf16[2,1,2,1056,32], index: 0, kind: input, shape index: {}]
  %s1 = inlined_call_operand.vmem [shape: bf16[2,2,32,128], index: 1, kind: input, shape index: {}]
  %s2 = inlined_call_operand.vmem [shape: bf16[2,1,2,2,1024,128], index: 2, kind: output, shape index: {0}]
  %s3 = inlined_call_operand.vmem [shape: f32[2,1,2,128], index: 3, kind: output, shape index: {1}]
  %4 = xla_tuple %s2, %s3
  %s5 = sld [smem:[#allocation0]]
  $region49: #{deconv4x4_forward.2} parent=0
    _
  %s7 = ssub.s32 1, %s5
  %s8 = scalar_select 0, %s7, %s5
  loop: start=0, step=1, limit=4
  $region2: #{deconv4x4_forward.2} parent=0 // loop_pre_header
    _
  $region3: #{deconv4x4_forward.2} parent=0 // loop_header
    %s10 = sphi 0, %s14
    %p11 = scmp.ge.s32.totalorder %s10, 4
    %s17 = sphi 0, %s29
    %s18 = sphi 0, %s25
    %s19 = sphi 0, %s17
    %s20 = sphi 0, %s18
    %s21 = sphi 0, %s19
    %s22 = sphi 0, %s20
    %s34 = sphi 0, %s36
    %s37 = sphi 0, %s34
    %s38 = sphi 0, %s37
    %s54 = sphi 0, %s38
    %s58 = sphi 0, %s58
    %s60 = sphi 0, %s58
    %s61 = sphi 0, %s60
    %s75 = sphi 0, %s61
    %s83 = sphi 0, %s85
    %s86 = sphi 0, %s83
    %s87 = sphi 0, %s86
    %s103 = sphi 0, %s87
    %s111 = sphi 0, %s113
    %s114 = sphi 0, %s111
    %s115 = sphi 0, %s114
    %s131 = sphi 0, %s115
  $region4: #{deconv4x4_forward.2} parent=0 // loop_header_branch
    %13 = sbr.rel (%p11) target = $region8
  $region5: #{deconv4x4_forward.2} parent=0 // loop_body
    %s15 = ssub.s32 %s10, 1
    %s16 = ssub.s32 %s10, 2
    %s23 = sadd.s32 1, %s18
    %p24 = scmp.ge.s32.totalorder %s23, 1
    %s25 = scalar_select %p24, 0, %s23
    %s26 = sadd.s32 1, %s17
    %s27 = scalar_select %p24, %s26, %s17
    %p28 = scmp.ge.s32.totalorder %s27, 2
    %s29 = scalar_select %p28, 0, %s27
    %s30 = ssub.s32 %s17, %s29
    %s31 = ssub.s32 %s18, %s25
    %s32 = sor.u32 %s30, %s31
    %p33 = scmp.eq.s32.totalorder %s32, 0
    %s35 = sadd.s32 %s34, 1
    %s36 = scalar_select %p33, %s34, %s35
    %p39 = pneg %p33
    %p40 = scmp.eq.s32.totalorder %s10, 1
    %p41 = por %p39, %p40
    %p42 = scmp.ne.s32.totalorder %s34, %s37
    %p43 = scmp.eq.s32.totalorder %s10, 0
    %p44 = por %p42, %p43
    %p45 = scmp.ne.s32.totalorder %s34, %s37
    %p46 = scmp.eq.s32.totalorder %s15, 1
    %p47 = por %p45, %p46
    %p48 = scmp.ne.s32.totalorder %s37, %s38
    %p49 = scmp.eq.s32.totalorder %s15, 0
    %p50 = por %p48, %p49
    %p51 = scmp.ne.s32.totalorder %s37, %s38
    %p52 = scmp.eq.s32.totalorder %s16, 1
    %p53 = por %p51, %p52
    %p55 = scmp.ne.s32.totalorder %s38, %s54
    %p56 = scmp.eq.s32.totalorder %s16, 0
    %p57 = por %p55, %p56
    %s59 = sadd.s32 %s58, 1
    %p62 = scmp.eq.s32.totalorder %s10, 1
    %p63 = scmp.ne.s32.totalorder %s58, %s60
    %p64 = scmp.eq.s32.totalorder %s10, 0
    %p65 = por %p63, %p64
    %p66 = scmp.ne.s32.totalorder %s58, %s60
    %p67 = scmp.eq.s32.totalorder %s15, 1
    %p68 = por %p66, %p67
    %p69 = scmp.ne.s32.totalorder %s60, %s61
    %p70 = scmp.eq.s32.totalorder %s15, 0
    %p71 = por %p69, %p70
    %p72 = scmp.ne.s32.totalorder %s60, %s61
    %p73 = scmp.eq.s32.totalorder %s16, 1
    %p74 = por %p72, %p73
    %p76 = scmp.ne.s32.totalorder %s61, %s75
    %p77 = scmp.eq.s32.totalorder %s16, 0
    %p78 = por %p76, %p77
    %s79 = ssub.s32 %s17, %s29
    %s80 = ssub.s32 %s18, %s25
    %s81 = sor.u32 %s79, %s80
    %p82 = scmp.eq.s32.totalorder %s81, 0
    %s84 = sadd.s32 %s83, 1
    %s85 = scalar_select %p82, %s83, %s84
    %p88 = pneg %p82
    %p89 = scmp.eq.s32.totalorder %s10, 1
    %p90 = por %p88, %p89
    %p91 = scmp.ne.s32.totalorder %s83, %s86
    %p92 = scmp.eq.s32.totalorder %s10, 0
    %p93 = por %p91, %p92
    %p94 = scmp.ne.s32.totalorder %s83, %s86
    %p95 = scmp.eq.s32.totalorder %s15, 1
    %p96 = por %p94, %p95
    %p97 = scmp.ne.s32.totalorder %s86, %s87
    %p98 = scmp.eq.s32.totalorder %s15, 0
    %p99 = por %p97, %p98
    %p100 = scmp.ne.s32.totalorder %s86, %s87
    %p101 = scmp.eq.s32.totalorder %s16, 1
    %p102 = por %p100, %p101
    %p104 = scmp.ne.s32.totalorder %s87, %s103
    %p105 = scmp.eq.s32.totalorder %s16, 0
    %p106 = por %p104, %p105
    %s107 = ssub.s32 %s17, %s29
    %s108 = ssub.s32 %s18, %s25
    %s109 = sor.u32 %s107, %s108
    %p110 = scmp.eq.s32.totalorder %s109, 0
    %s112 = sadd.s32 %s111, 1
    %s113 = scalar_select %p110, %s111, %s112
    %p116 = pneg %p110
    %p117 = scmp.eq.s32.totalorder %s10, 1
    %p118 = por %p116, %p117
    %p119 = scmp.ne.s32.totalorder %s111, %s114
    %p120 = scmp.eq.s32.totalorder %s10, 0
    %p121 = por %p119, %p120
    %p122 = scmp.ne.s32.totalorder %s111, %s114
    %p123 = scmp.eq.s32.totalorder %s15, 1
    %p124 = por %p122, %p123
    %p125 = scmp.ne.s32.totalorder %s114, %s115
    %p126 = scmp.eq.s32.totalorder %s15, 0
    %p127 = por %p125, %p126
    %p128 = scmp.ne.s32.totalorder %s114, %s115
    %p129 = scmp.eq.s32.totalorder %s16, 1
    %p130 = por %p128, %p129
    %p132 = scmp.ne.s32.totalorder %s115, %s131
    %p133 = scmp.eq.s32.totalorder %s16, 0
    %p134 = por %p132, %p133
    %p135 = scmp.le.s32.totalorder 1, %s10
    %p136 = scmp.lt.s32.totalorder %s10, 3
    %p137 = pnand %p135, %p136
    %p138 = pneg %p137
    // Predicated region
    $region9: #{deconv4x4_forward.2} parent=5 // pred_check
      _
    $region10: #{deconv4x4_forward.2} parent=5 // pred_check_branch
      %140 = sbr.rel (%p137) target = $region12
    $region11: #{deconv4x4_forward.2} parent=5 // pred_region
      %s141 = ssub.s32 %s10, 1
      // Predicated region
      $region13: #{deconv4x4_forward.2} parent=11 // pred_check
        %p142 = pneg %p71
      $region14: #{deconv4x4_forward.2} parent=11 // pred_check_branch
        %144 = sbr.rel (%p142) target = $region16
      $region15: #{deconv4x4_forward.2} parent=11 // pred_region
        _
      $region16: #{deconv4x4_forward.2} parent=11 // pred_fallthru
        _
    $region12: #{deconv4x4_forward.2} parent=5 // pred_fallthru
      _
    %p145 = scmp.lt.s32.totalorder %s10, 2
    // Predicated region
    $region17: #{deconv4x4_forward.2} parent=5 // pred_check
      %p146 = pneg %p145
    $region18: #{deconv4x4_forward.2} parent=5 // pred_check_branch
      %148 = sbr.rel (%p146) target = $region20
    $region19: #{deconv4x4_forward.2} parent=5 // pred_region
      // Predicated region
      $region21: #{deconv4x4_forward.2} parent=19 // pred_check
        %p149 = pneg %p44
      $region22: #{deconv4x4_forward.2} parent=19 // pred_check_branch
        %151 = sbr.rel (%p149) target = $region24
      $region23: #{deconv4x4_forward.2} parent=19 // pred_region
        %p152 = scmp.lt.s32.totalorder %s17, 1
        %s153 = scalar_select %p152, %s17, 1
        %p154 = scmp.lt.s32.totalorder %s18, 0
        %s155 = scalar_select %p154, %s18, 0
        %s156 = smul.addr %s155, 264
        %s157 = smul.addr %s153, 264
        %s158 = sadd.s32 %s156, %s157
        %s159 = smul.addr %s158, 4
        %s160 = scalar_lea.vmem %s0, %s159
      $region24: #{deconv4x4_forward.2} parent=19 // pred_fallthru
        _
    $region20: #{deconv4x4_forward.2} parent=5 // pred_fallthru
      _
    %p161 = scmp.le.s32.totalorder 1, %s10
    %p162 = scmp.lt.s32.totalorder %s10, 3
    %p163 = pnand %p161, %p162
    %p164 = pneg %p163
    // Predicated region
    $region25: #{deconv4x4_forward.2} parent=5 // pred_check
      _
    $region26: #{deconv4x4_forward.2} parent=5 // pred_check_branch
      %166 = sbr.rel (%p163) target = $region28
    $region27: #{deconv4x4_forward.2} parent=5 // pred_region
      %s167 = ssub.s32 %s10, 1
      %p168 = scmp.lt.s32.totalorder %s19, 1
      %s169 = scalar_select %p168, %s19, 1
      %p170 = scmp.lt.s32.totalorder %s20, 0
      %s171 = scalar_select %p170, %s20, 0
      %s172 = smul.addr %s171, 264
      %s173 = smul.addr %s169, 264
      %s174 = sadd.s32 %s172, %s173
      %s175 = smul.addr %s174, 4
      %s176 = scalar_lea.vmem %s0, %s175
      %p177 = pneg %p50
      %p178 = pneg %p47
      %p179 = pneg %p71
      %p180 = pneg %p68
      %p181 = pneg %p99
      %p182 = pneg %p96
      %p183 = scmp.lt.s32.totalorder %s19, 1
      %s184 = scalar_select %p183, %s19, 1
      %p185 = scmp.lt.s32.totalorder %s20, 0
      %s186 = scalar_select %p185, %s20, 0
      %s187 = smul.addr %s186, 512
      %s188 = smul.addr %s184, 512
      %s189 = sadd.s32 %s187, %s188
      %s190 = smul.addr %s189, 4
      %s191 = scalar_lea.vmem %s2, %s190
      %p192 = pneg %p127
      %p193 = pneg %p124
      %p194 = scmp.lt.s32.totalorder %s19, 1
      %s195 = scalar_select %p194, %s19, 1
      %p196 = scmp.lt.s32.totalorder %s20, 0
      %s197 = scalar_select %p196, %s20, 0
      %s198 = sadd.s32 %s197, %s195
      %s199 = smul.addr %s198, 2
      %s200 = scalar_lea.vmem %s3, %s199
      %p201 = scmp.lt.s32.totalorder %s19, 1
      %s202 = scalar_select %p201, %s19, 1
      %p203 = scmp.lt.s32.totalorder %s20, 0
      %s204 = scalar_select %p203, %s20, 0
      %s205 = smul.addr %s204, 264
      %s206 = smul.addr %s202, 264
      %s207 = sadd.s32 %s205, %s206
      %s208 = smul.addr %s207, 4
      %s209 = scalar_lea.vmem %s0, %s208
      %p210 = scmp.lt.s32.totalorder %s19, 1
      %s211 = scalar_select %p210, %s19, 1
      %p212 = scmp.lt.s32.totalorder %s20, 0
      %s213 = scalar_select %p212, %s20, 0
      %s214 = smul.addr %s213, 512
      %s215 = smul.addr %s211, 512
      %s216 = sadd.s32 %s214, %s215
      %s217 = smul.addr %s216, 4
      %s218 = scalar_lea.vmem %s2, %s217
      %p219 = scmp.lt.s32.totalorder %s19, 1
      %s220 = scalar_select %p219, %s19, 1
      %p221 = scmp.lt.s32.totalorder %s20, 0
      %s222 = scalar_select %p221, %s20, 0
      %s223 = sadd.s32 %s222, %s220
      %s224 = smul.addr %s223, 2
      %s225 = scalar_lea.vmem %s3, %s224
      %v227 = vld [vmem:[%s209] sm:$0xf]
      %v228 = vld [vmem:[%s209 + $0x4] sm:$0xf]
      %v229 = vld [vmem:[%s209 + $0x8] sm:$0xf]
      %v230 = vld [vmem:[%s209 + $0xc] sm:$0xf]
      %v231 = vld [vmem:[%s209 + $0x10] sm:$0xf]
      %v232 = vld [vmem:[%s209 + $0x14] sm:$0xf]
      %v233 = vld [vmem:[%s209 + $0x18] sm:$0xf]
      %v234 = vld [vmem:[%s209 + $0x1c] sm:$0xf]
      %v235 = vld [vmem:[%s209 + $0x20] sm:$0xf]
      %v236 = vld [vmem:[%s209 + $0x24] sm:$0xf]
      %v237 = vld [vmem:[%s209 + $0x28] sm:$0xf]
      %v238 = vld [vmem:[%s209 + $0x2c] sm:$0xf]
      %v239 = vld [vmem:[%s209 + $0x30] sm:$0xf]
      %v240 = vld [vmem:[%s209 + $0x34] sm:$0xf]
      %v241 = vld [vmem:[%s209 + $0x38] sm:$0xf]
      %v242 = vld [vmem:[%s209 + $0x3c] sm:$0xf]
      %v243 = vld [vmem:[%s209 + $0x40] sm:$0xf]
      %v244 = vld [vmem:[%s209 + $0x44] sm:$0xf]
      %v245 = vld [vmem:[%s209 + $0x48] sm:$0xf]
      %v246 = vld [vmem:[%s209 + $0x4c] sm:$0xf]
      %v247 = vld [vmem:[%s209 + $0x50] sm:$0xf]
      %v248 = vld [vmem:[%s209 + $0x54] sm:$0xf]
      %v249 = vld [vmem:[%s209 + $0x58] sm:$0xf]
      %v250 = vld [vmem:[%s209 + $0x5c] sm:$0xf]
      %v251 = vld [vmem:[%s209 + $0x60] sm:$0xf]
      %v252 = vld [vmem:[%s209 + $0x64] sm:$0xf]
      %v253 = vld [vmem:[%s209 + $0x68] sm:$0xf]
      %v254 = vld [vmem:[%s209 + $0x6c] sm:$0xf]
      %v255 = vld [vmem:[%s209 + $0x70] sm:$0xf]
      %v256 = vld [vmem:[%s209 + $0x74] sm:$0xf]
      %v257 = vld [vmem:[%s209 + $0x78] sm:$0xf]
      %v258 = vld [vmem:[%s209 + $0x7c] sm:$0xf]
      %v259 = vld [vmem:[%s209 + $0x80] sm:$0xf]
      %v260 = vld [vmem:[%s209 + $0x84] sm:$0xf]
      %v261 = vld [vmem:[%s209 + $0x88] sm:$0xf]
      %v262 = vld [vmem:[%s209 + $0x8c] sm:$0xf]
      %v263 = vld [vmem:[%s209 + $0x90] sm:$0xf]
      %v264 = vld [vmem:[%s209 + $0x94] sm:$0xf]
      %v265 = vld [vmem:[%s209 + $0x98] sm:$0xf]
      %v266 = vld [vmem:[%s209 + $0x9c] sm:$0xf]
      %v267 = vld [vmem:[%s209 + $0xa0] sm:$0xf]
      %v268 = vld [vmem:[%s209 + $0xa4] sm:$0xf]
      %v269 = vld [vmem:[%s209 + $0xa8] sm:$0xf]
      %v270 = vld [vmem:[%s209 + $0xac] sm:$0xf]
      %v271 = vld [vmem:[%s209 + $0xb0] sm:$0xf]
      %v272 = vld [vmem:[%s209 + $0xb4] sm:$0xf]
      %v273 = vld [vmem:[%s209 + $0xb8] sm:$0xf]
      %v274 = vld [vmem:[%s209 + $0xbc] sm:$0xf]
      %v275 = vld [vmem:[%s209 + $0xc0] sm:$0xf]
      %v276 = vld [vmem:[%s209 + $0xc4] sm:$0xf]
      %v277 = vld [vmem:[%s209 + $0xc8] sm:$0xf]
      %v278 = vld [vmem:[%s209 + $0xcc] sm:$0xf]
      %v279 = vld [vmem:[%s209 + $0xd0] sm:$0xf]
      %v280 = vld [vmem:[%s209 + $0xd4] sm:$0xf]
      %v281 = vld [vmem:[%s209 + $0xd8] sm:$0xf]
      %v282 = vld [vmem:[%s209 + $0xdc] sm:$0xf]
      %v283 = vld [vmem:[%s209 + $0xe0] sm:$0xf]
      %v284 = vld [vmem:[%s209 + $0xe4] sm:$0xf]
      %v285 = vld [vmem:[%s209 + $0xe8] sm:$0xf]
      %v286 = vld [vmem:[%s209 + $0xec] sm:$0xf]
      %v287 = vld [vmem:[%s209 + $0xf0] sm:$0xf]
      %v288 = vld [vmem:[%s209 + $0xf4] sm:$0xf]
      %v289 = vld [vmem:[%s209 + $0xf8] sm:$0xf]
      %v290 = vld [vmem:[%s209 + $0xfc] sm:$0xf]
      %v291 = vld [vmem:[%s209 + $0x100] sm:$0xf]
      %v292 = vld [vmem:[%s209 + $0x104] sm:$0xf]
      %v293 = vld [vmem:[%s209 + $0x108] sm:$0xf]
      %v294 = vld [vmem:[%s209 + $0x10c] sm:$0xf]
      %v295 = vld [vmem:[%s209 + $0x110] sm:$0xf]
      %v296 = vld [vmem:[%s209 + $0x114] sm:$0xf]
      %v297 = vld [vmem:[%s209 + $0x118] sm:$0xf]
      %v298 = vld [vmem:[%s209 + $0x11c] sm:$0xf]
      %v299 = vld [vmem:[%s209 + $0x120] sm:$0xf]
      %v300 = vld [vmem:[%s209 + $0x124] sm:$0xf]
      %v301 = vld [vmem:[%s209 + $0x128] sm:$0xf]
      %v302 = vld [vmem:[%s209 + $0x12c] sm:$0xf]
      %v303 = vld [vmem:[%s209 + $0x130] sm:$0xf]
      %v304 = vld [vmem:[%s209 + $0x134] sm:$0xf]
      %v305 = vld [vmem:[%s209 + $0x138] sm:$0xf]
      %v306 = vld [vmem:[%s209 + $0x13c] sm:$0xf]
      %v307 = vld [vmem:[%s209 + $0x140] sm:$0xf]
      %v308 = vld [vmem:[%s209 + $0x144] sm:$0xf]
      %v309 = vld [vmem:[%s209 + $0x148] sm:$0xf]
      %v310 = vld [vmem:[%s209 + $0x14c] sm:$0xf]
      %v311 = vld [vmem:[%s209 + $0x150] sm:$0xf]
      %v312 = vld [vmem:[%s209 + $0x154] sm:$0xf]
      %v313 = vld [vmem:[%s209 + $0x158] sm:$0xf]
      %v314 = vld [vmem:[%s209 + $0x15c] sm:$0xf]
      %v315 = vld [vmem:[%s209 + $0x160] sm:$0xf]
      %v316 = vld [vmem:[%s209 + $0x164] sm:$0xf]
      %v317 = vld [vmem:[%s209 + $0x168] sm:$0xf]
      %v318 = vld [vmem:[%s209 + $0x16c] sm:$0xf]
      %v319 = vld [vmem:[%s209 + $0x170] sm:$0xf]
      %v320 = vld [vmem:[%s209 + $0x174] sm:$0xf]
      %v321 = vld [vmem:[%s209 + $0x178] sm:$0xf]
      %v322 = vld [vmem:[%s209 + $0x17c] sm:$0xf]
      %v323 = vld [vmem:[%s209 + $0x180] sm:$0xf]
      %v324 = vld [vmem:[%s209 + $0x184] sm:$0xf]
      %v325 = vld [vmem:[%s209 + $0x188] sm:$0xf]
      %v326 = vld [vmem:[%s209 + $0x18c] sm:$0xf]
      %v327 = vld [vmem:[%s209 + $0x190] sm:$0xf]
      %v328 = vld [vmem:[%s209 + $0x194] sm:$0xf]
      %v329 = vld [vmem:[%s209 + $0x198] sm:$0xf]
      %v330 = vld [vmem:[%s209 + $0x19c] sm:$0xf]
      %v331 = vld [vmem:[%s209 + $0x1a0] sm:$0xf]
      %v332 = vld [vmem:[%s209 + $0x1a4] sm:$0xf]
      %v333 = vld [vmem:[%s209 + $0x1a8] sm:$0xf]
      %v334 = vld [vmem:[%s209 + $0x1ac] sm:$0xf]
      %v335 = vld [vmem:[%s209 + $0x1b0] sm:$0xf]
      %v336 = vld [vmem:[%s209 + $0x1b4] sm:$0xf]
      %v337 = vld [vmem:[%s209 + $0x1b8] sm:$0xf]
      %v338 = vld [vmem:[%s209 + $0x1bc] sm:$0xf]
      %v339 = vld [vmem:[%s209 + $0x1c0] sm:$0xf]
      %v340 = vld [vmem:[%s209 + $0x1c4] sm:$0xf]
      %v341 = vld [vmem:[%s209 + $0x1c8] sm:$0xf]
      %v342 = vld [vmem:[%s209 + $0x1cc] sm:$0xf]
      %v343 = vld [vmem:[%s209 + $0x1d0] sm:$0xf]
      %v344 = vld [vmem:[%s209 + $0x1d4] sm:$0xf]
      %v345 = vld [vmem:[%s209 + $0x1d8] sm:$0xf]
      %v346 = vld [vmem:[%s209 + $0x1dc] sm:$0xf]
      %v347 = vld [vmem:[%s209 + $0x1e0] sm:$0xf]
      %v348 = vld [vmem:[%s209 + $0x1e4] sm:$0xf]
      %v349 = vld [vmem:[%s209 + $0x1e8] sm:$0xf]
      %v350 = vld [vmem:[%s209 + $0x1ec] sm:$0xf]
      %v351 = vld [vmem:[%s209 + $0x1f0] sm:$0xf]
      %v352 = vld [vmem:[%s209 + $0x1f4] sm:$0xf]
      %v353 = vld [vmem:[%s209 + $0x1f8] sm:$0xf]
      %v354 = vld [vmem:[%s209 + $0x1fc] sm:$0xf]
      %v355 = vld [vmem:[%s1] sm:$0xf]
      %v356 = vld [vmem:[%s1 + $0x4] sm:$0xf]
      %v357 = vld [vmem:[%s1 + $0x8] sm:$0xf]
      %v358 = vld [vmem:[%s1 + $0xc] sm:$0xf]
      %v487 = vunpack.c.l.b16 %v227
      %v488 = vunpack.c.l.b16 %v228
      %v489 = vunpack.c.l.b16 %v229
      %v490 = vunpack.c.l.b16 %v230
      %v491 = vunpack.c.l.b16 %v231
      %v492 = vunpack.c.l.b16 %v232
      %v493 = vunpack.c.l.b16 %v233
      %v494 = vunpack.c.l.b16 %v234
      %v495 = vunpack.c.l.b16 %v235
      %v496 = vunpack.c.l.b16 %v236
      %v497 = vunpack.c.l.b16 %v237
      %v498 = vunpack.c.l.b16 %v238
      %v499 = vunpack.c.l.b16 %v239
      %v500 = vunpack.c.l.b16 %v240
      %v501 = vunpack.c.l.b16 %v241
      %v502 = vunpack.c.l.b16 %v242
      %v503 = vunpack.c.l.b16 %v243
      %v504 = vunpack.c.l.b16 %v244
      %v505 = vunpack.c.l.b16 %v245
      %v506 = vunpack.c.l.b16 %v246
      %v507 = vunpack.c.l.b16 %v247
      %v508 = vunpack.c.l.b16 %v248
      %v509 = vunpack.c.l.b16 %v249
      %v510 = vunpack.c.l.b16 %v250
      %v511 = vunpack.c.l.b16 %v251
      %v512 = vunpack.c.l.b16 %v252
      %v513 = vunpack.c.l.b16 %v253
      %v514 = vunpack.c.l.b16 %v254
      %v515 = vunpack.c.l.b16 %v255
      %v516 = vunpack.c.l.b16 %v256
      %v517 = vunpack.c.l.b16 %v257
      %v518 = vunpack.c.l.b16 %v258
      %v519 = vunpack.c.l.b16 %v259
      %v520 = vunpack.c.l.b16 %v260
      %v521 = vunpack.c.l.b16 %v261
      %v522 = vunpack.c.l.b16 %v262
      %v523 = vunpack.c.l.b16 %v263
      %v524 = vunpack.c.l.b16 %v264
      %v525 = vunpack.c.l.b16 %v265
      %v526 = vunpack.c.l.b16 %v266
      %v527 = vunpack.c.l.b16 %v267
      %v528 = vunpack.c.l.b16 %v268
      %v529 = vunpack.c.l.b16 %v269
      %v530 = vunpack.c.l.b16 %v270
      %v531 = vunpack.c.l.b16 %v271
      %v532 = vunpack.c.l.b16 %v272
      %v533 = vunpack.c.l.b16 %v273
      %v534 = vunpack.c.l.b16 %v274
      %v535 = vunpack.c.l.b16 %v275
      %v536 = vunpack.c.l.b16 %v276
      %v537 = vunpack.c.l.b16 %v277
      %v538 = vunpack.c.l.b16 %v278
      %v539 = vunpack.c.l.b16 %v279
      %v540 = vunpack.c.l.b16 %v280
      %v541 = vunpack.c.l.b16 %v281
      %v542 = vunpack.c.l.b16 %v282
      %v543 = vunpack.c.l.b16 %v283
      %v544 = vunpack.c.l.b16 %v284
      %v545 = vunpack.c.l.b16 %v285
      %v546 = vunpack.c.l.b16 %v286
      %v547 = vunpack.c.l.b16 %v287
      %v548 = vunpack.c.l.b16 %v288
      %v549 = vunpack.c.l.b16 %v289
      %v550 = vunpack.c.l.b16 %v290
      %v551 = vunpack.c.l.b16 %v291
      %v552 = vunpack.c.l.b16 %v292
      %v553 = vunpack.c.l.b16 %v293
      %v554 = vunpack.c.l.b16 %v294
      %v555 = vunpack.c.l.b16 %v295
      %v556 = vunpack.c.l.b16 %v296
      %v557 = vunpack.c.l.b16 %v297
      %v558 = vunpack.c.l.b16 %v298
      %v559 = vunpack.c.l.b16 %v299
      %v560 = vunpack.c.l.b16 %v300
      %v561 = vunpack.c.l.b16 %v301
      %v562 = vunpack.c.l.b16 %v302
      %v563 = vunpack.c.l.b16 %v303
      %v564 = vunpack.c.l.b16 %v304
      %v565 = vunpack.c.l.b16 %v305
      %v566 = vunpack.c.l.b16 %v306
      %v567 = vunpack.c.l.b16 %v307
      %v568 = vunpack.c.l.b16 %v308
      %v569 = vunpack.c.l.b16 %v309
      %v570 = vunpack.c.l.b16 %v310
      %v571 = vunpack.c.l.b16 %v311
      %v572 = vunpack.c.l.b16 %v312
      %v573 = vunpack.c.l.b16 %v313
      %v574 = vunpack.c.l.b16 %v314
      %v575 = vunpack.c.l.b16 %v315
      %v576 = vunpack.c.l.b16 %v316
      %v577 = vunpack.c.l.b16 %v317
      %v578 = vunpack.c.l.b16 %v318
      %v579 = vunpack.c.l.b16 %v319
      %v580 = vunpack.c.l.b16 %v320
      %v581 = vunpack.c.l.b16 %v321
      %v582 = vunpack.c.l.b16 %v322
      %v583 = vunpack.c.l.b16 %v323
      %v584 = vunpack.c.l.b16 %v324
      %v585 = vunpack.c.l.b16 %v325
      %v586 = vunpack.c.l.b16 %v326
      %v587 = vunpack.c.l.b16 %v327
      %v588 = vunpack.c.l.b16 %v328
      %v589 = vunpack.c.l.b16 %v329
      %v590 = vunpack.c.l.b16 %v330
      %v591 = vunpack.c.l.b16 %v331
      %v592 = vunpack.c.l.b16 %v332
      %v593 = vunpack.c.l.b16 %v333
      %v594 = vunpack.c.l.b16 %v334
      %v595 = vunpack.c.l.b16 %v335
      %v596 = vunpack.c.l.b16 %v336
      %v597 = vunpack.c.l.b16 %v337
      %v598 = vunpack.c.l.b16 %v338
      %v599 = vunpack.c.l.b16 %v339
      %v600 = vunpack.c.l.b16 %v340
      %v601 = vunpack.c.l.b16 %v341
      %v602 = vunpack.c.l.b16 %v342
      %v603 = vunpack.c.l.b16 %v343
      %v604 = vunpack.c.l.b16 %v344
      %v605 = vunpack.c.l.b16 %v345
      %v606 = vunpack.c.l.b16 %v346
      %v607 = vunpack.c.l.b16 %v347
      %v608 = vunpack.c.l.b16 %v348
      %v609 = vunpack.c.l.b16 %v349
      %v610 = vunpack.c.l.b16 %v350
      %v611 = vunpack.c.l.b16 %v351
      %v612 = vunpack.c.l.b16 %v352
      %v613 = vunpack.c.l.b16 %v353
      %v614 = vunpack.c.l.b16 %v354
      %v615 = vpack.c.b16 %v488, %v487
      %v616 = vpack.c.b16 %v490, %v489
      %v617 = vpack.c.b16 %v492, %v491
      %v618 = vpack.c.b16 %v494, %v493
      %v619 = vpack.c.b16 %v496, %v495
      %v620 = vpack.c.b16 %v498, %v497
      %v621 = vpack.c.b16 %v500, %v499
      %v622 = vpack.c.b16 %v502, %v501
      %v623 = vpack.c.b16 %v504, %v503
      %v624 = vpack.c.b16 %v506, %v505
      %v625 = vpack.c.b16 %v508, %v507
      %v626 = vpack.c.b16 %v510, %v509
      %v627 = vpack.c.b16 %v512, %v511
      %v628 = vpack.c.b16 %v514, %v513
      %v629 = vpack.c.b16 %v516, %v515
      %v630 = vpack.c.b16 %v518, %v517
      %v631 = vpack.c.b16 %v520, %v519
      %v632 = vpack.c.b16 %v522, %v521
      %v633 = vpack.c.b16 %v524, %v523
      %v634 = vpack.c.b16 %v526, %v525
      %v635 = vpack.c.b16 %v528, %v527
      %v636 = vpack.c.b16 %v530, %v529
      %v637 = vpack.c.b16 %v532, %v531
      %v638 = vpack.c.b16 %v534, %v533
      %v639 = vpack.c.b16 %v536, %v535
      %v640 = vpack.c.b16 %v538, %v537
      %v641 = vpack.c.b16 %v540, %v539
      %v642 = vpack.c.b16 %v542, %v541
      %v643 = vpack.c.b16 %v544, %v543
      %v644 = vpack.c.b16 %v546, %v545
      %v645 = vpack.c.b16 %v548, %v547
      %v646 = vpack.c.b16 %v550, %v549
      %v647 = vpack.c.b16 %v552, %v551
      %v648 = vpack.c.b16 %v554, %v553
      %v649 = vpack.c.b16 %v556, %v555
      %v650 = vpack.c.b16 %v558, %v557
      %v651 = vpack.c.b16 %v560, %v559
      %v652 = vpack.c.b16 %v562, %v561
      %v653 = vpack.c.b16 %v564, %v563
      %v654 = vpack.c.b16 %v566, %v565
      %v655 = vpack.c.b16 %v568, %v567
      %v656 = vpack.c.b16 %v570, %v569
      %v657 = vpack.c.b16 %v572, %v571
      %v658 = vpack.c.b16 %v574, %v573
      %v659 = vpack.c.b16 %v576, %v575
      %v660 = vpack.c.b16 %v578, %v577
      %v661 = vpack.c.b16 %v580, %v579
      %v662 = vpack.c.b16 %v582, %v581
      %v663 = vpack.c.b16 %v584, %v583
      %v664 = vpack.c.b16 %v586, %v585
      %v665 = vpack.c.b16 %v588, %v587
      %v666 = vpack.c.b16 %v590, %v589
      %v667 = vpack.c.b16 %v592, %v591
      %v668 = vpack.c.b16 %v594, %v593
      %v669 = vpack.c.b16 %v596, %v595
      %v670 = vpack.c.b16 %v598, %v597
      %v671 = vpack.c.b16 %v600, %v599
      %v672 = vpack.c.b16 %v602, %v601
      %v673 = vpack.c.b16 %v604, %v603
      %v674 = vpack.c.b16 %v606, %v605
      %v675 = vpack.c.b16 %v608, %v607
      %v676 = vpack.c.b16 %v610, %v609
      %v677 = vpack.c.b16 %v612, %v611
      %v678 = vpack.c.b16 %v614, %v613
      %v683 = vunpack.c.l.b16 %v355
      %v684 = vunpack.c.l.b16 %v356
      %v685 = vunpack.c.l.b16 %v357
      %v686 = vunpack.c.l.b16 %v358
      %v687 = vpack.c.b16 %v684, %v683
      %v688 = vpack.c.b16 %v686, %v685
      %vm691 = vcmask 261120
      %v693 = vsel %vm691, %v615, 0
      %v696 = vsel %vm691, %v616, 0
      %v699 = vsel %vm691, %v617, 0
      %v702 = vsel %vm691, %v618, 0
      %v705 = vsel %vm691, %v619, 0
      %v708 = vsel %vm691, %v620, 0
      %v711 = vsel %vm691, %v621, 0
      %v714 = vsel %vm691, %v622, 0
      %v717 = vsel %vm691, %v623, 0
      %v720 = vsel %vm691, %v624, 0
      %v723 = vsel %vm691, %v625, 0
      %v726 = vsel %vm691, %v626, 0
      %v729 = vsel %vm691, %v627, 0
      %v732 = vsel %vm691, %v628, 0
      %v735 = vsel %vm691, %v629, 0
      %v738 = vsel %vm691, %v630, 0
      %v741 = vsel %vm691, %v631, 0
      %v744 = vsel %vm691, %v632, 0
      %v747 = vsel %vm691, %v633, 0
      %v750 = vsel %vm691, %v634, 0
      %v753 = vsel %vm691, %v635, 0
      %v756 = vsel %vm691, %v636, 0
      %v759 = vsel %vm691, %v637, 0
      %v762 = vsel %vm691, %v638, 0
      %v765 = vsel %vm691, %v639, 0
      %v768 = vsel %vm691, %v640, 0
      %v771 = vsel %vm691, %v641, 0
      %v774 = vsel %vm691, %v642, 0
      %v777 = vsel %vm691, %v643, 0
      %v780 = vsel %vm691, %v644, 0
      %v783 = vsel %vm691, %v645, 0
      %v786 = vsel %vm691, %v646, 0
      %v789 = vsel %vm691, %v647, 0
      %v792 = vsel %vm691, %v648, 0
      %v795 = vsel %vm691, %v649, 0
      %v798 = vsel %vm691, %v650, 0
      %v801 = vsel %vm691, %v651, 0
      %v804 = vsel %vm691, %v652, 0
      %v807 = vsel %vm691, %v653, 0
      %v810 = vsel %vm691, %v654, 0
      %v813 = vsel %vm691, %v655, 0
      %v816 = vsel %vm691, %v656, 0
      %v819 = vsel %vm691, %v657, 0
      %v822 = vsel %vm691, %v658, 0
      %v825 = vsel %vm691, %v659, 0
      %v828 = vsel %vm691, %v660, 0
      %v831 = vsel %vm691, %v661, 0
      %v834 = vsel %vm691, %v662, 0
      %v837 = vsel %vm691, %v663, 0
      %v840 = vsel %vm691, %v664, 0
      %v843 = vsel %vm691, %v665, 0
      %v846 = vsel %vm691, %v666, 0
      %v849 = vsel %vm691, %v667, 0
      %v852 = vsel %vm691, %v668, 0
      %v855 = vsel %vm691, %v669, 0
      %v858 = vsel %vm691, %v670, 0
      %v861 = vsel %vm691, %v671, 0
      %v864 = vsel %vm691, %v672, 0
      %v867 = vsel %vm691, %v673, 0
      %v870 = vsel %vm691, %v674, 0
      %v873 = vsel %vm691, %v675, 0
      %v876 = vsel %vm691, %v676, 0
      %v879 = vsel %vm691, %v677, 0
      %v882 = vsel %vm691, %v678, 0
      %884 = vmatprep.subr.bf16.mxu0 0
      %885 = vmatpush1.bf16.msra.mxu0 %v687
      %886 = vmatprep.subr.bf16.mxu0 0
      %887 = vmatpush1.bf16.msra.mxu0 %v688
      %888 = vmatprep.subr.bf16.mxu0 0
      %889 = vmatpush1.bf16.msra.mxu0 0
      %890 = vmatprep.subr.bf16.mxu0 0
      %891 = vmatpush1.bf16.msra.mxu0 0
      %892 = vmatprep.subr.bf16.mxu0 0
      %893 = vmatpush1.bf16.msra.mxu0 0
      %894 = vmatprep.subr.bf16.mxu0 0
      %895 = vmatpush1.bf16.msra.mxu0 0
      %896 = vmatprep.subr.bf16.mxu0 0
      %897 = vmatpush1.bf16.msra.mxu0 0
      %898 = vmatprep.subr.bf16.mxu0 0
      %899 = vmatpush1.bf16.msra.mxu0 0
      %900 = vmatprep.subr.bf16.mxu0 0
      %901 = vmatpush1.bf16.msra.mxu0 0
      %902 = vmatprep.subr.bf16.mxu0 0
      %903 = vmatpush1.bf16.msra.mxu0 0
      %904 = vmatprep.subr.bf16.mxu0 0
      %905 = vmatpush1.bf16.msra.mxu0 0
      %906 = vmatprep.subr.bf16.mxu0 0
      %907 = vmatpush1.bf16.msra.mxu0 0
      %908 = vmatprep.subr.bf16.mxu0 0
      %909 = vmatpush1.bf16.msra.mxu0 0
      %910 = vmatprep.subr.bf16.mxu0 0
      %911 = vmatpush1.bf16.msra.mxu0 0
      %912 = vmatprep.subr.bf16.mxu0 0
      %913 = vmatpush1.bf16.msra.mxu0 0
      %914 = vmatprep.subr.bf16.mxu0 0
      %915 = vmatpush1.bf16.msra.mxu0 0
      %916 = vmatprep.mubr.bf16.mxu0 0
      %917 = vmatmul.mubr.bf16.gmra.mrb[0].mxu0 %v693
      %v918 = vpop.f32.mrb[0].mxu0
      %v919 = vadd.f32 0.0, %v918
      %v920 = vpop.f32.mrb[0].mxu0
      %v921 = vpop.f32.mrb[0].mxu0
      %v922 = vadd.f32 0.0, %v921
      %v923 = vpop.f32.mrb[0].mxu0
      %924 = vmatprep.mubr.bf16.mxu0 0
      %925 = vmatmul.mubr.bf16.gmra.mrb[0].mxu0 %v696
      %v926 = vpop.f32.mrb[0].mxu0
      %v927 = vadd.f32 0.0, %v926
      %v928 = vpop.f32.mrb[0].mxu0
      %v929 = vpop.f32.mrb[0].mxu0
      %v930 = vadd.f32 0.0, %v929
      %v931 = vpop.f32.mrb[0].mxu0
      %932 = vmatprep.mubr.bf16.mxu0 0
      %933 = vmatmul.mubr.bf16.gmra.mrb[0].mxu0 %v699
      %v934 = vpop.f32.mrb[0].mxu0
      %v935 = vadd.f32 0.0, %v934
      %v936 = vpop.f32.mrb[0].mxu0
      %v937 = vpop.f32.mrb[0].mxu0
      %v938 = vadd.f32 0.0, %v937
      %v939 = vpop.f32.mrb[0].mxu0
      %940 = vmatprep.mubr.bf16.mxu0 0
      %941 = vmatmul.mubr.bf16.gmra.mrb[0].mxu0 %v702
      %v942 = vpop.f32.mrb[0].mxu0
      %v943 = vadd.f32 0.0, %v942
      %v944 = vpop.f32.mrb[0].mxu0
      %v945 = vpop.f32.mrb[0].mxu0
      %v946 = vadd.f32 0.0, %v945
      %v947 = vpop.f32.mrb[0].mxu0
      %948 = vmatprep.mubr.bf16.mxu0 0
      %949 = vmatmul.mubr.bf16.gmra.mrb[0].mxu0 %v705
      %v950 = vpop.f32.mrb[0].mxu0
      %v951 = vadd.f32 0.0, %v950
      %v952 = vpop.f32.mrb[0].mxu0
      %v953 = vpop.f32.mrb[0].mxu0
      %v954 = vadd.f32 0.0, %v953
      %v955 = vpop.f32.mrb[0].mxu0
      %956 = vmatprep.mubr.bf16.mxu0 0
      %957 = vmatmul.mubr.bf16.gmra.mrb[0].mxu0 %v708
      %v958 = vpop.f32.mrb[0].mxu0
      %v959 = vadd.f32 0.0, %v958
      %v960 = vpop.f32.mrb[0].mxu0
      %v961 = vpop.f32.mrb[0].mxu0
      %v962 = vadd.f32 0.0, %v961
      %v963 = vpop.f32.mrb[0].mxu0
      %964 = vmatprep.mubr.bf16.mxu0 0
      %965 = vmatmul.mubr.bf16.gmra.mrb[0].mxu0 %v711
      %v966 = vpop.f32.mrb[0].mxu0
      %v967 = vadd.f32 0.0, %v966
      %v968 = vpop.f32.mrb[0].mxu0
      %v969 = vpop.f32.mrb[0].mxu0
      %v970 = vadd.f32 0.0, %v969
      %v971 = vpop.f32.mrb[0].mxu0
      %972 = vmatprep.mubr.bf16.mxu0 0
      %973 = vmatmul.mubr.bf16.gmra.mrb[0].mxu0 %v714
      %v974 = vpop.f32.mrb[0].mxu0
      %v975 = vadd.f32 0.0, %v974
      %v976 = vpop.f32.mrb[0].mxu0
      %v977 = vpop.f32.mrb[0].mxu0
      %v978 = vadd.f32 0.0, %v977
      %v979 = vpop.f32.mrb[0].mxu0
      %980 = vmatprep.mubr.bf16.mxu0 0
      %981 = vmatmul.mubr.bf16.gmra.mrb[0].mxu0 %v717
      %v982 = vpop.f32.mrb[0].mxu0
      %v983 = vadd.f32 0.0, %v982
      %v984 = vpop.f32.mrb[0].mxu0
      %v985 = vpop.f32.mrb[0].mxu0
      %v986 = vadd.f32 0.0, %v985
      %v987 = vpop.f32.mrb[0].mxu0
      %988 = vmatprep.mubr.bf16.mxu0 0
      %989 = vmatmul.mubr.bf16.gmra.mrb[0].mxu0 %v720
      %v990 = vpop.f32.mrb[0].mxu0
      %v991 = vadd.f32 0.0, %v990
      %v992 = vpop.f32.mrb[0].mxu0
      %v993 = vpop.f32.mrb[0].mxu0
      %v994 = vadd.f32 0.0, %v993
      %v995 = vpop.f32.mrb[0].mxu0
      %996 = vmatprep.mubr.bf16.mxu0 0
      %997 = vmatmul.mubr.bf16.gmra.mrb[0].mxu0 %v723
      %v998 = vpop.f32.mrb[0].mxu0
      %v999 = vadd.f32 0.0, %v998
      %v1000 = vpop.f32.mrb[0].mxu0
      %v1001 = vpop.f32.mrb[0].mxu0
      %v1002 = vadd.f32 0.0, %v1001
      %v1003 = vpop.f32.mrb[0].mxu0
      %1004 = vmatprep.mubr.bf16.mxu0 0
      %1005 = vmatmul.mubr.bf16.gmra.mrb[0].mxu0 %v726
      %v1006 = vpop.f32.mrb[0].mxu0
      %v1007 = vadd.f32 0.0, %v1006
      %v1008 = vpop.f32.mrb[0].mxu0
      %v1009 = vpop.f32.mrb[0].mxu0
      %v1010 = vadd.f32 0.0, %v1009
      %v1011 = vpop.f32.mrb[0].mxu0
      %1012 = vmatprep.mubr.bf16.mxu0 0
      %1013 = vmatmul.mubr.bf16.gmra.mrb[0].mxu0 %v729
      %v1014 = vpop.f32.mrb[0].mxu0
      %v1015 = vadd.f32 0.0, %v1014
      %v1016 = vpop.f32.mrb[0].mxu0
      %v1017 = vpop.f32.mrb[0].mxu0
      %v1018 = vadd.f32 0.0, %v1017
      %v1019 = vpop.f32.mrb[0].mxu0
      %1020 = vmatprep.mubr.bf16.mxu0 0
      %1021 = vmatmul.mubr.bf16.gmra.mrb[0].mxu0 %v732
      %v1022 = vpop.f32.mrb[0].mxu0
      %v1023 = vadd.f32 0.0, %v1022
      %v1024 = vpop.f32.mrb[0].mxu0
      %v1025 = vpop.f32.mrb[0].mxu0
      %v1026 = vadd.f32 0.0, %v1025
      %v1027 = vpop.f32.mrb[0].mxu0
      %1028 = vmatprep.mubr.bf16.mxu0 0
      %1029 = vmatmul.mubr.bf16.gmra.mrb[0].mxu0 %v735
      %v1030 = vpop.f32.mrb[0].mxu0
      %v1031 = vadd.f32 0.0, %v1030
      %v1032 = vpop.f32.mrb[0].mxu0
      %v1033 = vpop.f32.mrb[0].mxu0
      %v1034 = vadd.f32 0.0, %v1033
      %v1035 = vpop.f32.mrb[0].mxu0
      %1036 = vmatprep.mubr.bf16.mxu0 0
      %1037 = vmatmul.mubr.bf16.gmra.mrb[0].mxu0 %v738
      %v1038 = vpop.f32.mrb[0].mxu0
      %v1039 = vadd.f32 0.0, %v1038
      %v1040 = vpop.f32.mrb[0].mxu0
      %v1041 = vpop.f32.mrb[0].mxu0
      %v1042 = vadd.f32 0.0, %v1041
      %v1043 = vpop.f32.mrb[0].mxu0
      %1044 = vmatprep.mubr.bf16.mxu0 0
      %1045 = vmatmul.mubr.bf16.gmra.mrb[0].mxu0 %v741
      %v1046 = vpop.f32.mrb[0].mxu0
      %v1047 = vadd.f32 0.0, %v1046
      %v1048 = vpop.f32.mrb[0].mxu0
      %v1049 = vpop.f32.mrb[0].mxu0
      %v1050 = vadd.f32 0.0, %v1049
      %v1051 = vpop.f32.mrb[0].mxu0
      %1052 = vmatprep.mubr.bf16.mxu0 0
      %1053 = vmatmul.mubr.bf16.gmra.mrb[0].mxu0 %v744
      %v1054 = vpop.f32.mrb[0].mxu0
      %v1055 = vadd.f32 0.0, %v1054
      %v1056 = vpop.f32.mrb[0].mxu0
      %v1057 = vpop.f32.mrb[0].mxu0
      %v1058 = vadd.f32 0.0, %v1057
      %v1059 = vpop.f32.mrb[0].mxu0
      %1060 = vmatprep.mubr.bf16.mxu0 0
      %1061 = vmatmul.mubr.bf16.gmra.mrb[0].mxu0 %v747
      %v1062 = vpop.f32.mrb[0].mxu0
      %v1063 = vadd.f32 0.0, %v1062
      %v1064 = vpop.f32.mrb[0].mxu0
      %v1065 = vpop.f32.mrb[0].mxu0
      %v1066 = vadd.f32 0.0, %v1065
      %v1067 = vpop.f32.mrb[0].mxu0
      %1068 = vmatprep.mubr.bf16.mxu0 0
      %1069 = vmatmul.mubr.bf16.gmra.mrb[0].mxu0 %v750
      %v1070 = vpop.f32.mrb[0].mxu0
      %v1071 = vadd.f32 0.0, %v1070
      %v1072 = vpop.f32.mrb[0].mxu0
      %v1073 = vpop.f32.mrb[0].mxu0
      %v1074 = vadd.f32 0.0, %v1073
      %v1075 = vpop.f32.mrb[0].mxu0
      %1076 = vmatprep.mubr.bf16.mxu0 0
      %1077 = vmatmul.mubr.bf16.gmra.mrb[0].mxu0 %v753
      %v1078 = vpop.f32.mrb[0].mxu0
      %v1079 = vadd.f32 0.0, %v1078
      %v1080 = vpop.f32.mrb[0].mxu0
      %v1081 = vpop.f32.mrb[0].mxu0
      %v1082 = vadd.f32 0.0, %v1081
      %v1083 = vpop.f32.mrb[0].mxu0
      %1084 = vmatprep.mubr.bf16.mxu0 0
      %1085 = vmatmul.mubr.bf16.gmra.mrb[0].mxu0 %v756
      %v1086 = vpop.f32.mrb[0].mxu0
      %v1087 = vadd.f32 0.0, %v1086
      %v1088 = vpop.f32.mrb[0].mxu0
      %v1089 = vpop.f32.mrb[0].mxu0
      %v1090 = vadd.f32 0.0, %v1089
      %v1091 = vpop.f32.mrb[0].mxu0
      %1092 = vmatprep.mubr.bf16.mxu0 0
      %1093 = vmatmul.mubr.bf16.gmra.mrb[0].mxu0 %v759
      %v1094 = vpop.f32.mrb[0].mxu0
      %v1095 = vadd.f32 0.0, %v1094
      %v1096 = vpop.f32.mrb[0].mxu0
      %v1097 = vpop.f32.mrb[0].mxu0
      %v1098 = vadd.f32 0.0, %v1097
      %v1099 = vpop.f32.mrb[0].mxu0
      %1100 = vmatprep.mubr.bf16.mxu0 0
      %1101 = vmatmul.mubr.bf16.gmra.mrb[0].mxu0 %v762
      %v1102 = vpop.f32.mrb[0].mxu0
      %v1103 = vadd.f32 0.0, %v1102
      %v1104 = vpop.f32.mrb[0].mxu0
      %v1105 = vpop.f32.mrb[0].mxu0
      %v1106 = vadd.f32 0.0, %v1105
      %v1107 = vpop.f32.mrb[0].mxu0
      %1108 = vmatprep.mubr.bf16.mxu0 0
      %1109 = vmatmul.mubr.bf16.gmra.mrb[0].mxu0 %v765
      %v1110 = vpop.f32.mrb[0].mxu0
      %v1111 = vadd.f32 0.0, %v1110
      %v1112 = vpop.f32.mrb[0].mxu0
      %v1113 = vpop.f32.mrb[0].mxu0
      %v1114 = vadd.f32 0.0, %v1113
      %v1115 = vpop.f32.mrb[0].mxu0
      %1116 = vmatprep.mubr.bf16.mxu0 0
      %1117 = vmatmul.mubr.bf16.gmra.mrb[0].mxu0 %v768
      %v1118 = vpop.f32.mrb[0].mxu0
      %v1119 = vadd.f32 0.0, %v1118
      %v1120 = vpop.f32.mrb[0].mxu0
      %v1121 = vpop.f32.mrb[0].mxu0
      %v1122 = vadd.f32 0.0, %v1121
      %v1123 = vpop.f32.mrb[0].mxu0
      %1124 = vmatprep.mubr.bf16.mxu0 0
      %1125 = vmatmul.mubr.bf16.gmra.mrb[0].mxu0 %v771
      %v1126 = vpop.f32.mrb[0].mxu0
      %v1127 = vadd.f32 0.0, %v1126
      %v1128 = vpop.f32.mrb[0].mxu0
      %v1129 = vpop.f32.mrb[0].mxu0
      %v1130 = vadd.f32 0.0, %v1129
      %v1131 = vpop.f32.mrb[0].mxu0
      %1132 = vmatprep.mubr.bf16.mxu0 0
      %1133 = vmatmul.mubr.bf16.gmra.mrb[0].mxu0 %v774
      %v1134 = vpop.f32.mrb[0].mxu0
      %v1135 = vadd.f32 0.0, %v1134
      %v1136 = vpop.f32.mrb[0].mxu0
      %v1137 = vpop.f32.mrb[0].mxu0
      %v1138 = vadd.f32 0.0, %v1137
      %v1139 = vpop.f32.mrb[0].mxu0
      %1140 = vmatprep.mubr.bf16.mxu0 0
      %1141 = vmatmul.mubr.bf16.gmra.mrb[0].mxu0 %v777
      %v1142 = vpop.f32.mrb[0].mxu0
      %v1143 = vadd.f32 0.0, %v1142
      %v1144 = vpop.f32.mrb[0].mxu0
      %v1145 = vpop.f32.mrb[0].mxu0
      %v1146 = vadd.f32 0.0, %v1145
      %v1147 = vpop.f32.mrb[0].mxu0
      %1148 = vmatprep.mubr.bf16.mxu0 0
      %1149 = vmatmul.mubr.bf16.gmra.mrb[0].mxu0 %v780
      %v1150 = vpop.f32.mrb[0].mxu0
      %v1151 = vadd.f32 0.0, %v1150
      %v1152 = vpop.f32.mrb[0].mxu0
      %v1153 = vpop.f32.mrb[0].mxu0
      %v1154 = vadd.f32 0.0, %v1153
      %v1155 = vpop.f32.mrb[0].mxu0
      %1156 = vmatprep.mubr.bf16.mxu0 0
      %1157 = vmatmul.mubr.bf16.gmra.mrb[0].mxu0 %v783
      %v1158 = vpop.f32.mrb[0].mxu0
      %v1159 = vadd.f32 0.0, %v1158
      %v1160 = vpop.f32.mrb[0].mxu0
      %v1161 = vpop.f32.mrb[0].mxu0
      %v1162 = vadd.f32 0.0, %v1161
      %v1163 = vpop.f32.mrb[0].mxu0
      %1164 = vmatprep.mubr.bf16.mxu0 0
      %1165 = vmatmul.mubr.bf16.gmra.mrb[0].mxu0 %v786
      %v1166 = vpop.f32.mrb[0].mxu0
      %v1167 = vadd.f32 0.0, %v1166
      %v1168 = vpop.f32.mrb[0].mxu0
      %v1169 = vpop.f32.mrb[0].mxu0
      %v1170 = vadd.f32 0.0, %v1169
      %v1171 = vpop.f32.mrb[0].mxu0
      %1172 = vmatprep.mubr.bf16.mxu0 0
      %1173 = vmatmul.mubr.bf16.gmra.mrb[0].mxu0 %v789
      %v1174 = vpop.f32.mrb[0].mxu0
      %v1175 = vadd.f32 0.0, %v1174
      %v1176 = vpop.f32.mrb[0].mxu0
      %v1177 = vpop.f32.mrb[0].mxu0
      %v1178 = vadd.f32 0.0, %v1177
      %v1179 = vpop.f32.mrb[0].mxu0
      %1180 = vmatprep.mubr.bf16.mxu0 0
      %1181 = vmatmul.mubr.bf16.gmra.mrb[0].mxu0 %v792
      %v1182 = vpop.f32.mrb[0].mxu0
      %v1183 = vadd.f32 0.0, %v1182
      %v1184 = vpop.f32.mrb[0].mxu0
      %v1185 = vpop.f32.mrb[0].mxu0
      %v1186 = vadd.f32 0.0, %v1185
      %v1187 = vpop.f32.mrb[0].mxu0
      %1188 = vmatprep.mubr.bf16.mxu0 0
      %1189 = vmatmul.mubr.bf16.gmra.mrb[0].mxu0 %v795
      %v1190 = vpop.f32.mrb[0].mxu0
      %v1191 = vadd.f32 0.0, %v1190
      %v1192 = vpop.f32.mrb[0].mxu0
      %v1193 = vpop.f32.mrb[0].mxu0
      %v1194 = vadd.f32 0.0, %v1193
      %v1195 = vpop.f32.mrb[0].mxu0
      %1196 = vmatprep.mubr.bf16.mxu0 0
      %1197 = vmatmul.mubr.bf16.gmra.mrb[0].mxu0 %v798
      %v1198 = vpop.f32.mrb[0].mxu0
      %v1199 = vadd.f32 0.0, %v1198
      %v1200 = vpop.f32.mrb[0].mxu0
      %v1201 = vpop.f32.mrb[0].mxu0
      %v1202 = vadd.f32 0.0, %v1201
      %v1203 = vpop.f32.mrb[0].mxu0
      %1204 = vmatprep.mubr.bf16.mxu0 0
      %1205 = vmatmul.mubr.bf16.gmra.mrb[0].mxu0 %v801
      %v1206 = vpop.f32.mrb[0].mxu0
      %v1207 = vadd.f32 0.0, %v1206
      %v1208 = vpop.f32.mrb[0].mxu0
      %v1209 = vpop.f32.mrb[0].mxu0
      %v1210 = vadd.f32 0.0, %v1209
      %v1211 = vpop.f32.mrb[0].mxu0
      %1212 = vmatprep.mubr.bf16.mxu0 0
      %1213 = vmatmul.mubr.bf16.gmra.mrb[0].mxu0 %v804
      %v1214 = vpop.f32.mrb[0].mxu0
      %v1215 = vadd.f32 0.0, %v1214
      %v1216 = vpop.f32.mrb[0].mxu0
      %v1217 = vpop.f32.mrb[0].mxu0
      %v1218 = vadd.f32 0.0, %v1217
      %v1219 = vpop.f32.mrb[0].mxu0
      %1220 = vmatprep.mubr.bf16.mxu0 0
      %1221 = vmatmul.mubr.bf16.gmra.mrb[0].mxu0 %v807
      %v1222 = vpop.f32.mrb[0].mxu0
      %v1223 = vadd.f32 0.0, %v1222
      %v1224 = vpop.f32.mrb[0].mxu0
      %v1225 = vpop.f32.mrb[0].mxu0
      %v1226 = vadd.f32 0.0, %v1225
      %v1227 = vpop.f32.mrb[0].mxu0
      %1228 = vmatprep.mubr.bf16.mxu0 0
      %1229 = vmatmul.mubr.bf16.gmra.mrb[0].mxu0 %v810
      %v1230 = vpop.f32.mrb[0].mxu0
      %v1231 = vadd.f32 0.0, %v1230
      %v1232 = vpop.f32.mrb[0].mxu0
      %v1233 = vpop.f32.mrb[0].mxu0
      %v1234 = vadd.f32 0.0, %v1233
      %v1235 = vpop.f32.mrb[0].mxu0
      %1236 = vmatprep.mubr.bf16.mxu0 0
      %1237 = vmatmul.mubr.bf16.gmra.mrb[0].mxu0 %v813
      %v1238 = vpop.f32.mrb[0].mxu0
      %v1239 = vadd.f32 0.0, %v1238
      %v1240 = vpop.f32.mrb[0].mxu0
      %v1241 = vpop.f32.mrb[0].mxu0
      %v1242 = vadd.f32 0.0, %v1241
      %v1243 = vpop.f32.mrb[0].mxu0
      %1244 = vmatprep.mubr.bf16.mxu0 0
      %1245 = vmatmul.mubr.bf16.gmra.mrb[0].mxu0 %v816
      %v1246 = vpop.f32.mrb[0].mxu0
      %v1247 = vadd.f32 0.0, %v1246
      %v1248 = vpop.f32.mrb[0].mxu0
      %v1249 = vpop.f32.mrb[0].mxu0
      %v1250 = vadd.f32 0.0, %v1249
      %v1251 = vpop.f32.mrb[0].mxu0
      %1252 = vmatprep.mubr.bf16.mxu0 0
      %1253 = vmatmul.mubr.bf16.gmra.mrb[0].mxu0 %v819
      %v1254 = vpop.f32.mrb[0].mxu0
      %v1255 = vadd.f32 0.0, %v1254
      %v1256 = vpop.f32.mrb[0].mxu0
      %v1257 = vpop.f32.mrb[0].mxu0
      %v1258 = vadd.f32 0.0, %v1257
      %v1259 = vpop.f32.mrb[0].mxu0
      %1260 = vmatprep.mubr.bf16.mxu0 0
      %1261 = vmatmul.mubr.bf16.gmra.mrb[0].mxu0 %v822
      %v1262 = vpop.f32.mrb[0].mxu0
      %v1263 = vadd.f32 0.0, %v1262
      %v1264 = vpop.f32.mrb[0].mxu0
      %v1265 = vpop.f32.mrb[0].mxu0
      %v1266 = vadd.f32 0.0, %v1265
      %v1267 = vpop.f32.mrb[0].mxu0
      %1268 = vmatprep.mubr.bf16.mxu0 0
      %1269 = vmatmul.mubr.bf16.gmra.mrb[0].mxu0 %v825
      %v1270 = vpop.f32.mrb[0].mxu0
      %v1271 = vadd.f32 0.0, %v1270
      %v1272 = vpop.f32.mrb[0].mxu0
      %v1273 = vpop.f32.mrb[0].mxu0
      %v1274 = vadd.f32 0.0, %v1273
      %v1275 = vpop.f32.mrb[0].mxu0
      %1276 = vmatprep.mubr.bf16.mxu0 0
      %1277 = vmatmul.mubr.bf16.gmra.mrb[0].mxu0 %v828
      %v1278 = vpop.f32.mrb[0].mxu0
      %v1279 = vadd.f32 0.0, %v1278
      %v1280 = vpop.f32.mrb[0].mxu0
      %v1281 = vpop.f32.mrb[0].mxu0
      %v1282 = vadd.f32 0.0, %v1281
      %v1283 = vpop.f32.mrb[0].mxu0
      %1284 = vmatprep.mubr.bf16.mxu0 0
      %1285 = vmatmul.mubr.bf16.gmra.mrb[0].mxu0 %v831
      %v1286 = vpop.f32.mrb[0].mxu0
      %v1287 = vadd.f32 0.0, %v1286
      %v1288 = vpop.f32.mrb[0].mxu0
      %v1289 = vpop.f32.mrb[0].mxu0
      %v1290 = vadd.f32 0.0, %v1289
      %v1291 = vpop.f32.mrb[0].mxu0
      %1292 = vmatprep.mubr.bf16.mxu0 0
      %1293 = vmatmul.mubr.bf16.gmra.mrb[0].mxu0 %v834
      %v1294 = vpop.f32.mrb[0].mxu0
      %v1295 = vadd.f32 0.0, %v1294
      %v1296 = vpop.f32.mrb[0].mxu0
      %v1297 = vpop.f32.mrb[0].mxu0
      %v1298 = vadd.f32 0.0, %v1297
      %v1299 = vpop.f32.mrb[0].mxu0
      %1300 = vmatprep.mubr.bf16.mxu0 0
      %1301 = vmatmul.mubr.bf16.gmra.mrb[0].mxu0 %v837
      %v1302 = vpop.f32.mrb[0].mxu0
      %v1303 = vadd.f32 0.0, %v1302
      %v1304 = vpop.f32.mrb[0].mxu0
      %v1305 = vpop.f32.mrb[0].mxu0
      %v1306 = vadd.f32 0.0, %v1305
      %v1307 = vpop.f32.mrb[0].mxu0
      %1308 = vmatprep.mubr.bf16.mxu0 0
      %1309 = vmatmul.mubr.bf16.gmra.mrb[0].mxu0 %v840
      %v1310 = vpop.f32.mrb[0].mxu0
      %v1311 = vadd.f32 0.0, %v1310
      %v1312 = vpop.f32.mrb[0].mxu0
      %v1313 = vpop.f32.mrb[0].mxu0
      %v1314 = vadd.f32 0.0, %v1313
      %v1315 = vpop.f32.mrb[0].mxu0
      %1316 = vmatprep.mubr.bf16.mxu0 0
      %1317 = vmatmul.mubr.bf16.gmra.mrb[0].mxu0 %v843
      %v1318 = vpop.f32.mrb[0].mxu0
      %v1319 = vadd.f32 0.0, %v1318
      %v1320 = vpop.f32.mrb[0].mxu0
      %v1321 = vpop.f32.mrb[0].mxu0
      %v1322 = vadd.f32 0.0, %v1321
      %v1323 = vpop.f32.mrb[0].mxu0
      %1324 = vmatprep.mubr.bf16.mxu0 0
      %1325 = vmatmul.mubr.bf16.gmra.mrb[0].mxu0 %v846
      %v1326 = vpop.f32.mrb[0].mxu0
      %v1327 = vadd.f32 0.0, %v1326
      %v1328 = vpop.f32.mrb[0].mxu0
      %v1329 = vpop.f32.mrb[0].mxu0
      %v1330 = vadd.f32 0.0, %v1329
      %v1331 = vpop.f32.mrb[0].mxu0
      %1332 = vmatprep.mubr.bf16.mxu0 0
      %1333 = vmatmul.mubr.bf16.gmra.mrb[0].mxu0 %v849
      %v1334 = vpop.f32.mrb[0].mxu0
      %v1335 = vadd.f32 0.0, %v1334
      %v1336 = vpop.f32.mrb[0].mxu0
      %v1337 = vpop.f32.mrb[0].mxu0
      %v1338 = vadd.f32 0.0, %v1337
      %v1339 = vpop.f32.mrb[0].mxu0
      %1340 = vmatprep.mubr.bf16.mxu0 0
      %1341 = vmatmul.mubr.bf16.gmra.mrb[0].mxu0 %v852
      %v1342 = vpop.f32.mrb[0].mxu0
      %v1343 = vadd.f32 0.0, %v1342
      %v1344 = vpop.f32.mrb[0].mxu0
      %v1345 = vpop.f32.mrb[0].mxu0
      %v1346 = vadd.f32 0.0, %v1345
      %v1347 = vpop.f32.mrb[0].mxu0
      %1348 = vmatprep.mubr.bf16.mxu0 0
      %1349 = vmatmul.mubr.bf16.gmra.mrb[0].mxu0 %v855
      %v1350 = vpop.f32.mrb[0].mxu0
      %v1351 = vadd.f32 0.0, %v1350
      %v1352 = vpop.f32.mrb[0].mxu0
      %v1353 = vpop.f32.mrb[0].mxu0
      %v1354 = vadd.f32 0.0, %v1353
      %v1355 = vpop.f32.mrb[0].mxu0
      %1356 = vmatprep.mubr.bf16.mxu0 0
      %1357 = vmatmul.mubr.bf16.gmra.mrb[0].mxu0 %v858
      %v1358 = vpop.f32.mrb[0].mxu0
      %v1359 = vadd.f32 0.0, %v1358
      %v1360 = vpop.f32.mrb[0].mxu0
      %v1361 = vpop.f32.mrb[0].mxu0
      %v1362 = vadd.f32 0.0, %v1361
      %v1363 = vpop.f32.mrb[0].mxu0
      %1364 = vmatprep.mubr.bf16.mxu0 0
      %1365 = vmatmul.mubr.bf16.gmra.mrb[0].mxu0 %v861
      %v1366 = vpop.f32.mrb[0].mxu0
      %v1367 = vadd.f32 0.0, %v1366
      %v1368 = vpop.f32.mrb[0].mxu0
      %v1369 = vpop.f32.mrb[0].mxu0
      %v1370 = vadd.f32 0.0, %v1369
      %v1371 = vpop.f32.mrb[0].mxu0
      %1372 = vmatprep.mubr.bf16.mxu0 0
      %1373 = vmatmul.mubr.bf16.gmra.mrb[0].mxu0 %v864
      %v1374 = vpop.f32.mrb[0].mxu0
      %v1375 = vadd.f32 0.0, %v1374
      %v1376 = vpop.f32.mrb[0].mxu0
      %v1377 = vpop.f32.mrb[0].mxu0
      %v1378 = vadd.f32 0.0, %v1377
      %v1379 = vpop.f32.mrb[0].mxu0
      %1380 = vmatprep.mubr.bf16.mxu0 0
      %1381 = vmatmul.mubr.bf16.gmra.mrb[0].mxu0 %v867
      %v1382 = vpop.f32.mrb[0].mxu0
      %v1383 = vadd.f32 0.0, %v1382
      %v1384 = vpop.f32.mrb[0].mxu0
      %v1385 = vpop.f32.mrb[0].mxu0
      %v1386 = vadd.f32 0.0, %v1385
      %v1387 = vpop.f32.mrb[0].mxu0
      %1388 = vmatprep.mubr.bf16.mxu0 0
      %1389 = vmatmul.mubr.bf16.gmra.mrb[0].mxu0 %v870
      %v1390 = vpop.f32.mrb[0].mxu0
      %v1391 = vadd.f32 0.0, %v1390
      %v1392 = vpop.f32.mrb[0].mxu0
      %v1393 = vpop.f32.mrb[0].mxu0
      %v1394 = vadd.f32 0.0, %v1393
      %v1395 = vpop.f32.mrb[0].mxu0
      %1396 = vmatprep.mubr.bf16.mxu0 0
      %1397 = vmatmul.mubr.bf16.gmra.mrb[0].mxu0 %v873
      %v1398 = vpop.f32.mrb[0].mxu0
      %v1399 = vadd.f32 0.0, %v1398
      %v1400 = vpop.f32.mrb[0].mxu0
      %v1401 = vpop.f32.mrb[0].mxu0
      %v1402 = vadd.f32 0.0, %v1401
      %v1403 = vpop.f32.mrb[0].mxu0
      %1404 = vmatprep.mubr.bf16.mxu0 0
      %1405 = vmatmul.mubr.bf16.gmra.mrb[0].mxu0 %v876
      %v1406 = vpop.f32.mrb[0].mxu0
      %v1407 = vadd.f32 0.0, %v1406
      %v1408 = vpop.f32.mrb[0].mxu0
      %v1409 = vpop.f32.mrb[0].mxu0
      %v1410 = vadd.f32 0.0, %v1409
      %v1411 = vpop.f32.mrb[0].mxu0
      %1412 = vmatprep.mubr.bf16.mxu0 0
      %1413 = vmatmul.mubr.bf16.gmra.mrb[0].mxu0 %v879
      %v1414 = vpop.f32.mrb[0].mxu0
      %v1415 = vadd.f32 0.0, %v1414
      %v1416 = vpop.f32.mrb[0].mxu0
      %v1417 = vpop.f32.mrb[0].mxu0
      %v1418 = vadd.f32 0.0, %v1417
      %v1419 = vpop.f32.mrb[0].mxu0
      %1420 = vmatprep.mubr.bf16.mxu0 0
      %1421 = vmatmul.mubr.bf16.gmra.mrb[0].mxu0 %v882
      %v1422 = vpop.f32.mrb[0].mxu0
      %v1423 = vadd.f32 0.0, %v1422
      %v1424 = vpop.f32.mrb[0].mxu0
      %v1425 = vpop.f32.mrb[0].mxu0
      %v1426 = vadd.f32 0.0, %v1425
      %v1427 = vpop.f32.mrb[0].mxu0
      %1428 = vdwg.mxu0
      %v1429 = vpack.c.bf16 %v922, %v919
      %v1430 = vpack.c.bf16 %v930, %v927
      %v1431 = vpack.c.bf16 %v938, %v935
      %v1432 = vpack.c.bf16 %v946, %v943
      %v1433 = vpack.c.bf16 %v954, %v951
      %v1434 = vpack.c.bf16 %v962, %v959
      %v1435 = vpack.c.bf16 %v970, %v967
      %v1436 = vpack.c.bf16 %v978, %v975
      %v1437 = vpack.c.bf16 %v986, %v983
      %v1438 = vpack.c.bf16 %v994, %v991
      %v1439 = vpack.c.bf16 %v1002, %v999
      %v1440 = vpack.c.bf16 %v1010, %v1007
      %v1441 = vpack.c.bf16 %v1018, %v1015
      %v1442 = vpack.c.bf16 %v1026, %v1023
      %v1443 = vpack.c.bf16 %v1034, %v1031
      %v1444 = vpack.c.bf16 %v1042, %v1039
      %v1445 = vpack.c.bf16 %v1050, %v1047
      %v1446 = vpack.c.bf16 %v1058, %v1055
      %v1447 = vpack.c.bf16 %v1066, %v1063
      %v1448 = vpack.c.bf16 %v1074, %v1071
      %v1449 = vpack.c.bf16 %v1082, %v1079
      %v1450 = vpack.c.bf16 %v1090, %v1087
      %v1451 = vpack.c.bf16 %v1098, %v1095
      %v1452 = vpack.c.bf16 %v1106, %v1103
      %v1453 = vpack.c.bf16 %v1114, %v1111
      %v1454 = vpack.c.bf16 %v1122, %v1119
      %v1455 = vpack.c.bf16 %v1130, %v1127
      %v1456 = vpack.c.bf16 %v1138, %v1135
      %v1457 = vpack.c.bf16 %v1146, %v1143
      %v1458 = vpack.c.bf16 %v1154, %v1151
      %v1459 = vpack.c.bf16 %v1162, %v1159
      %v1460 = vpack.c.bf16 %v1170, %v1167
      %v1461 = vpack.c.bf16 %v1178, %v1175
      %v1462 = vpack.c.bf16 %v1186, %v1183
      %v1463 = vpack.c.bf16 %v1194, %v1191
      %v1464 = vpack.c.bf16 %v1202, %v1199
      %v1465 = vpack.c.bf16 %v1210, %v1207
      %v1466 = vpack.c.bf16 %v1218, %v1215
      %v1467 = vpack.c.bf16 %v1226, %v1223
      %v1468 = vpack.c.bf16 %v1234, %v1231
      %v1469 = vpack.c.bf16 %v1242, %v1239
      %v1470 = vpack.c.bf16 %v1250, %v1247
      %v1471 = vpack.c.bf16 %v1258, %v1255
      %v1472 = vpack.c.bf16 %v1266, %v1263
      %v1473 = vpack.c.bf16 %v1274, %v1271
      %v1474 = vpack.c.bf16 %v1282, %v1279
      %v1475 = vpack.c.bf16 %v1290, %v1287
      %v1476 = vpack.c.bf16 %v1298, %v1295
      %v1477 = vpack.c.bf16 %v1306, %v1303
      %v1478 = vpack.c.bf16 %v1314, %v1311
      %v1479 = vpack.c.bf16 %v1322, %v1319
      %v1480 = vpack.c.bf16 %v1330, %v1327
      %v1481 = vpack.c.bf16 %v1338, %v1335
      %v1482 = vpack.c.bf16 %v1346, %v1343
      %v1483 = vpack.c.bf16 %v1354, %v1351
      %v1484 = vpack.c.bf16 %v1362, %v1359
      %v1485 = vpack.c.bf16 %v1370, %v1367
      %v1486 = vpack.c.bf16 %v1378, %v1375
      %v1487 = vpack.c.bf16 %v1386, %v1383
      %v1488 = vpack.c.bf16 %v1394, %v1391
      %v1489 = vpack.c.bf16 %v1402, %v1399
      %v1490 = vpack.c.bf16 %v1410, %v1407
      %v1491 = vpack.c.bf16 %v1418, %v1415
      %v1492 = vpack.c.bf16 %v1426, %v1423
      %v1557 = vunpack.c.l.b16 %v1429
      %v1558 = vunpack.c.h.b16 %v1429
      %v1559 = vunpack.c.l.b16 %v1430
      %v1560 = vunpack.c.h.b16 %v1430
      %v1561 = vunpack.c.l.b16 %v1431
      %v1562 = vunpack.c.h.b16 %v1431
      %v1563 = vunpack.c.l.b16 %v1432
      %v1564 = vunpack.c.h.b16 %v1432
      %v1565 = vunpack.c.l.b16 %v1433
      %v1566 = vunpack.c.h.b16 %v1433
      %v1567 = vunpack.c.l.b16 %v1434
      %v1568 = vunpack.c.h.b16 %v1434
      %v1569 = vunpack.c.l.b16 %v1435
      %v1570 = vunpack.c.h.b16 %v1435
      %v1571 = vunpack.c.l.b16 %v1436
      %v1572 = vunpack.c.h.b16 %v1436
      %v1573 = vunpack.c.l.b16 %v1437
      %v1574 = vunpack.c.h.b16 %v1437
      %v1575 = vunpack.c.l.b16 %v1438
      %v1576 = vunpack.c.h.b16 %v1438
      %v1577 = vunpack.c.l.b16 %v1439
      %v1578 = vunpack.c.h.b16 %v1439
      %v1579 = vunpack.c.l.b16 %v1440
      %v1580 = vunpack.c.h.b16 %v1440
      %v1581 = vunpack.c.l.b16 %v1441
      %v1582 = vunpack.c.h.b16 %v1441
      %v1583 = vunpack.c.l.b16 %v1442
      %v1584 = vunpack.c.h.b16 %v1442
      %v1585 = vunpack.c.l.b16 %v1443
      %v1586 = vunpack.c.h.b16 %v1443
      %v1587 = vunpack.c.l.b16 %v1444
      %v1588 = vunpack.c.h.b16 %v1444
      %v1589 = vunpack.c.l.b16 %v1445
      %v1590 = vunpack.c.h.b16 %v1445
      %v1591 = vunpack.c.l.b16 %v1446
      %v1592 = vunpack.c.h.b16 %v1446
      %v1593 = vunpack.c.l.b16 %v1447
      %v1594 = vunpack.c.h.b16 %v1447
      %v1595 = vunpack.c.l.b16 %v1448
      %v1596 = vunpack.c.h.b16 %v1448
      %v1597 = vunpack.c.l.b16 %v1449
      %v1598 = vunpack.c.h.b16 %v1449
      %v1599 = vunpack.c.l.b16 %v1450
      %v1600 = vunpack.c.h.b16 %v1450
      %v1601 = vunpack.c.l.b16 %v1451
      %v1602 = vunpack.c.h.b16 %v1451
      %v1603 = vunpack.c.l.b16 %v1452
      %v1604 = vunpack.c.h.b16 %v1452
      %v1605 = vunpack.c.l.b16 %v1453
      %v1606 = vunpack.c.h.b16 %v1453
      %v1607 = vunpack.c.l.b16 %v1454
      %v1608 = vunpack.c.h.b16 %v1454
      %v1609 = vunpack.c.l.b16 %v1455
      %v1610 = vunpack.c.h.b16 %v1455
      %v1611 = vunpack.c.l.b16 %v1456
      %v1612 = vunpack.c.h.b16 %v1456
      %v1613 = vunpack.c.l.b16 %v1457
      %v1614 = vunpack.c.h.b16 %v1457
      %v1615 = vunpack.c.l.b16 %v1458
      %v1616 = vunpack.c.h.b16 %v1458
      %v1617 = vunpack.c.l.b16 %v1459
      %v1618 = vunpack.c.h.b16 %v1459
      %v1619 = vunpack.c.l.b16 %v1460
      %v1620 = vunpack.c.h.b16 %v1460
      %v1621 = vunpack.c.l.b16 %v1461
      %v1622 = vunpack.c.h.b16 %v1461
      %v1623 = vunpack.c.l.b16 %v1462
      %v1624 = vunpack.c.h.b16 %v1462
      %v1625 = vunpack.c.l.b16 %v1463
      %v1626 = vunpack.c.h.b16 %v1463
      %v1627 = vunpack.c.l.b16 %v1464
      %v1628 = vunpack.c.h.b16 %v1464
      %v1629 = vunpack.c.l.b16 %v1465
      %v1630 = vunpack.c.h.b16 %v1465
      %v1631 = vunpack.c.l.b16 %v1466
      %v1632 = vunpack.c.h.b16 %v1466
      %v1633 = vunpack.c.l.b16 %v1467
      %v1634 = vunpack.c.h.b16 %v1467
      %v1635 = vunpack.c.l.b16 %v1468
      %v1636 = vunpack.c.h.b16 %v1468
      %v1637 = vunpack.c.l.b16 %v1469
      %v1638 = vunpack.c.h.b16 %v1469
      %v1639 = vunpack.c.l.b16 %v1470
      %v1640 = vunpack.c.h.b16 %v1470
      %v1641 = vunpack.c.l.b16 %v1471
      %v1642 = vunpack.c.h.b16 %v1471
      %v1643 = vunpack.c.l.b16 %v1472
      %v1644 = vunpack.c.h.b16 %v1472
      %v1645 = vunpack.c.l.b16 %v1473
      %v1646 = vunpack.c.h.b16 %v1473
      %v1647 = vunpack.c.l.b16 %v1474
      %v1648 = vunpack.c.h.b16 %v1474
      %v1649 = vunpack.c.l.b16 %v1475
      %v1650 = vunpack.c.h.b16 %v1475
      %v1651 = vunpack.c.l.b16 %v1476
      %v1652 = vunpack.c.h.b16 %v1476
      %v1653 = vunpack.c.l.b16 %v1477
      %v1654 = vunpack.c.h.b16 %v1477
      %v1655 = vunpack.c.l.b16 %v1478
      %v1656 = vunpack.c.h.b16 %v1478
      %v1657 = vunpack.c.l.b16 %v1479
      %v1658 = vunpack.c.h.b16 %v1479
      %v1659 = vunpack.c.l.b16 %v1480
      %v1660 = vunpack.c.h.b16 %v1480
      %v1661 = vunpack.c.l.b16 %v1481
      %v1662 = vunpack.c.h.b16 %v1481
      %v1663 = vunpack.c.l.b16 %v1482
      %v1664 = vunpack.c.h.b16 %v1482
      %v1665 = vunpack.c.l.b16 %v1483
      %v1666 = vunpack.c.h.b16 %v1483
      %v1667 = vunpack.c.l.b16 %v1484
      %v1668 = vunpack.c.h.b16 %v1484
      %v1669 = vunpack.c.l.b16 %v1485
      %v1670 = vunpack.c.h.b16 %v1485
      %v1671 = vunpack.c.l.b16 %v1486
      %v1672 = vunpack.c.h.b16 %v1486
      %v1673 = vunpack.c.l.b16 %v1487
      %v1674 = vunpack.c.h.b16 %v1487
      %v1675 = vunpack.c.l.b16 %v1488
      %v1676 = vunpack.c.h.b16 %v1488
      %v1677 = vunpack.c.l.b16 %v1489
      %v1678 = vunpack.c.h.b16 %v1489
      %v1679 = vunpack.c.l.b16 %v1490
      %v1680 = vunpack.c.h.b16 %v1490
      %v1681 = vunpack.c.l.b16 %v1491
      %v1682 = vunpack.c.h.b16 %v1491
      %v1683 = vunpack.c.l.b16 %v1492
      %v1684 = vunpack.c.h.b16 %v1492
      %v1685 = vpack.c.b16 %v1557, %v1557
      %v1686 = vpack.c.b16 %v1558, %v1558
      %v1687 = vpack.c.b16 %v1559, %v1559
      %v1688 = vpack.c.b16 %v1560, %v1560
      %v1689 = vpack.c.b16 %v1561, %v1561
      %v1690 = vpack.c.b16 %v1562, %v1562
      %v1691 = vpack.c.b16 %v1563, %v1563
      %v1692 = vpack.c.b16 %v1564, %v1564
      %v1693 = vpack.c.b16 %v1565, %v1565
      %v1694 = vpack.c.b16 %v1566, %v1566
      %v1695 = vpack.c.b16 %v1567, %v1567
      %v1696 = vpack.c.b16 %v1568, %v1568
      %v1697 = vpack.c.b16 %v1569, %v1569
      %v1698 = vpack.c.b16 %v1570, %v1570
      %v1699 = vpack.c.b16 %v1571, %v1571
      %v1700 = vpack.c.b16 %v1572, %v1572
      %v1701 = vpack.c.b16 %v1573, %v1573
      %v1702 = vpack.c.b16 %v1574, %v1574
      %v1703 = vpack.c.b16 %v1575, %v1575
      %v1704 = vpack.c.b16 %v1576, %v1576
      %v1705 = vpack.c.b16 %v1577, %v1577
      %v1706 = vpack.c.b16 %v1578, %v1578
      %v1707 = vpack.c.b16 %v1579, %v1579
      %v1708 = vpack.c.b16 %v1580, %v1580
      %v1709 = vpack.c.b16 %v1581, %v1581
      %v1710 = vpack.c.b16 %v1582, %v1582
      %v1711 = vpack.c.b16 %v1583, %v1583
      %v1712 = vpack.c.b16 %v1584, %v1584
      %v1713 = vpack.c.b16 %v1585, %v1585
      %v1714 = vpack.c.b16 %v1586, %v1586
      %v1715 = vpack.c.b16 %v1587, %v1587
      %v1716 = vpack.c.b16 %v1588, %v1588
      %v1717 = vpack.c.b16 %v1589, %v1589
      %v1718 = vpack.c.b16 %v1590, %v1590
      %v1719 = vpack.c.b16 %v1591, %v1591
      %v1720 = vpack.c.b16 %v1592, %v1592
      %v1721 = vpack.c.b16 %v1593, %v1593
      %v1722 = vpack.c.b16 %v1594, %v1594
      %v1723 = vpack.c.b16 %v1595, %v1595
      %v1724 = vpack.c.b16 %v1596, %v1596
      %v1725 = vpack.c.b16 %v1597, %v1597
      %v1726 = vpack.c.b16 %v1598, %v1598
      %v1727 = vpack.c.b16 %v1599, %v1599
      %v1728 = vpack.c.b16 %v1600, %v1600
      %v1729 = vpack.c.b16 %v1601, %v1601
      %v1730 = vpack.c.b16 %v1602, %v1602
      %v1731 = vpack.c.b16 %v1603, %v1603
      %v1732 = vpack.c.b16 %v1604, %v1604
      %v1733 = vpack.c.b16 %v1605, %v1605
      %v1734 = vpack.c.b16 %v1606, %v1606
      %v1735 = vpack.c.b16 %v1607, %v1607
      %v1736 = vpack.c.b16 %v1608, %v1608
      %v1737 = vpack.c.b16 %v1609, %v1609
      %v1738 = vpack.c.b16 %v1610, %v1610
      %v1739 = vpack.c.b16 %v1611, %v1611
      %v1740 = vpack.c.b16 %v1612, %v1612
      %v1741 = vpack.c.b16 %v1613, %v1613
      %v1742 = vpack.c.b16 %v1614, %v1614
      %v1743 = vpack.c.b16 %v1615, %v1615
      %v1744 = vpack.c.b16 %v1616, %v1616
      %v1745 = vpack.c.b16 %v1617, %v1617
      %v1746 = vpack.c.b16 %v1618, %v1618
      %v1747 = vpack.c.b16 %v1619, %v1619
      %v1748 = vpack.c.b16 %v1620, %v1620
      %v1749 = vpack.c.b16 %v1621, %v1621
      %v1750 = vpack.c.b16 %v1622, %v1622
      %v1751 = vpack.c.b16 %v1623, %v1623
      %v1752 = vpack.c.b16 %v1624, %v1624
      %v1753 = vpack.c.b16 %v1625, %v1625
      %v1754 = vpack.c.b16 %v1626, %v1626
      %v1755 = vpack.c.b16 %v1627, %v1627
      %v1756 = vpack.c.b16 %v1628, %v1628
      %v1757 = vpack.c.b16 %v1629, %v1629
      %v1758 = vpack.c.b16 %v1630, %v1630
      %v1759 = vpack.c.b16 %v1631, %v1631
      %v1760 = vpack.c.b16 %v1632, %v1632
      %v1761 = vpack.c.b16 %v1633, %v1633
      %v1762 = vpack.c.b16 %v1634, %v1634
      %v1763 = vpack.c.b16 %v1635, %v1635
      %v1764 = vpack.c.b16 %v1636, %v1636
      %v1765 = vpack.c.b16 %v1637, %v1637
      %v1766 = vpack.c.b16 %v1638, %v1638
      %v1767 = vpack.c.b16 %v1639, %v1639
      %v1768 = vpack.c.b16 %v1640, %v1640
      %v1769 = vpack.c.b16 %v1641, %v1641
      %v1770 = vpack.c.b16 %v1642, %v1642
      %v1771 = vpack.c.b16 %v1643, %v1643
      %v1772 = vpack.c.b16 %v1644, %v1644
      %v1773 = vpack.c.b16 %v1645, %v1645
      %v1774 = vpack.c.b16 %v1646, %v1646
      %v1775 = vpack.c.b16 %v1647, %v1647
      %v1776 = vpack.c.b16 %v1648, %v1648
      %v1777 = vpack.c.b16 %v1649, %v1649
      %v1778 = vpack.c.b16 %v1650, %v1650
      %v1779 = vpack.c.b16 %v1651, %v1651
      %v1780 = vpack.c.b16 %v1652, %v1652
      %v1781 = vpack.c.b16 %v1653, %v1653
      %v1782 = vpack.c.b16 %v1654, %v1654
      %v1783 = vpack.c.b16 %v1655, %v1655
      %v1784 = vpack.c.b16 %v1656, %v1656
      %v1785 = vpack.c.b16 %v1657, %v1657
      %v1786 = vpack.c.b16 %v1658, %v1658
      %v1787 = vpack.c.b16 %v1659, %v1659
      %v1788 = vpack.c.b16 %v1660, %v1660
      %v1789 = vpack.c.b16 %v1661, %v1661
      %v1790 = vpack.c.b16 %v1662, %v1662
      %v1791 = vpack.c.b16 %v1663, %v1663
      %v1792 = vpack.c.b16 %v1664, %v1664
      %v1793 = vpack.c.b16 %v1665, %v1665
      %v1794 = vpack.c.b16 %v1666, %v1666
      %v1795 = vpack.c.b16 %v1667, %v1667
      %v1796 = vpack.c.b16 %v1668, %v1668
      %v1797 = vpack.c.b16 %v1669, %v1669
      %v1798 = vpack.c.b16 %v1670, %v1670
      %v1799 = vpack.c.b16 %v1671, %v1671
      %v1800 = vpack.c.b16 %v1672, %v1672
      %v1801 = vpack.c.b16 %v1673, %v1673
      %v1802 = vpack.c.b16 %v1674, %v1674
      %v1803 = vpack.c.b16 %v1675, %v1675
      %v1804 = vpack.c.b16 %v1676, %v1676
      %v1805 = vpack.c.b16 %v1677, %v1677
      %v1806 = vpack.c.b16 %v1678, %v1678
      %v1807 = vpack.c.b16 %v1679, %v1679
      %v1808 = vpack.c.b16 %v1680, %v1680
      %v1809 = vpack.c.b16 %v1681, %v1681
      %v1810 = vpack.c.b16 %v1682, %v1682
      %v1811 = vpack.c.b16 %v1683, %v1683
      %v1812 = vpack.c.b16 %v1684, %v1684
      %1941 = vst [vmem:[%s218] sm:$0xf] %v1685
      %1942 = vst [vmem:[%s218 + $0x4] sm:$0xf] %v1686
      %1943 = vst [vmem:[%s218 + $0x8] sm:$0xf] %v1687
      %1944 = vst [vmem:[%s218 + $0xc] sm:$0xf] %v1688
      %1945 = vst [vmem:[%s218 + $0x10] sm:$0xf] %v1689
      %1946 = vst [vmem:[%s218 + $0x14] sm:$0xf] %v1690
      %1947 = vst [vmem:[%s218 + $0x18] sm:$0xf] %v1691
      %1948 = vst [vmem:[%s218 + $0x1c] sm:$0xf] %v1692
      %1949 = vst [vmem:[%s218 + $0x20] sm:$0xf] %v1693
      %1950 = vst [vmem:[%s218 + $0x24] sm:$0xf] %v1694
      %1951 = vst [vmem:[%s218 + $0x28] sm:$0xf] %v1695
      %1952 = vst [vmem:[%s218 + $0x2c] sm:$0xf] %v1696
      %1953 = vst [vmem:[%s218 + $0x30] sm:$0xf] %v1697
      %1954 = vst [vmem:[%s218 + $0x34] sm:$0xf] %v1698
      %1955 = vst [vmem:[%s218 + $0x38] sm:$0xf] %v1699
      %1956 = vst [vmem:[%s218 + $0x3c] sm:$0xf] %v1700
      %1957 = vst [vmem:[%s218 + $0x40] sm:$0xf] %v1701
      %1958 = vst [vmem:[%s218 + $0x44] sm:$0xf] %v1702
      %1959 = vst [vmem:[%s218 + $0x48] sm:$0xf] %v1703
      %1960 = vst [vmem:[%s218 + $0x4c] sm:$0xf] %v1704
      %1961 = vst [vmem:[%s218 + $0x50] sm:$0xf] %v1705
      %1962 = vst [vmem:[%s218 + $0x54] sm:$0xf] %v1706
      %1963 = vst [vmem:[%s218 + $0x58] sm:$0xf] %v1707
      %1964 = vst [vmem:[%s218 + $0x5c] sm:$0xf] %v1708
      %1965 = vst [vmem:[%s218 + $0x60] sm:$0xf] %v1709
      %1966 = vst [vmem:[%s218 + $0x64] sm:$0xf] %v1710
      %1967 = vst [vmem:[%s218 + $0x68] sm:$0xf] %v1711
      %1968 = vst [vmem:[%s218 + $0x6c] sm:$0xf] %v1712
      %1969 = vst [vmem:[%s218 + $0x70] sm:$0xf] %v1713
      %1970 = vst [vmem:[%s218 + $0x74] sm:$0xf] %v1714
      %1971 = vst [vmem:[%s218 + $0x78] sm:$0xf] %v1715
      %1972 = vst [vmem:[%s218 + $0x7c] sm:$0xf] %v1716
      %1973 = vst [vmem:[%s218 + $0x80] sm:$0xf] %v1717
      %1974 = vst [vmem:[%s218 + $0x84] sm:$0xf] %v1718
      %1975 = vst [vmem:[%s218 + $0x88] sm:$0xf] %v1719
      %1976 = vst [vmem:[%s218 + $0x8c] sm:$0xf] %v1720
      %1977 = vst [vmem:[%s218 + $0x90] sm:$0xf] %v1721
      %1978 = vst [vmem:[%s218 + $0x94] sm:$0xf] %v1722
      %1979 = vst [vmem:[%s218 + $0x98] sm:$0xf] %v1723
      %1980 = vst [vmem:[%s218 + $0x9c] sm:$0xf] %v1724
      %1981 = vst [vmem:[%s218 + $0xa0] sm:$0xf] %v1725
      %1982 = vst [vmem:[%s218 + $0xa4] sm:$0xf] %v1726
      %1983 = vst [vmem:[%s218 + $0xa8] sm:$0xf] %v1727
      %1984 = vst [vmem:[%s218 + $0xac] sm:$0xf] %v1728
      %1985 = vst [vmem:[%s218 + $0xb0] sm:$0xf] %v1729
      %1986 = vst [vmem:[%s218 + $0xb4] sm:$0xf] %v1730
      %1987 = vst [vmem:[%s218 + $0xb8] sm:$0xf] %v1731
      %1988 = vst [vmem:[%s218 + $0xbc] sm:$0xf] %v1732
      %1989 = vst [vmem:[%s218 + $0xc0] sm:$0xf] %v1733
      %1990 = vst [vmem:[%s218 + $0xc4] sm:$0xf] %v1734
      %1991 = vst [vmem:[%s218 + $0xc8] sm:$0xf] %v1735
      %1992 = vst [vmem:[%s218 + $0xcc] sm:$0xf] %v1736
      %1993 = vst [vmem:[%s218 + $0xd0] sm:$0xf] %v1737
      %1994 = vst [vmem:[%s218 + $0xd4] sm:$0xf] %v1738
      %1995 = vst [vmem:[%s218 + $0xd8] sm:$0xf] %v1739
      %1996 = vst [vmem:[%s218 + $0xdc] sm:$0xf] %v1740
      %1997 = vst [vmem:[%s218 + $0xe0] sm:$0xf] %v1741
      %1998 = vst [vmem:[%s218 + $0xe4] sm:$0xf] %v1742
      %1999 = vst [vmem:[%s218 + $0xe8] sm:$0xf] %v1743
      %2000 = vst [vmem:[%s218 + $0xec] sm:$0xf] %v1744
      %2001 = vst [vmem:[%s218 + $0xf0] sm:$0xf] %v1745
      %2002 = vst [vmem:[%s218 + $0xf4] sm:$0xf] %v1746
      %2003 = vst [vmem:[%s218 + $0xf8] sm:$0xf] %v1747
      %2004 = vst [vmem:[%s218 + $0xfc] sm:$0xf] %v1748
      %2005 = vst [vmem:[%s218 + $0x100] sm:$0xf] %v1749
      %2006 = vst [vmem:[%s218 + $0x104] sm:$0xf] %v1750
      %2007 = vst [vmem:[%s218 + $0x108] sm:$0xf] %v1751
      %2008 = vst [vmem:[%s218 + $0x10c] sm:$0xf] %v1752
      %2009 = vst [vmem:[%s218 + $0x110] sm:$0xf] %v1753
      %2010 = vst [vmem:[%s218 + $0x114] sm:$0xf] %v1754
      %2011 = vst [vmem:[%s218 + $0x118] sm:$0xf] %v1755
      %2012 = vst [vmem:[%s218 + $0x11c] sm:$0xf] %v1756
      %2013 = vst [vmem:[%s218 + $0x120] sm:$0xf] %v1757
      %2014 = vst [vmem:[%s218 + $0x124] sm:$0xf] %v1758
      %2015 = vst [vmem:[%s218 + $0x128] sm:$0xf] %v1759
      %2016 = vst [vmem:[%s218 + $0x12c] sm:$0xf] %v1760
      %2017 = vst [vmem:[%s218 + $0x130] sm:$0xf] %v1761
      %2018 = vst [vmem:[%s218 + $0x134] sm:$0xf] %v1762
      %2019 = vst [vmem:[%s218 + $0x138] sm:$0xf] %v1763
      %2020 = vst [vmem:[%s218 + $0x13c] sm:$0xf] %v1764
      %2021 = vst [vmem:[%s218 + $0x140] sm:$0xf] %v1765
      %2022 = vst [vmem:[%s218 + $0x144] sm:$0xf] %v1766
      %2023 = vst [vmem:[%s218 + $0x148] sm:$0xf] %v1767
      %2024 = vst [vmem:[%s218 + $0x14c] sm:$0xf] %v1768
      %2025 = vst [vmem:[%s218 + $0x150] sm:$0xf] %v1769
      %2026 = vst [vmem:[%s218 + $0x154] sm:$0xf] %v1770
      %2027 = vst [vmem:[%s218 + $0x158] sm:$0xf] %v1771
      %2028 = vst [vmem:[%s218 + $0x15c] sm:$0xf] %v1772
      %2029 = vst [vmem:[%s218 + $0x160] sm:$0xf] %v1773
      %2030 = vst [vmem:[%s218 + $0x164] sm:$0xf] %v1774
      %2031 = vst [vmem:[%s218 + $0x168] sm:$0xf] %v1775
      %2032 = vst [vmem:[%s218 + $0x16c] sm:$0xf] %v1776
      %2033 = vst [vmem:[%s218 + $0x170] sm:$0xf] %v1777
      %2034 = vst [vmem:[%s218 + $0x174] sm:$0xf] %v1778
      %2035 = vst [vmem:[%s218 + $0x178] sm:$0xf] %v1779
      %2036 = vst [vmem:[%s218 + $0x17c] sm:$0xf] %v1780
      %2037 = vst [vmem:[%s218 + $0x180] sm:$0xf] %v1781
      %2038 = vst [vmem:[%s218 + $0x184] sm:$0xf] %v1782
      %2039 = vst [vmem:[%s218 + $0x188] sm:$0xf] %v1783
      %2040 = vst [vmem:[%s218 + $0x18c] sm:$0xf] %v1784
      %2041 = vst [vmem:[%s218 + $0x190] sm:$0xf] %v1785
      %2042 = vst [vmem:[%s218 + $0x194] sm:$0xf] %v1786
      %2043 = vst [vmem:[%s218 + $0x198] sm:$0xf] %v1787
      %2044 = vst [vmem:[%s218 + $0x19c] sm:$0xf] %v1788
      %2045 = vst [vmem:[%s218 + $0x1a0] sm:$0xf] %v1789
      %2046 = vst [vmem:[%s218 + $0x1a4] sm:$0xf] %v1790
      %2047 = vst [vmem:[%s218 + $0x1a8] sm:$0xf] %v1791
      %2048 = vst [vmem:[%s218 + $0x1ac] sm:$0xf] %v1792
      %2049 = vst [vmem:[%s218 + $0x1b0] sm:$0xf] %v1793
      %2050 = vst [vmem:[%s218 + $0x1b4] sm:$0xf] %v1794
      %2051 = vst [vmem:[%s218 + $0x1b8] sm:$0xf] %v1795
      %2052 = vst [vmem:[%s218 + $0x1bc] sm:$0xf] %v1796
      %2053 = vst [vmem:[%s218 + $0x1c0] sm:$0xf] %v1797
      %2054 = vst [vmem:[%s218 + $0x1c4] sm:$0xf] %v1798
      %2055 = vst [vmem:[%s218 + $0x1c8] sm:$0xf] %v1799
      %2056 = vst [vmem:[%s218 + $0x1cc] sm:$0xf] %v1800
      %2057 = vst [vmem:[%s218 + $0x1d0] sm:$0xf] %v1801
      %2058 = vst [vmem:[%s218 + $0x1d4] sm:$0xf] %v1802
      %2059 = vst [vmem:[%s218 + $0x1d8] sm:$0xf] %v1803
      %2060 = vst [vmem:[%s218 + $0x1dc] sm:$0xf] %v1804
      %2061 = vst [vmem:[%s218 + $0x1e0] sm:$0xf] %v1805
      %2062 = vst [vmem:[%s218 + $0x1e4] sm:$0xf] %v1806
      %2063 = vst [vmem:[%s218 + $0x1e8] sm:$0xf] %v1807
      %2064 = vst [vmem:[%s218 + $0x1ec] sm:$0xf] %v1808
      %2065 = vst [vmem:[%s218 + $0x1f0] sm:$0xf] %v1809
      %2066 = vst [vmem:[%s218 + $0x1f4] sm:$0xf] %v1810
      %2067 = vst [vmem:[%s218 + $0x1f8] sm:$0xf] %v1811
      %2068 = vst [vmem:[%s218 + $0x1fc] sm:$0xf] %v1812
      %v2069 = vadd.f32 %v919, %v922
      %v2070 = vadd.f32 %v2069, %v927
      %v2071 = vadd.f32 %v2070, %v930
      %v2072 = vadd.f32 %v2071, %v935
      %v2073 = vadd.f32 %v2072, %v938
      %v2074 = vadd.f32 %v2073, %v943
      %v2075 = vadd.f32 %v2074, %v946
      %v2076 = vadd.f32 %v2075, %v951
      %v2077 = vadd.f32 %v2076, %v954
      %v2078 = vadd.f32 %v2077, %v959
      %v2079 = vadd.f32 %v2078, %v962
      %v2080 = vadd.f32 %v2079, %v967
      %v2081 = vadd.f32 %v2080, %v970
      %v2082 = vadd.f32 %v2081, %v975
      %v2083 = vadd.f32 %v2082, %v978
      %v2084 = vadd.f32 %v2083, %v983
      %v2085 = vadd.f32 %v2084, %v986
      %v2086 = vadd.f32 %v2085, %v991
      %v2087 = vadd.f32 %v2086, %v994
      %v2088 = vadd.f32 %v2087, %v999
      %v2089 = vadd.f32 %v2088, %v1002
      %v2090 = vadd.f32 %v2089, %v1007
      %v2091 = vadd.f32 %v2090, %v1010
      %v2092 = vadd.f32 %v2091, %v1015
      %v2093 = vadd.f32 %v2092, %v1018
      %v2094 = vadd.f32 %v2093, %v1023
      %v2095 = vadd.f32 %v2094, %v1026
      %v2096 = vadd.f32 %v2095, %v1031
      %v2097 = vadd.f32 %v2096, %v1034
      %v2098 = vadd.f32 %v2097, %v1039
      %v2099 = vadd.f32 %v2098, %v1042
      %v2100 = vadd.f32 %v2099, %v1047
      %v2101 = vadd.f32 %v2100, %v1050
      %v2102 = vadd.f32 %v2101, %v1055
      %v2103 = vadd.f32 %v2102, %v1058
      %v2104 = vadd.f32 %v2103, %v1063
      %v2105 = vadd.f32 %v2104, %v1066
      %v2106 = vadd.f32 %v2105, %v1071
      %v2107 = vadd.f32 %v2106, %v1074
      %v2108 = vadd.f32 %v2107, %v1079
      %v2109 = vadd.f32 %v2108, %v1082
      %v2110 = vadd.f32 %v2109, %v1087
      %v2111 = vadd.f32 %v2110, %v1090
      %v2112 = vadd.f32 %v2111, %v1095
      %v2113 = vadd.f32 %v2112, %v1098
      %v2114 = vadd.f32 %v2113, %v1103
      %v2115 = vadd.f32 %v2114, %v1106
      %v2116 = vadd.f32 %v2115, %v1111
      %v2117 = vadd.f32 %v2116, %v1114
      %v2118 = vadd.f32 %v2117, %v1119
      %v2119 = vadd.f32 %v2118, %v1122
      %v2120 = vadd.f32 %v2119, %v1127
      %v2121 = vadd.f32 %v2120, %v1130
      %v2122 = vadd.f32 %v2121, %v1135
      %v2123 = vadd.f32 %v2122, %v1138
      %v2124 = vadd.f32 %v2123, %v1143
      %v2125 = vadd.f32 %v2124, %v1146
      %v2126 = vadd.f32 %v2125, %v1151
      %v2127 = vadd.f32 %v2126, %v1154
      %v2128 = vadd.f32 %v2127, %v1159
      %v2129 = vadd.f32 %v2128, %v1162
      %v2130 = vadd.f32 %v2129, %v1167
      %v2131 = vadd.f32 %v2130, %v1170
      %v2132 = vadd.f32 %v2131, %v1175
      %v2133 = vadd.f32 %v2132, %v1178
      %v2134 = vadd.f32 %v2133, %v1183
      %v2135 = vadd.f32 %v2134, %v1186
      %v2136 = vadd.f32 %v2135, %v1191
      %v2137 = vadd.f32 %v2136, %v1194
      %v2138 = vadd.f32 %v2137, %v1199
      %v2139 = vadd.f32 %v2138, %v1202
      %v2140 = vadd.f32 %v2139, %v1207
      %v2141 = vadd.f32 %v2140, %v1210
      %v2142 = vadd.f32 %v2141, %v1215
      %v2143 = vadd.f32 %v2142, %v1218
      %v2144 = vadd.f32 %v2143, %v1223
      %v2145 = vadd.f32 %v2144, %v1226
      %v2146 = vadd.f32 %v2145, %v1231
      %v2147 = vadd.f32 %v2146, %v1234
      %v2148 = vadd.f32 %v2147, %v1239
      %v2149 = vadd.f32 %v2148, %v1242
      %v2150 = vadd.f32 %v2149, %v1247
      %v2151 = vadd.f32 %v2150, %v1250
      %v2152 = vadd.f32 %v2151, %v1255
      %v2153 = vadd.f32 %v2152, %v1258
      %v2154 = vadd.f32 %v2153, %v1263
      %v2155 = vadd.f32 %v2154, %v1266
      %v2156 = vadd.f32 %v2155, %v1271
      %v2157 = vadd.f32 %v2156, %v1274
      %v2158 = vadd.f32 %v2157, %v1279
      %v2159 = vadd.f32 %v2158, %v1282
      %v2160 = vadd.f32 %v2159, %v1287
      %v2161 = vadd.f32 %v2160, %v1290
      %v2162 = vadd.f32 %v2161, %v1295
      %v2163 = vadd.f32 %v2162, %v1298
      %v2164 = vadd.f32 %v2163, %v1303
      %v2165 = vadd.f32 %v2164, %v1306
      %v2166 = vadd.f32 %v2165, %v1311
      %v2167 = vadd.f32 %v2166, %v1314
      %v2168 = vadd.f32 %v2167, %v1319
      %v2169 = vadd.f32 %v2168, %v1322
      %v2170 = vadd.f32 %v2169, %v1327
      %v2171 = vadd.f32 %v2170, %v1330
      %v2172 = vadd.f32 %v2171, %v1335
      %v2173 = vadd.f32 %v2172, %v1338
      %v2174 = vadd.f32 %v2173, %v1343
      %v2175 = vadd.f32 %v2174, %v1346
      %v2176 = vadd.f32 %v2175, %v1351
      %v2177 = vadd.f32 %v2176, %v1354
      %v2178 = vadd.f32 %v2177, %v1359
      %v2179 = vadd.f32 %v2178, %v1362
      %v2180 = vadd.f32 %v2179, %v1367
      %v2181 = vadd.f32 %v2180, %v1370
      %v2182 = vadd.f32 %v2181, %v1375
      %v2183 = vadd.f32 %v2182, %v1378
      %v2184 = vadd.f32 %v2183, %v1383
      %v2185 = vadd.f32 %v2184, %v1386
      %v2186 = vadd.f32 %v2185, %v1391
      %v2187 = vadd.f32 %v2186, %v1394
      %v2188 = vadd.f32 %v2187, %v1399
      %v2189 = vadd.f32 %v2188, %v1402
      %v2190 = vadd.f32 %v2189, %v1407
      %v2191 = vadd.f32 %v2190, %v1410
      %v2192 = vadd.f32 %v2191, %v1415
      %v2193 = vadd.f32 %v2192, %v1418
      %v2194 = vadd.f32 %v2193, %v1423
      %v2195 = vadd.f32 %v2194, %v1426
      %v2196 = vrot.slane %v2195, 4
      %v2197 = vadd.f32 %v2195, %v2196
      %v2198 = vrot.slane %v2197, 2
      %v2199 = vadd.f32 %v2197, %v2198
      %v2200 = vrot.slane %v2199, 1
      %v2201 = vadd.f32 %v2199, %v2200
      %v2202 = vadd.f32 %v2201, 0.0
      %v2203 = vmul.f32 %v919, %v919
      %v2204 = vmul.f32 %v922, %v922
      %v2205 = vmul.f32 %v927, %v927
      %v2206 = vmul.f32 %v930, %v930
      %v2207 = vmul.f32 %v935, %v935
      %v2208 = vmul.f32 %v938, %v938
      %v2209 = vmul.f32 %v943, %v943
      %v2210 = vmul.f32 %v946, %v946
      %v2211 = vmul.f32 %v951, %v951
      %v2212 = vmul.f32 %v954, %v954
      %v2213 = vmul.f32 %v959, %v959
      %v2214 = vmul.f32 %v962, %v962
      %v2215 = vmul.f32 %v967, %v967
      %v2216 = vmul.f32 %v970, %v970
      %v2217 = vmul.f32 %v975, %v975
      %v2218 = vmul.f32 %v978, %v978
      %v2219 = vmul.f32 %v983, %v983
      %v2220 = vmul.f32 %v986, %v986
      %v2221 = vmul.f32 %v991, %v991
      %v2222 = vmul.f32 %v994, %v994
      %v2223 = vmul.f32 %v999, %v999
      %v2224 = vmul.f32 %v1002, %v1002
      %v2225 = vmul.f32 %v1007, %v1007
      %v2226 = vmul.f32 %v1010, %v1010
      %v2227 = vmul.f32 %v1015, %v1015
      %v2228 = vmul.f32 %v1018, %v1018
      %v2229 = vmul.f32 %v1023, %v1023
      %v2230 = vmul.f32 %v1026, %v1026
      %v2231 = vmul.f32 %v1031, %v1031
      %v2232 = vmul.f32 %v1034, %v1034
      %v2233 = vmul.f32 %v1039, %v1039
      %v2234 = vmul.f32 %v1042, %v1042
      %v2235 = vmul.f32 %v1047, %v1047
      %v2236 = vmul.f32 %v1050, %v1050
      %v2237 = vmul.f32 %v1055, %v1055
      %v2238 = vmul.f32 %v1058, %v1058
      %v2239 = vmul.f32 %v1063, %v1063
      %v2240 = vmul.f32 %v1066, %v1066
      %v2241 = vmul.f32 %v1071, %v1071
      %v2242 = vmul.f32 %v1074, %v1074
      %v2243 = vmul.f32 %v1079, %v1079
      %v2244 = vmul.f32 %v1082, %v1082
      %v2245 = vmul.f32 %v1087, %v1087
      %v2246 = vmul.f32 %v1090, %v1090
      %v2247 = vmul.f32 %v1095, %v1095
      %v2248 = vmul.f32 %v1098, %v1098
      %v2249 = vmul.f32 %v1103, %v1103
      %v2250 = vmul.f32 %v1106, %v1106
      %v2251 = vmul.f32 %v1111, %v1111
      %v2252 = vmul.f32 %v1114, %v1114
      %v2253 = vmul.f32 %v1119, %v1119
      %v2254 = vmul.f32 %v1122, %v1122
      %v2255 = vmul.f32 %v1127, %v1127
      %v2256 = vmul.f32 %v1130, %v1130
      %v2257 = vmul.f32 %v1135, %v1135
      %v2258 = vmul.f32 %v1138, %v1138
      %v2259 = vmul.f32 %v1143, %v1143
      %v2260 = vmul.f32 %v1146, %v1146
      %v2261 = vmul.f32 %v1151, %v1151
      %v2262 = vmul.f32 %v1154, %v1154
      %v2263 = vmul.f32 %v1159, %v1159
      %v2264 = vmul.f32 %v1162, %v1162
      %v2265 = vmul.f32 %v1167, %v1167
      %v2266 = vmul.f32 %v1170, %v1170
      %v2267 = vmul.f32 %v1175, %v1175
      %v2268 = vmul.f32 %v1178, %v1178
      %v2269 = vmul.f32 %v1183, %v1183
      %v2270 = vmul.f32 %v1186, %v1186
      %v2271 = vmul.f32 %v1191, %v1191
      %v2272 = vmul.f32 %v1194, %v1194
      %v2273 = vmul.f32 %v1199, %v1199
      %v2274 = vmul.f32 %v1202, %v1202
      %v2275 = vmul.f32 %v1207, %v1207
      %v2276 = vmul.f32 %v1210, %v1210
      %v2277 = vmul.f32 %v1215, %v1215
      %v2278 = vmul.f32 %v1218, %v1218
      %v2279 = vmul.f32 %v1223, %v1223
      %v2280 = vmul.f32 %v1226, %v1226
      %v2281 = vmul.f32 %v1231, %v1231
      %v2282 = vmul.f32 %v1234, %v1234
      %v2283 = vmul.f32 %v1239, %v1239
      %v2284 = vmul.f32 %v1242, %v1242
      %v2285 = vmul.f32 %v1247, %v1247
      %v2286 = vmul.f32 %v1250, %v1250
      %v2287 = vmul.f32 %v1255, %v1255
      %v2288 = vmul.f32 %v1258, %v1258
      %v2289 = vmul.f32 %v1263, %v1263
      %v2290 = vmul.f32 %v1266, %v1266
      %v2291 = vmul.f32 %v1271, %v1271
      %v2292 = vmul.f32 %v1274, %v1274
      %v2293 = vmul.f32 %v1279, %v1279
      %v2294 = vmul.f32 %v1282, %v1282
      %v2295 = vmul.f32 %v1287, %v1287
      %v2296 = vmul.f32 %v1290, %v1290
      %v2297 = vmul.f32 %v1295, %v1295
      %v2298 = vmul.f32 %v1298, %v1298
      %v2299 = vmul.f32 %v1303, %v1303
      %v2300 = vmul.f32 %v1306, %v1306
      %v2301 = vmul.f32 %v1311, %v1311
      %v2302 = vmul.f32 %v1314, %v1314
      %v2303 = vmul.f32 %v1319, %v1319
      %v2304 = vmul.f32 %v1322, %v1322
      %v2305 = vmul.f32 %v1327, %v1327
      %v2306 = vmul.f32 %v1330, %v1330
      %v2307 = vmul.f32 %v1335, %v1335
      %v2308 = vmul.f32 %v1338, %v1338
      %v2309 = vmul.f32 %v1343, %v1343
      %v2310 = vmul.f32 %v1346, %v1346
      %v2311 = vmul.f32 %v1351, %v1351
      %v2312 = vmul.f32 %v1354, %v1354
      %v2313 = vmul.f32 %v1359, %v1359
      %v2314 = vmul.f32 %v1362, %v1362
      %v2315 = vmul.f32 %v1367, %v1367
      %v2316 = vmul.f32 %v1370, %v1370
      %v2317 = vmul.f32 %v1375, %v1375
      %v2318 = vmul.f32 %v1378, %v1378
      %v2319 = vmul.f32 %v1383, %v1383
      %v2320 = vmul.f32 %v1386, %v1386
      %v2321 = vmul.f32 %v1391, %v1391
      %v2322 = vmul.f32 %v1394, %v1394
      %v2323 = vmul.f32 %v1399, %v1399
      %v2324 = vmul.f32 %v1402, %v1402
      %v2325 = vmul.f32 %v1407, %v1407
      %v2326 = vmul.f32 %v1410, %v1410
      %v2327 = vmul.f32 %v1415, %v1415
      %v2328 = vmul.f32 %v1418, %v1418
      %v2329 = vmul.f32 %v1423, %v1423
      %v2330 = vmul.f32 %v1426, %v1426
      %v2331 = vadd.f32 %v2203, %v2204
      %v2332 = vadd.f32 %v2331, %v2205
      %v2333 = vadd.f32 %v2332, %v2206
      %v2334 = vadd.f32 %v2333, %v2207
      %v2335 = vadd.f32 %v2334, %v2208
      %v2336 = vadd.f32 %v2335, %v2209
      %v2337 = vadd.f32 %v2336, %v2210
      %v2338 = vadd.f32 %v2337, %v2211
      %v2339 = vadd.f32 %v2338, %v2212
      %v2340 = vadd.f32 %v2339, %v2213
      %v2341 = vadd.f32 %v2340, %v2214
      %v2342 = vadd.f32 %v2341, %v2215
      %v2343 = vadd.f32 %v2342, %v2216
      %v2344 = vadd.f32 %v2343, %v2217
      %v2345 = vadd.f32 %v2344, %v2218
      %v2346 = vadd.f32 %v2345, %v2219
      %v2347 = vadd.f32 %v2346, %v2220
      %v2348 = vadd.f32 %v2347, %v2221
      %v2349 = vadd.f32 %v2348, %v2222
      %v2350 = vadd.f32 %v2349, %v2223
      %v2351 = vadd.f32 %v2350, %v2224
      %v2352 = vadd.f32 %v2351, %v2225
      %v2353 = vadd.f32 %v2352, %v2226
      %v2354 = vadd.f32 %v2353, %v2227
      %v2355 = vadd.f32 %v2354, %v2228
      %v2356 = vadd.f32 %v2355, %v2229
      %v2357 = vadd.f32 %v2356, %v2230
      %v2358 = vadd.f32 %v2357, %v2231
      %v2359 = vadd.f32 %v2358, %v2232
      %v2360 = vadd.f32 %v2359, %v2233
      %v2361 = vadd.f32 %v2360, %v2234
      %v2362 = vadd.f32 %v2361, %v2235
      %v2363 = vadd.f32 %v2362, %v2236
      %v2364 = vadd.f32 %v2363, %v2237
      %v2365 = vadd.f32 %v2364, %v2238
      %v2366 = vadd.f32 %v2365, %v2239
      %v2367 = vadd.f32 %v2366, %v2240
      %v2368 = vadd.f32 %v2367, %v2241
      %v2369 = vadd.f32 %v2368, %v2242
      %v2370 = vadd.f32 %v2369, %v2243
      %v2371 = vadd.f32 %v2370, %v2244
      %v2372 = vadd.f32 %v2371, %v2245
      %v2373 = vadd.f32 %v2372, %v2246
      %v2374 = vadd.f32 %v2373, %v2247
      %v2375 = vadd.f32 %v2374, %v2248
      %v2376 = vadd.f32 %v2375, %v2249
      %v2377 = vadd.f32 %v2376, %v2250
      %v2378 = vadd.f32 %v2377, %v2251
      %v2379 = vadd.f32 %v2378, %v2252
      %v2380 = vadd.f32 %v2379, %v2253
      %v2381 = vadd.f32 %v2380, %v2254
      %v2382 = vadd.f32 %v2381, %v2255
      %v2383 = vadd.f32 %v2382, %v2256
      %v2384 = vadd.f32 %v2383, %v2257
      %v2385 = vadd.f32 %v2384, %v2258
      %v2386 = vadd.f32 %v2385, %v2259
      %v2387 = vadd.f32 %v2386, %v2260
      %v2388 = vadd.f32 %v2387, %v2261
      %v2389 = vadd.f32 %v2388, %v2262
      %v2390 = vadd.f32 %v2389, %v2263
      %v2391 = vadd.f32 %v2390, %v2264
      %v2392 = vadd.f32 %v2391, %v2265
      %v2393 = vadd.f32 %v2392, %v2266
      %v2394 = vadd.f32 %v2393, %v2267
      %v2395 = vadd.f32 %v2394, %v2268
      %v2396 = vadd.f32 %v2395, %v2269
      %v2397 = vadd.f32 %v2396, %v2270
      %v2398 = vadd.f32 %v2397, %v2271
      %v2399 = vadd.f32 %v2398, %v2272
      %v2400 = vadd.f32 %v2399, %v2273
      %v2401 = vadd.f32 %v2400, %v2274
      %v2402 = vadd.f32 %v2401, %v2275
      %v2403 = vadd.f32 %v2402, %v2276
      %v2404 = vadd.f32 %v2403, %v2277
      %v2405 = vadd.f32 %v2404, %v2278
      %v2406 = vadd.f32 %v2405, %v2279
      %v2407 = vadd.f32 %v2406, %v2280
      %v2408 = vadd.f32 %v2407, %v2281
      %v2409 = vadd.f32 %v2408, %v2282
      %v2410 = vadd.f32 %v2409, %v2283
      %v2411 = vadd.f32 %v2410, %v2284
      %v2412 = vadd.f32 %v2411, %v2285
      %v2413 = vadd.f32 %v2412, %v2286
      %v2414 = vadd.f32 %v2413, %v2287
      %v2415 = vadd.f32 %v2414, %v2288
      %v2416 = vadd.f32 %v2415, %v2289
      %v2417 = vadd.f32 %v2416, %v2290
      %v2418 = vadd.f32 %v2417, %v2291
      %v2419 = vadd.f32 %v2418, %v2292
      %v2420 = vadd.f32 %v2419, %v2293
      %v2421 = vadd.f32 %v2420, %v2294
      %v2422 = vadd.f32 %v2421, %v2295
      %v2423 = vadd.f32 %v2422, %v2296
      %v2424 = vadd.f32 %v2423, %v2297
      %v2425 = vadd.f32 %v2424, %v2298
      %v2426 = vadd.f32 %v2425, %v2299
      %v2427 = vadd.f32 %v2426, %v2300
      %v2428 = vadd.f32 %v2427, %v2301
      %v2429 = vadd.f32 %v2428, %v2302
      %v2430 = vadd.f32 %v2429, %v2303
      %v2431 = vadd.f32 %v2430, %v2304
      %v2432 = vadd.f32 %v2431, %v2305
      %v2433 = vadd.f32 %v2432, %v2306
      %v2434 = vadd.f32 %v2433, %v2307
      %v2435 = vadd.f32 %v2434, %v2308
      %v2436 = vadd.f32 %v2435, %v2309
      %v2437 = vadd.f32 %v2436, %v2310
      %v2438 = vadd.f32 %v2437, %v2311
      %v2439 = vadd.f32 %v2438, %v2312
      %v2440 = vadd.f32 %v2439, %v2313
      %v2441 = vadd.f32 %v2440, %v2314
      %v2442 = vadd.f32 %v2441, %v2315
      %v2443 = vadd.f32 %v2442, %v2316
      %v2444 = vadd.f32 %v2443, %v2317
      %v2445 = vadd.f32 %v2444, %v2318
      %v2446 = vadd.f32 %v2445, %v2319
      %v2447 = vadd.f32 %v2446, %v2320
      %v2448 = vadd.f32 %v2447, %v2321
      %v2449 = vadd.f32 %v2448, %v2322
      %v2450 = vadd.f32 %v2449, %v2323
      %v2451 = vadd.f32 %v2450, %v2324
      %v2452 = vadd.f32 %v2451, %v2325
      %v2453 = vadd.f32 %v2452, %v2326
      %v2454 = vadd.f32 %v2453, %v2327
      %v2455 = vadd.f32 %v2454, %v2328
      %v2456 = vadd.f32 %v2455, %v2329
      %v2457 = vadd.f32 %v2456, %v2330
      %v2458 = vrot.slane %v2457, 4
      %v2459 = vadd.f32 %v2457, %v2458
      %v2460 = vrot.slane %v2459, 2
      %v2461 = vadd.f32 %v2459, %v2460
      %v2462 = vrot.slane %v2461, 1
      %v2463 = vadd.f32 %v2461, %v2462
      %v2464 = vadd.f32 %v2463, 0.0
      %s2465 = scalar_lea.vmem %s209, 528
      %v2466 = vld [vmem:[%s2465] sm:$0xf]
      %v2467 = vld [vmem:[%s2465 + $0x4] sm:$0xf]
      %v2468 = vld [vmem:[%s2465 + $0x8] sm:$0xf]
      %v2469 = vld [vmem:[%s2465 + $0xc] sm:$0xf]
      %v2470 = vld [vmem:[%s2465 + $0x10] sm:$0xf]
      %v2471 = vld [vmem:[%s2465 + $0x14] sm:$0xf]
      %v2472 = vld [vmem:[%s2465 + $0x18] sm:$0xf]
      %v2473 = vld [vmem:[%s2465 + $0x1c] sm:$0xf]
      %v2474 = vld [vmem:[%s2465 + $0x20] sm:$0xf]
      %v2475 = vld [vmem:[%s2465 + $0x24] sm:$0xf]
      %v2476 = vld [vmem:[%s2465 + $0x28] sm:$0xf]
      %v2477 = vld [vmem:[%s2465 + $0x2c] sm:$0xf]
      %v2478 = vld [vmem:[%s2465 + $0x30] sm:$0xf]
      %v2479 = vld [vmem:[%s2465 + $0x34] sm:$0xf]
      %v2480 = vld [vmem:[%s2465 + $0x38] sm:$0xf]
      %v2481 = vld [vmem:[%s2465 + $0x3c] sm:$0xf]
      %v2482 = vld [vmem:[%s2465 + $0x40] sm:$0xf]
      %v2483 = vld [vmem:[%s2465 + $0x44] sm:$0xf]
      %v2484 = vld [vmem:[%s2465 + $0x48] sm:$0xf]
      %v2485 = vld [vmem:[%s2465 + $0x4c] sm:$0xf]
      %v2486 = vld [vmem:[%s2465 + $0x50] sm:$0xf]
      %v2487 = vld [vmem:[%s2465 + $0x54] sm:$0xf]
      %v2488 = vld [vmem:[%s2465 + $0x58] sm:$0xf]
      %v2489 = vld [vmem:[%s2465 + $0x5c] sm:$0xf]
      %v2490 = vld [vmem:[%s2465 + $0x60] sm:$0xf]
      %v2491 = vld [vmem:[%s2465 + $0x64] sm:$0xf]
      %v2492 = vld [vmem:[%s2465 + $0x68] sm:$0xf]
      %v2493 = vld [vmem:[%s2465 + $0x6c] sm:$0xf]
      %v2494 = vld [vmem:[%s2465 + $0x70] sm:$0xf]
      %v2495 = vld [vmem:[%s2465 + $0x74] sm:$0xf]
      %v2496 = vld [vmem:[%s2465 + $0x78] sm:$0xf]
      %v2497 = vld [vmem:[%s2465 + $0x7c] sm:$0xf]
      %v2498 = vld [vmem:[%s2465 + $0x80] sm:$0xf]
      %v2499 = vld [vmem:[%s2465 + $0x84] sm:$0xf]
      %v2500 = vld [vmem:[%s2465 + $0x88] sm:$0xf]
      %v2501 = vld [vmem:[%s2465 + $0x8c] sm:$0xf]
      %v2502 = vld [vmem:[%s2465 + $0x90] sm:$0xf]
      %v2503 = vld [vmem:[%s2465 + $0x94] sm:$0xf]
      %v2504 = vld [vmem:[%s2465 + $0x98] sm:$0xf]
      %v2505 = vld [vmem:[%s2465 + $0x9c] sm:$0xf]
      %v2506 = vld [vmem:[%s2465 + $0xa0] sm:$0xf]
      %v2507 = vld [vmem:[%s2465 + $0xa4] sm:$0xf]
      %v2508 = vld [vmem:[%s2465 + $0xa8] sm:$0xf]
      %v2509 = vld [vmem:[%s2465 + $0xac] sm:$0xf]
      %v2510 = vld [vmem:[%s2465 + $0xb0] sm:$0xf]
      %v2511 = vld [vmem:[%s2465 + $0xb4] sm:$0xf]
      %v2512 = vld [vmem:[%s2465 + $0xb8] sm:$0xf]
      %v2513 = vld [vmem:[%s2465 + $0xbc] sm:$0xf]
      %v2514 = vld [vmem:[%s2465 + $0xc0] sm:$0xf]
      %v2515 = vld [vmem:[%s2465 + $0xc4] sm:$0xf]
      %v2516 = vld [vmem:[%s2465 + $0xc8] sm:$0xf]
      %v2517 = vld [vmem:[%s2465 + $0xcc] sm:$0xf]
      %v2518 = vld [vmem:[%s2465 + $0xd0] sm:$0xf]
      %v2519 = vld [vmem:[%s2465 + $0xd4] sm:$0xf]
      %v2520 = vld [vmem:[%s2465 + $0xd8] sm:$0xf]
      %v2521 = vld [vmem:[%s2465 + $0xdc] sm:$0xf]
      %v2522 = vld [vmem:[%s2465 + $0xe0] sm:$0xf]
      %v2523 = vld [vmem:[%s2465 + $0xe4] sm:$0xf]
      %v2524 = vld [vmem:[%s2465 + $0xe8] sm:$0xf]
      %v2525 = vld [vmem:[%s2465 + $0xec] sm:$0xf]
      %v2526 = vld [vmem:[%s2465 + $0xf0] sm:$0xf]
      %v2527 = vld [vmem:[%s2465 + $0xf4] sm:$0xf]
      %v2528 = vld [vmem:[%s2465 + $0xf8] sm:$0xf]
      %v2529 = vld [vmem:[%s2465 + $0xfc] sm:$0xf]
      %v2530 = vld [vmem:[%s2465 + $0x100] sm:$0xf]
      %v2531 = vld [vmem:[%s2465 + $0x104] sm:$0xf]
      %v2532 = vld [vmem:[%s2465 + $0x108] sm:$0xf]
      %v2533 = vld [vmem:[%s2465 + $0x10c] sm:$0xf]
      %v2534 = vld [vmem:[%s2465 + $0x110] sm:$0xf]
      %v2535 = vld [vmem:[%s2465 + $0x114] sm:$0xf]
      %v2536 = vld [vmem:[%s2465 + $0x118] sm:$0xf]
      %v2537 = vld [vmem:[%s2465 + $0x11c] sm:$0xf]
      %v2538 = vld [vmem:[%s2465 + $0x120] sm:$0xf]
      %v2539 = vld [vmem:[%s2465 + $0x124] sm:$0xf]
      %v2540 = vld [vmem:[%s2465 + $0x128] sm:$0xf]
      %v2541 = vld [vmem:[%s2465 + $0x12c] sm:$0xf]
      %v2542 = vld [vmem:[%s2465 + $0x130] sm:$0xf]
      %v2543 = vld [vmem:[%s2465 + $0x134] sm:$0xf]
      %v2544 = vld [vmem:[%s2465 + $0x138] sm:$0xf]
      %v2545 = vld [vmem:[%s2465 + $0x13c] sm:$0xf]
      %v2546 = vld [vmem:[%s2465 + $0x140] sm:$0xf]
      %v2547 = vld [vmem:[%s2465 + $0x144] sm:$0xf]
      %v2548 = vld [vmem:[%s2465 + $0x148] sm:$0xf]
      %v2549 = vld [vmem:[%s2465 + $0x14c] sm:$0xf]
      %v2550 = vld [vmem:[%s2465 + $0x150] sm:$0xf]
      %v2551 = vld [vmem:[%s2465 + $0x154] sm:$0xf]
      %v2552 = vld [vmem:[%s2465 + $0x158] sm:$0xf]
      %v2553 = vld [vmem:[%s2465 + $0x15c] sm:$0xf]
      %v2554 = vld [vmem:[%s2465 + $0x160] sm:$0xf]
      %v2555 = vld [vmem:[%s2465 + $0x164] sm:$0xf]
      %v2556 = vld [vmem:[%s2465 + $0x168] sm:$0xf]
      %v2557 = vld [vmem:[%s2465 + $0x16c] sm:$0xf]
      %v2558 = vld [vmem:[%s2465 + $0x170] sm:$0xf]
      %v2559 = vld [vmem:[%s2465 + $0x174] sm:$0xf]
      %v2560 = vld [vmem:[%s2465 + $0x178] sm:$0xf]
      %v2561 = vld [vmem:[%s2465 + $0x17c] sm:$0xf]
      %v2562 = vld [vmem:[%s2465 + $0x180] sm:$0xf]
      %v2563 = vld [vmem:[%s2465 + $0x184] sm:$0xf]
      %v2564 = vld [vmem:[%s2465 + $0x188] sm:$0xf]
      %v2565 = vld [vmem:[%s2465 + $0x18c] sm:$0xf]
      %v2566 = vld [vmem:[%s2465 + $0x190] sm:$0xf]
      %v2567 = vld [vmem:[%s2465 + $0x194] sm:$0xf]
      %v2568 = vld [vmem:[%s2465 + $0x198] sm:$0xf]
      %v2569 = vld [vmem:[%s2465 + $0x19c] sm:$0xf]
      %v2570 = vld [vmem:[%s2465 + $0x1a0] sm:$0xf]
      %v2571 = vld [vmem:[%s2465 + $0x1a4] sm:$0xf]
      %v2572 = vld [vmem:[%s2465 + $0x1a8] sm:$0xf]
      %v2573 = vld [vmem:[%s2465 + $0x1ac] sm:$0xf]
      %v2574 = vld [vmem:[%s2465 + $0x1b0] sm:$0xf]
      %v2575 = vld [vmem:[%s2465 + $0x1b4] sm:$0xf]
      %v2576 = vld [vmem:[%s2465 + $0x1b8] sm:$0xf]
      %v2577 = vld [vmem:[%s2465 + $0x1bc] sm:$0xf]
      %v2578 = vld [vmem:[%s2465 + $0x1c0] sm:$0xf]
      %v2579 = vld [vmem:[%s2465 + $0x1c4] sm:$0xf]
      %v2580 = vld [vmem:[%s2465 + $0x1c8] sm:$0xf]
      %v2581 = vld [vmem:[%s2465 + $0x1cc] sm:$0xf]
      %v2582 = vld [vmem:[%s2465 + $0x1d0] sm:$0xf]
      %v2583 = vld [vmem:[%s2465 + $0x1d4] sm:$0xf]
      %v2584 = vld [vmem:[%s2465 + $0x1d8] sm:$0xf]
      %v2585 = vld [vmem:[%s2465 + $0x1dc] sm:$0xf]
      %v2586 = vld [vmem:[%s2465 + $0x1e0] sm:$0xf]
      %v2587 = vld [vmem:[%s2465 + $0x1e4] sm:$0xf]
      %v2588 = vld [vmem:[%s2465 + $0x1e8] sm:$0xf]
      %v2589 = vld [vmem:[%s2465 + $0x1ec] sm:$0xf]
      %v2590 = vld [vmem:[%s2465 + $0x1f0] sm:$0xf]
      %v2591 = vld [vmem:[%s2465 + $0x1f4] sm:$0xf]
      %v2592 = vld [vmem:[%s2465 + $0x1f8] sm:$0xf]
      %v2593 = vld [vmem:[%s2465 + $0x1fc] sm:$0xf]
      %s2594 = scalar_lea.vmem %s1, 16
      %v2595 = vld [vmem:[%s2594] sm:$0xf]
      %v2596 = vld [vmem:[%s2594 + $0x4] sm:$0xf]
      %v2597 = vld [vmem:[%s2594 + $0x8] sm:$0xf]
      %v2598 = vld [vmem:[%s2594 + $0xc] sm:$0xf]
      %v2727 = vunpack.c.l.b16 %v2466
      %v2728 = vunpack.c.l.b16 %v2467
      %v2729 = vunpack.c.l.b16 %v2468
      %v2730 = vunpack.c.l.b16 %v2469
      %v2731 = vunpack.c.l.b16 %v2470
      %v2732 = vunpack.c.l.b16 %v2471
      %v2733 = vunpack.c.l.b16 %v2472
      %v2734 = vunpack.c.l.b16 %v2473
      %v2735 = vunpack.c.l.b16 %v2474
      %v2736 = vunpack.c.l.b16 %v2475
      %v2737 = vunpack.c.l.b16 %v2476
      %v2738 = vunpack.c.l.b16 %v2477
      %v2739 = vunpack.c.l.b16 %v2478
      %v2740 = vunpack.c.l.b16 %v2479
      %v2741 = vunpack.c.l.b16 %v2480
      %v2742 = vunpack.c.l.b16 %v2481
      %v2743 = vunpack.c.l.b16 %v2482
      %v2744 = vunpack.c.l.b16 %v2483
      %v2745 = vunpack.c.l.b16 %v2484
      %v2746 = vunpack.c.l.b16 %v2485
      %v2747 = vunpack.c.l.b16 %v2486
      %v2748 = vunpack.c.l.b16 %v2487
      %v2749 = vunpack.c.l.b16 %v2488
      %v2750 = vunpack.c.l.b16 %v2489
      %v2751 = vunpack.c.l.b16 %v2490
      %v2752 = vunpack.c.l.b16 %v2491
      %v2753 = vunpack.c.l.b16 %v2492
      %v2754 = vunpack.c.l.b16 %v2493
      %v2755 = vunpack.c.l.b16 %v2494
      %v2756 = vunpack.c.l.b16 %v2495
      %v2757 = vunpack.c.l.b16 %v2496
      %v2758 = vunpack.c.l.b16 %v2497
      %v2759 = vunpack.c.l.b16 %v2498
      %v2760 = vunpack.c.l.b16 %v2499
      %v2761 = vunpack.c.l.b16 %v2500
      %v2762 = vunpack.c.l.b16 %v2501
      %v2763 = vunpack.c.l.b16 %v2502
      %v2764 = vunpack.c.l.b16 %v2503
      %v2765 = vunpack.c.l.b16 %v2504
      %v2766 = vunpack.c.l.b16 %v2505
      %v2767 = vunpack.c.l.b16 %v2506
      %v2768 = vunpack.c.l.b16 %v2507
      %v2769 = vunpack.c.l.b16 %v2508
      %v2770 = vunpack.c.l.b16 %v2509
      %v2771 = vunpack.c.l.b16 %v2510
      %v2772 = vunpack.c.l.b16 %v2511
      %v2773 = vunpack.c.l.b16 %v2512
      %v2774 = vunpack.c.l.b16 %v2513
      %v2775 = vunpack.c.l.b16 %v2514
      %v2776 = vunpack.c.l.b16 %v2515
      %v2777 = vunpack.c.l.b16 %v2516
      %v2778 = vunpack.c.l.b16 %v2517
      %v2779 = vunpack.c.l.b16 %v2518
      %v2780 = vunpack.c.l.b16 %v2519
      %v2781 = vunpack.c.l.b16 %v2520
      %v2782 = vunpack.c.l.b16 %v2521
      %v2783 = vunpack.c.l.b16 %v2522
      %v2784 = vunpack.c.l.b16 %v2523
      %v2785 = vunpack.c.l.b16 %v2524
      %v2786 = vunpack.c.l.b16 %v2525
      %v2787 = vunpack.c.l.b16 %v2526
      %v2788 = vunpack.c.l.b16 %v2527
      %v2789 = vunpack.c.l.b16 %v2528
      %v2790 = vunpack.c.l.b16 %v2529
      %v2791 = vunpack.c.l.b16 %v2530
      %v2792 = vunpack.c.l.b16 %v2531
      %v2793 = vunpack.c.l.b16 %v2532
      %v2794 = vunpack.c.l.b16 %v2533
      %v2795 = vunpack.c.l.b16 %v2534
      %v2796 = vunpack.c.l.b16 %v2535
      %v2797 = vunpack.c.l.b16 %v2536
      %v2798 = vunpack.c.l.b16 %v2537
      %v2799 = vunpack.c.l.b16 %v2538
      %v2800 = vunpack.c.l.b16 %v2539
      %v2801 = vunpack.c.l.b16 %v2540
      %v2802 = vunpack.c.l.b16 %v2541
      %v2803 = vunpack.c.l.b16 %v2542
      %v2804 = vunpack.c.l.b16 %v2543
      %v2805 = vunpack.c.l.b16 %v2544
      %v2806 = vunpack.c.l.b16 %v2545
      %v2807 = vunpack.c.l.b16 %v2546
      %v2808 = vunpack.c.l.b16 %v2547
      %v2809 = vunpack.c.l.b16 %v2548
      %v2810 = vunpack.c.l.b16 %v2549
      %v2811 = vunpack.c.l.b16 %v2550
      %v2812 = vunpack.c.l.b16 %v2551
      %v2813 = vunpack.c.l.b16 %v2552
      %v2814 = vunpack.c.l.b16 %v2553
      %v2815 = vunpack.c.l.b16 %v2554
      %v2816 = vunpack.c.l.b16 %v2555
      %v2817 = vunpack.c.l.b16 %v2556
      %v2818 = vunpack.c.l.b16 %v2557
      %v2819 = vunpack.c.l.b16 %v2558
      %v2820 = vunpack.c.l.b16 %v2559
      %v2821 = vunpack.c.l.b16 %v2560
      %v2822 = vunpack.c.l.b16 %v2561
      %v2823 = vunpack.c.l.b16 %v2562
      %v2824 = vunpack.c.l.b16 %v2563
      %v2825 = vunpack.c.l.b16 %v2564
      %v2826 = vunpack.c.l.b16 %v2565
      %v2827 = vunpack.c.l.b16 %v2566
      %v2828 = vunpack.c.l.b16 %v2567
      %v2829 = vunpack.c.l.b16 %v2568
      %v2830 = vunpack.c.l.b16 %v2569
      %v2831 = vunpack.c.l.b16 %v2570
      %v2832 = vunpack.c.l.b16 %v2571
      %v2833 = vunpack.c.l.b16 %v2572
      %v2834 = vunpack.c.l.b16 %v2573
      %v2835 = vunpack.c.l.b16 %v2574
      %v2836 = vunpack.c.l.b16 %v2575
      %v2837 = vunpack.c.l.b16 %v2576
      %v2838 = vunpack.c.l.b16 %v2577
      %v2839 = vunpack.c.l.b16 %v2578
      %v2840 = vunpack.c.l.b16 %v2579
      %v2841 = vunpack.c.l.b16 %v2580
      %v2842 = vunpack.c.l.b16 %v2581
      %v2843 = vunpack.c.l.b16 %v2582
      %v2844 = vunpack.c.l.b16 %v2583
      %v2845 = vunpack.c.l.b16 %v2584
      %v2846 = vunpack.c.l.b16 %v2585
      %v2847 = vunpack.c.l.b16 %v2586
      %v2848 = vunpack.c.l.b16 %v2587
      %v2849 = vunpack.c.l.b16 %v2588
      %v2850 = vunpack.c.l.b16 %v2589
      %v2851 = vunpack.c.l.b16 %v2590
      %v2852 = vunpack.c.l.b16 %v2591
      %v2853 = vunpack.c.l.b16 %v2592
      %v2854 = vunpack.c.l.b16 %v2593
      %v2855 = vpack.c.b16 %v2728, %v2727
      %v2856 = vpack.c.b16 %v2730, %v2729
      %v2857 = vpack.c.b16 %v2732, %v2731
      %v2858 = vpack.c.b16 %v2734, %v2733
      %v2859 = vpack.c.b16 %v2736, %v2735
      %v2860 = vpack.c.b16 %v2738, %v2737
      %v2861 = vpack.c.b16 %v2740, %v2739
      %v2862 = vpack.c.b16 %v2742, %v2741
      %v2863 = vpack.c.b16 %v2744, %v2743
      %v2864 = vpack.c.b16 %v2746, %v2745
      %v2865 = vpack.c.b16 %v2748, %v2747
      %v2866 = vpack.c.b16 %v2750, %v2749
      %v2867 = vpack.c.b16 %v2752, %v2751
      %v2868 = vpack.c.b16 %v2754, %v2753
      %v2869 = vpack.c.b16 %v2756, %v2755
      %v2870 = vpack.c.b16 %v2758, %v2757
      %v2871 = vpack.c.b16 %v2760, %v2759
      %v2872 = vpack.c.b16 %v2762, %v2761
      %v2873 = vpack.c.b16 %v2764, %v2763
      %v2874 = vpack.c.b16 %v2766, %v2765
      %v2875 = vpack.c.b16 %v2768, %v2767
      %v2876 = vpack.c.b16 %v2770, %v2769
      %v2877 = vpack.c.b16 %v2772, %v2771
      %v2878 = vpack.c.b16 %v2774, %v2773
      %v2879 = vpack.c.b16 %v2776, %v2775
      %v2880 = vpack.c.b16 %v2778, %v2777
      %v2881 = vpack.c.b16 %v2780, %v2779
      %v2882 = vpack.c.b16 %v2782, %v2781
      %v2883 = vpack.c.b16 %v2784, %v2783
      %v2884 = vpack.c.b16 %v2786, %v2785
      %v2885 = vpack.c.b16 %v2788, %v2787
      %v2886 = vpack.c.b16 %v2790, %v2789
      %v2887 = vpack.c.b16 %v2792, %v2791
      %v2888 = vpack.c.b16 %v2794, %v2793
      %v2889 = vpack.c.b16 %v2796, %v2795
      %v2890 = vpack.c.b16 %v2798, %v2797
      %v2891 = vpack.c.b16 %v2800, %v2799
      %v2892 = vpack.c.b16 %v2802, %v2801
      %v2893 = vpack.c.b16 %v2804, %v2803
      %v2894 = vpack.c.b16 %v2806, %v2805
      %v2895 = vpack.c.b16 %v2808, %v2807
      %v2896 = vpack.c.b16 %v2810, %v2809
      %v2897 = vpack.c.b16 %v2812, %v2811
      %v2898 = vpack.c.b16 %v2814, %v2813
      %v2899 = vpack.c.b16 %v2816, %v2815
      %v2900 = vpack.c.b16 %v2818, %v2817
      %v2901 = vpack.c.b16 %v2820, %v2819
      %v2902 = vpack.c.b16 %v2822, %v2821
      %v2903 = vpack.c.b16 %v2824, %v2823
      %v2904 = vpack.c.b16 %v2826, %v2825
      %v2905 = vpack.c.b16 %v2828, %v2827
      %v2906 = vpack.c.b16 %v2830, %v2829
      %v2907 = vpack.c.b16 %v2832, %v2831
      %v2908 = vpack.c.b16 %v2834, %v2833
      %v2909 = vpack.c.b16 %v2836, %v2835
      %v2910 = vpack.c.b16 %v2838, %v2837
      %v2911 = vpack.c.b16 %v2840, %v2839
      %v2912 = vpack.c.b16 %v2842, %v2841
      %v2913 = vpack.c.b16 %v2844, %v2843
      %v2914 = vpack.c.b16 %v2846, %v2845
      %v2915 = vpack.c.b16 %v2848, %v2847
      %v2916 = vpack.c.b16 %v2850, %v2849
      %v2917 = vpack.c.b16 %v2852, %v2851
      %v2918 = vpack.c.b16 %v2854, %v2853
      %v2923 = vunpack.c.l.b16 %v2595
      %v2924 = vunpack.c.l.b16 %v2596
      %v2925 = vunpack.c.l.b16 %v2597
      %v2926 = vunpack.c.l.b16 %v2598
      %v2927 = vpack.c.b16 %v2924, %v2923
      %v2928 = vpack.c.b16 %v2926, %v2925
      %v2932 = vsel %vm691, %v2855, 0
      %v2935 = vsel %vm691, %v2856, 0
      %v2938 = vsel %vm691, %v2857, 0
      %v2941 = vsel %vm691, %v2858, 0
      %v2944 = vsel %vm691, %v2859, 0
      %v2947 = vsel %vm691, %v2860, 0
      %v2950 = vsel %vm691, %v2861, 0
      %v2953 = vsel %vm691, %v2862, 0
      %v2956 = vsel %vm691, %v2863, 0
      %v2959 = vsel %vm691, %v2864, 0
      %v2962 = vsel %vm691, %v2865, 0
      %v2965 = vsel %vm691, %v2866, 0
      %v2968 = vsel %vm691, %v2867, 0
      %v2971 = vsel %vm691, %v2868, 0
      %v2974 = vsel %vm691, %v2869, 0
      %v2977 = vsel %vm691, %v2870, 0
      %v2980 = vsel %vm691, %v2871, 0
      %v2983 = vsel %vm691, %v2872, 0
      %v2986 = vsel %vm691, %v2873, 0
      %v2989 = vsel %vm691, %v2874, 0
      %v2992 = vsel %vm691, %v2875, 0
      %v2995 = vsel %vm691, %v2876, 0
      %v2998 = vsel %vm691, %v2877, 0
      %v3001 = vsel %vm691, %v2878, 0
      %v3004 = vsel %vm691, %v2879, 0
      %v3007 = vsel %vm691, %v2880, 0
      %v3010 = vsel %vm691, %v2881, 0
      %v3013 = vsel %vm691, %v2882, 0
      %v3016 = vsel %vm691, %v2883, 0
      %v3019 = vsel %vm691, %v2884, 0
      %v3022 = vsel %vm691, %v2885, 0
      %v3025 = vsel %vm691, %v2886, 0
      %v3028 = vsel %vm691, %v2887, 0
      %v3031 = vsel %vm691, %v2888, 0
      %v3034 = vsel %vm691, %v2889, 0
      %v3037 = vsel %vm691, %v2890, 0
      %v3040 = vsel %vm691, %v2891, 0
      %v3043 = vsel %vm691, %v2892, 0
      %v3046 = vsel %vm691, %v2893, 0
      %v3049 = vsel %vm691, %v2894, 0
      %v3052 = vsel %vm691, %v2895, 0
      %v3055 = vsel %vm691, %v2896, 0
      %v3058 = vsel %vm691, %v2897, 0
      %v3061 = vsel %vm691, %v2898, 0
      %v3064 = vsel %vm691, %v2899, 0
      %v3067 = vsel %vm691, %v2900, 0
      %v3070 = vsel %vm691, %v2901, 0
      %v3073 = vsel %vm691, %v2902, 0
      %v3076 = vsel %vm691, %v2903, 0
      %v3079 = vsel %vm691, %v2904, 0
      %v3082 = vsel %vm691, %v2905, 0
      %v3085 = vsel %vm691, %v2906, 0
      %v3088 = vsel %vm691, %v2907, 0
      %v3091 = vsel %vm691, %v2908, 0
      %v3094 = vsel %vm691, %v2909, 0
      %v3097 = vsel %vm691, %v2910, 0
      %v3100 = vsel %vm691, %v2911, 0
      %v3103 = vsel %vm691, %v2912, 0
      %v3106 = vsel %vm691, %v2913, 0
      %v3109 = vsel %vm691, %v2914, 0
      %v3112 = vsel %vm691, %v2915, 0
      %v3115 = vsel %vm691, %v2916, 0
      %v3118 = vsel %vm691, %v2917, 0
      %v3121 = vsel %vm691, %v2918, 0
      %3123 = vmatprep.subr.bf16.mxu0 0
      %3124 = vmatpush1.bf16.msra.mxu0 %v2927
      %3125 = vmatprep.subr.bf16.mxu0 0
      %3126 = vmatpush1.bf16.msra.mxu0 %v2928
      %3127 = vmatprep.subr.bf16.mxu0 0
      %3128 = vmatpush1.bf16.msra.mxu0 0
      %3129 = vmatprep.subr.bf16.mxu0 0
      %3130 = vmatpush1.bf16.msra.mxu0 0
      %3131 = vmatprep.subr.bf16.mxu0 0
      %3132 = vmatpush1.bf16.msra.mxu0 0
      %3133 = vmatprep.subr.bf16.mxu0 0
      %3134 = vmatpush1.bf16.msra.mxu0 0
      %3135 = vmatprep.subr.bf16.mxu0 0
      %3136 = vmatpush1.bf16.msra.mxu0 0
      %3137 = vmatprep.subr.bf16.mxu0 0
      %3138 = vmatpush1.bf16.msra.mxu0 0
      %3139 = vmatprep.subr.bf16.mxu0 0
      %3140 = vmatpush1.bf16.msra.mxu0 0
      %3141 = vmatprep.subr.bf16.mxu0 0
      %3142 = vmatpush1.bf16.msra.mxu0 0
      %3143 = vmatprep.subr.bf16.mxu0 0
      %3144 = vmatpush1.bf16.msra.mxu0 0
      %3145 = vmatprep.subr.bf16.mxu0 0
      %3146 = vmatpush1.bf16.msra.mxu0 0
      %3147 = vmatprep.subr.bf16.mxu0 0
      %3148 = vmatpush1.bf16.msra.mxu0 0
      %3149 = vmatprep.subr.bf16.mxu0 0
      %3150 = vmatpush1.bf16.msra.mxu0 0
      %3151 = vmatprep.subr.bf16.mxu0 0
      %3152 = vmatpush1.bf16.msra.mxu0 0
      %3153 = vmatprep.subr.bf16.mxu0 0
      %3154 = vmatpush1.bf16.msra.mxu0 0
      %3155 = vmatprep.mubr.bf16.mxu0 0
      %3156 = vmatmul.mubr.bf16.gmra.mrb[0].mxu0 %v2932
      %v3157 = vpop.f32.mrb[0].mxu0
      %v3158 = vadd.f32 0.0, %v3157
      %v3159 = vpop.f32.mrb[0].mxu0
      %v3160 = vpop.f32.mrb[0].mxu0
      %v3161 = vadd.f32 0.0, %v3160
      %v3162 = vpop.f32.mrb[0].mxu0
      %3163 = vmatprep.mubr.bf16.mxu0 0
      %3164 = vmatmul.mubr.bf16.gmra.mrb[0].mxu0 %v2935
      %v3165 = vpop.f32.mrb[0].mxu0
      %v3166 = vadd.f32 0.0, %v3165
      %v3167 = vpop.f32.mrb[0].mxu0
      %v3168 = vpop.f32.mrb[0].mxu0
      %v3169 = vadd.f32 0.0, %v3168
      %v3170 = vpop.f32.mrb[0].mxu0
      %3171 = vmatprep.mubr.bf16.mxu0 0
      %3172 = vmatmul.mubr.bf16.gmra.mrb[0].mxu0 %v2938
      %v3173 = vpop.f32.mrb[0].mxu0
      %v3174 = vadd.f32 0.0, %v3173
      %v3175 = vpop.f32.mrb[0].mxu0
      %v3176 = vpop.f32.mrb[0].mxu0
      %v3177 = vadd.f32 0.0, %v3176
      %v3178 = vpop.f32.mrb[0].mxu0
      %3179 = vmatprep.mubr.bf16.mxu0 0
      %3180 = vmatmul.mubr.bf16.gmra.mrb[0].mxu0 %v2941
      %v3181 = vpop.f32.mrb[0].mxu0
      %v3182 = vadd.f32 0.0, %v3181
      %v3183 = vpop.f32.mrb[0].mxu0
      %v3184 = vpop.f32.mrb[0].mxu0
      %v3185 = vadd.f32 0.0, %v3184
      %v3186 = vpop.f32.mrb[0].mxu0
      %3187 = vmatprep.mubr.bf16.mxu0 0
      %3188 = vmatmul.mubr.bf16.gmra.mrb[0].mxu0 %v2944
      %v3189 = vpop.f32.mrb[0].mxu0
      %v3190 = vadd.f32 0.0, %v3189
      %v3191 = vpop.f32.mrb[0].mxu0
      %v3192 = vpop.f32.mrb[0].mxu0
      %v3193 = vadd.f32 0.0, %v3192
      %v3194 = vpop.f32.mrb[0].mxu0
      %3195 = vmatprep.mubr.bf16.mxu0 0
      %3196 = vmatmul.mubr.bf16.gmra.mrb[0].mxu0 %v2947
      %v3197 = vpop.f32.mrb[0].mxu0
      %v3198 = vadd.f32 0.0, %v3197
      %v3199 = vpop.f32.mrb[0].mxu0
      %v3200 = vpop.f32.mrb[0].mxu0
      %v3201 = vadd.f32 0.0, %v3200
      %v3202 = vpop.f32.mrb[0].mxu0
      %3203 = vmatprep.mubr.bf16.mxu0 0
      %3204 = vmatmul.mubr.bf16.gmra.mrb[0].mxu0 %v2950
      %v3205 = vpop.f32.mrb[0].mxu0
      %v3206 = vadd.f32 0.0, %v3205
      %v3207 = vpop.f32.mrb[0].mxu0
      %v3208 = vpop.f32.mrb[0].mxu0
      %v3209 = vadd.f32 0.0, %v3208
      %v3210 = vpop.f32.mrb[0].mxu0
      %3211 = vmatprep.mubr.bf16.mxu0 0
      %3212 = vmatmul.mubr.bf16.gmra.mrb[0].mxu0 %v2953
      %v3213 = vpop.f32.mrb[0].mxu0
      %v3214 = vadd.f32 0.0, %v3213
      %v3215 = vpop.f32.mrb[0].mxu0
      %v3216 = vpop.f32.mrb[0].mxu0
      %v3217 = vadd.f32 0.0, %v3216
      %v3218 = vpop.f32.mrb[0].mxu0
      %3219 = vmatprep.mubr.bf16.mxu0 0
      %3220 = vmatmul.mubr.bf16.gmra.mrb[0].mxu0 %v2956
      %v3221 = vpop.f32.mrb[0].mxu0
      %v3222 = vadd.f32 0.0, %v3221
      %v3223 = vpop.f32.mrb[0].mxu0
      %v3224 = vpop.f32.mrb[0].mxu0
      %v3225 = vadd.f32 0.0, %v3224
      %v3226 = vpop.f32.mrb[0].mxu0
      %3227 = vmatprep.mubr.bf16.mxu0 0
      %3228 = vmatmul.mubr.bf16.gmra.mrb[0].mxu0 %v2959
      %v3229 = vpop.f32.mrb[0].mxu0
      %v3230 = vadd.f32 0.0, %v3229
      %v3231 = vpop.f32.mrb[0].mxu0
      %v3232 = vpop.f32.mrb[0].mxu0
      %v3233 = vadd.f32 0.0, %v3232
      %v3234 = vpop.f32.mrb[0].mxu0
      %3235 = vmatprep.mubr.bf16.mxu0 0
      %3236 = vmatmul.mubr.bf16.gmra.mrb[0].mxu0 %v2962
      %v3237 = vpop.f32.mrb[0].mxu0
      %v3238 = vadd.f32 0.0, %v3237
      %v3239 = vpop.f32.mrb[0].mxu0
      %v3240 = vpop.f32.mrb[0].mxu0
      %v3241 = vadd.f32 0.0, %v3240
      %v3242 = vpop.f32.mrb[0].mxu0
      %3243 = vmatprep.mubr.bf16.mxu0 0
      %3244 = vmatmul.mubr.bf16.gmra.mrb[0].mxu0 %v2965
      %v3245 = vpop.f32.mrb[0].mxu0
      %v3246 = vadd.f32 0.0, %v3245
      %v3247 = vpop.f32.mrb[0].mxu0
      %v3248 = vpop.f32.mrb[0].mxu0
      %v3249 = vadd.f32 0.0, %v3248
      %v3250 = vpop.f32.mrb[0].mxu0
      %3251 = vmatprep.mubr.bf16.mxu0 0
      %3252 = vmatmul.mubr.bf16.gmra.mrb[0].mxu0 %v2968
      %v3253 = vpop.f32.mrb[0].mxu0
      %v3254 = vadd.f32 0.0, %v3253
      %v3255 = vpop.f32.mrb[0].mxu0
      %v3256 = vpop.f32.mrb[0].mxu0
      %v3257 = vadd.f32 0.0, %v3256
      %v3258 = vpop.f32.mrb[0].mxu0
      %3259 = vmatprep.mubr.bf16.mxu0 0
      %3260 = vmatmul.mubr.bf16.gmra.mrb[0].mxu0 %v2971
      %v3261 = vpop.f32.mrb[0].mxu0
      %v3262 = vadd.f32 0.0, %v3261
      %v3263 = vpop.f32.mrb[0].mxu0
      %v3264 = vpop.f32.mrb[0].mxu0
      %v3265 = vadd.f32 0.0, %v3264
      %v3266 = vpop.f32.mrb[0].mxu0
      %3267 = vmatprep.mubr.bf16.mxu0 0
      %3268 = vmatmul.mubr.bf16.gmra.mrb[0].mxu0 %v2974
      %v3269 = vpop.f32.mrb[0].mxu0
      %v3270 = vadd.f32 0.0, %v3269
      %v3271 = vpop.f32.mrb[0].mxu0
      %v3272 = vpop.f32.mrb[0].mxu0
      %v3273 = vadd.f32 0.0, %v3272
      %v3274 = vpop.f32.mrb[0].mxu0
      %3275 = vmatprep.mubr.bf16.mxu0 0
      %3276 = vmatmul.mubr.bf16.gmra.mrb[0].mxu0 %v2977
      %v3277 = vpop.f32.mrb[0].mxu0
      %v3278 = vadd.f32 0.0, %v3277
      %v3279 = vpop.f32.mrb[0].mxu0
      %v3280 = vpop.f32.mrb[0].mxu0
      %v3281 = vadd.f32 0.0, %v3280
      %v3282 = vpop.f32.mrb[0].mxu0
      %3283 = vmatprep.mubr.bf16.mxu0 0
      %3284 = vmatmul.mubr.bf16.gmra.mrb[0].mxu0 %v2980
      %v3285 = vpop.f32.mrb[0].mxu0
      %v3286 = vadd.f32 0.0, %v3285
      %v3287 = vpop.f32.mrb[0].mxu0
      %v3288 = vpop.f32.mrb[0].mxu0
      %v3289 = vadd.f32 0.0, %v3288
      %v3290 = vpop.f32.mrb[0].mxu0
      %3291 = vmatprep.mubr.bf16.mxu0 0
      %3292 = vmatmul.mubr.bf16.gmra.mrb[0].mxu0 %v2983
      %v3293 = vpop.f32.mrb[0].mxu0
      %v3294 = vadd.f32 0.0, %v3293
      %v3295 = vpop.f32.mrb[0].mxu0
      %v3296 = vpop.f32.mrb[0].mxu0
      %v3297 = vadd.f32 0.0, %v3296
      %v3298 = vpop.f32.mrb[0].mxu0
      %3299 = vmatprep.mubr.bf16.mxu0 0
      %3300 = vmatmul.mubr.bf16.gmra.mrb[0].mxu0 %v2986
      %v3301 = vpop.f32.mrb[0].mxu0
      %v3302 = vadd.f32 0.0, %v3301
      %v3303 = vpop.f32.mrb[0].mxu0
      %v3304 = vpop.f32.mrb[0].mxu0
      %v3305 = vadd.f32 0.0, %v3304
      %v3306 = vpop.f32.mrb[0].mxu0
      %3307 = vmatprep.mubr.bf16.mxu0 0
      %3308 = vmatmul.mubr.bf16.gmra.mrb[0].mxu0 %v2989
      %v3309 = vpop.f32.mrb[0].mxu0
      %v3310 = vadd.f32 0.0, %v3309
      %v3311 = vpop.f32.mrb[0].mxu0
      %v3312 = vpop.f32.mrb[0].mxu0
      %v3313 = vadd.f32 0.0, %v3312
      %v3314 = vpop.f32.mrb[0].mxu0
      %3315 = vmatprep.mubr.bf16.mxu0 0
      %3316 = vmatmul.mubr.bf16.gmra.mrb[0].mxu0 %v2992
      %v3317 = vpop.f32.mrb[0].mxu0
      %v3318 = vadd.f32 0.0, %v3317
      %v3319 = vpop.f32.mrb[0].mxu0
      %v3320 = vpop.f32.mrb[0].mxu0
      %v3321 = vadd.f32 0.0, %v3320
      %v3322 = vpop.f32.mrb[0].mxu0
      %3323 = vmatprep.mubr.bf16.mxu0 0
      %3324 = vmatmul.mubr.bf16.gmra.mrb[0].mxu0 %v2995
      %v3325 = vpop.f32.mrb[0].mxu0
      %v3326 = vadd.f32 0.0, %v3325
      %v3327 = vpop.f32.mrb[0].mxu0
      %v3328 = vpop.f32.mrb[0].mxu0
      %v3329 = vadd.f32 0.0, %v3328
      %v3330 = vpop.f32.mrb[0].mxu0
      %3331 = vmatprep.mubr.bf16.mxu0 0
      %3332 = vmatmul.mubr.bf16.gmra.mrb[0].mxu0 %v2998
      %v3333 = vpop.f32.mrb[0].mxu0
      %v3334 = vadd.f32 0.0, %v3333
      %v3335 = vpop.f32.mrb[0].mxu0
      %v3336 = vpop.f32.mrb[0].mxu0
      %v3337 = vadd.f32 0.0, %v3336
      %v3338 = vpop.f32.mrb[0].mxu0
      %3339 = vmatprep.mubr.bf16.mxu0 0
      %3340 = vmatmul.mubr.bf16.gmra.mrb[0].mxu0 %v3001
      %v3341 = vpop.f32.mrb[0].mxu0
      %v3342 = vadd.f32 0.0, %v3341
      %v3343 = vpop.f32.mrb[0].mxu0
      %v3344 = vpop.f32.mrb[0].mxu0
      %v3345 = vadd.f32 0.0, %v3344
      %v3346 = vpop.f32.mrb[0].mxu0
      %3347 = vmatprep.mubr.bf16.mxu0 0
      %3348 = vmatmul.mubr.bf16.gmra.mrb[0].mxu0 %v3004
      %v3349 = vpop.f32.mrb[0].mxu0
      %v3350 = vadd.f32 0.0, %v3349
      %v3351 = vpop.f32.mrb[0].mxu0
      %v3352 = vpop.f32.mrb[0].mxu0
      %v3353 = vadd.f32 0.0, %v3352
      %v3354 = vpop.f32.mrb[0].mxu0
      %3355 = vmatprep.mubr.bf16.mxu0 0
      %3356 = vmatmul.mubr.bf16.gmra.mrb[0].mxu0 %v3007
      %v3357 = vpop.f32.mrb[0].mxu0
      %v3358 = vadd.f32 0.0, %v3357
      %v3359 = vpop.f32.mrb[0].mxu0
      %v3360 = vpop.f32.mrb[0].mxu0
      %v3361 = vadd.f32 0.0, %v3360
      %v3362 = vpop.f32.mrb[0].mxu0
      %3363 = vmatprep.mubr.bf16.mxu0 0
      %3364 = vmatmul.mubr.bf16.gmra.mrb[0].mxu0 %v3010
      %v3365 = vpop.f32.mrb[0].mxu0
      %v3366 = vadd.f32 0.0, %v3365
      %v3367 = vpop.f32.mrb[0].mxu0
      %v3368 = vpop.f32.mrb[0].mxu0
      %v3369 = vadd.f32 0.0, %v3368
      %v3370 = vpop.f32.mrb[0].mxu0
      %3371 = vmatprep.mubr.bf16.mxu0 0
      %3372 = vmatmul.mubr.bf16.gmra.mrb[0].mxu0 %v3013
      %v3373 = vpop.f32.mrb[0].mxu0
      %v3374 = vadd.f32 0.0, %v3373
      %v3375 = vpop.f32.mrb[0].mxu0
      %v3376 = vpop.f32.mrb[0].mxu0
      %v3377 = vadd.f32 0.0, %v3376
      %v3378 = vpop.f32.mrb[0].mxu0
      %3379 = vmatprep.mubr.bf16.mxu0 0
      %3380 = vmatmul.mubr.bf16.gmra.mrb[0].mxu0 %v3016
      %v3381 = vpop.f32.mrb[0].mxu0
      %v3382 = vadd.f32 0.0, %v3381
      %v3383 = vpop.f32.mrb[0].mxu0
      %v3384 = vpop.f32.mrb[0].mxu0
      %v3385 = vadd.f32 0.0, %v3384
      %v3386 = vpop.f32.mrb[0].mxu0
      %3387 = vmatprep.mubr.bf16.mxu0 0
      %3388 = vmatmul.mubr.bf16.gmra.mrb[0].mxu0 %v3019
      %v3389 = vpop.f32.mrb[0].mxu0
      %v3390 = vadd.f32 0.0, %v3389
      %v3391 = vpop.f32.mrb[0].mxu0
      %v3392 = vpop.f32.mrb[0].mxu0
      %v3393 = vadd.f32 0.0, %v3392
      %v3394 = vpop.f32.mrb[0].mxu0
      %3395 = vmatprep.mubr.bf16.mxu0 0
      %3396 = vmatmul.mubr.bf16.gmra.mrb[0].mxu0 %v3022
      %v3397 = vpop.f32.mrb[0].mxu0
      %v3398 = vadd.f32 0.0, %v3397
      %v3399 = vpop.f32.mrb[0].mxu0
      %v3400 = vpop.f32.mrb[0].mxu0
      %v3401 = vadd.f32 0.0, %v3400
      %v3402 = vpop.f32.mrb[0].mxu0
      %3403 = vmatprep.mubr.bf16.mxu0 0
      %3404 = vmatmul.mubr.bf16.gmra.mrb[0].mxu0 %v3025
      %v3405 = vpop.f32.mrb[0].mxu0
      %v3406 = vadd.f32 0.0, %v3405
      %v3407 = vpop.f32.mrb[0].mxu0
      %v3408 = vpop.f32.mrb[0].mxu0
      %v3409 = vadd.f32 0.0, %v3408
      %v3410 = vpop.f32.mrb[0].mxu0
      %3411 = vmatprep.mubr.bf16.mxu0 0
      %3412 = vmatmul.mubr.bf16.gmra.mrb[0].mxu0 %v3028
      %v3413 = vpop.f32.mrb[0].mxu0
      %v3414 = vadd.f32 0.0, %v3413
      %v3415 = vpop.f32.mrb[0].mxu0
      %v3416 = vpop.f32.mrb[0].mxu0
      %v3417 = vadd.f32 0.0, %v3416
      %v3418 = vpop.f32.mrb[0].mxu0
      %3419 = vmatprep.mubr.bf16.mxu0 0
      %3420 = vmatmul.mubr.bf16.gmra.mrb[0].mxu0 %v3031
      %v3421 = vpop.f32.mrb[0].mxu0
      %v3422 = vadd.f32 0.0, %v3421
      %v3423 = vpop.f32.mrb[0].mxu0
      %v3424 = vpop.f32.mrb[0].mxu0
      %v3425 = vadd.f32 0.0, %v3424
      %v3426 = vpop.f32.mrb[0].mxu0
      %3427 = vmatprep.mubr.bf16.mxu0 0
      %3428 = vmatmul.mubr.bf16.gmra.mrb[0].mxu0 %v3034
      %v3429 = vpop.f32.mrb[0].mxu0
      %v3430 = vadd.f32 0.0, %v3429
      %v3431 = vpop.f32.mrb[0].mxu0
      %v3432 = vpop.f32.mrb[0].mxu0
      %v3433 = vadd.f32 0.0, %v3432
      %v3434 = vpop.f32.mrb[0].mxu0
      %3435 = vmatprep.mubr.bf16.mxu0 0
      %3436 = vmatmul.mubr.bf16.gmra.mrb[0].mxu0 %v3037
      %v3437 = vpop.f32.mrb[0].mxu0
      %v3438 = vadd.f32 0.0, %v3437
      %v3439 = vpop.f32.mrb[0].mxu0
      %v3440 = vpop.f32.mrb[0].mxu0
      %v3441 = vadd.f32 0.0, %v3440
      %v3442 = vpop.f32.mrb[0].mxu0
      %3443 = vmatprep.mubr.bf16.mxu0 0
      %3444 = vmatmul.mubr.bf16.gmra.mrb[0].mxu0 %v3040
      %v3445 = vpop.f32.mrb[0].mxu0
      %v3446 = vadd.f32 0.0, %v3445
      %v3447 = vpop.f32.mrb[0].mxu0
      %v3448 = vpop.f32.mrb[0].mxu0
      %v3449 = vadd.f32 0.0, %v3448
      %v3450 = vpop.f32.mrb[0].mxu0
      %3451 = vmatprep.mubr.bf16.mxu0 0
      %3452 = vmatmul.mubr.bf16.gmra.mrb[0].mxu0 %v3043
      %v3453 = vpop.f32.mrb[0].mxu0
      %v3454 = vadd.f32 0.0, %v3453
      %v3455 = vpop.f32.mrb[0].mxu0
      %v3456 = vpop.f32.mrb[0].mxu0
      %v3457 = vadd.f32 0.0, %v3456
      %v3458 = vpop.f32.mrb[0].mxu0
      %3459 = vmatprep.mubr.bf16.mxu0 0
      %3460 = vmatmul.mubr.bf16.gmra.mrb[0].mxu0 %v3046
      %v3461 = vpop.f32.mrb[0].mxu0
      %v3462 = vadd.f32 0.0, %v3461
      %v3463 = vpop.f32.mrb[0].mxu0
      %v3464 = vpop.f32.mrb[0].mxu0
      %v3465 = vadd.f32 0.0, %v3464
      %v3466 = vpop.f32.mrb[0].mxu0
      %3467 = vmatprep.mubr.bf16.mxu0 0
      %3468 = vmatmul.mubr.bf16.gmra.mrb[0].mxu0 %v3049
      %v3469 = vpop.f32.mrb[0].mxu0
      %v3470 = vadd.f32 0.0, %v3469
      %v3471 = vpop.f32.mrb[0].mxu0
      %v3472 = vpop.f32.mrb[0].mxu0
      %v3473 = vadd.f32 0.0, %v3472
      %v3474 = vpop.f32.mrb[0].mxu0
      %3475 = vmatprep.mubr.bf16.mxu0 0
      %3476 = vmatmul.mubr.bf16.gmra.mrb[0].mxu0 %v3052
      %v3477 = vpop.f32.mrb[0].mxu0
      %v3478 = vadd.f32 0.0, %v3477
      %v3479 = vpop.f32.mrb[0].mxu0
      %v3480 = vpop.f32.mrb[0].mxu0
      %v3481 = vadd.f32 0.0, %v3480
      %v3482 = vpop.f32.mrb[0].mxu0
      %3483 = vmatprep.mubr.bf16.mxu0 0
      %3484 = vmatmul.mubr.bf16.gmra.mrb[0].mxu0 %v3055
      %v3485 = vpop.f32.mrb[0].mxu0
      %v3486 = vadd.f32 0.0, %v3485
      %v3487 = vpop.f32.mrb[0].mxu0
      %v3488 = vpop.f32.mrb[0].mxu0
      %v3489 = vadd.f32 0.0, %v3488
      %v3490 = vpop.f32.mrb[0].mxu0
      %3491 = vmatprep.mubr.bf16.mxu0 0
      %3492 = vmatmul.mubr.bf16.gmra.mrb[0].mxu0 %v3058
      %v3493 = vpop.f32.mrb[0].mxu0
      %v3494 = vadd.f32 0.0, %v3493
      %v3495 = vpop.f32.mrb[0].mxu0
      %v3496 = vpop.f32.mrb[0].mxu0
      %v3497 = vadd.f32 0.0, %v3496
      %v3498 = vpop.f32.mrb[0].mxu0
      %3499 = vmatprep.mubr.bf16.mxu0 0
      %3500 = vmatmul.mubr.bf16.gmra.mrb[0].mxu0 %v3061
      %v3501 = vpop.f32.mrb[0].mxu0
      %v3502 = vadd.f32 0.0, %v3501
      %v3503 = vpop.f32.mrb[0].mxu0
      %v3504 = vpop.f32.mrb[0].mxu0
      %v3505 = vadd.f32 0.0, %v3504
      %v3506 = vpop.f32.mrb[0].mxu0
      %3507 = vmatprep.mubr.bf16.mxu0 0
      %3508 = vmatmul.mubr.bf16.gmra.mrb[0].mxu0 %v3064
      %v3509 = vpop.f32.mrb[0].mxu0
      %v3510 = vadd.f32 0.0, %v3509
      %v3511 = vpop.f32.mrb[0].mxu0
      %v3512 = vpop.f32.mrb[0].mxu0
      %v3513 = vadd.f32 0.0, %v3512
      %v3514 = vpop.f32.mrb[0].mxu0
      %3515 = vmatprep.mubr.bf16.mxu0 0
      %3516 = vmatmul.mubr.bf16.gmra.mrb[0].mxu0 %v3067
      %v3517 = vpop.f32.mrb[0].mxu0
      %v3518 = vadd.f32 0.0, %v3517
      %v3519 = vpop.f32.mrb[0].mxu0
      %v3520 = vpop.f32.mrb[0].mxu0
      %v3521 = vadd.f32 0.0, %v3520
      %v3522 = vpop.f32.mrb[0].mxu0
      %3523 = vmatprep.mubr.bf16.mxu0 0
      %3524 = vmatmul.mubr.bf16.gmra.mrb[0].mxu0 %v3070
      %v3525 = vpop.f32.mrb[0].mxu0
      %v3526 = vadd.f32 0.0, %v3525
      %v3527 = vpop.f32.mrb[0].mxu0
      %v3528 = vpop.f32.mrb[0].mxu0
      %v3529 = vadd.f32 0.0, %v3528
      %v3530 = vpop.f32.mrb[0].mxu0
      %3531 = vmatprep.mubr.bf16.mxu0 0
      %3532 = vmatmul.mubr.bf16.gmra.mrb[0].mxu0 %v3073
      %v3533 = vpop.f32.mrb[0].mxu0
      %v3534 = vadd.f32 0.0, %v3533
      %v3535 = vpop.f32.mrb[0].mxu0
      %v3536 = vpop.f32.mrb[0].mxu0
      %v3537 = vadd.f32 0.0, %v3536
      %v3538 = vpop.f32.mrb[0].mxu0
      %3539 = vmatprep.mubr.bf16.mxu0 0
      %3540 = vmatmul.mubr.bf16.gmra.mrb[0].mxu0 %v3076
      %v3541 = vpop.f32.mrb[0].mxu0
      %v3542 = vadd.f32 0.0, %v3541
      %v3543 = vpop.f32.mrb[0].mxu0
      %v3544 = vpop.f32.mrb[0].mxu0
      %v3545 = vadd.f32 0.0, %v3544
      %v3546 = vpop.f32.mrb[0].mxu0
      %3547 = vmatprep.mubr.bf16.mxu0 0
      %3548 = vmatmul.mubr.bf16.gmra.mrb[0].mxu0 %v3079
      %v3549 = vpop.f32.mrb[0].mxu0
      %v3550 = vadd.f32 0.0, %v3549
      %v3551 = vpop.f32.mrb[0].mxu0
      %v3552 = vpop.f32.mrb[0].mxu0
      %v3553 = vadd.f32 0.0, %v3552
      %v3554 = vpop.f32.mrb[0].mxu0
      %3555 = vmatprep.mubr.bf16.mxu0 0
      %3556 = vmatmul.mubr.bf16.gmra.mrb[0].mxu0 %v3082
      %v3557 = vpop.f32.mrb[0].mxu0
      %v3558 = vadd.f32 0.0, %v3557
      %v3559 = vpop.f32.mrb[0].mxu0
      %v3560 = vpop.f32.mrb[0].mxu0
      %v3561 = vadd.f32 0.0, %v3560
      %v3562 = vpop.f32.mrb[0].mxu0
      %3563 = vmatprep.mubr.bf16.mxu0 0
      %3564 = vmatmul.mubr.bf16.gmra.mrb[0].mxu0 %v3085
      %v3565 = vpop.f32.mrb[0].mxu0
      %v3566 = vadd.f32 0.0, %v3565
      %v3567 = vpop.f32.mrb[0].mxu0
      %v3568 = vpop.f32.mrb[0].mxu0
      %v3569 = vadd.f32 0.0, %v3568
      %v3570 = vpop.f32.mrb[0].mxu0
      %3571 = vmatprep.mubr.bf16.mxu0 0
      %3572 = vmatmul.mubr.bf16.gmra.mrb[0].mxu0 %v3088
      %v3573 = vpop.f32.mrb[0].mxu0
      %v3574 = vadd.f32 0.0, %v3573
      %v3575 = vpop.f32.mrb[0].mxu0
      %v3576 = vpop.f32.mrb[0].mxu0
      %v3577 = vadd.f32 0.0, %v3576
      %v3578 = vpop.f32.mrb[0].mxu0
      %3579 = vmatprep.mubr.bf16.mxu0 0
      %3580 = vmatmul.mubr.bf16.gmra.mrb[0].mxu0 %v3091
      %v3581 = vpop.f32.mrb[0].mxu0
      %v3582 = vadd.f32 0.0, %v3581
      %v3583 = vpop.f32.mrb[0].mxu0
      %v3584 = vpop.f32.mrb[0].mxu0
      %v3585 = vadd.f32 0.0, %v3584
      %v3586 = vpop.f32.mrb[0].mxu0
      %3587 = vmatprep.mubr.bf16.mxu0 0
      %3588 = vmatmul.mubr.bf16.gmra.mrb[0].mxu0 %v3094
      %v3589 = vpop.f32.mrb[0].mxu0
      %v3590 = vadd.f32 0.0, %v3589
      %v3591 = vpop.f32.mrb[0].mxu0
      %v3592 = vpop.f32.mrb[0].mxu0
      %v3593 = vadd.f32 0.0, %v3592
      %v3594 = vpop.f32.mrb[0].mxu0
      %3595 = vmatprep.mubr.bf16.mxu0 0
      %3596 = vmatmul.mubr.bf16.gmra.mrb[0].mxu0 %v3097
      %v3597 = vpop.f32.mrb[0].mxu0
      %v3598 = vadd.f32 0.0, %v3597
      %v3599 = vpop.f32.mrb[0].mxu0
      %v3600 = vpop.f32.mrb[0].mxu0
      %v3601 = vadd.f32 0.0, %v3600
      %v3602 = vpop.f32.mrb[0].mxu0
      %3603 = vmatprep.mubr.bf16.mxu0 0
      %3604 = vmatmul.mubr.bf16.gmra.mrb[0].mxu0 %v3100
      %v3605 = vpop.f32.mrb[0].mxu0
      %v3606 = vadd.f32 0.0, %v3605
      %v3607 = vpop.f32.mrb[0].mxu0
      %v3608 = vpop.f32.mrb[0].mxu0
      %v3609 = vadd.f32 0.0, %v3608
      %v3610 = vpop.f32.mrb[0].mxu0
      %3611 = vmatprep.mubr.bf16.mxu0 0
      %3612 = vmatmul.mubr.bf16.gmra.mrb[0].mxu0 %v3103
      %v3613 = vpop.f32.mrb[0].mxu0
      %v3614 = vadd.f32 0.0, %v3613
      %v3615 = vpop.f32.mrb[0].mxu0
      %v3616 = vpop.f32.mrb[0].mxu0
      %v3617 = vadd.f32 0.0, %v3616
      %v3618 = vpop.f32.mrb[0].mxu0
      %3619 = vmatprep.mubr.bf16.mxu0 0
      %3620 = vmatmul.mubr.bf16.gmra.mrb[0].mxu0 %v3106
      %v3621 = vpop.f32.mrb[0].mxu0
      %v3622 = vadd.f32 0.0, %v3621
      %v3623 = vpop.f32.mrb[0].mxu0
      %v3624 = vpop.f32.mrb[0].mxu0
      %v3625 = vadd.f32 0.0, %v3624
      %v3626 = vpop.f32.mrb[0].mxu0
      %3627 = vmatprep.mubr.bf16.mxu0 0
      %3628 = vmatmul.mubr.bf16.gmra.mrb[0].mxu0 %v3109
      %v3629 = vpop.f32.mrb[0].mxu0
      %v3630 = vadd.f32 0.0, %v3629
      %v3631 = vpop.f32.mrb[0].mxu0
      %v3632 = vpop.f32.mrb[0].mxu0
      %v3633 = vadd.f32 0.0, %v3632
      %v3634 = vpop.f32.mrb[0].mxu0
      %3635 = vmatprep.mubr.bf16.mxu0 0
      %3636 = vmatmul.mubr.bf16.gmra.mrb[0].mxu0 %v3112
      %v3637 = vpop.f32.mrb[0].mxu0
      %v3638 = vadd.f32 0.0, %v3637
      %v3639 = vpop.f32.mrb[0].mxu0
      %v3640 = vpop.f32.mrb[0].mxu0
      %v3641 = vadd.f32 0.0, %v3640
      %v3642 = vpop.f32.mrb[0].mxu0
      %3643 = vmatprep.mubr.bf16.mxu0 0
      %3644 = vmatmul.mubr.bf16.gmra.mrb[0].mxu0 %v3115
      %v3645 = vpop.f32.mrb[0].mxu0
      %v3646 = vadd.f32 0.0, %v3645
      %v3647 = vpop.f32.mrb[0].mxu0
      %v3648 = vpop.f32.mrb[0].mxu0
      %v3649 = vadd.f32 0.0, %v3648
      %v3650 = vpop.f32.mrb[0].mxu0
      %3651 = vmatprep.mubr.bf16.mxu0 0
      %3652 = vmatmul.mubr.bf16.gmra.mrb[0].mxu0 %v3118
      %v3653 = vpop.f32.mrb[0].mxu0
      %v3654 = vadd.f32 0.0, %v3653
      %v3655 = vpop.f32.mrb[0].mxu0
      %v3656 = vpop.f32.mrb[0].mxu0
      %v3657 = vadd.f32 0.0, %v3656
      %v3658 = vpop.f32.mrb[0].mxu0
      %3659 = vmatprep.mubr.bf16.mxu0 0
      %3660 = vmatmul.mubr.bf16.gmra.mrb[0].mxu0 %v3121
      %v3661 = vpop.f32.mrb[0].mxu0
      %v3662 = vadd.f32 0.0, %v3661
      %v3663 = vpop.f32.mrb[0].mxu0
      %v3664 = vpop.f32.mrb[0].mxu0
      %v3665 = vadd.f32 0.0, %v3664
      %v3666 = vpop.f32.mrb[0].mxu0
      %3667 = vdwg.mxu0
      %v3668 = vpack.c.bf16 %v3161, %v3158
      %v3669 = vpack.c.bf16 %v3169, %v3166
      %v3670 = vpack.c.bf16 %v3177, %v3174
      %v3671 = vpack.c.bf16 %v3185, %v3182
      %v3672 = vpack.c.bf16 %v3193, %v3190
      %v3673 = vpack.c.bf16 %v3201, %v3198
      %v3674 = vpack.c.bf16 %v3209, %v3206
      %v3675 = vpack.c.bf16 %v3217, %v3214
      %v3676 = vpack.c.bf16 %v3225, %v3222
      %v3677 = vpack.c.bf16 %v3233, %v3230
      %v3678 = vpack.c.bf16 %v3241, %v3238
      %v3679 = vpack.c.bf16 %v3249, %v3246
      %v3680 = vpack.c.bf16 %v3257, %v3254
      %v3681 = vpack.c.bf16 %v3265, %v3262
      %v3682 = vpack.c.bf16 %v3273, %v3270
      %v3683 = vpack.c.bf16 %v3281, %v3278
      %v3684 = vpack.c.bf16 %v3289, %v3286
      %v3685 = vpack.c.bf16 %v3297, %v3294
      %v3686 = vpack.c.bf16 %v3305, %v3302
      %v3687 = vpack.c.bf16 %v3313, %v3310
      %v3688 = vpack.c.bf16 %v3321, %v3318
      %v3689 = vpack.c.bf16 %v3329, %v3326
      %v3690 = vpack.c.bf16 %v3337, %v3334
      %v3691 = vpack.c.bf16 %v3345, %v3342
      %v3692 = vpack.c.bf16 %v3353, %v3350
      %v3693 = vpack.c.bf16 %v3361, %v3358
      %v3694 = vpack.c.bf16 %v3369, %v3366
      %v3695 = vpack.c.bf16 %v3377, %v3374
      %v3696 = vpack.c.bf16 %v3385, %v3382
      %v3697 = vpack.c.bf16 %v3393, %v3390
      %v3698 = vpack.c.bf16 %v3401, %v3398
      %v3699 = vpack.c.bf16 %v3409, %v3406
      %v3700 = vpack.c.bf16 %v3417, %v3414
      %v3701 = vpack.c.bf16 %v3425, %v3422
      %v3702 = vpack.c.bf16 %v3433, %v3430
      %v3703 = vpack.c.bf16 %v3441, %v3438
      %v3704 = vpack.c.bf16 %v3449, %v3446
      %v3705 = vpack.c.bf16 %v3457, %v3454
      %v3706 = vpack.c.bf16 %v3465, %v3462
      %v3707 = vpack.c.bf16 %v3473, %v3470
      %v3708 = vpack.c.bf16 %v3481, %v3478
      %v3709 = vpack.c.bf16 %v3489, %v3486
      %v3710 = vpack.c.bf16 %v3497, %v3494
      %v3711 = vpack.c.bf16 %v3505, %v3502
      %v3712 = vpack.c.bf16 %v3513, %v3510
      %v3713 = vpack.c.bf16 %v3521, %v3518
      %v3714 = vpack.c.bf16 %v3529, %v3526
      %v3715 = vpack.c.bf16 %v3537, %v3534
      %v3716 = vpack.c.bf16 %v3545, %v3542
      %v3717 = vpack.c.bf16 %v3553, %v3550
      %v3718 = vpack.c.bf16 %v3561, %v3558
      %v3719 = vpack.c.bf16 %v3569, %v3566
      %v3720 = vpack.c.bf16 %v3577, %v3574
      %v3721 = vpack.c.bf16 %v3585, %v3582
      %v3722 = vpack.c.bf16 %v3593, %v3590
      %v3723 = vpack.c.bf16 %v3601, %v3598
      %v3724 = vpack.c.bf16 %v3609, %v3606
      %v3725 = vpack.c.bf16 %v3617, %v3614
      %v3726 = vpack.c.bf16 %v3625, %v3622
      %v3727 = vpack.c.bf16 %v3633, %v3630
      %v3728 = vpack.c.bf16 %v3641, %v3638
      %v3729 = vpack.c.bf16 %v3649, %v3646
      %v3730 = vpack.c.bf16 %v3657, %v3654
      %v3731 = vpack.c.bf16 %v3665, %v3662
      %v3796 = vunpack.c.l.b16 %v3668
      %v3797 = vunpack.c.h.b16 %v3668
      %v3798 = vunpack.c.l.b16 %v3669
      %v3799 = vunpack.c.h.b16 %v3669
      %v3800 = vunpack.c.l.b16 %v3670
      %v3801 = vunpack.c.h.b16 %v3670
      %v3802 = vunpack.c.l.b16 %v3671
      %v3803 = vunpack.c.h.b16 %v3671
      %v3804 = vunpack.c.l.b16 %v3672
      %v3805 = vunpack.c.h.b16 %v3672
      %v3806 = vunpack.c.l.b16 %v3673
      %v3807 = vunpack.c.h.b16 %v3673
      %v3808 = vunpack.c.l.b16 %v3674
      %v3809 = vunpack.c.h.b16 %v3674
      %v3810 = vunpack.c.l.b16 %v3675
      %v3811 = vunpack.c.h.b16 %v3675
      %v3812 = vunpack.c.l.b16 %v3676
      %v3813 = vunpack.c.h.b16 %v3676
      %v3814 = vunpack.c.l.b16 %v3677
      %v3815 = vunpack.c.h.b16 %v3677
      %v3816 = vunpack.c.l.b16 %v3678
      %v3817 = vunpack.c.h.b16 %v3678
      %v3818 = vunpack.c.l.b16 %v3679
      %v3819 = vunpack.c.h.b16 %v3679
      %v3820 = vunpack.c.l.b16 %v3680
      %v3821 = vunpack.c.h.b16 %v3680
      %v3822 = vunpack.c.l.b16 %v3681
      %v3823 = vunpack.c.h.b16 %v3681
      %v3824 = vunpack.c.l.b16 %v3682
      %v3825 = vunpack.c.h.b16 %v3682
      %v3826 = vunpack.c.l.b16 %v3683
      %v3827 = vunpack.c.h.b16 %v3683
      %v3828 = vunpack.c.l.b16 %v3684
      %v3829 = vunpack.c.h.b16 %v3684
      %v3830 = vunpack.c.l.b16 %v3685
      %v3831 = vunpack.c.h.b16 %v3685
      %v3832 = vunpack.c.l.b16 %v3686
      %v3833 = vunpack.c.h.b16 %v3686
      %v3834 = vunpack.c.l.b16 %v3687
      %v3835 = vunpack.c.h.b16 %v3687
      %v3836 = vunpack.c.l.b16 %v3688
      %v3837 = vunpack.c.h.b16 %v3688
      %v3838 = vunpack.c.l.b16 %v3689
      %v3839 = vunpack.c.h.b16 %v3689
      %v3840 = vunpack.c.l.b16 %v3690
      %v3841 = vunpack.c.h.b16 %v3690
      %v3842 = vunpack.c.l.b16 %v3691
      %v3843 = vunpack.c.h.b16 %v3691
      %v3844 = vunpack.c.l.b16 %v3692
      %v3845 = vunpack.c.h.b16 %v3692
      %v3846 = vunpack.c.l.b16 %v3693
      %v3847 = vunpack.c.h.b16 %v3693
      %v3848 = vunpack.c.l.b16 %v3694
      %v3849 = vunpack.c.h.b16 %v3694
      %v3850 = vunpack.c.l.b16 %v3695
      %v3851 = vunpack.c.h.b16 %v3695
      %v3852 = vunpack.c.l.b16 %v3696
      %v3853 = vunpack.c.h.b16 %v3696
      %v3854 = vunpack.c.l.b16 %v3697
      %v3855 = vunpack.c.h.b16 %v3697
      %v3856 = vunpack.c.l.b16 %v3698
      %v3857 = vunpack.c.h.b16 %v3698
      %v3858 = vunpack.c.l.b16 %v3699
      %v3859 = vunpack.c.h.b16 %v3699
      %v3860 = vunpack.c.l.b16 %v3700
      %v3861 = vunpack.c.h.b16 %v3700
      %v3862 = vunpack.c.l.b16 %v3701
      %v3863 = vunpack.c.h.b16 %v3701
      %v3864 = vunpack.c.l.b16 %v3702
      %v3865 = vunpack.c.h.b16 %v3702
      %v3866 = vunpack.c.l.b16 %v3703
      %v3867 = vunpack.c.h.b16 %v3703
      %v3868 = vunpack.c.l.b16 %v3704
      %v3869 = vunpack.c.h.b16 %v3704
      %v3870 = vunpack.c.l.b16 %v3705
      %v3871 = vunpack.c.h.b16 %v3705
      %v3872 = vunpack.c.l.b16 %v3706
      %v3873 = vunpack.c.h.b16 %v3706
      %v3874 = vunpack.c.l.b16 %v3707
      %v3875 = vunpack.c.h.b16 %v3707
      %v3876 = vunpack.c.l.b16 %v3708
      %v3877 = vunpack.c.h.b16 %v3708
      %v3878 = vunpack.c.l.b16 %v3709
      %v3879 = vunpack.c.h.b16 %v3709
      %v3880 = vunpack.c.l.b16 %v3710
      %v3881 = vunpack.c.h.b16 %v3710
      %v3882 = vunpack.c.l.b16 %v3711
      %v3883 = vunpack.c.h.b16 %v3711
      %v3884 = vunpack.c.l.b16 %v3712
      %v3885 = vunpack.c.h.b16 %v3712
      %v3886 = vunpack.c.l.b16 %v3713
      %v3887 = vunpack.c.h.b16 %v3713
      %v3888 = vunpack.c.l.b16 %v3714
      %v3889 = vunpack.c.h.b16 %v3714
      %v3890 = vunpack.c.l.b16 %v3715
      %v3891 = vunpack.c.h.b16 %v3715
      %v3892 = vunpack.c.l.b16 %v3716
      %v3893 = vunpack.c.h.b16 %v3716
      %v3894 = vunpack.c.l.b16 %v3717
      %v3895 = vunpack.c.h.b16 %v3717
      %v3896 = vunpack.c.l.b16 %v3718
      %v3897 = vunpack.c.h.b16 %v3718
      %v3898 = vunpack.c.l.b16 %v3719
      %v3899 = vunpack.c.h.b16 %v3719
      %v3900 = vunpack.c.l.b16 %v3720
      %v3901 = vunpack.c.h.b16 %v3720
      %v3902 = vunpack.c.l.b16 %v3721
      %v3903 = vunpack.c.h.b16 %v3721
      %v3904 = vunpack.c.l.b16 %v3722
      %v3905 = vunpack.c.h.b16 %v3722
      %v3906 = vunpack.c.l.b16 %v3723
      %v3907 = vunpack.c.h.b16 %v3723
      %v3908 = vunpack.c.l.b16 %v3724
      %v3909 = vunpack.c.h.b16 %v3724
      %v3910 = vunpack.c.l.b16 %v3725
      %v3911 = vunpack.c.h.b16 %v3725
      %v3912 = vunpack.c.l.b16 %v3726
      %v3913 = vunpack.c.h.b16 %v3726
      %v3914 = vunpack.c.l.b16 %v3727
      %v3915 = vunpack.c.h.b16 %v3727
      %v3916 = vunpack.c.l.b16 %v3728
      %v3917 = vunpack.c.h.b16 %v3728
      %v3918 = vunpack.c.l.b16 %v3729
      %v3919 = vunpack.c.h.b16 %v3729
      %v3920 = vunpack.c.l.b16 %v3730
      %v3921 = vunpack.c.h.b16 %v3730
      %v3922 = vunpack.c.l.b16 %v3731
      %v3923 = vunpack.c.h.b16 %v3731
      %v3924 = vpack.c.b16 %v3796, %v3796
      %v3925 = vpack.c.b16 %v3797, %v3797
      %v3926 = vpack.c.b16 %v3798, %v3798
      %v3927 = vpack.c.b16 %v3799, %v3799
      %v3928 = vpack.c.b16 %v3800, %v3800
      %v3929 = vpack.c.b16 %v3801, %v3801
      %v3930 = vpack.c.b16 %v3802, %v3802
      %v3931 = vpack.c.b16 %v3803, %v3803
      %v3932 = vpack.c.b16 %v3804, %v3804
      %v3933 = vpack.c.b16 %v3805, %v3805
      %v3934 = vpack.c.b16 %v3806, %v3806
      %v3935 = vpack.c.b16 %v3807, %v3807
      %v3936 = vpack.c.b16 %v3808, %v3808
      %v3937 = vpack.c.b16 %v3809, %v3809
      %v3938 = vpack.c.b16 %v3810, %v3810
      %v3939 = vpack.c.b16 %v3811, %v3811
      %v3940 = vpack.c.b16 %v3812, %v3812
      %v3941 = vpack.c.b16 %v3813, %v3813
      %v3942 = vpack.c.b16 %v3814, %v3814
      %v3943 = vpack.c.b16 %v3815, %v3815
      %v3944 = vpack.c.b16 %v3816, %v3816
      %v3945 = vpack.c.b16 %v3817, %v3817
      %v3946 = vpack.c.b16 %v3818, %v3818
      %v3947 = vpack.c.b16 %v3819, %v3819
      %v3948 = vpack.c.b16 %v3820, %v3820
      %v3949 = vpack.c.b16 %v3821, %v3821
      %v3950 = vpack.c.b16 %v3822, %v3822
      %v3951 = vpack.c.b16 %v3823, %v3823
      %v3952 = vpack.c.b16 %v3824, %v3824
      %v3953 = vpack.c.b16 %v3825, %v3825
      %v3954 = vpack.c.b16 %v3826, %v3826
      %v3955 = vpack.c.b16 %v3827, %v3827
      %v3956 = vpack.c.b16 %v3828, %v3828
      %v3957 = vpack.c.b16 %v3829, %v3829
      %v3958 = vpack.c.b16 %v3830, %v3830
      %v3959 = vpack.c.b16 %v3831, %v3831
      %v3960 = vpack.c.b16 %v3832, %v3832
      %v3961 = vpack.c.b16 %v3833, %v3833
      %v3962 = vpack.c.b16 %v3834, %v3834
      %v3963 = vpack.c.b16 %v3835, %v3835
      %v3964 = vpack.c.b16 %v3836, %v3836
      %v3965 = vpack.c.b16 %v3837, %v3837
      %v3966 = vpack.c.b16 %v3838, %v3838
      %v3967 = vpack.c.b16 %v3839, %v3839
      %v3968 = vpack.c.b16 %v3840, %v3840
      %v3969 = vpack.c.b16 %v3841, %v3841
      %v3970 = vpack.c.b16 %v3842, %v3842
      %v3971 = vpack.c.b16 %v3843, %v3843
      %v3972 = vpack.c.b16 %v3844, %v3844
      %v3973 = vpack.c.b16 %v3845, %v3845
      %v3974 = vpack.c.b16 %v3846, %v3846
      %v3975 = vpack.c.b16 %v3847, %v3847
      %v3976 = vpack.c.b16 %v3848, %v3848
      %v3977 = vpack.c.b16 %v3849, %v3849
      %v3978 = vpack.c.b16 %v3850, %v3850
      %v3979 = vpack.c.b16 %v3851, %v3851
      %v3980 = vpack.c.b16 %v3852, %v3852
      %v3981 = vpack.c.b16 %v3853, %v3853
      %v3982 = vpack.c.b16 %v3854, %v3854
      %v3983 = vpack.c.b16 %v3855, %v3855
      %v3984 = vpack.c.b16 %v3856, %v3856
      %v3985 = vpack.c.b16 %v3857, %v3857
      %v3986 = vpack.c.b16 %v3858, %v3858
      %v3987 = vpack.c.b16 %v3859, %v3859
      %v3988 = vpack.c.b16 %v3860, %v3860
      %v3989 = vpack.c.b16 %v3861, %v3861
      %v3990 = vpack.c.b16 %v3862, %v3862
      %v3991 = vpack.c.b16 %v3863, %v3863
      %v3992 = vpack.c.b16 %v3864, %v3864
      %v3993 = vpack.c.b16 %v3865, %v3865
      %v3994 = vpack.c.b16 %v3866, %v3866
      %v3995 = vpack.c.b16 %v3867, %v3867
      %v3996 = vpack.c.b16 %v3868, %v3868
      %v3997 = vpack.c.b16 %v3869, %v3869
      %v3998 = vpack.c.b16 %v3870, %v3870
      %v3999 = vpack.c.b16 %v3871, %v3871
      %v4000 = vpack.c.b16 %v3872, %v3872
      %v4001 = vpack.c.b16 %v3873, %v3873
      %v4002 = vpack.c.b16 %v3874, %v3874
      %v4003 = vpack.c.b16 %v3875, %v3875
      %v4004 = vpack.c.b16 %v3876, %v3876
      %v4005 = vpack.c.b16 %v3877, %v3877
      %v4006 = vpack.c.b16 %v3878, %v3878
      %v4007 = vpack.c.b16 %v3879, %v3879
      %v4008 = vpack.c.b16 %v3880, %v3880
      %v4009 = vpack.c.b16 %v3881, %v3881
      %v4010 = vpack.c.b16 %v3882, %v3882
      %v4011 = vpack.c.b16 %v3883, %v3883
      %v4012 = vpack.c.b16 %v3884, %v3884
      %v4013 = vpack.c.b16 %v3885, %v3885
      %v4014 = vpack.c.b16 %v3886, %v3886
      %v4015 = vpack.c.b16 %v3887, %v3887
      %v4016 = vpack.c.b16 %v3888, %v3888
      %v4017 = vpack.c.b16 %v3889, %v3889
      %v4018 = vpack.c.b16 %v3890, %v3890
      %v4019 = vpack.c.b16 %v3891, %v3891
      %v4020 = vpack.c.b16 %v3892, %v3892
      %v4021 = vpack.c.b16 %v3893, %v3893
      %v4022 = vpack.c.b16 %v3894, %v3894
      %v4023 = vpack.c.b16 %v3895, %v3895
      %v4024 = vpack.c.b16 %v3896, %v3896
      %v4025 = vpack.c.b16 %v3897, %v3897
      %v4026 = vpack.c.b16 %v3898, %v3898
      %v4027 = vpack.c.b16 %v3899, %v3899
      %v4028 = vpack.c.b16 %v3900, %v3900
      %v4029 = vpack.c.b16 %v3901, %v3901
      %v4030 = vpack.c.b16 %v3902, %v3902
      %v4031 = vpack.c.b16 %v3903, %v3903
      %v4032 = vpack.c.b16 %v3904, %v3904
      %v4033 = vpack.c.b16 %v3905, %v3905
      %v4034 = vpack.c.b16 %v3906, %v3906
      %v4035 = vpack.c.b16 %v3907, %v3907
      %v4036 = vpack.c.b16 %v3908, %v3908
      %v4037 = vpack.c.b16 %v3909, %v3909
      %v4038 = vpack.c.b16 %v3910, %v3910
      %v4039 = vpack.c.b16 %v3911, %v3911
      %v4040 = vpack.c.b16 %v3912, %v3912
      %v4041 = vpack.c.b16 %v3913, %v3913
      %v4042 = vpack.c.b16 %v3914, %v3914
      %v4043 = vpack.c.b16 %v3915, %v3915
      %v4044 = vpack.c.b16 %v3916, %v3916
      %v4045 = vpack.c.b16 %v3917, %v3917
      %v4046 = vpack.c.b16 %v3918, %v3918
      %v4047 = vpack.c.b16 %v3919, %v3919
      %v4048 = vpack.c.b16 %v3920, %v3920
      %v4049 = vpack.c.b16 %v3921, %v3921
      %v4050 = vpack.c.b16 %v3922, %v3922
      %v4051 = vpack.c.b16 %v3923, %v3923
      %s4180 = scalar_lea.vmem %s218, 512
      %4181 = vst [vmem:[%s4180] sm:$0xf] %v3924
      %4182 = vst [vmem:[%s4180 + $0x4] sm:$0xf] %v3925
      %4183 = vst [vmem:[%s4180 + $0x8] sm:$0xf] %v3926
      %4184 = vst [vmem:[%s4180 + $0xc] sm:$0xf] %v3927
      %4185 = vst [vmem:[%s4180 + $0x10] sm:$0xf] %v3928
      %4186 = vst [vmem:[%s4180 + $0x14] sm:$0xf] %v3929
      %4187 = vst [vmem:[%s4180 + $0x18] sm:$0xf] %v3930
      %4188 = vst [vmem:[%s4180 + $0x1c] sm:$0xf] %v3931
      %4189 = vst [vmem:[%s4180 + $0x20] sm:$0xf] %v3932
      %4190 = vst [vmem:[%s4180 + $0x24] sm:$0xf] %v3933
      %4191 = vst [vmem:[%s4180 + $0x28] sm:$0xf] %v3934
      %4192 = vst [vmem:[%s4180 + $0x2c] sm:$0xf] %v3935
      %4193 = vst [vmem:[%s4180 + $0x30] sm:$0xf] %v3936
      %4194 = vst [vmem:[%s4180 + $0x34] sm:$0xf] %v3937
      %4195 = vst [vmem:[%s4180 + $0x38] sm:$0xf] %v3938
      %4196 = vst [vmem:[%s4180 + $0x3c] sm:$0xf] %v3939
      %4197 = vst [vmem:[%s4180 + $0x40] sm:$0xf] %v3940
      %4198 = vst [vmem:[%s4180 + $0x44] sm:$0xf] %v3941
      %4199 = vst [vmem:[%s4180 + $0x48] sm:$0xf] %v3942
      %4200 = vst [vmem:[%s4180 + $0x4c] sm:$0xf] %v3943
      %4201 = vst [vmem:[%s4180 + $0x50] sm:$0xf] %v3944
      %4202 = vst [vmem:[%s4180 + $0x54] sm:$0xf] %v3945
      %4203 = vst [vmem:[%s4180 + $0x58] sm:$0xf] %v3946
      %4204 = vst [vmem:[%s4180 + $0x5c] sm:$0xf] %v3947
      %4205 = vst [vmem:[%s4180 + $0x60] sm:$0xf] %v3948
      %4206 = vst [vmem:[%s4180 + $0x64] sm:$0xf] %v3949
      %4207 = vst [vmem:[%s4180 + $0x68] sm:$0xf] %v3950
      %4208 = vst [vmem:[%s4180 + $0x6c] sm:$0xf] %v3951
      %4209 = vst [vmem:[%s4180 + $0x70] sm:$0xf] %v3952
      %4210 = vst [vmem:[%s4180 + $0x74] sm:$0xf] %v3953
      %4211 = vst [vmem:[%s4180 + $0x78] sm:$0xf] %v3954
      %4212 = vst [vmem:[%s4180 + $0x7c] sm:$0xf] %v3955
      %4213 = vst [vmem:[%s4180 + $0x80] sm:$0xf] %v3956
      %4214 = vst [vmem:[%s4180 + $0x84] sm:$0xf] %v3957
      %4215 = vst [vmem:[%s4180 + $0x88] sm:$0xf] %v3958
      %4216 = vst [vmem:[%s4180 + $0x8c] sm:$0xf] %v3959
      %4217 = vst [vmem:[%s4180 + $0x90] sm:$0xf] %v3960
      %4218 = vst [vmem:[%s4180 + $0x94] sm:$0xf] %v3961
      %4219 = vst [vmem:[%s4180 + $0x98] sm:$0xf] %v3962
      %4220 = vst [vmem:[%s4180 + $0x9c] sm:$0xf] %v3963
      %4221 = vst [vmem:[%s4180 + $0xa0] sm:$0xf] %v3964
      %4222 = vst [vmem:[%s4180 + $0xa4] sm:$0xf] %v3965
      %4223 = vst [vmem:[%s4180 + $0xa8] sm:$0xf] %v3966
      %4224 = vst [vmem:[%s4180 + $0xac] sm:$0xf] %v3967
      %4225 = vst [vmem:[%s4180 + $0xb0] sm:$0xf] %v3968
      %4226 = vst [vmem:[%s4180 + $0xb4] sm:$0xf] %v3969
      %4227 = vst [vmem:[%s4180 + $0xb8] sm:$0xf] %v3970
      %4228 = vst [vmem:[%s4180 + $0xbc] sm:$0xf] %v3971
      %4229 = vst [vmem:[%s4180 + $0xc0] sm:$0xf] %v3972
      %4230 = vst [vmem:[%s4180 + $0xc4] sm:$0xf] %v3973
      %4231 = vst [vmem:[%s4180 + $0xc8] sm:$0xf] %v3974
      %4232 = vst [vmem:[%s4180 + $0xcc] sm:$0xf] %v3975
      %4233 = vst [vmem:[%s4180 + $0xd0] sm:$0xf] %v3976
      %4234 = vst [vmem:[%s4180 + $0xd4] sm:$0xf] %v3977
      %4235 = vst [vmem:[%s4180 + $0xd8] sm:$0xf] %v3978
      %4236 = vst [vmem:[%s4180 + $0xdc] sm:$0xf] %v3979
      %4237 = vst [vmem:[%s4180 + $0xe0] sm:$0xf] %v3980
      %4238 = vst [vmem:[%s4180 + $0xe4] sm:$0xf] %v3981
      %4239 = vst [vmem:[%s4180 + $0xe8] sm:$0xf] %v3982
      %4240 = vst [vmem:[%s4180 + $0xec] sm:$0xf] %v3983
      %4241 = vst [vmem:[%s4180 + $0xf0] sm:$0xf] %v3984
      %4242 = vst [vmem:[%s4180 + $0xf4] sm:$0xf] %v3985
      %4243 = vst [vmem:[%s4180 + $0xf8] sm:$0xf] %v3986
      %4244 = vst [vmem:[%s4180 + $0xfc] sm:$0xf] %v3987
      %4245 = vst [vmem:[%s4180 + $0x100] sm:$0xf] %v3988
      %4246 = vst [vmem:[%s4180 + $0x104] sm:$0xf] %v3989
      %4247 = vst [vmem:[%s4180 + $0x108] sm:$0xf] %v3990
      %4248 = vst [vmem:[%s4180 + $0x10c] sm:$0xf] %v3991
      %4249 = vst [vmem:[%s4180 + $0x110] sm:$0xf] %v3992
      %4250 = vst [vmem:[%s4180 + $0x114] sm:$0xf] %v3993
      %4251 = vst [vmem:[%s4180 + $0x118] sm:$0xf] %v3994
      %4252 = vst [vmem:[%s4180 + $0x11c] sm:$0xf] %v3995
      %4253 = vst [vmem:[%s4180 + $0x120] sm:$0xf] %v3996
      %4254 = vst [vmem:[%s4180 + $0x124] sm:$0xf] %v3997
      %4255 = vst [vmem:[%s4180 + $0x128] sm:$0xf] %v3998
      %4256 = vst [vmem:[%s4180 + $0x12c] sm:$0xf] %v3999
      %4257 = vst [vmem:[%s4180 + $0x130] sm:$0xf] %v4000
      %4258 = vst [vmem:[%s4180 + $0x134] sm:$0xf] %v4001
      %4259 = vst [vmem:[%s4180 + $0x138] sm:$0xf] %v4002
      %4260 = vst [vmem:[%s4180 + $0x13c] sm:$0xf] %v4003
      %4261 = vst [vmem:[%s4180 + $0x140] sm:$0xf] %v4004
      %4262 = vst [vmem:[%s4180 + $0x144] sm:$0xf] %v4005
      %4263 = vst [vmem:[%s4180 + $0x148] sm:$0xf] %v4006
      %4264 = vst [vmem:[%s4180 + $0x14c] sm:$0xf] %v4007
      %4265 = vst [vmem:[%s4180 + $0x150] sm:$0xf] %v4008
      %4266 = vst [vmem:[%s4180 + $0x154] sm:$0xf] %v4009
      %4267 = vst [vmem:[%s4180 + $0x158] sm:$0xf] %v4010
      %4268 = vst [vmem:[%s4180 + $0x15c] sm:$0xf] %v4011
      %4269 = vst [vmem:[%s4180 + $0x160] sm:$0xf] %v4012
      %4270 = vst [vmem:[%s4180 + $0x164] sm:$0xf] %v4013
      %4271 = vst [vmem:[%s4180 + $0x168] sm:$0xf] %v4014
      %4272 = vst [vmem:[%s4180 + $0x16c] sm:$0xf] %v4015
      %4273 = vst [vmem:[%s4180 + $0x170] sm:$0xf] %v4016
      %4274 = vst [vmem:[%s4180 + $0x174] sm:$0xf] %v4017
      %4275 = vst [vmem:[%s4180 + $0x178] sm:$0xf] %v4018
      %4276 = vst [vmem:[%s4180 + $0x17c] sm:$0xf] %v4019
      %4277 = vst [vmem:[%s4180 + $0x180] sm:$0xf] %v4020
      %4278 = vst [vmem:[%s4180 + $0x184] sm:$0xf] %v4021
      %4279 = vst [vmem:[%s4180 + $0x188] sm:$0xf] %v4022
      %4280 = vst [vmem:[%s4180 + $0x18c] sm:$0xf] %v4023
      %4281 = vst [vmem:[%s4180 + $0x190] sm:$0xf] %v4024
      %4282 = vst [vmem:[%s4180 + $0x194] sm:$0xf] %v4025
      %4283 = vst [vmem:[%s4180 + $0x198] sm:$0xf] %v4026
      %4284 = vst [vmem:[%s4180 + $0x19c] sm:$0xf] %v4027
      %4285 = vst [vmem:[%s4180 + $0x1a0] sm:$0xf] %v4028
      %4286 = vst [vmem:[%s4180 + $0x1a4] sm:$0xf] %v4029
      %4287 = vst [vmem:[%s4180 + $0x1a8] sm:$0xf] %v4030
      %4288 = vst [vmem:[%s4180 + $0x1ac] sm:$0xf] %v4031
      %4289 = vst [vmem:[%s4180 + $0x1b0] sm:$0xf] %v4032
      %4290 = vst [vmem:[%s4180 + $0x1b4] sm:$0xf] %v4033
      %4291 = vst [vmem:[%s4180 + $0x1b8] sm:$0xf] %v4034
      %4292 = vst [vmem:[%s4180 + $0x1bc] sm:$0xf] %v4035
      %4293 = vst [vmem:[%s4180 + $0x1c0] sm:$0xf] %v4036
      %4294 = vst [vmem:[%s4180 + $0x1c4] sm:$0xf] %v4037
      %4295 = vst [vmem:[%s4180 + $0x1c8] sm:$0xf] %v4038
      %4296 = vst [vmem:[%s4180 + $0x1cc] sm:$0xf] %v4039
      %4297 = vst [vmem:[%s4180 + $0x1d0] sm:$0xf] %v4040
      %4298 = vst [vmem:[%s4180 + $0x1d4] sm:$0xf] %v4041
      %4299 = vst [vmem:[%s4180 + $0x1d8] sm:$0xf] %v4042
      %4300 = vst [vmem:[%s4180 + $0x1dc] sm:$0xf] %v4043
      %4301 = vst [vmem:[%s4180 + $0x1e0] sm:$0xf] %v4044
      %4302 = vst [vmem:[%s4180 + $0x1e4] sm:$0xf] %v4045
      %4303 = vst [vmem:[%s4180 + $0x1e8] sm:$0xf] %v4046
      %4304 = vst [vmem:[%s4180 + $0x1ec] sm:$0xf] %v4047
      %4305 = vst [vmem:[%s4180 + $0x1f0] sm:$0xf] %v4048
      %4306 = vst [vmem:[%s4180 + $0x1f4] sm:$0xf] %v4049
      %4307 = vst [vmem:[%s4180 + $0x1f8] sm:$0xf] %v4050
      %4308 = vst [vmem:[%s4180 + $0x1fc] sm:$0xf] %v4051
      %v4309 = vadd.f32 %v3158, %v3161
      %v4310 = vadd.f32 %v4309, %v3166
      %v4311 = vadd.f32 %v4310, %v3169
      %v4312 = vadd.f32 %v4311, %v3174
      %v4313 = vadd.f32 %v4312, %v3177
      %v4314 = vadd.f32 %v4313, %v3182
      %v4315 = vadd.f32 %v4314, %v3185
      %v4316 = vadd.f32 %v4315, %v3190
      %v4317 = vadd.f32 %v4316, %v3193
      %v4318 = vadd.f32 %v4317, %v3198
      %v4319 = vadd.f32 %v4318, %v3201
      %v4320 = vadd.f32 %v4319, %v3206
      %v4321 = vadd.f32 %v4320, %v3209
      %v4322 = vadd.f32 %v4321, %v3214
      %v4323 = vadd.f32 %v4322, %v3217
      %v4324 = vadd.f32 %v4323, %v3222
      %v4325 = vadd.f32 %v4324, %v3225
      %v4326 = vadd.f32 %v4325, %v3230
      %v4327 = vadd.f32 %v4326, %v3233
      %v4328 = vadd.f32 %v4327, %v3238
      %v4329 = vadd.f32 %v4328, %v3241
      %v4330 = vadd.f32 %v4329, %v3246
      %v4331 = vadd.f32 %v4330, %v3249
      %v4332 = vadd.f32 %v4331, %v3254
      %v4333 = vadd.f32 %v4332, %v3257
      %v4334 = vadd.f32 %v4333, %v3262
      %v4335 = vadd.f32 %v4334, %v3265
      %v4336 = vadd.f32 %v4335, %v3270
      %v4337 = vadd.f32 %v4336, %v3273
      %v4338 = vadd.f32 %v4337, %v3278
      %v4339 = vadd.f32 %v4338, %v3281
      %v4340 = vadd.f32 %v4339, %v3286
      %v4341 = vadd.f32 %v4340, %v3289
      %v4342 = vadd.f32 %v4341, %v3294
      %v4343 = vadd.f32 %v4342, %v3297
      %v4344 = vadd.f32 %v4343, %v3302
      %v4345 = vadd.f32 %v4344, %v3305
      %v4346 = vadd.f32 %v4345, %v3310
      %v4347 = vadd.f32 %v4346, %v3313
      %v4348 = vadd.f32 %v4347, %v3318
      %v4349 = vadd.f32 %v4348, %v3321
      %v4350 = vadd.f32 %v4349, %v3326
      %v4351 = vadd.f32 %v4350, %v3329
      %v4352 = vadd.f32 %v4351, %v3334
      %v4353 = vadd.f32 %v4352, %v3337
      %v4354 = vadd.f32 %v4353, %v3342
      %v4355 = vadd.f32 %v4354, %v3345
      %v4356 = vadd.f32 %v4355, %v3350
      %v4357 = vadd.f32 %v4356, %v3353
      %v4358 = vadd.f32 %v4357, %v3358
      %v4359 = vadd.f32 %v4358, %v3361
      %v4360 = vadd.f32 %v4359, %v3366
      %v4361 = vadd.f32 %v4360, %v3369
      %v4362 = vadd.f32 %v4361, %v3374
      %v4363 = vadd.f32 %v4362, %v3377
      %v4364 = vadd.f32 %v4363, %v3382
      %v4365 = vadd.f32 %v4364, %v3385
      %v4366 = vadd.f32 %v4365, %v3390
      %v4367 = vadd.f32 %v4366, %v3393
      %v4368 = vadd.f32 %v4367, %v3398
      %v4369 = vadd.f32 %v4368, %v3401
      %v4370 = vadd.f32 %v4369, %v3406
      %v4371 = vadd.f32 %v4370, %v3409
      %v4372 = vadd.f32 %v4371, %v3414
      %v4373 = vadd.f32 %v4372, %v3417
      %v4374 = vadd.f32 %v4373, %v3422
      %v4375 = vadd.f32 %v4374, %v3425
      %v4376 = vadd.f32 %v4375, %v3430
      %v4377 = vadd.f32 %v4376, %v3433
      %v4378 = vadd.f32 %v4377, %v3438
      %v4379 = vadd.f32 %v4378, %v3441
      %v4380 = vadd.f32 %v4379, %v3446
      %v4381 = vadd.f32 %v4380, %v3449
      %v4382 = vadd.f32 %v4381, %v3454
      %v4383 = vadd.f32 %v4382, %v3457
      %v4384 = vadd.f32 %v4383, %v3462
      %v4385 = vadd.f32 %v4384, %v3465
      %v4386 = vadd.f32 %v4385, %v3470
      %v4387 = vadd.f32 %v4386, %v3473
      %v4388 = vadd.f32 %v4387, %v3478
      %v4389 = vadd.f32 %v4388, %v3481
      %v4390 = vadd.f32 %v4389, %v3486
      %v4391 = vadd.f32 %v4390, %v3489
      %v4392 = vadd.f32 %v4391, %v3494
      %v4393 = vadd.f32 %v4392, %v3497
      %v4394 = vadd.f32 %v4393, %v3502
      %v4395 = vadd.f32 %v4394, %v3505
      %v4396 = vadd.f32 %v4395, %v3510
      %v4397 = vadd.f32 %v4396, %v3513
      %v4398 = vadd.f32 %v4397, %v3518
      %v4399 = vadd.f32 %v4398, %v3521
      %v4400 = vadd.f32 %v4399, %v3526
      %v4401 = vadd.f32 %v4400, %v3529
      %v4402 = vadd.f32 %v4401, %v3534
      %v4403 = vadd.f32 %v4402, %v3537
      %v4404 = vadd.f32 %v4403, %v3542
      %v4405 = vadd.f32 %v4404, %v3545
      %v4406 = vadd.f32 %v4405, %v3550
      %v4407 = vadd.f32 %v4406, %v3553
      %v4408 = vadd.f32 %v4407, %v3558
      %v4409 = vadd.f32 %v4408, %v3561
      %v4410 = vadd.f32 %v4409, %v3566
      %v4411 = vadd.f32 %v4410, %v3569
      %v4412 = vadd.f32 %v4411, %v3574
      %v4413 = vadd.f32 %v4412, %v3577
      %v4414 = vadd.f32 %v4413, %v3582
      %v4415 = vadd.f32 %v4414, %v3585
      %v4416 = vadd.f32 %v4415, %v3590
      %v4417 = vadd.f32 %v4416, %v3593
      %v4418 = vadd.f32 %v4417, %v3598
      %v4419 = vadd.f32 %v4418, %v3601
      %v4420 = vadd.f32 %v4419, %v3606
      %v4421 = vadd.f32 %v4420, %v3609
      %v4422 = vadd.f32 %v4421, %v3614
      %v4423 = vadd.f32 %v4422, %v3617
      %v4424 = vadd.f32 %v4423, %v3622
      %v4425 = vadd.f32 %v4424, %v3625
      %v4426 = vadd.f32 %v4425, %v3630
      %v4427 = vadd.f32 %v4426, %v3633
      %v4428 = vadd.f32 %v4427, %v3638
      %v4429 = vadd.f32 %v4428, %v3641
      %v4430 = vadd.f32 %v4429, %v3646
      %v4431 = vadd.f32 %v4430, %v3649
      %v4432 = vadd.f32 %v4431, %v3654
      %v4433 = vadd.f32 %v4432, %v3657
      %v4434 = vadd.f32 %v4433, %v3662
      %v4435 = vadd.f32 %v4434, %v3665
      %v4436 = vrot.slane %v4435, 4
      %v4437 = vadd.f32 %v4435, %v4436
      %v4438 = vrot.slane %v4437, 2
      %v4439 = vadd.f32 %v4437, %v4438
      %v4440 = vrot.slane %v4439, 1
      %v4441 = vadd.f32 %v4439, %v4440
      %v4442 = vadd.f32 %v2202, %v4441
      %v4443 = vmul.f32 %v3158, %v3158
      %v4444 = vmul.f32 %v3161, %v3161
      %v4445 = vmul.f32 %v3166, %v3166
      %v4446 = vmul.f32 %v3169, %v3169
      %v4447 = vmul.f32 %v3174, %v3174
      %v4448 = vmul.f32 %v3177, %v3177
      %v4449 = vmul.f32 %v3182, %v3182
      %v4450 = vmul.f32 %v3185, %v3185
      %v4451 = vmul.f32 %v3190, %v3190
      %v4452 = vmul.f32 %v3193, %v3193
      %v4453 = vmul.f32 %v3198, %v3198
      %v4454 = vmul.f32 %v3201, %v3201
      %v4455 = vmul.f32 %v3206, %v3206
      %v4456 = vmul.f32 %v3209, %v3209
      %v4457 = vmul.f32 %v3214, %v3214
      %v4458 = vmul.f32 %v3217, %v3217
      %v4459 = vmul.f32 %v3222, %v3222
      %v4460 = vmul.f32 %v3225, %v3225
      %v4461 = vmul.f32 %v3230, %v3230
      %v4462 = vmul.f32 %v3233, %v3233
      %v4463 = vmul.f32 %v3238, %v3238
      %v4464 = vmul.f32 %v3241, %v3241
      %v4465 = vmul.f32 %v3246, %v3246
      %v4466 = vmul.f32 %v3249, %v3249
      %v4467 = vmul.f32 %v3254, %v3254
      %v4468 = vmul.f32 %v3257, %v3257
      %v4469 = vmul.f32 %v3262, %v3262
      %v4470 = vmul.f32 %v3265, %v3265
      %v4471 = vmul.f32 %v3270, %v3270
      %v4472 = vmul.f32 %v3273, %v3273
      %v4473 = vmul.f32 %v3278, %v3278
      %v4474 = vmul.f32 %v3281, %v3281
      %v4475 = vmul.f32 %v3286, %v3286
      %v4476 = vmul.f32 %v3289, %v3289
      %v4477 = vmul.f32 %v3294, %v3294
      %v4478 = vmul.f32 %v3297, %v3297
      %v4479 = vmul.f32 %v3302, %v3302
      %v4480 = vmul.f32 %v3305, %v3305
      %v4481 = vmul.f32 %v3310, %v3310
      %v4482 = vmul.f32 %v3313, %v3313
      %v4483 = vmul.f32 %v3318, %v3318
      %v4484 = vmul.f32 %v3321, %v3321
      %v4485 = vmul.f32 %v3326, %v3326
      %v4486 = vmul.f32 %v3329, %v3329
      %v4487 = vmul.f32 %v3334, %v3334
      %v4488 = vmul.f32 %v3337, %v3337
      %v4489 = vmul.f32 %v3342, %v3342
      %v4490 = vmul.f32 %v3345, %v3345
      %v4491 = vmul.f32 %v3350, %v3350
      %v4492 = vmul.f32 %v3353, %v3353
      %v4493 = vmul.f32 %v3358, %v3358
      %v4494 = vmul.f32 %v3361, %v3361
      %v4495 = vmul.f32 %v3366, %v3366
      %v4496 = vmul.f32 %v3369, %v3369
      %v4497 = vmul.f32 %v3374, %v3374
      %v4498 = vmul.f32 %v3377, %v3377
      %v4499 = vmul.f32 %v3382, %v3382
      %v4500 = vmul.f32 %v3385, %v3385
      %v4501 = vmul.f32 %v3390, %v3390
      %v4502 = vmul.f32 %v3393, %v3393
      %v4503 = vmul.f32 %v3398, %v3398
      %v4504 = vmul.f32 %v3401, %v3401
      %v4505 = vmul.f32 %v3406, %v3406
      %v4506 = vmul.f32 %v3409, %v3409
      %v4507 = vmul.f32 %v3414, %v3414
      %v4508 = vmul.f32 %v3417, %v3417
      %v4509 = vmul.f32 %v3422, %v3422
      %v4510 = vmul.f32 %v3425, %v3425
      %v4511 = vmul.f32 %v3430, %v3430
      %v4512 = vmul.f32 %v3433, %v3433
      %v4513 = vmul.f32 %v3438, %v3438
      %v4514 = vmul.f32 %v3441, %v3441
      %v4515 = vmul.f32 %v3446, %v3446
      %v4516 = vmul.f32 %v3449, %v3449
      %v4517 = vmul.f32 %v3454, %v3454
      %v4518 = vmul.f32 %v3457, %v3457
      %v4519 = vmul.f32 %v3462, %v3462
      %v4520 = vmul.f32 %v3465, %v3465
      %v4521 = vmul.f32 %v3470, %v3470
      %v4522 = vmul.f32 %v3473, %v3473
      %v4523 = vmul.f32 %v3478, %v3478
      %v4524 = vmul.f32 %v3481, %v3481
      %v4525 = vmul.f32 %v3486, %v3486
      %v4526 = vmul.f32 %v3489, %v3489
      %v4527 = vmul.f32 %v3494, %v3494
      %v4528 = vmul.f32 %v3497, %v3497
      %v4529 = vmul.f32 %v3502, %v3502
      %v4530 = vmul.f32 %v3505, %v3505
      %v4531 = vmul.f32 %v3510, %v3510
      %v4532 = vmul.f32 %v3513, %v3513
      %v4533 = vmul.f32 %v3518, %v3518
      %v4534 = vmul.f32 %v3521, %v3521
      %v4535 = vmul.f32 %v3526, %v3526
      %v4536 = vmul.f32 %v3529, %v3529
      %v4537 = vmul.f32 %v3534, %v3534
      %v4538 = vmul.f32 %v3537, %v3537
      %v4539 = vmul.f32 %v3542, %v3542
      %v4540 = vmul.f32 %v3545, %v3545
      %v4541 = vmul.f32 %v3550, %v3550
      %v4542 = vmul.f32 %v3553, %v3553
      %v4543 = vmul.f32 %v3558, %v3558
      %v4544 = vmul.f32 %v3561, %v3561
      %v4545 = vmul.f32 %v3566, %v3566
      %v4546 = vmul.f32 %v3569, %v3569
      %v4547 = vmul.f32 %v3574, %v3574
      %v4548 = vmul.f32 %v3577, %v3577
      %v4549 = vmul.f32 %v3582, %v3582
      %v4550 = vmul.f32 %v3585, %v3585
      %v4551 = vmul.f32 %v3590, %v3590
      %v4552 = vmul.f32 %v3593, %v3593
      %v4553 = vmul.f32 %v3598, %v3598
      %v4554 = vmul.f32 %v3601, %v3601
      %v4555 = vmul.f32 %v3606, %v3606
      %v4556 = vmul.f32 %v3609, %v3609
      %v4557 = vmul.f32 %v3614, %v3614
      %v4558 = vmul.f32 %v3617, %v3617
      %v4559 = vmul.f32 %v3622, %v3622
      %v4560 = vmul.f32 %v3625, %v3625
      %v4561 = vmul.f32 %v3630, %v3630
      %v4562 = vmul.f32 %v3633, %v3633
      %v4563 = vmul.f32 %v3638, %v3638
      %v4564 = vmul.f32 %v3641, %v3641
      %v4565 = vmul.f32 %v3646, %v3646
      %v4566 = vmul.f32 %v3649, %v3649
      %v4567 = vmul.f32 %v3654, %v3654
      %v4568 = vmul.f32 %v3657, %v3657
      %v4569 = vmul.f32 %v3662, %v3662
      %v4570 = vmul.f32 %v3665, %v3665
      %v4571 = vadd.f32 %v4443, %v4444
      %v4572 = vadd.f32 %v4571, %v4445
      %v4573 = vadd.f32 %v4572, %v4446
      %v4574 = vadd.f32 %v4573, %v4447
      %v4575 = vadd.f32 %v4574, %v4448
      %v4576 = vadd.f32 %v4575, %v4449
      %v4577 = vadd.f32 %v4576, %v4450
      %v4578 = vadd.f32 %v4577, %v4451
      %v4579 = vadd.f32 %v4578, %v4452
      %v4580 = vadd.f32 %v4579, %v4453
      %v4581 = vadd.f32 %v4580, %v4454
      %v4582 = vadd.f32 %v4581, %v4455
      %v4583 = vadd.f32 %v4582, %v4456
      %v4584 = vadd.f32 %v4583, %v4457
      %v4585 = vadd.f32 %v4584, %v4458
      %v4586 = vadd.f32 %v4585, %v4459
      %v4587 = vadd.f32 %v4586, %v4460
      %v4588 = vadd.f32 %v4587, %v4461
      %v4589 = vadd.f32 %v4588, %v4462
      %v4590 = vadd.f32 %v4589, %v4463
      %v4591 = vadd.f32 %v4590, %v4464
      %v4592 = vadd.f32 %v4591, %v4465
      %v4593 = vadd.f32 %v4592, %v4466
      %v4594 = vadd.f32 %v4593, %v4467
      %v4595 = vadd.f32 %v4594, %v4468
      %v4596 = vadd.f32 %v4595, %v4469
      %v4597 = vadd.f32 %v4596, %v4470
      %v4598 = vadd.f32 %v4597, %v4471
      %v4599 = vadd.f32 %v4598, %v4472
      %v4600 = vadd.f32 %v4599, %v4473
      %v4601 = vadd.f32 %v4600, %v4474
      %v4602 = vadd.f32 %v4601, %v4475
      %v4603 = vadd.f32 %v4602, %v4476
      %v4604 = vadd.f32 %v4603, %v4477
      %v4605 = vadd.f32 %v4604, %v4478
      %v4606 = vadd.f32 %v4605, %v4479
      %v4607 = vadd.f32 %v4606, %v4480
      %v4608 = vadd.f32 %v4607, %v4481
      %v4609 = vadd.f32 %v4608, %v4482
      %v4610 = vadd.f32 %v4609, %v4483
      %v4611 = vadd.f32 %v4610, %v4484
      %v4612 = vadd.f32 %v4611, %v4485
      %v4613 = vadd.f32 %v4612, %v4486
      %v4614 = vadd.f32 %v4613, %v4487
      %v4615 = vadd.f32 %v4614, %v4488
      %v4616 = vadd.f32 %v4615, %v4489
      %v4617 = vadd.f32 %v4616, %v4490
      %v4618 = vadd.f32 %v4617, %v4491
      %v4619 = vadd.f32 %v4618, %v4492
      %v4620 = vadd.f32 %v4619, %v4493
      %v4621 = vadd.f32 %v4620, %v4494
      %v4622 = vadd.f32 %v4621, %v4495
      %v4623 = vadd.f32 %v4622, %v4496
      %v4624 = vadd.f32 %v4623, %v4497
      %v4625 = vadd.f32 %v4624, %v4498
      %v4626 = vadd.f32 %v4625, %v4499
      %v4627 = vadd.f32 %v4626, %v4500
      %v4628 = vadd.f32 %v4627, %v4501
      %v4629 = vadd.f32 %v4628, %v4502
      %v4630 = vadd.f32 %v4629, %v4503
      %v4631 = vadd.f32 %v4630, %v4504
      %v4632 = vadd.f32 %v4631, %v4505
      %v4633 = vadd.f32 %v4632, %v4506
      %v4634 = vadd.f32 %v4633, %v4507
      %v4635 = vadd.f32 %v4634, %v4508
      %v4636 = vadd.f32 %v4635, %v4509
      %v4637 = vadd.f32 %v4636, %v4510
      %v4638 = vadd.f32 %v4637, %v4511
      %v4639 = vadd.f32 %v4638, %v4512
      %v4640 = vadd.f32 %v4639, %v4513
      %v4641 = vadd.f32 %v4640, %v4514
      %v4642 = vadd.f32 %v4641, %v4515
      %v4643 = vadd.f32 %v4642, %v4516
      %v4644 = vadd.f32 %v4643, %v4517
      %v4645 = vadd.f32 %v4644, %v4518
      %v4646 = vadd.f32 %v4645, %v4519
      %v4647 = vadd.f32 %v4646, %v4520
      %v4648 = vadd.f32 %v4647, %v4521
      %v4649 = vadd.f32 %v4648, %v4522
      %v4650 = vadd.f32 %v4649, %v4523
      %v4651 = vadd.f32 %v4650, %v4524
      %v4652 = vadd.f32 %v4651, %v4525
      %v4653 = vadd.f32 %v4652, %v4526
      %v4654 = vadd.f32 %v4653, %v4527
      %v4655 = vadd.f32 %v4654, %v4528
      %v4656 = vadd.f32 %v4655, %v4529
      %v4657 = vadd.f32 %v4656, %v4530
      %v4658 = vadd.f32 %v4657, %v4531
      %v4659 = vadd.f32 %v4658, %v4532
      %v4660 = vadd.f32 %v4659, %v4533
      %v4661 = vadd.f32 %v4660, %v4534
      %v4662 = vadd.f32 %v4661, %v4535
      %v4663 = vadd.f32 %v4662, %v4536
      %v4664 = vadd.f32 %v4663, %v4537
      %v4665 = vadd.f32 %v4664, %v4538
      %v4666 = vadd.f32 %v4665, %v4539
      %v4667 = vadd.f32 %v4666, %v4540
      %v4668 = vadd.f32 %v4667, %v4541
      %v4669 = vadd.f32 %v4668, %v4542
      %v4670 = vadd.f32 %v4669, %v4543
      %v4671 = vadd.f32 %v4670, %v4544
      %v4672 = vadd.f32 %v4671, %v4545
      %v4673 = vadd.f32 %v4672, %v4546
      %v4674 = vadd.f32 %v4673, %v4547
      %v4675 = vadd.f32 %v4674, %v4548
      %v4676 = vadd.f32 %v4675, %v4549
      %v4677 = vadd.f32 %v4676, %v4550
      %v4678 = vadd.f32 %v4677, %v4551
      %v4679 = vadd.f32 %v4678, %v4552
      %v4680 = vadd.f32 %v4679, %v4553
      %v4681 = vadd.f32 %v4680, %v4554
      %v4682 = vadd.f32 %v4681, %v4555
      %v4683 = vadd.f32 %v4682, %v4556
      %v4684 = vadd.f32 %v4683, %v4557
      %v4685 = vadd.f32 %v4684, %v4558
      %v4686 = vadd.f32 %v4685, %v4559
      %v4687 = vadd.f32 %v4686, %v4560
      %v4688 = vadd.f32 %v4687, %v4561
      %v4689 = vadd.f32 %v4688, %v4562
      %v4690 = vadd.f32 %v4689, %v4563
      %v4691 = vadd.f32 %v4690, %v4564
      %v4692 = vadd.f32 %v4691, %v4565
      %v4693 = vadd.f32 %v4692, %v4566
      %v4694 = vadd.f32 %v4693, %v4567
      %v4695 = vadd.f32 %v4694, %v4568
      %v4696 = vadd.f32 %v4695, %v4569
      %v4697 = vadd.f32 %v4696, %v4570
      %v4698 = vrot.slane %v4697, 4
      %v4699 = vadd.f32 %v4697, %v4698
      %v4700 = vrot.slane %v4699, 2
      %v4701 = vadd.f32 %v4699, %v4700
      %v4702 = vrot.slane %v4701, 1
      %v4703 = vadd.f32 %v4701, %v4702
      %v4704 = vadd.f32 %v2464, %v4703
      %v4705 = vld [vmem:[%s209 + $0x10] sm:$0xf]
      %v4706 = vld [vmem:[%s209 + $0x14] sm:$0xf]
      %v4707 = vld [vmem:[%s209 + $0x18] sm:$0xf]
      %v4708 = vld [vmem:[%s209 + $0x1c] sm:$0xf]
      %v4709 = vld [vmem:[%s209 + $0x20] sm:$0xf]
      %v4710 = vld [vmem:[%s209 + $0x24] sm:$0xf]
      %v4711 = vld [vmem:[%s209 + $0x28] sm:$0xf]
      %v4712 = vld [vmem:[%s209 + $0x2c] sm:$0xf]
      %v4713 = vld [vmem:[%s209 + $0x30] sm:$0xf]
      %v4714 = vld [vmem:[%s209 + $0x34] sm:$0xf]
      %v4715 = vld [vmem:[%s209 + $0x38] sm:$0xf]
      %v4716 = vld [vmem:[%s209 + $0x3c] sm:$0xf]
      %v4717 = vld [vmem:[%s209 + $0x40] sm:$0xf]
      %v4718 = vld [vmem:[%s209 + $0x44] sm:$0xf]
      %v4719 = vld [vmem:[%s209 + $0x48] sm:$0xf]
      %v4720 = vld [vmem:[%s209 + $0x4c] sm:$0xf]
      %v4721 = vld [vmem:[%s209 + $0x50] sm:$0xf]
      %v4722 = vld [vmem:[%s209 + $0x54] sm:$0xf]
      %v4723 = vld [vmem:[%s209 + $0x58] sm:$0xf]
      %v4724 = vld [vmem:[%s209 + $0x5c] sm:$0xf]
      %v4725 = vld [vmem:[%s209 + $0x60] sm:$0xf]
      %v4726 = vld [vmem:[%s209 + $0x64] sm:$0xf]
      %v4727 = vld [vmem:[%s209 + $0x68] sm:$0xf]
      %v4728 = vld [vmem:[%s209 + $0x6c] sm:$0xf]
      %v4729 = vld [vmem:[%s209 + $0x70] sm:$0xf]
      %v4730 = vld [vmem:[%s209 + $0x74] sm:$0xf]
      %v4731 = vld [vmem:[%s209 + $0x78] sm:$0xf]
      %v4732 = vld [vmem:[%s209 + $0x7c] sm:$0xf]
      %v4733 = vld [vmem:[%s209 + $0x80] sm:$0xf]
      %v4734 = vld [vmem:[%s209 + $0x84] sm:$0xf]
      %v4735 = vld [vmem:[%s209 + $0x88] sm:$0xf]
      %v4736 = vld [vmem:[%s209 + $0x8c] sm:$0xf]
      %v4737 = vld [vmem:[%s209 + $0x90] sm:$0xf]
      %v4738 = vld [vmem:[%s209 + $0x94] sm:$0xf]
      %v4739 = vld [vmem:[%s209 + $0x98] sm:$0xf]
      %v4740 = vld [vmem:[%s209 + $0x9c] sm:$0xf]
      %v4741 = vld [vmem:[%s209 + $0xa0] sm:$0xf]
      %v4742 = vld [vmem:[%s209 + $0xa4] sm:$0xf]
      %v4743 = vld [vmem:[%s209 + $0xa8] sm:$0xf]
      %v4744 = vld [vmem:[%s209 + $0xac] sm:$0xf]
      %v4745 = vld [vmem:[%s209 + $0xb0] sm:$0xf]
      %v4746 = vld [vmem:[%s209 + $0xb4] sm:$0xf]
      %v4747 = vld [vmem:[%s209 + $0xb8] sm:$0xf]
      %v4748 = vld [vmem:[%s209 + $0xbc] sm:$0xf]
      %v4749 = vld [vmem:[%s209 + $0xc0] sm:$0xf]
      %v4750 = vld [vmem:[%s209 + $0xc4] sm:$0xf]
      %v4751 = vld [vmem:[%s209 + $0xc8] sm:$0xf]
      %v4752 = vld [vmem:[%s209 + $0xcc] sm:$0xf]
      %v4753 = vld [vmem:[%s209 + $0xd0] sm:$0xf]
      %v4754 = vld [vmem:[%s209 + $0xd4] sm:$0xf]
      %v4755 = vld [vmem:[%s209 + $0xd8] sm:$0xf]
      %v4756 = vld [vmem:[%s209 + $0xdc] sm:$0xf]
      %v4757 = vld [vmem:[%s209 + $0xe0] sm:$0xf]
      %v4758 = vld [vmem:[%s209 + $0xe4] sm:$0xf]
      %v4759 = vld [vmem:[%s209 + $0xe8] sm:$0xf]
      %v4760 = vld [vmem:[%s209 + $0xec] sm:$0xf]
      %v4761 = vld [vmem:[%s209 + $0xf0] sm:$0xf]
      %v4762 = vld [vmem:[%s209 + $0xf4] sm:$0xf]
      %v4763 = vld [vmem:[%s209 + $0xf8] sm:$0xf]
      %v4764 = vld [vmem:[%s209 + $0xfc] sm:$0xf]
      %v4765 = vld [vmem:[%s209 + $0x100] sm:$0xf]
      %v4766 = vld [vmem:[%s209 + $0x104] sm:$0xf]
      %v4767 = vld [vmem:[%s209 + $0x108] sm:$0xf]
      %v4768 = vld [vmem:[%s209 + $0x10c] sm:$0xf]
      %v4769 = vld [vmem:[%s209 + $0x110] sm:$0xf]
      %v4770 = vld [vmem:[%s209 + $0x114] sm:$0xf]
      %v4771 = vld [vmem:[%s209 + $0x118] sm:$0xf]
      %v4772 = vld [vmem:[%s209 + $0x11c] sm:$0xf]
      %v4773 = vld [vmem:[%s209 + $0x120] sm:$0xf]
      %v4774 = vld [vmem:[%s209 + $0x124] sm:$0xf]
      %v4775 = vld [vmem:[%s209 + $0x128] sm:$0xf]
      %v4776 = vld [vmem:[%s209 + $0x12c] sm:$0xf]
      %v4777 = vld [vmem:[%s209 + $0x130] sm:$0xf]
      %v4778 = vld [vmem:[%s209 + $0x134] sm:$0xf]
      %v4779 = vld [vmem:[%s209 + $0x138] sm:$0xf]
      %v4780 = vld [vmem:[%s209 + $0x13c] sm:$0xf]
      %v4781 = vld [vmem:[%s209 + $0x140] sm:$0xf]
      %v4782 = vld [vmem:[%s209 + $0x144] sm:$0xf]
      %v4783 = vld [vmem:[%s209 + $0x148] sm:$0xf]
      %v4784 = vld [vmem:[%s209 + $0x14c] sm:$0xf]
      %v4785 = vld [vmem:[%s209 + $0x150] sm:$0xf]
      %v4786 = vld [vmem:[%s209 + $0x154] sm:$0xf]
      %v4787 = vld [vmem:[%s209 + $0x158] sm:$0xf]
      %v4788 = vld [vmem:[%s209 + $0x15c] sm:$0xf]
      %v4789 = vld [vmem:[%s209 + $0x160] sm:$0xf]
      %v4790 = vld [vmem:[%s209 + $0x164] sm:$0xf]
      %v4791 = vld [vmem:[%s209 + $0x168] sm:$0xf]
      %v4792 = vld [vmem:[%s209 + $0x16c] sm:$0xf]
      %v4793 = vld [vmem:[%s209 + $0x170] sm:$0xf]
      %v4794 = vld [vmem:[%s209 + $0x174] sm:$0xf]
      %v4795 = vld [vmem:[%s209 + $0x178] sm:$0xf]
      %v4796 = vld [vmem:[%s209 + $0x17c] sm:$0xf]
      %v4797 = vld [vmem:[%s209 + $0x180] sm:$0xf]
      %v4798 = vld [vmem:[%s209 + $0x184] sm:$0xf]
      %v4799 = vld [vmem:[%s209 + $0x188] sm:$0xf]
      %v4800 = vld [vmem:[%s209 + $0x18c] sm:$0xf]
      %v4801 = vld [vmem:[%s209 + $0x190] sm:$0xf]
      %v4802 = vld [vmem:[%s209 + $0x194] sm:$0xf]
      %v4803 = vld [vmem:[%s209 + $0x198] sm:$0xf]
      %v4804 = vld [vmem:[%s209 + $0x19c] sm:$0xf]
      %v4805 = vld [vmem:[%s209 + $0x1a0] sm:$0xf]
      %v4806 = vld [vmem:[%s209 + $0x1a4] sm:$0xf]
      %v4807 = vld [vmem:[%s209 + $0x1a8] sm:$0xf]
      %v4808 = vld [vmem:[%s209 + $0x1ac] sm:$0xf]
      %v4809 = vld [vmem:[%s209 + $0x1b0] sm:$0xf]
      %v4810 = vld [vmem:[%s209 + $0x1b4] sm:$0xf]
      %v4811 = vld [vmem:[%s209 + $0x1b8] sm:$0xf]
      %v4812 = vld [vmem:[%s209 + $0x1bc] sm:$0xf]
      %v4813 = vld [vmem:[%s209 + $0x1c0] sm:$0xf]
      %v4814 = vld [vmem:[%s209 + $0x1c4] sm:$0xf]
      %v4815 = vld [vmem:[%s209 + $0x1c8] sm:$0xf]
      %v4816 = vld [vmem:[%s209 + $0x1cc] sm:$0xf]
      %v4817 = vld [vmem:[%s209 + $0x1d0] sm:$0xf]
      %v4818 = vld [vmem:[%s209 + $0x1d4] sm:$0xf]
      %v4819 = vld [vmem:[%s209 + $0x1d8] sm:$0xf]
      %v4820 = vld [vmem:[%s209 + $0x1dc] sm:$0xf]
      %v4821 = vld [vmem:[%s209 + $0x1e0] sm:$0xf]
      %v4822 = vld [vmem:[%s209 + $0x1e4] sm:$0xf]
      %v4823 = vld [vmem:[%s209 + $0x1e8] sm:$0xf]
      %v4824 = vld [vmem:[%s209 + $0x1ec] sm:$0xf]
      %v4825 = vld [vmem:[%s209 + $0x1f0] sm:$0xf]
      %v4826 = vld [vmem:[%s209 + $0x1f4] sm:$0xf]
      %v4827 = vld [vmem:[%s209 + $0x1f8] sm:$0xf]
      %v4828 = vld [vmem:[%s209 + $0x1fc] sm:$0xf]
      %v4829 = vld [vmem:[%s209 + $0x200] sm:$0xf]
      %v4830 = vld [vmem:[%s209 + $0x204] sm:$0xf]
      %v4831 = vld [vmem:[%s209 + $0x208] sm:$0xf]
      %v4832 = vld [vmem:[%s209 + $0x20c] sm:$0xf]
      %s4833 = scalar_lea.vmem %s1, 32
      %v4834 = vld [vmem:[%s4833] sm:$0xf]
      %v4835 = vld [vmem:[%s4833 + $0x4] sm:$0xf]
      %v4836 = vld [vmem:[%s4833 + $0x8] sm:$0xf]
      %v4837 = vld [vmem:[%s4833 + $0xc] sm:$0xf]
      %v4966 = vunpack.c.l.b16 %v4705
      %v4967 = vunpack.c.l.b16 %v4706
      %v4968 = vunpack.c.l.b16 %v4707
      %v4969 = vunpack.c.l.b16 %v4708
      %v4970 = vunpack.c.l.b16 %v4709
      %v4971 = vunpack.c.l.b16 %v4710
      %v4972 = vunpack.c.l.b16 %v4711
      %v4973 = vunpack.c.l.b16 %v4712
      %v4974 = vunpack.c.l.b16 %v4713
      %v4975 = vunpack.c.l.b16 %v4714
      %v4976 = vunpack.c.l.b16 %v4715
      %v4977 = vunpack.c.l.b16 %v4716
      %v4978 = vunpack.c.l.b16 %v4717
      %v4979 = vunpack.c.l.b16 %v4718
      %v4980 = vunpack.c.l.b16 %v4719
      %v4981 = vunpack.c.l.b16 %v4720
      %v4982 = vunpack.c.l.b16 %v4721
      %v4983 = vunpack.c.l.b16 %v4722
      %v4984 = vunpack.c.l.b16 %v4723
      %v4985 = vunpack.c.l.b16 %v4724
      %v4986 = vunpack.c.l.b16 %v4725
      %v4987 = vunpack.c.l.b16 %v4726
      %v4988 = vunpack.c.l.b16 %v4727
      %v4989 = vunpack.c.l.b16 %v4728
      %v4990 = vunpack.c.l.b16 %v4729
      %v4991 = vunpack.c.l.b16 %v4730
      %v4992 = vunpack.c.l.b16 %v4731
      %v4993 = vunpack.c.l.b16 %v4732
      %v4994 = vunpack.c.l.b16 %v4733
      %v4995 = vunpack.c.l.b16 %v4734
      %v4996 = vunpack.c.l.b16 %v4735
      %v4997 = vunpack.c.l.b16 %v4736
      %v4998 = vunpack.c.l.b16 %v4737
      %v4999 = vunpack.c.l.b16 %v4738
      %v5000 = vunpack.c.l.b16 %v4739
      %v5001 = vunpack.c.l.b16 %v4740
      %v5002 = vunpack.c.l.b16 %v4741
      %v5003 = vunpack.c.l.b16 %v4742
      %v5004 = vunpack.c.l.b16 %v4743
      %v5005 = vunpack.c.l.b16 %v4744
      %v5006 = vunpack.c.l.b16 %v4745
      %v5007 = vunpack.c.l.b16 %v4746
      %v5008 = vunpack.c.l.b16 %v4747
      %v5009 = vunpack.c.l.b16 %v4748
      %v5010 = vunpack.c.l.b16 %v4749
      %v5011 = vunpack.c.l.b16 %v4750
      %v5012 = vunpack.c.l.b16 %v4751
      %v5013 = vunpack.c.l.b16 %v4752
      %v5014 = vunpack.c.l.b16 %v4753
      %v5015 = vunpack.c.l.b16 %v4754
      %v5016 = vunpack.c.l.b16 %v4755
      %v5017 = vunpack.c.l.b16 %v4756
      %v5018 = vunpack.c.l.b16 %v4757
      %v5019 = vunpack.c.l.b16 %v4758
      %v5020 = vunpack.c.l.b16 %v4759
      %v5021 = vunpack.c.l.b16 %v4760
      %v5022 = vunpack.c.l.b16 %v4761
      %v5023 = vunpack.c.l.b16 %v4762
      %v5024 = vunpack.c.l.b16 %v4763
      %v5025 = vunpack.c.l.b16 %v4764
      %v5026 = vunpack.c.l.b16 %v4765
      %v5027 = vunpack.c.l.b16 %v4766
      %v5028 = vunpack.c.l.b16 %v4767
      %v5029 = vunpack.c.l.b16 %v4768
      %v5030 = vunpack.c.l.b16 %v4769
      %v5031 = vunpack.c.l.b16 %v4770
      %v5032 = vunpack.c.l.b16 %v4771
      %v5033 = vunpack.c.l.b16 %v4772
      %v5034 = vunpack.c.l.b16 %v4773
      %v5035 = vunpack.c.l.b16 %v4774
      %v5036 = vunpack.c.l.b16 %v4775
      %v5037 = vunpack.c.l.b16 %v4776
      %v5038 = vunpack.c.l.b16 %v4777
      %v5039 = vunpack.c.l.b16 %v4778
      %v5040 = vunpack.c.l.b16 %v4779
      %v5041 = vunpack.c.l.b16 %v4780
      %v5042 = vunpack.c.l.b16 %v4781
      %v5043 = vunpack.c.l.b16 %v4782
      %v5044 = vunpack.c.l.b16 %v4783
      %v5045 = vunpack.c.l.b16 %v4784
      %v5046 = vunpack.c.l.b16 %v4785
      %v5047 = vunpack.c.l.b16 %v4786
      %v5048 = vunpack.c.l.b16 %v4787
      %v5049 = vunpack.c.l.b16 %v4788
      %v5050 = vunpack.c.l.b16 %v4789
      %v5051 = vunpack.c.l.b16 %v4790
      %v5052 = vunpack.c.l.b16 %v4791
      %v5053 = vunpack.c.l.b16 %v4792
      %v5054 = vunpack.c.l.b16 %v4793
      %v5055 = vunpack.c.l.b16 %v4794
      %v5056 = vunpack.c.l.b16 %v4795
      %v5057 = vunpack.c.l.b16 %v4796
      %v5058 = vunpack.c.l.b16 %v4797
      %v5059 = vunpack.c.l.b16 %v4798
      %v5060 = vunpack.c.l.b16 %v4799
      %v5061 = vunpack.c.l.b16 %v4800
      %v5062 = vunpack.c.l.b16 %v4801
      %v5063 = vunpack.c.l.b16 %v4802
      %v5064 = vunpack.c.l.b16 %v4803
      %v5065 = vunpack.c.l.b16 %v4804
      %v5066 = vunpack.c.l.b16 %v4805
      %v5067 = vunpack.c.l.b16 %v4806
      %v5068 = vunpack.c.l.b16 %v4807
      %v5069 = vunpack.c.l.b16 %v4808
      %v5070 = vunpack.c.l.b16 %v4809
      %v5071 = vunpack.c.l.b16 %v4810
      %v5072 = vunpack.c.l.b16 %v4811
      %v5073 = vunpack.c.l.b16 %v4812
      %v5074 = vunpack.c.l.b16 %v4813
      %v5075 = vunpack.c.l.b16 %v4814
      %v5076 = vunpack.c.l.b16 %v4815
      %v5077 = vunpack.c.l.b16 %v4816
      %v5078 = vunpack.c.l.b16 %v4817
      %v5079 = vunpack.c.l.b16 %v4818
      %v5080 = vunpack.c.l.b16 %v4819
      %v5081 = vunpack.c.l.b16 %v4820
      %v5082 = vunpack.c.l.b16 %v4821
      %v5083 = vunpack.c.l.b16 %v4822
      %v5084 = vunpack.c.l.b16 %v4823
      %v5085 = vunpack.c.l.b16 %v4824
      %v5086 = vunpack.c.l.b16 %v4825
      %v5087 = vunpack.c.l.b16 %v4826
      %v5088 = vunpack.c.l.b16 %v4827
      %v5089 = vunpack.c.l.b16 %v4828
      %v5090 = vunpack.c.l.b16 %v4829
      %v5091 = vunpack.c.l.b16 %v4830
      %v5092 = vunpack.c.l.b16 %v4831
      %v5093 = vunpack.c.l.b16 %v4832
      %v5094 = vpack.c.b16 %v4967, %v4966
      %v5095 = vpack.c.b16 %v4969, %v4968
      %v5096 = vpack.c.b16 %v4971, %v4970
      %v5097 = vpack.c.b16 %v4973, %v4972
      %v5098 = vpack.c.b16 %v4975, %v4974
      %v5099 = vpack.c.b16 %v4977, %v4976
      %v5100 = vpack.c.b16 %v4979, %v4978
      %v5101 = vpack.c.b16 %v4981, %v4980
      %v5102 = vpack.c.b16 %v4983, %v4982
      %v5103 = vpack.c.b16 %v4985, %v4984
      %v5104 = vpack.c.b16 %v4987, %v4986
      %v5105 = vpack.c.b16 %v4989, %v4988
      %v5106 = vpack.c.b16 %v4991, %v4990
      %v5107 = vpack.c.b16 %v4993, %v4992
      %v5108 = vpack.c.b16 %v4995, %v4994
      %v5109 = vpack.c.b16 %v4997, %v4996
      %v5110 = vpack.c.b16 %v4999, %v4998
      %v5111 = vpack.c.b16 %v5001, %v5000
      %v5112 = vpack.c.b16 %v5003, %v5002
      %v5113 = vpack.c.b16 %v5005, %v5004
      %v5114 = vpack.c.b16 %v5007, %v5006
      %v5115 = vpack.c.b16 %v5009, %v5008
      %v5116 = vpack.c.b16 %v5011, %v5010
      %v5117 = vpack.c.b16 %v5013, %v5012
      %v5118 = vpack.c.b16 %v5015, %v5014
      %v5119 = vpack.c.b16 %v5017, %v5016
      %v5120 = vpack.c.b16 %v5019, %v5018
      %v5121 = vpack.c.b16 %v5021, %v5020
      %v5122 = vpack.c.b16 %v5023, %v5022
      %v5123 = vpack.c.b16 %v5025, %v5024
      %v5124 = vpack.c.b16 %v5027, %v5026
      %v5125 = vpack.c.b16 %v5029, %v5028
      %v5126 = vpack.c.b16 %v5031, %v5030
      %v5127 = vpack.c.b16 %v5033, %v5032
      %v5128 = vpack.c.b16 %v5035, %v5034
      %v5129 = vpack.c.b16 %v5037, %v5036
      %v5130 = vpack.c.b16 %v5039, %v5038
      %v5131 = vpack.c.b16 %v5041, %v5040
      %v5132 = vpack.c.b16 %v5043, %v5042
      %v5133 = vpack.c.b16 %v5045, %v5044
      %v5134 = vpack.c.b16 %v5047, %v5046
      %v5135 = vpack.c.b16 %v5049, %v5048
      %v5136 = vpack.c.b16 %v5051, %v5050
      %v5137 = vpack.c.b16 %v5053, %v5052
      %v5138 = vpack.c.b16 %v5055, %v5054
      %v5139 = vpack.c.b16 %v5057, %v5056
      %v5140 = vpack.c.b16 %v5059, %v5058
      %v5141 = vpack.c.b16 %v5061, %v5060
      %v5142 = vpack.c.b16 %v5063, %v5062
      %v5143 = vpack.c.b16 %v5065, %v5064
      %v5144 = vpack.c.b16 %v5067, %v5066
      %v5145 = vpack.c.b16 %v5069, %v5068
      %v5146 = vpack.c.b16 %v5071, %v5070
      %v5147 = vpack.c.b16 %v5073, %v5072
      %v5148 = vpack.c.b16 %v5075, %v5074
      %v5149 = vpack.c.b16 %v5077, %v5076
      %v5150 = vpack.c.b16 %v5079, %v5078
      %v5151 = vpack.c.b16 %v5081, %v5080
      %v5152 = vpack.c.b16 %v5083, %v5082
      %v5153 = vpack.c.b16 %v5085, %v5084
      %v5154 = vpack.c.b16 %v5087, %v5086
      %v5155 = vpack.c.b16 %v5089, %v5088
      %v5156 = vpack.c.b16 %v5091, %v5090
      %v5157 = vpack.c.b16 %v5093, %v5092
      %v5162 = vunpack.c.l.b16 %v4834
      %v5163 = vunpack.c.l.b16 %v4835
      %v5164 = vunpack.c.l.b16 %v4836
      %v5165 = vunpack.c.l.b16 %v4837
      %v5166 = vpack.c.b16 %v5163, %v5162
      %v5167 = vpack.c.b16 %v5165, %v5164
      %v5171 = vsel %vm691, %v5094, 0
      %v5174 = vsel %vm691, %v5095, 0
      %v5177 = vsel %vm691, %v5096, 0
      %v5180 = vsel %vm691, %v5097, 0
      %v5183 = vsel %vm691, %v5098, 0
      %v5186 = vsel %vm691, %v5099, 0
      %v5189 = vsel %vm691, %v5100, 0
      %v5192 = vsel %vm691, %v5101, 0
      %v5195 = vsel %vm691, %v5102, 0
      %v5198 = vsel %vm691, %v5103, 0
      %v5201 = vsel %vm691, %v5104, 0
      %v5204 = vsel %vm691, %v5105, 0
      %v5207 = vsel %vm691, %v5106, 0
      %v5210 = vsel %vm691, %v5107, 0
      %v5213 = vsel %vm691, %v5108, 0
      %v5216 = vsel %vm691, %v5109, 0
      %v5219 = vsel %vm691, %v5110, 0
      %v5222 = vsel %vm691, %v5111, 0
      %v5225 = vsel %vm691, %v5112, 0
      %v5228 = vsel %vm691, %v5113, 0
      %v5231 = vsel %vm691, %v5114, 0
      %v5234 = vsel %vm691, %v5115, 0
      %v5237 = vsel %vm691, %v5116, 0
      %v5240 = vsel %vm691, %v5117, 0
      %v5243 = vsel %vm691, %v5118, 0
      %v5246 = vsel %vm691, %v5119, 0
      %v5249 = vsel %vm691, %v5120, 0
      %v5252 = vsel %vm691, %v5121, 0
      %v5255 = vsel %vm691, %v5122, 0
      %v5258 = vsel %vm691, %v5123, 0
      %v5261 = vsel %vm691, %v5124, 0
      %v5264 = vsel %vm691, %v5125, 0
      %v5267 = vsel %vm691, %v5126, 0
      %v5270 = vsel %vm691, %v5127, 0
      %v5273 = vsel %vm691, %v5128, 0
      %v5276 = vsel %vm691, %v5129, 0
      %v5279 = vsel %vm691, %v5130, 0
      %v5282 = vsel %vm691, %v5131, 0
      %v5285 = vsel %vm691, %v5132, 0
      %v5288 = vsel %vm691, %v5133, 0
      %v5291 = vsel %vm691, %v5134, 0
      %v5294 = vsel %vm691, %v5135, 0
      %v5297 = vsel %vm691, %v5136, 0
      %v5300 = vsel %vm691, %v5137, 0
      %v5303 = vsel %vm691, %v5138, 0
      %v5306 = vsel %vm691, %v5139, 0
      %v5309 = vsel %vm691, %v5140, 0
      %v5312 = vsel %vm691, %v5141, 0
      %v5315 = vsel %vm691, %v5142, 0
      %v5318 = vsel %vm691, %v5143, 0
      %v5321 = vsel %vm691, %v5144, 0
      %v5324 = vsel %vm691, %v5145, 0
      %v5327 = vsel %vm691, %v5146, 0
      %v5330 = vsel %vm691, %v5147, 0
      %v5333 = vsel %vm691, %v5148, 0
      %v5336 = vsel %vm691, %v5149, 0
      %v5339 = vsel %vm691, %v5150, 0
      %v5342 = vsel %vm691, %v5151, 0
      %v5345 = vsel %vm691, %v5152, 0
      %v5348 = vsel %vm691, %v5153, 0
      %v5351 = vsel %vm691, %v5154, 0
      %v5354 = vsel %vm691, %v5155, 0
      %v5357 = vsel %vm691, %v5156, 0
      %v5360 = vsel %vm691, %v5157, 0
      %5362 = vmatprep.subr.bf16.mxu0 0
      %5363 = vmatpush1.bf16.msra.mxu0 %v5166
      %5364 = vmatprep.subr.bf16.mxu0 0
      %5365 = vmatpush1.bf16.msra.mxu0 %v5167
      %5366 = vmatprep.subr.bf16.mxu0 0
      %5367 = vmatpush1.bf16.msra.mxu0 0
      %5368 = vmatprep.subr.bf16.mxu0 0
      %5369 = vmatpush1.bf16.msra.mxu0 0
      %5370 = vmatprep.subr.bf16.mxu0 0
      %5371 = vmatpush1.bf16.msra.mxu0 0
      %5372 = vmatprep.subr.bf16.mxu0 0
      %5373 = vmatpush1.bf16.msra.mxu0 0
      %5374 = vmatprep.subr.bf16.mxu0 0
      %5375 = vmatpush1.bf16.msra.mxu0 0
      %5376 = vmatprep.subr.bf16.mxu0 0
      %5377 = vmatpush1.bf16.msra.mxu0 0
      %5378 = vmatprep.subr.bf16.mxu0 0
      %5379 = vmatpush1.bf16.msra.mxu0 0
      %5380 = vmatprep.subr.bf16.mxu0 0
      %5381 = vmatpush1.bf16.msra.mxu0 0
      %5382 = vmatprep.subr.bf16.mxu0 0
      %5383 = vmatpush1.bf16.msra.mxu0 0
      %5384 = vmatprep.subr.bf16.mxu0 0
      %5385 = vmatpush1.bf16.msra.mxu0 0
      %5386 = vmatprep.subr.bf16.mxu0 0
      %5387 = vmatpush1.bf16.msra.mxu0 0
      %5388 = vmatprep.subr.bf16.mxu0 0
      %5389 = vmatpush1.bf16.msra.mxu0 0
      %5390 = vmatprep.subr.bf16.mxu0 0
      %5391 = vmatpush1.bf16.msra.mxu0 0
      %5392 = vmatprep.subr.bf16.mxu0 0
      %5393 = vmatpush1.bf16.msra.mxu0 0
      %5394 = vmatprep.mubr.bf16.mxu0 0
      %5395 = vmatmul.mubr.bf16.gmra.mrb[0].mxu0 %v5171
      %v5396 = vpop.f32.mrb[0].mxu0
      %v5397 = vadd.f32 0.0, %v5396
      %v5398 = vpop.f32.mrb[0].mxu0
      %v5399 = vpop.f32.mrb[0].mxu0
      %v5400 = vadd.f32 0.0, %v5399
      %v5401 = vpop.f32.mrb[0].mxu0
      %5402 = vmatprep.mubr.bf16.mxu0 0
      %5403 = vmatmul.mubr.bf16.gmra.mrb[0].mxu0 %v5174
      %v5404 = vpop.f32.mrb[0].mxu0
      %v5405 = vadd.f32 0.0, %v5404
      %v5406 = vpop.f32.mrb[0].mxu0
      %v5407 = vpop.f32.mrb[0].mxu0
      %v5408 = vadd.f32 0.0, %v5407
      %v5409 = vpop.f32.mrb[0].mxu0
      %5410 = vmatprep.mubr.bf16.mxu0 0
      %5411 = vmatmul.mubr.bf16.gmra.mrb[0].mxu0 %v5177
      %v5412 = vpop.f32.mrb[0].mxu0
      %v5413 = vadd.f32 0.0, %v5412
      %v5414 = vpop.f32.mrb[0].mxu0
      %v5415 = vpop.f32.mrb[0].mxu0
      %v5416 = vadd.f32 0.0, %v5415
      %v5417 = vpop.f32.mrb[0].mxu0
      %5418 = vmatprep.mubr.bf16.mxu0 0
      %5419 = vmatmul.mubr.bf16.gmra.mrb[0].mxu0 %v5180
      %v5420 = vpop.f32.mrb[0].mxu0
      %v5421 = vadd.f32 0.0, %v5420
      %v5422 = vpop.f32.mrb[0].mxu0
      %v5423 = vpop.f32.mrb[0].mxu0
      %v5424 = vadd.f32 0.0, %v5423
      %v5425 = vpop.f32.mrb[0].mxu0
      %5426 = vmatprep.mubr.bf16.mxu0 0
      %5427 = vmatmul.mubr.bf16.gmra.mrb[0].mxu0 %v5183
      %v5428 = vpop.f32.mrb[0].mxu0
      %v5429 = vadd.f32 0.0, %v5428
      %v5430 = vpop.f32.mrb[0].mxu0
      %v5431 = vpop.f32.mrb[0].mxu0
      %v5432 = vadd.f32 0.0, %v5431
      %v5433 = vpop.f32.mrb[0].mxu0
      %5434 = vmatprep.mubr.bf16.mxu0 0
      %5435 = vmatmul.mubr.bf16.gmra.mrb[0].mxu0 %v5186
      %v5436 = vpop.f32.mrb[0].mxu0
      %v5437 = vadd.f32 0.0, %v5436
      %v5438 = vpop.f32.mrb[0].mxu0
      %v5439 = vpop.f32.mrb[0].mxu0
      %v5440 = vadd.f32 0.0, %v5439
      %v5441 = vpop.f32.mrb[0].mxu0
      %5442 = vmatprep.mubr.bf16.mxu0 0
      %5443 = vmatmul.mubr.bf16.gmra.mrb[0].mxu0 %v5189
      %v5444 = vpop.f32.mrb[0].mxu0
      %v5445 = vadd.f32 0.0, %v5444
      %v5446 = vpop.f32.mrb[0].mxu0
      %v5447 = vpop.f32.mrb[0].mxu0
      %v5448 = vadd.f32 0.0, %v5447
      %v5449 = vpop.f32.mrb[0].mxu0
      %5450 = vmatprep.mubr.bf16.mxu0 0
      %5451 = vmatmul.mubr.bf16.gmra.mrb[0].mxu0 %v5192
      %v5452 = vpop.f32.mrb[0].mxu0
      %v5453 = vadd.f32 0.0, %v5452
      %v5454 = vpop.f32.mrb[0].mxu0
      %v5455 = vpop.f32.mrb[0].mxu0
      %v5456 = vadd.f32 0.0, %v5455
      %v5457 = vpop.f32.mrb[0].mxu0
      %5458 = vmatprep.mubr.bf16.mxu0 0
      %5459 = vmatmul.mubr.bf16.gmra.mrb[0].mxu0 %v5195
      %v5460 = vpop.f32.mrb[0].mxu0
      %v5461 = vadd.f32 0.0, %v5460
      %v5462 = vpop.f32.mrb[0].mxu0
      %v5463 = vpop.f32.mrb[0].mxu0
      %v5464 = vadd.f32 0.0, %v5463
      %v5465 = vpop.f32.mrb[0].mxu0
      %5466 = vmatprep.mubr.bf16.mxu0 0
      %5467 = vmatmul.mubr.bf16.gmra.mrb[0].mxu0 %v5198
      %v5468 = vpop.f32.mrb[0].mxu0
      %v5469 = vadd.f32 0.0, %v5468
      %v5470 = vpop.f32.mrb[0].mxu0
      %v5471 = vpop.f32.mrb[0].mxu0
      %v5472 = vadd.f32 0.0, %v5471
      %v5473 = vpop.f32.mrb[0].mxu0
      %5474 = vmatprep.mubr.bf16.mxu0 0
      %5475 = vmatmul.mubr.bf16.gmra.mrb[0].mxu0 %v5201
      %v5476 = vpop.f32.mrb[0].mxu0
      %v5477 = vadd.f32 0.0, %v5476
      %v5478 = vpop.f32.mrb[0].mxu0
      %v5479 = vpop.f32.mrb[0].mxu0
      %v5480 = vadd.f32 0.0, %v5479
      %v5481 = vpop.f32.mrb[0].mxu0
      %5482 = vmatprep.mubr.bf16.mxu0 0
      %5483 = vmatmul.mubr.bf16.gmra.mrb[0].mxu0 %v5204
      %v5484 = vpop.f32.mrb[0].mxu0
      %v5485 = vadd.f32 0.0, %v5484
      %v5486 = vpop.f32.mrb[0].mxu0
      %v5487 = vpop.f32.mrb[0].mxu0
      %v5488 = vadd.f32 0.0, %v5487
      %v5489 = vpop.f32.mrb[0].mxu0
      %5490 = vmatprep.mubr.bf16.mxu0 0
      %5491 = vmatmul.mubr.bf16.gmra.mrb[0].mxu0 %v5207
      %v5492 = vpop.f32.mrb[0].mxu0
      %v5493 = vadd.f32 0.0, %v5492
      %v5494 = vpop.f32.mrb[0].mxu0
      %v5495 = vpop.f32.mrb[0].mxu0
      %v5496 = vadd.f32 0.0, %v5495
      %v5497 = vpop.f32.mrb[0].mxu0
      %5498 = vmatprep.mubr.bf16.mxu0 0
      %5499 = vmatmul.mubr.bf16.gmra.mrb[0].mxu0 %v5210
      %v5500 = vpop.f32.mrb[0].mxu0
      %v5501 = vadd.f32 0.0, %v5500
      %v5502 = vpop.f32.mrb[0].mxu0
      %v5503 = vpop.f32.mrb[0].mxu0
      %v5504 = vadd.f32 0.0, %v5503
      %v5505 = vpop.f32.mrb[0].mxu0
      %5506 = vmatprep.mubr.bf16.mxu0 0
      %5507 = vmatmul.mubr.bf16.gmra.mrb[0].mxu0 %v5213
      %v5508 = vpop.f32.mrb[0].mxu0
      %v5509 = vadd.f32 0.0, %v5508
      %v5510 = vpop.f32.mrb[0].mxu0
      %v5511 = vpop.f32.mrb[0].mxu0
      %v5512 = vadd.f32 0.0, %v5511
      %v5513 = vpop.f32.mrb[0].mxu0
      %5514 = vmatprep.mubr.bf16.mxu0 0
      %5515 = vmatmul.mubr.bf16.gmra.mrb[0].mxu0 %v5216
      %v5516 = vpop.f32.mrb[0].mxu0
      %v5517 = vadd.f32 0.0, %v5516
      %v5518 = vpop.f32.mrb[0].mxu0
      %v5519 = vpop.f32.mrb[0].mxu0
      %v5520 = vadd.f32 0.0, %v5519
      %v5521 = vpop.f32.mrb[0].mxu0
      %5522 = vmatprep.mubr.bf16.mxu0 0
      %5523 = vmatmul.mubr.bf16.gmra.mrb[0].mxu0 %v5219
      %v5524 = vpop.f32.mrb[0].mxu0
      %v5525 = vadd.f32 0.0, %v5524
      %v5526 = vpop.f32.mrb[0].mxu0
      %v5527 = vpop.f32.mrb[0].mxu0
      %v5528 = vadd.f32 0.0, %v5527
      %v5529 = vpop.f32.mrb[0].mxu0
      %5530 = vmatprep.mubr.bf16.mxu0 0
      %5531 = vmatmul.mubr.bf16.gmra.mrb[0].mxu0 %v5222
      %v5532 = vpop.f32.mrb[0].mxu0
      %v5533 = vadd.f32 0.0, %v5532
      %v5534 = vpop.f32.mrb[0].mxu0
      %v5535 = vpop.f32.mrb[0].mxu0
      %v5536 = vadd.f32 0.0, %v5535
      %v5537 = vpop.f32.mrb[0].mxu0
      %5538 = vmatprep.mubr.bf16.mxu0 0
      %5539 = vmatmul.mubr.bf16.gmra.mrb[0].mxu0 %v5225
      %v5540 = vpop.f32.mrb[0].mxu0
      %v5541 = vadd.f32 0.0, %v5540
      %v5542 = vpop.f32.mrb[0].mxu0
      %v5543 = vpop.f32.mrb[0].mxu0
      %v5544 = vadd.f32 0.0, %v5543
      %v5545 = vpop.f32.mrb[0].mxu0
      %5546 = vmatprep.mubr.bf16.mxu0 0
      %5547 = vmatmul.mubr.bf16.gmra.mrb[0].mxu0 %v5228
      %v5548 = vpop.f32.mrb[0].mxu0
      %v5549 = vadd.f32 0.0, %v5548
      %v5550 = vpop.f32.mrb[0].mxu0
      %v5551 = vpop.f32.mrb[0].mxu0
      %v5552 = vadd.f32 0.0, %v5551
      %v5553 = vpop.f32.mrb[0].mxu0
      %5554 = vmatprep.mubr.bf16.mxu0 0
      %5555 = vmatmul.mubr.bf16.gmra.mrb[0].mxu0 %v5231
      %v5556 = vpop.f32.mrb[0].mxu0
      %v5557 = vadd.f32 0.0, %v5556
      %v5558 = vpop.f32.mrb[0].mxu0
      %v5559 = vpop.f32.mrb[0].mxu0
      %v5560 = vadd.f32 0.0, %v5559
      %v5561 = vpop.f32.mrb[0].mxu0
      %5562 = vmatprep.mubr.bf16.mxu0 0
      %5563 = vmatmul.mubr.bf16.gmra.mrb[0].mxu0 %v5234
      %v5564 = vpop.f32.mrb[0].mxu0
      %v5565 = vadd.f32 0.0, %v5564
      %v5566 = vpop.f32.mrb[0].mxu0
      %v5567 = vpop.f32.mrb[0].mxu0
      %v5568 = vadd.f32 0.0, %v5567
      %v5569 = vpop.f32.mrb[0].mxu0
      %5570 = vmatprep.mubr.bf16.mxu0 0
      %5571 = vmatmul.mubr.bf16.gmra.mrb[0].mxu0 %v5237
      %v5572 = vpop.f32.mrb[0].mxu0
      %v5573 = vadd.f32 0.0, %v5572
      %v5574 = vpop.f32.mrb[0].mxu0
      %v5575 = vpop.f32.mrb[0].mxu0
      %v5576 = vadd.f32 0.0, %v5575
      %v5577 = vpop.f32.mrb[0].mxu0
      %5578 = vmatprep.mubr.bf16.mxu0 0
      %5579 = vmatmul.mubr.bf16.gmra.mrb[0].mxu0 %v5240
      %v5580 = vpop.f32.mrb[0].mxu0
      %v5581 = vadd.f32 0.0, %v5580
      %v5582 = vpop.f32.mrb[0].mxu0
      %v5583 = vpop.f32.mrb[0].mxu0
      %v5584 = vadd.f32 0.0, %v5583
      %v5585 = vpop.f32.mrb[0].mxu0
      %5586 = vmatprep.mubr.bf16.mxu0 0
      %5587 = vmatmul.mubr.bf16.gmra.mrb[0].mxu0 %v5243
      %v5588 = vpop.f32.mrb[0].mxu0
      %v5589 = vadd.f32 0.0, %v5588
      %v5590 = vpop.f32.mrb[0].mxu0
      %v5591 = vpop.f32.mrb[0].mxu0
      %v5592 = vadd.f32 0.0, %v5591
      %v5593 = vpop.f32.mrb[0].mxu0
      %5594 = vmatprep.mubr.bf16.mxu0 0
      %5595 = vmatmul.mubr.bf16.gmra.mrb[0].mxu0 %v5246
      %v5596 = vpop.f32.mrb[0].mxu0
      %v5597 = vadd.f32 0.0, %v5596
      %v5598 = vpop.f32.mrb[0].mxu0
      %v5599 = vpop.f32.mrb[0].mxu0
      %v5600 = vadd.f32 0.0, %v5599
      %v5601 = vpop.f32.mrb[0].mxu0
      %5602 = vmatprep.mubr.bf16.mxu0 0
      %5603 = vmatmul.mubr.bf16.gmra.mrb[0].mxu0 %v5249
      %v5604 = vpop.f32.mrb[0].mxu0
      %v5605 = vadd.f32 0.0, %v5604
      %v5606 = vpop.f32.mrb[0].mxu0
      %v5607 = vpop.f32.mrb[0].mxu0
      %v5608 = vadd.f32 0.0, %v5607
      %v5609 = vpop.f32.mrb[0].mxu0
      %5610 = vmatprep.mubr.bf16.mxu0 0
      %5611 = vmatmul.mubr.bf16.gmra.mrb[0].mxu0 %v5252
      %v5612 = vpop.f32.mrb[0].mxu0
      %v5613 = vadd.f32 0.0, %v5612
      %v5614 = vpop.f32.mrb[0].mxu0
      %v5615 = vpop.f32.mrb[0].mxu0
      %v5616 = vadd.f32 0.0, %v5615
      %v5617 = vpop.f32.mrb[0].mxu0
      %5618 = vmatprep.mubr.bf16.mxu0 0
      %5619 = vmatmul.mubr.bf16.gmra.mrb[0].mxu0 %v5255
      %v5620 = vpop.f32.mrb[0].mxu0
      %v5621 = vadd.f32 0.0, %v5620
      %v5622 = vpop.f32.mrb[0].mxu0
      %v5623 = vpop.f32.mrb[0].mxu0
      %v5624 = vadd.f32 0.0, %v5623
      %v5625 = vpop.f32.mrb[0].mxu0
      %5626 = vmatprep.mubr.bf16.mxu0 0
      %5627 = vmatmul.mubr.bf16.gmra.mrb[0].mxu0 %v5258
      %v5628 = vpop.f32.mrb[0].mxu0
      %v5629 = vadd.f32 0.0, %v5628
      %v5630 = vpop.f32.mrb[0].mxu0
      %v5631 = vpop.f32.mrb[0].mxu0
      %v5632 = vadd.f32 0.0, %v5631
      %v5633 = vpop.f32.mrb[0].mxu0
      %5634 = vmatprep.mubr.bf16.mxu0 0
      %5635 = vmatmul.mubr.bf16.gmra.mrb[0].mxu0 %v5261
      %v5636 = vpop.f32.mrb[0].mxu0
      %v5637 = vadd.f32 0.0, %v5636
      %v5638 = vpop.f32.mrb[0].mxu0
      %v5639 = vpop.f32.mrb[0].mxu0
      %v5640 = vadd.f32 0.0, %v5639
      %v5641 = vpop.f32.mrb[0].mxu0
      %5642 = vmatprep.mubr.bf16.mxu0 0
      %5643 = vmatmul.mubr.bf16.gmra.mrb[0].mxu0 %v5264
      %v5644 = vpop.f32.mrb[0].mxu0
      %v5645 = vadd.f32 0.0, %v5644
      %v5646 = vpop.f32.mrb[0].mxu0
      %v5647 = vpop.f32.mrb[0].mxu0
      %v5648 = vadd.f32 0.0, %v5647
      %v5649 = vpop.f32.mrb[0].mxu0
      %5650 = vmatprep.mubr.bf16.mxu0 0
      %5651 = vmatmul.mubr.bf16.gmra.mrb[0].mxu0 %v5267
      %v5652 = vpop.f32.mrb[0].mxu0
      %v5653 = vadd.f32 0.0, %v5652
      %v5654 = vpop.f32.mrb[0].mxu0
      %v5655 = vpop.f32.mrb[0].mxu0
      %v5656 = vadd.f32 0.0, %v5655
      %v5657 = vpop.f32.mrb[0].mxu0
      %5658 = vmatprep.mubr.bf16.mxu0 0
      %5659 = vmatmul.mubr.bf16.gmra.mrb[0].mxu0 %v5270
      %v5660 = vpop.f32.mrb[0].mxu0
      %v5661 = vadd.f32 0.0, %v5660
      %v5662 = vpop.f32.mrb[0].mxu0
      %v5663 = vpop.f32.mrb[0].mxu0
      %v5664 = vadd.f32 0.0, %v5663
      %v5665 = vpop.f32.mrb[0].mxu0
      %5666 = vmatprep.mubr.bf16.mxu0 0
      %5667 = vmatmul.mubr.bf16.gmra.mrb[0].mxu0 %v5273
      %v5668 = vpop.f32.mrb[0].mxu0
      %v5669 = vadd.f32 0.0, %v5668
      %v5670 = vpop.f32.mrb[0].mxu0
      %v5671 = vpop.f32.mrb[0].mxu0
      %v5672 = vadd.f32 0.0, %v5671
      %v5673 = vpop.f32.mrb[0].mxu0
      %5674 = vmatprep.mubr.bf16.mxu0 0
      %5675 = vmatmul.mubr.bf16.gmra.mrb[0].mxu0 %v5276
      %v5676 = vpop.f32.mrb[0].mxu0
      %v5677 = vadd.f32 0.0, %v5676
      %v5678 = vpop.f32.mrb[0].mxu0
      %v5679 = vpop.f32.mrb[0].mxu0
      %v5680 = vadd.f32 0.0, %v5679
      %v5681 = vpop.f32.mrb[0].mxu0
      %5682 = vmatprep.mubr.bf16.mxu0 0
      %5683 = vmatmul.mubr.bf16.gmra.mrb[0].mxu0 %v5279
      %v5684 = vpop.f32.mrb[0].mxu0
      %v5685 = vadd.f32 0.0, %v5684
      %v5686 = vpop.f32.mrb[0].mxu0
      %v5687 = vpop.f32.mrb[0].mxu0
      %v5688 = vadd.f32 0.0, %v5687
      %v5689 = vpop.f32.mrb[0].mxu0
      %5690 = vmatprep.mubr.bf16.mxu0 0
      %5691 = vmatmul.mubr.bf16.gmra.mrb[0].mxu0 %v5282
      %v5692 = vpop.f32.mrb[0].mxu0
      %v5693 = vadd.f32 0.0, %v5692
      %v5694 = vpop.f32.mrb[0].mxu0
      %v5695 = vpop.f32.mrb[0].mxu0
      %v5696 = vadd.f32 0.0, %v5695
      %v5697 = vpop.f32.mrb[0].mxu0
      %5698 = vmatprep.mubr.bf16.mxu0 0
      %5699 = vmatmul.mubr.bf16.gmra.mrb[0].mxu0 %v5285
      %v5700 = vpop.f32.mrb[0].mxu0
      %v5701 = vadd.f32 0.0, %v5700
      %v5702 = vpop.f32.mrb[0].mxu0
      %v5703 = vpop.f32.mrb[0].mxu0
      %v5704 = vadd.f32 0.0, %v5703
      %v5705 = vpop.f32.mrb[0].mxu0
      %5706 = vmatprep.mubr.bf16.mxu0 0
      %5707 = vmatmul.mubr.bf16.gmra.mrb[0].mxu0 %v5288
      %v5708 = vpop.f32.mrb[0].mxu0
      %v5709 = vadd.f32 0.0, %v5708
      %v5710 = vpop.f32.mrb[0].mxu0
      %v5711 = vpop.f32.mrb[0].mxu0
      %v5712 = vadd.f32 0.0, %v5711
      %v5713 = vpop.f32.mrb[0].mxu0
      %5714 = vmatprep.mubr.bf16.mxu0 0
      %5715 = vmatmul.mubr.bf16.gmra.mrb[0].mxu0 %v5291
      %v5716 = vpop.f32.mrb[0].mxu0
      %v5717 = vadd.f32 0.0, %v5716
      %v5718 = vpop.f32.mrb[0].mxu0
      %v5719 = vpop.f32.mrb[0].mxu0
      %v5720 = vadd.f32 0.0, %v5719
      %v5721 = vpop.f32.mrb[0].mxu0
      %5722 = vmatprep.mubr.bf16.mxu0 0
      %5723 = vmatmul.mubr.bf16.gmra.mrb[0].mxu0 %v5294
      %v5724 = vpop.f32.mrb[0].mxu0
      %v5725 = vadd.f32 0.0, %v5724
      %v5726 = vpop.f32.mrb[0].mxu0
      %v5727 = vpop.f32.mrb[0].mxu0
      %v5728 = vadd.f32 0.0, %v5727
      %v5729 = vpop.f32.mrb[0].mxu0
      %5730 = vmatprep.mubr.bf16.mxu0 0
      %5731 = vmatmul.mubr.bf16.gmra.mrb[0].mxu0 %v5297
      %v5732 = vpop.f32.mrb[0].mxu0
      %v5733 = vadd.f32 0.0, %v5732
      %v5734 = vpop.f32.mrb[0].mxu0
      %v5735 = vpop.f32.mrb[0].mxu0
      %v5736 = vadd.f32 0.0, %v5735
      %v5737 = vpop.f32.mrb[0].mxu0
      %5738 = vmatprep.mubr.bf16.mxu0 0
      %5739 = vmatmul.mubr.bf16.gmra.mrb[0].mxu0 %v5300
      %v5740 = vpop.f32.mrb[0].mxu0
      %v5741 = vadd.f32 0.0, %v5740
      %v5742 = vpop.f32.mrb[0].mxu0
      %v5743 = vpop.f32.mrb[0].mxu0
      %v5744 = vadd.f32 0.0, %v5743
      %v5745 = vpop.f32.mrb[0].mxu0
      %5746 = vmatprep.mubr.bf16.mxu0 0
      %5747 = vmatmul.mubr.bf16.gmra.mrb[0].mxu0 %v5303
      %v5748 = vpop.f32.mrb[0].mxu0
      %v5749 = vadd.f32 0.0, %v5748
      %v5750 = vpop.f32.mrb[0].mxu0
      %v5751 = vpop.f32.mrb[0].mxu0
      %v5752 = vadd.f32 0.0, %v5751
      %v5753 = vpop.f32.mrb[0].mxu0
      %5754 = vmatprep.mubr.bf16.mxu0 0
      %5755 = vmatmul.mubr.bf16.gmra.mrb[0].mxu0 %v5306
      %v5756 = vpop.f32.mrb[0].mxu0
      %v5757 = vadd.f32 0.0, %v5756
      %v5758 = vpop.f32.mrb[0].mxu0
      %v5759 = vpop.f32.mrb[0].mxu0
      %v5760 = vadd.f32 0.0, %v5759
      %v5761 = vpop.f32.mrb[0].mxu0
      %5762 = vmatprep.mubr.bf16.mxu0 0
      %5763 = vmatmul.mubr.bf16.gmra.mrb[0].mxu0 %v5309
      %v5764 = vpop.f32.mrb[0].mxu0
      %v5765 = vadd.f32 0.0, %v5764
      %v5766 = vpop.f32.mrb[0].mxu0
      %v5767 = vpop.f32.mrb[0].mxu0
      %v5768 = vadd.f32 0.0, %v5767
      %v5769 = vpop.f32.mrb[0].mxu0
      %5770 = vmatprep.mubr.bf16.mxu0 0
      %5771 = vmatmul.mubr.bf16.gmra.mrb[0].mxu0 %v5312
      %v5772 = vpop.f32.mrb[0].mxu0
      %v5773 = vadd.f32 0.0, %v5772
      %v5774 = vpop.f32.mrb[0].mxu0
      %v5775 = vpop.f32.mrb[0].mxu0
      %v5776 = vadd.f32 0.0, %v5775
      %v5777 = vpop.f32.mrb[0].mxu0
      %5778 = vmatprep.mubr.bf16.mxu0 0
      %5779 = vmatmul.mubr.bf16.gmra.mrb[0].mxu0 %v5315
      %v5780 = vpop.f32.mrb[0].mxu0
      %v5781 = vadd.f32 0.0, %v5780
      %v5782 = vpop.f32.mrb[0].mxu0
      %v5783 = vpop.f32.mrb[0].mxu0
      %v5784 = vadd.f32 0.0, %v5783
      %v5785 = vpop.f32.mrb[0].mxu0
      %5786 = vmatprep.mubr.bf16.mxu0 0
      %5787 = vmatmul.mubr.bf16.gmra.mrb[0].mxu0 %v5318
      %v5788 = vpop.f32.mrb[0].mxu0
      %v5789 = vadd.f32 0.0, %v5788
      %v5790 = vpop.f32.mrb[0].mxu0
      %v5791 = vpop.f32.mrb[0].mxu0
      %v5792 = vadd.f32 0.0, %v5791
      %v5793 = vpop.f32.mrb[0].mxu0
      %5794 = vmatprep.mubr.bf16.mxu0 0
      %5795 = vmatmul.mubr.bf16.gmra.mrb[0].mxu0 %v5321
      %v5796 = vpop.f32.mrb[0].mxu0
      %v5797 = vadd.f32 0.0, %v5796
      %v5798 = vpop.f32.mrb[0].mxu0
      %v5799 = vpop.f32.mrb[0].mxu0
      %v5800 = vadd.f32 0.0, %v5799
      %v5801 = vpop.f32.mrb[0].mxu0
      %5802 = vmatprep.mubr.bf16.mxu0 0
      %5803 = vmatmul.mubr.bf16.gmra.mrb[0].mxu0 %v5324
      %v5804 = vpop.f32.mrb[0].mxu0
      %v5805 = vadd.f32 0.0, %v5804
      %v5806 = vpop.f32.mrb[0].mxu0
      %v5807 = vpop.f32.mrb[0].mxu0
      %v5808 = vadd.f32 0.0, %v5807
      %v5809 = vpop.f32.mrb[0].mxu0
      %5810 = vmatprep.mubr.bf16.mxu0 0
      %5811 = vmatmul.mubr.bf16.gmra.mrb[0].mxu0 %v5327
      %v5812 = vpop.f32.mrb[0].mxu0
      %v5813 = vadd.f32 0.0, %v5812
      %v5814 = vpop.f32.mrb[0].mxu0
      %v5815 = vpop.f32.mrb[0].mxu0
      %v5816 = vadd.f32 0.0, %v5815
      %v5817 = vpop.f32.mrb[0].mxu0
      %5818 = vmatprep.mubr.bf16.mxu0 0
      %5819 = vmatmul.mubr.bf16.gmra.mrb[0].mxu0 %v5330
      %v5820 = vpop.f32.mrb[0].mxu0
      %v5821 = vadd.f32 0.0, %v5820
      %v5822 = vpop.f32.mrb[0].mxu0
      %v5823 = vpop.f32.mrb[0].mxu0
      %v5824 = vadd.f32 0.0, %v5823
      %v5825 = vpop.f32.mrb[0].mxu0
      %5826 = vmatprep.mubr.bf16.mxu0 0
      %5827 = vmatmul.mubr.bf16.gmra.mrb[0].mxu0 %v5333
      %v5828 = vpop.f32.mrb[0].mxu0
      %v5829 = vadd.f32 0.0, %v5828
      %v5830 = vpop.f32.mrb[0].mxu0
      %v5831 = vpop.f32.mrb[0].mxu0
      %v5832 = vadd.f32 0.0, %v5831
      %v5833 = vpop.f32.mrb[0].mxu0
      %5834 = vmatprep.mubr.bf16.mxu0 0
      %5835 = vmatmul.mubr.bf16.gmra.mrb[0].mxu0 %v5336
      %v5836 = vpop.f32.mrb[0].mxu0
      %v5837 = vadd.f32 0.0, %v5836
      %v5838 = vpop.f32.mrb[0].mxu0
      %v5839 = vpop.f32.mrb[0].mxu0
      %v5840 = vadd.f32 0.0, %v5839
      %v5841 = vpop.f32.mrb[0].mxu0
      %5842 = vmatprep.mubr.bf16.mxu0 0
      %5843 = vmatmul.mubr.bf16.gmra.mrb[0].mxu0 %v5339
      %v5844 = vpop.f32.mrb[0].mxu0
      %v5845 = vadd.f32 0.0, %v5844
      %v5846 = vpop.f32.mrb[0].mxu0
      %v5847 = vpop.f32.mrb[0].mxu0
      %v5848 = vadd.f32 0.0, %v5847
      %v5849 = vpop.f32.mrb[0].mxu0
      %5850 = vmatprep.mubr.bf16.mxu0 0
      %5851 = vmatmul.mubr.bf16.gmra.mrb[0].mxu0 %v5342
      %v5852 = vpop.f32.mrb[0].mxu0
      %v5853 = vadd.f32 0.0, %v5852
      %v5854 = vpop.f32.mrb[0].mxu0
      %v5855 = vpop.f32.mrb[0].mxu0
      %v5856 = vadd.f32 0.0, %v5855
      %v5857 = vpop.f32.mrb[0].mxu0
      %5858 = vmatprep.mubr.bf16.mxu0 0
      %5859 = vmatmul.mubr.bf16.gmra.mrb[0].mxu0 %v5345
      %v5860 = vpop.f32.mrb[0].mxu0
      %v5861 = vadd.f32 0.0, %v5860
      %v5862 = vpop.f32.mrb[0].mxu0
      %v5863 = vpop.f32.mrb[0].mxu0
      %v5864 = vadd.f32 0.0, %v5863
      %v5865 = vpop.f32.mrb[0].mxu0
      %5866 = vmatprep.mubr.bf16.mxu0 0
      %5867 = vmatmul.mubr.bf16.gmra.mrb[0].mxu0 %v5348
      %v5868 = vpop.f32.mrb[0].mxu0
      %v5869 = vadd.f32 0.0, %v5868
      %v5870 = vpop.f32.mrb[0].mxu0
      %v5871 = vpop.f32.mrb[0].mxu0
      %v5872 = vadd.f32 0.0, %v5871
      %v5873 = vpop.f32.mrb[0].mxu0
      %5874 = vmatprep.mubr.bf16.mxu0 0
      %5875 = vmatmul.mubr.bf16.gmra.mrb[0].mxu0 %v5351
      %v5876 = vpop.f32.mrb[0].mxu0
      %v5877 = vadd.f32 0.0, %v5876
      %v5878 = vpop.f32.mrb[0].mxu0
      %v5879 = vpop.f32.mrb[0].mxu0
      %v5880 = vadd.f32 0.0, %v5879
      %v5881 = vpop.f32.mrb[0].mxu0
      %5882 = vmatprep.mubr.bf16.mxu0 0
      %5883 = vmatmul.mubr.bf16.gmra.mrb[0].mxu0 %v5354
      %v5884 = vpop.f32.mrb[0].mxu0
      %v5885 = vadd.f32 0.0, %v5884
      %v5886 = vpop.f32.mrb[0].mxu0
      %v5887 = vpop.f32.mrb[0].mxu0
      %v5888 = vadd.f32 0.0, %v5887
      %v5889 = vpop.f32.mrb[0].mxu0
      %5890 = vmatprep.mubr.bf16.mxu0 0
      %5891 = vmatmul.mubr.bf16.gmra.mrb[0].mxu0 %v5357
      %v5892 = vpop.f32.mrb[0].mxu0
      %v5893 = vadd.f32 0.0, %v5892
      %v5894 = vpop.f32.mrb[0].mxu0
      %v5895 = vpop.f32.mrb[0].mxu0
      %v5896 = vadd.f32 0.0, %v5895
      %v5897 = vpop.f32.mrb[0].mxu0
      %5898 = vmatprep.mubr.bf16.mxu0 0
      %5899 = vmatmul.mubr.bf16.gmra.mrb[0].mxu0 %v5360
      %v5900 = vpop.f32.mrb[0].mxu0
      %v5901 = vadd.f32 0.0, %v5900
      %v5902 = vpop.f32.mrb[0].mxu0
      %v5903 = vpop.f32.mrb[0].mxu0
      %v5904 = vadd.f32 0.0, %v5903
      %v5905 = vpop.f32.mrb[0].mxu0
      %5906 = vdwg.mxu0
      %v5907 = vpack.c.bf16 %v5400, %v5397
      %v5908 = vpack.c.bf16 %v5408, %v5405
      %v5909 = vpack.c.bf16 %v5416, %v5413
      %v5910 = vpack.c.bf16 %v5424, %v5421
      %v5911 = vpack.c.bf16 %v5432, %v5429
      %v5912 = vpack.c.bf16 %v5440, %v5437
      %v5913 = vpack.c.bf16 %v5448, %v5445
      %v5914 = vpack.c.bf16 %v5456, %v5453
      %v5915 = vpack.c.bf16 %v5464, %v5461
      %v5916 = vpack.c.bf16 %v5472, %v5469
      %v5917 = vpack.c.bf16 %v5480, %v5477
      %v5918 = vpack.c.bf16 %v5488, %v5485
      %v5919 = vpack.c.bf16 %v5496, %v5493
      %v5920 = vpack.c.bf16 %v5504, %v5501
      %v5921 = vpack.c.bf16 %v5512, %v5509
      %v5922 = vpack.c.bf16 %v5520, %v5517
      %v5923 = vpack.c.bf16 %v5528, %v5525
      %v5924 = vpack.c.bf16 %v5536, %v5533
      %v5925 = vpack.c.bf16 %v5544, %v5541
      %v5926 = vpack.c.bf16 %v5552, %v5549
      %v5927 = vpack.c.bf16 %v5560, %v5557
      %v5928 = vpack.c.bf16 %v5568, %v5565
      %v5929 = vpack.c.bf16 %v5576, %v5573
      %v5930 = vpack.c.bf16 %v5584, %v5581
      %v5931 = vpack.c.bf16 %v5592, %v5589
      %v5932 = vpack.c.bf16 %v5600, %v5597
      %v5933 = vpack.c.bf16 %v5608, %v5605
      %v5934 = vpack.c.bf16 %v5616, %v5613
      %v5935 = vpack.c.bf16 %v5624, %v5621
      %v5936 = vpack.c.bf16 %v5632, %v5629
      %v5937 = vpack.c.bf16 %v5640, %v5637
      %v5938 = vpack.c.bf16 %v5648, %v5645
      %v5939 = vpack.c.bf16 %v5656, %v5653
      %v5940 = vpack.c.bf16 %v5664, %v5661
      %v5941 = vpack.c.bf16 %v5672, %v5669
      %v5942 = vpack.c.bf16 %v5680, %v5677
      %v5943 = vpack.c.bf16 %v5688, %v5685
      %v5944 = vpack.c.bf16 %v5696, %v5693
      %v5945 = vpack.c.bf16 %v5704, %v5701
      %v5946 = vpack.c.bf16 %v5712, %v5709
      %v5947 = vpack.c.bf16 %v5720, %v5717
      %v5948 = vpack.c.bf16 %v5728, %v5725
      %v5949 = vpack.c.bf16 %v5736, %v5733
      %v5950 = vpack.c.bf16 %v5744, %v5741
      %v5951 = vpack.c.bf16 %v5752, %v5749
      %v5952 = vpack.c.bf16 %v5760, %v5757
      %v5953 = vpack.c.bf16 %v5768, %v5765
      %v5954 = vpack.c.bf16 %v5776, %v5773
      %v5955 = vpack.c.bf16 %v5784, %v5781
      %v5956 = vpack.c.bf16 %v5792, %v5789
      %v5957 = vpack.c.bf16 %v5800, %v5797
      %v5958 = vpack.c.bf16 %v5808, %v5805
      %v5959 = vpack.c.bf16 %v5816, %v5813
      %v5960 = vpack.c.bf16 %v5824, %v5821
      %v5961 = vpack.c.bf16 %v5832, %v5829
      %v5962 = vpack.c.bf16 %v5840, %v5837
      %v5963 = vpack.c.bf16 %v5848, %v5845
      %v5964 = vpack.c.bf16 %v5856, %v5853
      %v5965 = vpack.c.bf16 %v5864, %v5861
      %v5966 = vpack.c.bf16 %v5872, %v5869
      %v5967 = vpack.c.bf16 %v5880, %v5877
      %v5968 = vpack.c.bf16 %v5888, %v5885
      %v5969 = vpack.c.bf16 %v5896, %v5893
      %v5970 = vpack.c.bf16 %v5904, %v5901
      %v6035 = vunpack.c.l.b16 %v5907
      %v6036 = vunpack.c.h.b16 %v5907
      %v6037 = vunpack.c.l.b16 %v5908
      %v6038 = vunpack.c.h.b16 %v5908
      %v6039 = vunpack.c.l.b16 %v5909
      %v6040 = vunpack.c.h.b16 %v5909
      %v6041 = vunpack.c.l.b16 %v5910
      %v6042 = vunpack.c.h.b16 %v5910
      %v6043 = vunpack.c.l.b16 %v5911
      %v6044 = vunpack.c.h.b16 %v5911
      %v6045 = vunpack.c.l.b16 %v5912
      %v6046 = vunpack.c.h.b16 %v5912
      %v6047 = vunpack.c.l.b16 %v5913
      %v6048 = vunpack.c.h.b16 %v5913
      %v6049 = vunpack.c.l.b16 %v5914
      %v6050 = vunpack.c.h.b16 %v5914
      %v6051 = vunpack.c.l.b16 %v5915
      %v6052 = vunpack.c.h.b16 %v5915
      %v6053 = vunpack.c.l.b16 %v5916
      %v6054 = vunpack.c.h.b16 %v5916
      %v6055 = vunpack.c.l.b16 %v5917
      %v6056 = vunpack.c.h.b16 %v5917
      %v6057 = vunpack.c.l.b16 %v5918
      %v6058 = vunpack.c.h.b16 %v5918
      %v6059 = vunpack.c.l.b16 %v5919
      %v6060 = vunpack.c.h.b16 %v5919
      %v6061 = vunpack.c.l.b16 %v5920
      %v6062 = vunpack.c.h.b16 %v5920
      %v6063 = vunpack.c.l.b16 %v5921
      %v6064 = vunpack.c.h.b16 %v5921
      %v6065 = vunpack.c.l.b16 %v5922
      %v6066 = vunpack.c.h.b16 %v5922
      %v6067 = vunpack.c.l.b16 %v5923
      %v6068 = vunpack.c.h.b16 %v5923
      %v6069 = vunpack.c.l.b16 %v5924
      %v6070 = vunpack.c.h.b16 %v5924
      %v6071 = vunpack.c.l.b16 %v5925
      %v6072 = vunpack.c.h.b16 %v5925
      %v6073 = vunpack.c.l.b16 %v5926
      %v6074 = vunpack.c.h.b16 %v5926
      %v6075 = vunpack.c.l.b16 %v5927
      %v6076 = vunpack.c.h.b16 %v5927
      %v6077 = vunpack.c.l.b16 %v5928
      %v6078 = vunpack.c.h.b16 %v5928
      %v6079 = vunpack.c.l.b16 %v5929
      %v6080 = vunpack.c.h.b16 %v5929
      %v6081 = vunpack.c.l.b16 %v5930
      %v6082 = vunpack.c.h.b16 %v5930
      %v6083 = vunpack.c.l.b16 %v5931
      %v6084 = vunpack.c.h.b16 %v5931
      %v6085 = vunpack.c.l.b16 %v5932
      %v6086 = vunpack.c.h.b16 %v5932
      %v6087 = vunpack.c.l.b16 %v5933
      %v6088 = vunpack.c.h.b16 %v5933
      %v6089 = vunpack.c.l.b16 %v5934
      %v6090 = vunpack.c.h.b16 %v5934
      %v6091 = vunpack.c.l.b16 %v5935
      %v6092 = vunpack.c.h.b16 %v5935
      %v6093 = vunpack.c.l.b16 %v5936
      %v6094 = vunpack.c.h.b16 %v5936
      %v6095 = vunpack.c.l.b16 %v5937
      %v6096 = vunpack.c.h.b16 %v5937
      %v6097 = vunpack.c.l.b16 %v5938
      %v6098 = vunpack.c.h.b16 %v5938
      %v6099 = vunpack.c.l.b16 %v5939
      %v6100 = vunpack.c.h.b16 %v5939
      %v6101 = vunpack.c.l.b16 %v5940
      %v6102 = vunpack.c.h.b16 %v5940
      %v6103 = vunpack.c.l.b16 %v5941
      %v6104 = vunpack.c.h.b16 %v5941
      %v6105 = vunpack.c.l.b16 %v5942
      %v6106 = vunpack.c.h.b16 %v5942
      %v6107 = vunpack.c.l.b16 %v5943
      %v6108 = vunpack.c.h.b16 %v5943
      %v6109 = vunpack.c.l.b16 %v5944
      %v6110 = vunpack.c.h.b16 %v5944
      %v6111 = vunpack.c.l.b16 %v5945
      %v6112 = vunpack.c.h.b16 %v5945
      %v6113 = vunpack.c.l.b16 %v5946
      %v6114 = vunpack.c.h.b16 %v5946
      %v6115 = vunpack.c.l.b16 %v5947
      %v6116 = vunpack.c.h.b16 %v5947
      %v6117 = vunpack.c.l.b16 %v5948
      %v6118 = vunpack.c.h.b16 %v5948
      %v6119 = vunpack.c.l.b16 %v5949
      %v6120 = vunpack.c.h.b16 %v5949
      %v6121 = vunpack.c.l.b16 %v5950
      %v6122 = vunpack.c.h.b16 %v5950
      %v6123 = vunpack.c.l.b16 %v5951
      %v6124 = vunpack.c.h.b16 %v5951
      %v6125 = vunpack.c.l.b16 %v5952
      %v6126 = vunpack.c.h.b16 %v5952
      %v6127 = vunpack.c.l.b16 %v5953
      %v6128 = vunpack.c.h.b16 %v5953
      %v6129 = vunpack.c.l.b16 %v5954
      %v6130 = vunpack.c.h.b16 %v5954
      %v6131 = vunpack.c.l.b16 %v5955
      %v6132 = vunpack.c.h.b16 %v5955
      %v6133 = vunpack.c.l.b16 %v5956
      %v6134 = vunpack.c.h.b16 %v5956
      %v6135 = vunpack.c.l.b16 %v5957
      %v6136 = vunpack.c.h.b16 %v5957
      %v6137 = vunpack.c.l.b16 %v5958
      %v6138 = vunpack.c.h.b16 %v5958
      %v6139 = vunpack.c.l.b16 %v5959
      %v6140 = vunpack.c.h.b16 %v5959
      %v6141 = vunpack.c.l.b16 %v5960
      %v6142 = vunpack.c.h.b16 %v5960
      %v6143 = vunpack.c.l.b16 %v5961
      %v6144 = vunpack.c.h.b16 %v5961
      %v6145 = vunpack.c.l.b16 %v5962
      %v6146 = vunpack.c.h.b16 %v5962
      %v6147 = vunpack.c.l.b16 %v5963
      %v6148 = vunpack.c.h.b16 %v5963
      %v6149 = vunpack.c.l.b16 %v5964
      %v6150 = vunpack.c.h.b16 %v5964
      %v6151 = vunpack.c.l.b16 %v5965
      %v6152 = vunpack.c.h.b16 %v5965
      %v6153 = vunpack.c.l.b16 %v5966
      %v6154 = vunpack.c.h.b16 %v5966
      %v6155 = vunpack.c.l.b16 %v5967
      %v6156 = vunpack.c.h.b16 %v5967
      %v6157 = vunpack.c.l.b16 %v5968
      %v6158 = vunpack.c.h.b16 %v5968
      %v6159 = vunpack.c.l.b16 %v5969
      %v6160 = vunpack.c.h.b16 %v5969
      %v6161 = vunpack.c.l.b16 %v5970
      %v6162 = vunpack.c.h.b16 %v5970
      %v6163 = vpack.c.b16 %v6035, %v6035
      %v6164 = vpack.c.b16 %v6036, %v6036
      %v6165 = vpack.c.b16 %v6037, %v6037
      %v6166 = vpack.c.b16 %v6038, %v6038
      %v6167 = vpack.c.b16 %v6039, %v6039
      %v6168 = vpack.c.b16 %v6040, %v6040
      %v6169 = vpack.c.b16 %v6041, %v6041
      %v6170 = vpack.c.b16 %v6042, %v6042
      %v6171 = vpack.c.b16 %v6043, %v6043
      %v6172 = vpack.c.b16 %v6044, %v6044
      %v6173 = vpack.c.b16 %v6045, %v6045
      %v6174 = vpack.c.b16 %v6046, %v6046
      %v6175 = vpack.c.b16 %v6047, %v6047
      %v6176 = vpack.c.b16 %v6048, %v6048
      %v6177 = vpack.c.b16 %v6049, %v6049
      %v6178 = vpack.c.b16 %v6050, %v6050
      %v6179 = vpack.c.b16 %v6051, %v6051
      %v6180 = vpack.c.b16 %v6052, %v6052
      %v6181 = vpack.c.b16 %v6053, %v6053
      %v6182 = vpack.c.b16 %v6054, %v6054
      %v6183 = vpack.c.b16 %v6055, %v6055
      %v6184 = vpack.c.b16 %v6056, %v6056
      %v6185 = vpack.c.b16 %v6057, %v6057
      %v6186 = vpack.c.b16 %v6058, %v6058
      %v6187 = vpack.c.b16 %v6059, %v6059
      %v6188 = vpack.c.b16 %v6060, %v6060
      %v6189 = vpack.c.b16 %v6061, %v6061
      %v6190 = vpack.c.b16 %v6062, %v6062
      %v6191 = vpack.c.b16 %v6063, %v6063
      %v6192 = vpack.c.b16 %v6064, %v6064
      %v6193 = vpack.c.b16 %v6065, %v6065
      %v6194 = vpack.c.b16 %v6066, %v6066
      %v6195 = vpack.c.b16 %v6067, %v6067
      %v6196 = vpack.c.b16 %v6068, %v6068
      %v6197 = vpack.c.b16 %v6069, %v6069
      %v6198 = vpack.c.b16 %v6070, %v6070
      %v6199 = vpack.c.b16 %v6071, %v6071
      %v6200 = vpack.c.b16 %v6072, %v6072
      %v6201 = vpack.c.b16 %v6073, %v6073
      %v6202 = vpack.c.b16 %v6074, %v6074
      %v6203 = vpack.c.b16 %v6075, %v6075
      %v6204 = vpack.c.b16 %v6076, %v6076
      %v6205 = vpack.c.b16 %v6077, %v6077
      %v6206 = vpack.c.b16 %v6078, %v6078
      %v6207 = vpack.c.b16 %v6079, %v6079
      %v6208 = vpack.c.b16 %v6080, %v6080
      %v6209 = vpack.c.b16 %v6081, %v6081
      %v6210 = vpack.c.b16 %v6082, %v6082
      %v6211 = vpack.c.b16 %v6083, %v6083
      %v6212 = vpack.c.b16 %v6084, %v6084
      %v6213 = vpack.c.b16 %v6085, %v6085
      %v6214 = vpack.c.b16 %v6086, %v6086
      %v6215 = vpack.c.b16 %v6087, %v6087
      %v6216 = vpack.c.b16 %v6088, %v6088
      %v6217 = vpack.c.b16 %v6089, %v6089
      %v6218 = vpack.c.b16 %v6090, %v6090
      %v6219 = vpack.c.b16 %v6091, %v6091
      %v6220 = vpack.c.b16 %v6092, %v6092
      %v6221 = vpack.c.b16 %v6093, %v6093
      %v6222 = vpack.c.b16 %v6094, %v6094
      %v6223 = vpack.c.b16 %v6095, %v6095
      %v6224 = vpack.c.b16 %v6096, %v6096
      %v6225 = vpack.c.b16 %v6097, %v6097
      %v6226 = vpack.c.b16 %v6098, %v6098
      %v6227 = vpack.c.b16 %v6099, %v6099
      %v6228 = vpack.c.b16 %v6100, %v6100
      %v6229 = vpack.c.b16 %v6101, %v6101
      %v6230 = vpack.c.b16 %v6102, %v6102
      %v6231 = vpack.c.b16 %v6103, %v6103
      %v6232 = vpack.c.b16 %v6104, %v6104
      %v6233 = vpack.c.b16 %v6105, %v6105
      %v6234 = vpack.c.b16 %v6106, %v6106
      %v6235 = vpack.c.b16 %v6107, %v6107
      %v6236 = vpack.c.b16 %v6108, %v6108
      %v6237 = vpack.c.b16 %v6109, %v6109
      %v6238 = vpack.c.b16 %v6110, %v6110
      %v6239 = vpack.c.b16 %v6111, %v6111
      %v6240 = vpack.c.b16 %v6112, %v6112
      %v6241 = vpack.c.b16 %v6113, %v6113
      %v6242 = vpack.c.b16 %v6114, %v6114
      %v6243 = vpack.c.b16 %v6115, %v6115
      %v6244 = vpack.c.b16 %v6116, %v6116
      %v6245 = vpack.c.b16 %v6117, %v6117
      %v6246 = vpack.c.b16 %v6118, %v6118
      %v6247 = vpack.c.b16 %v6119, %v6119
      %v6248 = vpack.c.b16 %v6120, %v6120
      %v6249 = vpack.c.b16 %v6121, %v6121
      %v6250 = vpack.c.b16 %v6122, %v6122
      %v6251 = vpack.c.b16 %v6123, %v6123
      %v6252 = vpack.c.b16 %v6124, %v6124
      %v6253 = vpack.c.b16 %v6125, %v6125
      %v6254 = vpack.c.b16 %v6126, %v6126
      %v6255 = vpack.c.b16 %v6127, %v6127
      %v6256 = vpack.c.b16 %v6128, %v6128
      %v6257 = vpack.c.b16 %v6129, %v6129
      %v6258 = vpack.c.b16 %v6130, %v6130
      %v6259 = vpack.c.b16 %v6131, %v6131
      %v6260 = vpack.c.b16 %v6132, %v6132
      %v6261 = vpack.c.b16 %v6133, %v6133
      %v6262 = vpack.c.b16 %v6134, %v6134
      %v6263 = vpack.c.b16 %v6135, %v6135
      %v6264 = vpack.c.b16 %v6136, %v6136
      %v6265 = vpack.c.b16 %v6137, %v6137
      %v6266 = vpack.c.b16 %v6138, %v6138
      %v6267 = vpack.c.b16 %v6139, %v6139
      %v6268 = vpack.c.b16 %v6140, %v6140
      %v6269 = vpack.c.b16 %v6141, %v6141
      %v6270 = vpack.c.b16 %v6142, %v6142
      %v6271 = vpack.c.b16 %v6143, %v6143
      %v6272 = vpack.c.b16 %v6144, %v6144
      %v6273 = vpack.c.b16 %v6145, %v6145
      %v6274 = vpack.c.b16 %v6146, %v6146
      %v6275 = vpack.c.b16 %v6147, %v6147
      %v6276 = vpack.c.b16 %v6148, %v6148
      %v6277 = vpack.c.b16 %v6149, %v6149
      %v6278 = vpack.c.b16 %v6150, %v6150
      %v6279 = vpack.c.b16 %v6151, %v6151
      %v6280 = vpack.c.b16 %v6152, %v6152
      %v6281 = vpack.c.b16 %v6153, %v6153
      %v6282 = vpack.c.b16 %v6154, %v6154
      %v6283 = vpack.c.b16 %v6155, %v6155
      %v6284 = vpack.c.b16 %v6156, %v6156
      %v6285 = vpack.c.b16 %v6157, %v6157
      %v6286 = vpack.c.b16 %v6158, %v6158
      %v6287 = vpack.c.b16 %v6159, %v6159
      %v6288 = vpack.c.b16 %v6160, %v6160
      %v6289 = vpack.c.b16 %v6161, %v6161
      %v6290 = vpack.c.b16 %v6162, %v6162
      %s6419 = scalar_lea.vmem %s218, 1024
      %6420 = vst [vmem:[%s6419] sm:$0xf] %v6163
      %6421 = vst [vmem:[%s6419 + $0x4] sm:$0xf] %v6164
      %6422 = vst [vmem:[%s6419 + $0x8] sm:$0xf] %v6165
      %6423 = vst [vmem:[%s6419 + $0xc] sm:$0xf] %v6166
      %6424 = vst [vmem:[%s6419 + $0x10] sm:$0xf] %v6167
      %6425 = vst [vmem:[%s6419 + $0x14] sm:$0xf] %v6168
      %6426 = vst [vmem:[%s6419 + $0x18] sm:$0xf] %v6169
      %6427 = vst [vmem:[%s6419 + $0x1c] sm:$0xf] %v6170
      %6428 = vst [vmem:[%s6419 + $0x20] sm:$0xf] %v6171
      %6429 = vst [vmem:[%s6419 + $0x24] sm:$0xf] %v6172
      %6430 = vst [vmem:[%s6419 + $0x28] sm:$0xf] %v6173
      %6431 = vst [vmem:[%s6419 + $0x2c] sm:$0xf] %v6174
      %6432 = vst [vmem:[%s6419 + $0x30] sm:$0xf] %v6175
      %6433 = vst [vmem:[%s6419 + $0x34] sm:$0xf] %v6176
      %6434 = vst [vmem:[%s6419 + $0x38] sm:$0xf] %v6177
      %6435 = vst [vmem:[%s6419 + $0x3c] sm:$0xf] %v6178
      %6436 = vst [vmem:[%s6419 + $0x40] sm:$0xf] %v6179
      %6437 = vst [vmem:[%s6419 + $0x44] sm:$0xf] %v6180
      %6438 = vst [vmem:[%s6419 + $0x48] sm:$0xf] %v6181
      %6439 = vst [vmem:[%s6419 + $0x4c] sm:$0xf] %v6182
      %6440 = vst [vmem:[%s6419 + $0x50] sm:$0xf] %v6183
      %6441 = vst [vmem:[%s6419 + $0x54] sm:$0xf] %v6184
      %6442 = vst [vmem:[%s6419 + $0x58] sm:$0xf] %v6185
      %6443 = vst [vmem:[%s6419 + $0x5c] sm:$0xf] %v6186
      %6444 = vst [vmem:[%s6419 + $0x60] sm:$0xf] %v6187
      %6445 = vst [vmem:[%s6419 + $0x64] sm:$0xf] %v6188
      %6446 = vst [vmem:[%s6419 + $0x68] sm:$0xf] %v6189
      %6447 = vst [vmem:[%s6419 + $0x6c] sm:$0xf] %v6190
      %6448 = vst [vmem:[%s6419 + $0x70] sm:$0xf] %v6191
      %6449 = vst [vmem:[%s6419 + $0x74] sm:$0xf] %v6192
      %6450 = vst [vmem:[%s6419 + $0x78] sm:$0xf] %v6193
      %6451 = vst [vmem:[%s6419 + $0x7c] sm:$0xf] %v6194
      %6452 = vst [vmem:[%s6419 + $0x80] sm:$0xf] %v6195
      %6453 = vst [vmem:[%s6419 + $0x84] sm:$0xf] %v6196
      %6454 = vst [vmem:[%s6419 + $0x88] sm:$0xf] %v6197
      %6455 = vst [vmem:[%s6419 + $0x8c] sm:$0xf] %v6198
      %6456 = vst [vmem:[%s6419 + $0x90] sm:$0xf] %v6199
      %6457 = vst [vmem:[%s6419 + $0x94] sm:$0xf] %v6200
      %6458 = vst [vmem:[%s6419 + $0x98] sm:$0xf] %v6201
      %6459 = vst [vmem:[%s6419 + $0x9c] sm:$0xf] %v6202
      %6460 = vst [vmem:[%s6419 + $0xa0] sm:$0xf] %v6203
      %6461 = vst [vmem:[%s6419 + $0xa4] sm:$0xf] %v6204
      %6462 = vst [vmem:[%s6419 + $0xa8] sm:$0xf] %v6205
      %6463 = vst [vmem:[%s6419 + $0xac] sm:$0xf] %v6206
      %6464 = vst [vmem:[%s6419 + $0xb0] sm:$0xf] %v6207
      %6465 = vst [vmem:[%s6419 + $0xb4] sm:$0xf] %v6208
      %6466 = vst [vmem:[%s6419 + $0xb8] sm:$0xf] %v6209
      %6467 = vst [vmem:[%s6419 + $0xbc] sm:$0xf] %v6210
      %6468 = vst [vmem:[%s6419 + $0xc0] sm:$0xf] %v6211
      %6469 = vst [vmem:[%s6419 + $0xc4] sm:$0xf] %v6212
      %6470 = vst [vmem:[%s6419 + $0xc8] sm:$0xf] %v6213
      %6471 = vst [vmem:[%s6419 + $0xcc] sm:$0xf] %v6214
      %6472 = vst [vmem:[%s6419 + $0xd0] sm:$0xf] %v6215
      %6473 = vst [vmem:[%s6419 + $0xd4] sm:$0xf] %v6216
      %6474 = vst [vmem:[%s6419 + $0xd8] sm:$0xf] %v6217
      %6475 = vst [vmem:[%s6419 + $0xdc] sm:$0xf] %v6218
      %6476 = vst [vmem:[%s6419 + $0xe0] sm:$0xf] %v6219
      %6477 = vst [vmem:[%s6419 + $0xe4] sm:$0xf] %v6220
      %6478 = vst [vmem:[%s6419 + $0xe8] sm:$0xf] %v6221
      %6479 = vst [vmem:[%s6419 + $0xec] sm:$0xf] %v6222
      %6480 = vst [vmem:[%s6419 + $0xf0] sm:$0xf] %v6223
      %6481 = vst [vmem:[%s6419 + $0xf4] sm:$0xf] %v6224
      %6482 = vst [vmem:[%s6419 + $0xf8] sm:$0xf] %v6225
      %6483 = vst [vmem:[%s6419 + $0xfc] sm:$0xf] %v6226
      %6484 = vst [vmem:[%s6419 + $0x100] sm:$0xf] %v6227
      %6485 = vst [vmem:[%s6419 + $0x104] sm:$0xf] %v6228
      %6486 = vst [vmem:[%s6419 + $0x108] sm:$0xf] %v6229
      %6487 = vst [vmem:[%s6419 + $0x10c] sm:$0xf] %v6230
      %6488 = vst [vmem:[%s6419 + $0x110] sm:$0xf] %v6231
      %6489 = vst [vmem:[%s6419 + $0x114] sm:$0xf] %v6232
      %6490 = vst [vmem:[%s6419 + $0x118] sm:$0xf] %v6233
      %6491 = vst [vmem:[%s6419 + $0x11c] sm:$0xf] %v6234
      %6492 = vst [vmem:[%s6419 + $0x120] sm:$0xf] %v6235
      %6493 = vst [vmem:[%s6419 + $0x124] sm:$0xf] %v6236
      %6494 = vst [vmem:[%s6419 + $0x128] sm:$0xf] %v6237
      %6495 = vst [vmem:[%s6419 + $0x12c] sm:$0xf] %v6238
      %6496 = vst [vmem:[%s6419 + $0x130] sm:$0xf] %v6239
      %6497 = vst [vmem:[%s6419 + $0x134] sm:$0xf] %v6240
      %6498 = vst [vmem:[%s6419 + $0x138] sm:$0xf] %v6241
      %6499 = vst [vmem:[%s6419 + $0x13c] sm:$0xf] %v6242
      %6500 = vst [vmem:[%s6419 + $0x140] sm:$0xf] %v6243
      %6501 = vst [vmem:[%s6419 + $0x144] sm:$0xf] %v6244
      %6502 = vst [vmem:[%s6419 + $0x148] sm:$0xf] %v6245
      %6503 = vst [vmem:[%s6419 + $0x14c] sm:$0xf] %v6246
      %6504 = vst [vmem:[%s6419 + $0x150] sm:$0xf] %v6247
      %6505 = vst [vmem:[%s6419 + $0x154] sm:$0xf] %v6248
      %6506 = vst [vmem:[%s6419 + $0x158] sm:$0xf] %v6249
      %6507 = vst [vmem:[%s6419 + $0x15c] sm:$0xf] %v6250
      %6508 = vst [vmem:[%s6419 + $0x160] sm:$0xf] %v6251
      %6509 = vst [vmem:[%s6419 + $0x164] sm:$0xf] %v6252
      %6510 = vst [vmem:[%s6419 + $0x168] sm:$0xf] %v6253
      %6511 = vst [vmem:[%s6419 + $0x16c] sm:$0xf] %v6254
      %6512 = vst [vmem:[%s6419 + $0x170] sm:$0xf] %v6255
      %6513 = vst [vmem:[%s6419 + $0x174] sm:$0xf] %v6256
      %6514 = vst [vmem:[%s6419 + $0x178] sm:$0xf] %v6257
      %6515 = vst [vmem:[%s6419 + $0x17c] sm:$0xf] %v6258
      %6516 = vst [vmem:[%s6419 + $0x180] sm:$0xf] %v6259
      %6517 = vst [vmem:[%s6419 + $0x184] sm:$0xf] %v6260
      %6518 = vst [vmem:[%s6419 + $0x188] sm:$0xf] %v6261
      %6519 = vst [vmem:[%s6419 + $0x18c] sm:$0xf] %v6262
      %6520 = vst [vmem:[%s6419 + $0x190] sm:$0xf] %v6263
      %6521 = vst [vmem:[%s6419 + $0x194] sm:$0xf] %v6264
      %6522 = vst [vmem:[%s6419 + $0x198] sm:$0xf] %v6265
      %6523 = vst [vmem:[%s6419 + $0x19c] sm:$0xf] %v6266
      %6524 = vst [vmem:[%s6419 + $0x1a0] sm:$0xf] %v6267
      %6525 = vst [vmem:[%s6419 + $0x1a4] sm:$0xf] %v6268
      %6526 = vst [vmem:[%s6419 + $0x1a8] sm:$0xf] %v6269
      %6527 = vst [vmem:[%s6419 + $0x1ac] sm:$0xf] %v6270
      %6528 = vst [vmem:[%s6419 + $0x1b0] sm:$0xf] %v6271
      %6529 = vst [vmem:[%s6419 + $0x1b4] sm:$0xf] %v6272
      %6530 = vst [vmem:[%s6419 + $0x1b8] sm:$0xf] %v6273
      %6531 = vst [vmem:[%s6419 + $0x1bc] sm:$0xf] %v6274
      %6532 = vst [vmem:[%s6419 + $0x1c0] sm:$0xf] %v6275
      %6533 = vst [vmem:[%s6419 + $0x1c4] sm:$0xf] %v6276
      %6534 = vst [vmem:[%s6419 + $0x1c8] sm:$0xf] %v6277
      %6535 = vst [vmem:[%s6419 + $0x1cc] sm:$0xf] %v6278
      %6536 = vst [vmem:[%s6419 + $0x1d0] sm:$0xf] %v6279
      %6537 = vst [vmem:[%s6419 + $0x1d4] sm:$0xf] %v6280
      %6538 = vst [vmem:[%s6419 + $0x1d8] sm:$0xf] %v6281
      %6539 = vst [vmem:[%s6419 + $0x1dc] sm:$0xf] %v6282
      %6540 = vst [vmem:[%s6419 + $0x1e0] sm:$0xf] %v6283
      %6541 = vst [vmem:[%s6419 + $0x1e4] sm:$0xf] %v6284
      %6542 = vst [vmem:[%s6419 + $0x1e8] sm:$0xf] %v6285
      %6543 = vst [vmem:[%s6419 + $0x1ec] sm:$0xf] %v6286
      %6544 = vst [vmem:[%s6419 + $0x1f0] sm:$0xf] %v6287
      %6545 = vst [vmem:[%s6419 + $0x1f4] sm:$0xf] %v6288
      %6546 = vst [vmem:[%s6419 + $0x1f8] sm:$0xf] %v6289
      %6547 = vst [vmem:[%s6419 + $0x1fc] sm:$0xf] %v6290
      %v6548 = vadd.f32 %v5397, %v5400
      %v6549 = vadd.f32 %v6548, %v5405
      %v6550 = vadd.f32 %v6549, %v5408
      %v6551 = vadd.f32 %v6550, %v5413
      %v6552 = vadd.f32 %v6551, %v5416
      %v6553 = vadd.f32 %v6552, %v5421
      %v6554 = vadd.f32 %v6553, %v5424
      %v6555 = vadd.f32 %v6554, %v5429
      %v6556 = vadd.f32 %v6555, %v5432
      %v6557 = vadd.f32 %v6556, %v5437
      %v6558 = vadd.f32 %v6557, %v5440
      %v6559 = vadd.f32 %v6558, %v5445
      %v6560 = vadd.f32 %v6559, %v5448
      %v6561 = vadd.f32 %v6560, %v5453
      %v6562 = vadd.f32 %v6561, %v5456
      %v6563 = vadd.f32 %v6562, %v5461
      %v6564 = vadd.f32 %v6563, %v5464
      %v6565 = vadd.f32 %v6564, %v5469
      %v6566 = vadd.f32 %v6565, %v5472
      %v6567 = vadd.f32 %v6566, %v5477
      %v6568 = vadd.f32 %v6567, %v5480
      %v6569 = vadd.f32 %v6568, %v5485
      %v6570 = vadd.f32 %v6569, %v5488
      %v6571 = vadd.f32 %v6570, %v5493
      %v6572 = vadd.f32 %v6571, %v5496
      %v6573 = vadd.f32 %v6572, %v5501
      %v6574 = vadd.f32 %v6573, %v5504
      %v6575 = vadd.f32 %v6574, %v5509
      %v6576 = vadd.f32 %v6575, %v5512
      %v6577 = vadd.f32 %v6576, %v5517
      %v6578 = vadd.f32 %v6577, %v5520
      %v6579 = vadd.f32 %v6578, %v5525
      %v6580 = vadd.f32 %v6579, %v5528
      %v6581 = vadd.f32 %v6580, %v5533
      %v6582 = vadd.f32 %v6581, %v5536
      %v6583 = vadd.f32 %v6582, %v5541
      %v6584 = vadd.f32 %v6583, %v5544
      %v6585 = vadd.f32 %v6584, %v5549
      %v6586 = vadd.f32 %v6585, %v5552
      %v6587 = vadd.f32 %v6586, %v5557
      %v6588 = vadd.f32 %v6587, %v5560
      %v6589 = vadd.f32 %v6588, %v5565
      %v6590 = vadd.f32 %v6589, %v5568
      %v6591 = vadd.f32 %v6590, %v5573
      %v6592 = vadd.f32 %v6591, %v5576
      %v6593 = vadd.f32 %v6592, %v5581
      %v6594 = vadd.f32 %v6593, %v5584
      %v6595 = vadd.f32 %v6594, %v5589
      %v6596 = vadd.f32 %v6595, %v5592
      %v6597 = vadd.f32 %v6596, %v5597
      %v6598 = vadd.f32 %v6597, %v5600
      %v6599 = vadd.f32 %v6598, %v5605
      %v6600 = vadd.f32 %v6599, %v5608
      %v6601 = vadd.f32 %v6600, %v5613
      %v6602 = vadd.f32 %v6601, %v5616
      %v6603 = vadd.f32 %v6602, %v5621
      %v6604 = vadd.f32 %v6603, %v5624
      %v6605 = vadd.f32 %v6604, %v5629
      %v6606 = vadd.f32 %v6605, %v5632
      %v6607 = vadd.f32 %v6606, %v5637
      %v6608 = vadd.f32 %v6607, %v5640
      %v6609 = vadd.f32 %v6608, %v5645
      %v6610 = vadd.f32 %v6609, %v5648
      %v6611 = vadd.f32 %v6610, %v5653
      %v6612 = vadd.f32 %v6611, %v5656
      %v6613 = vadd.f32 %v6612, %v5661
      %v6614 = vadd.f32 %v6613, %v5664
      %v6615 = vadd.f32 %v6614, %v5669
      %v6616 = vadd.f32 %v6615, %v5672
      %v6617 = vadd.f32 %v6616, %v5677
      %v6618 = vadd.f32 %v6617, %v5680
      %v6619 = vadd.f32 %v6618, %v5685
      %v6620 = vadd.f32 %v6619, %v5688
      %v6621 = vadd.f32 %v6620, %v5693
      %v6622 = vadd.f32 %v6621, %v5696
      %v6623 = vadd.f32 %v6622, %v5701
      %v6624 = vadd.f32 %v6623, %v5704
      %v6625 = vadd.f32 %v6624, %v5709
      %v6626 = vadd.f32 %v6625, %v5712
      %v6627 = vadd.f32 %v6626, %v5717
      %v6628 = vadd.f32 %v6627, %v5720
      %v6629 = vadd.f32 %v6628, %v5725
      %v6630 = vadd.f32 %v6629, %v5728
      %v6631 = vadd.f32 %v6630, %v5733
      %v6632 = vadd.f32 %v6631, %v5736
      %v6633 = vadd.f32 %v6632, %v5741
      %v6634 = vadd.f32 %v6633, %v5744
      %v6635 = vadd.f32 %v6634, %v5749
      %v6636 = vadd.f32 %v6635, %v5752
      %v6637 = vadd.f32 %v6636, %v5757
      %v6638 = vadd.f32 %v6637, %v5760
      %v6639 = vadd.f32 %v6638, %v5765
      %v6640 = vadd.f32 %v6639, %v5768
      %v6641 = vadd.f32 %v6640, %v5773
      %v6642 = vadd.f32 %v6641, %v5776
      %v6643 = vadd.f32 %v6642, %v5781
      %v6644 = vadd.f32 %v6643, %v5784
      %v6645 = vadd.f32 %v6644, %v5789
      %v6646 = vadd.f32 %v6645, %v5792
      %v6647 = vadd.f32 %v6646, %v5797
      %v6648 = vadd.f32 %v6647, %v5800
      %v6649 = vadd.f32 %v6648, %v5805
      %v6650 = vadd.f32 %v6649, %v5808
      %v6651 = vadd.f32 %v6650, %v5813
      %v6652 = vadd.f32 %v6651, %v5816
      %v6653 = vadd.f32 %v6652, %v5821
      %v6654 = vadd.f32 %v6653, %v5824
      %v6655 = vadd.f32 %v6654, %v5829
      %v6656 = vadd.f32 %v6655, %v5832
      %v6657 = vadd.f32 %v6656, %v5837
      %v6658 = vadd.f32 %v6657, %v5840
      %v6659 = vadd.f32 %v6658, %v5845
      %v6660 = vadd.f32 %v6659, %v5848
      %v6661 = vadd.f32 %v6660, %v5853
      %v6662 = vadd.f32 %v6661, %v5856
      %v6663 = vadd.f32 %v6662, %v5861
      %v6664 = vadd.f32 %v6663, %v5864
      %v6665 = vadd.f32 %v6664, %v5869
      %v6666 = vadd.f32 %v6665, %v5872
      %v6667 = vadd.f32 %v6666, %v5877
      %v6668 = vadd.f32 %v6667, %v5880
      %v6669 = vadd.f32 %v6668, %v5885
      %v6670 = vadd.f32 %v6669, %v5888
      %v6671 = vadd.f32 %v6670, %v5893
      %v6672 = vadd.f32 %v6671, %v5896
      %v6673 = vadd.f32 %v6672, %v5901
      %v6674 = vadd.f32 %v6673, %v5904
      %v6675 = vrot.slane %v6674, 4
      %v6676 = vadd.f32 %v6674, %v6675
      %v6677 = vrot.slane %v6676, 2
      %v6678 = vadd.f32 %v6676, %v6677
      %v6679 = vrot.slane %v6678, 1
      %v6680 = vadd.f32 %v6678, %v6679
      %v6681 = vadd.f32 %v4442, %v6680
      %v6682 = vmul.f32 %v5397, %v5397
      %v6683 = vmul.f32 %v5400, %v5400
      %v6684 = vmul.f32 %v5405, %v5405
      %v6685 = vmul.f32 %v5408, %v5408
      %v6686 = vmul.f32 %v5413, %v5413
      %v6687 = vmul.f32 %v5416, %v5416
      %v6688 = vmul.f32 %v5421, %v5421
      %v6689 = vmul.f32 %v5424, %v5424
      %v6690 = vmul.f32 %v5429, %v5429
      %v6691 = vmul.f32 %v5432, %v5432
      %v6692 = vmul.f32 %v5437, %v5437
      %v6693 = vmul.f32 %v5440, %v5440
      %v6694 = vmul.f32 %v5445, %v5445
      %v6695 = vmul.f32 %v5448, %v5448
      %v6696 = vmul.f32 %v5453, %v5453
      %v6697 = vmul.f32 %v5456, %v5456
      %v6698 = vmul.f32 %v5461, %v5461
      %v6699 = vmul.f32 %v5464, %v5464
      %v6700 = vmul.f32 %v5469, %v5469
      %v6701 = vmul.f32 %v5472, %v5472
      %v6702 = vmul.f32 %v5477, %v5477
      %v6703 = vmul.f32 %v5480, %v5480
      %v6704 = vmul.f32 %v5485, %v5485
      %v6705 = vmul.f32 %v5488, %v5488
      %v6706 = vmul.f32 %v5493, %v5493
      %v6707 = vmul.f32 %v5496, %v5496
      %v6708 = vmul.f32 %v5501, %v5501
      %v6709 = vmul.f32 %v5504, %v5504
      %v6710 = vmul.f32 %v5509, %v5509
      %v6711 = vmul.f32 %v5512, %v5512
      %v6712 = vmul.f32 %v5517, %v5517
      %v6713 = vmul.f32 %v5520, %v5520
      %v6714 = vmul.f32 %v5525, %v5525
      %v6715 = vmul.f32 %v5528, %v5528
      %v6716 = vmul.f32 %v5533, %v5533
      %v6717 = vmul.f32 %v5536, %v5536
      %v6718 = vmul.f32 %v5541, %v5541
      %v6719 = vmul.f32 %v5544, %v5544
      %v6720 = vmul.f32 %v5549, %v5549
      %v6721 = vmul.f32 %v5552, %v5552
      %v6722 = vmul.f32 %v5557, %v5557
      %v6723 = vmul.f32 %v5560, %v5560
      %v6724 = vmul.f32 %v5565, %v5565
      %v6725 = vmul.f32 %v5568, %v5568
      %v6726 = vmul.f32 %v5573, %v5573
      %v6727 = vmul.f32 %v5576, %v5576
      %v6728 = vmul.f32 %v5581, %v5581
      %v6729 = vmul.f32 %v5584, %v5584
      %v6730 = vmul.f32 %v5589, %v5589
      %v6731 = vmul.f32 %v5592, %v5592
      %v6732 = vmul.f32 %v5597, %v5597
      %v6733 = vmul.f32 %v5600, %v5600
      %v6734 = vmul.f32 %v5605, %v5605
      %v6735 = vmul.f32 %v5608, %v5608
      %v6736 = vmul.f32 %v5613, %v5613
      %v6737 = vmul.f32 %v5616, %v5616
      %v6738 = vmul.f32 %v5621, %v5621
      %v6739 = vmul.f32 %v5624, %v5624
      %v6740 = vmul.f32 %v5629, %v5629
      %v6741 = vmul.f32 %v5632, %v5632
      %v6742 = vmul.f32 %v5637, %v5637
      %v6743 = vmul.f32 %v5640, %v5640
      %v6744 = vmul.f32 %v5645, %v5645
      %v6745 = vmul.f32 %v5648, %v5648
      %v6746 = vmul.f32 %v5653, %v5653
      %v6747 = vmul.f32 %v5656, %v5656
      %v6748 = vmul.f32 %v5661, %v5661
      %v6749 = vmul.f32 %v5664, %v5664
      %v6750 = vmul.f32 %v5669, %v5669
      %v6751 = vmul.f32 %v5672, %v5672
      %v6752 = vmul.f32 %v5677, %v5677
      %v6753 = vmul.f32 %v5680, %v5680
      %v6754 = vmul.f32 %v5685, %v5685
      %v6755 = vmul.f32 %v5688, %v5688
      %v6756 = vmul.f32 %v5693, %v5693
      %v6757 = vmul.f32 %v5696, %v5696
      %v6758 = vmul.f32 %v5701, %v5701
      %v6759 = vmul.f32 %v5704, %v5704
      %v6760 = vmul.f32 %v5709, %v5709
      %v6761 = vmul.f32 %v5712, %v5712
      %v6762 = vmul.f32 %v5717, %v5717
      %v6763 = vmul.f32 %v5720, %v5720
      %v6764 = vmul.f32 %v5725, %v5725
      %v6765 = vmul.f32 %v5728, %v5728
      %v6766 = vmul.f32 %v5733, %v5733
      %v6767 = vmul.f32 %v5736, %v5736
      %v6768 = vmul.f32 %v5741, %v5741
      %v6769 = vmul.f32 %v5744, %v5744
      %v6770 = vmul.f32 %v5749, %v5749
      %v6771 = vmul.f32 %v5752, %v5752
      %v6772 = vmul.f32 %v5757, %v5757
      %v6773 = vmul.f32 %v5760, %v5760
      %v6774 = vmul.f32 %v5765, %v5765
      %v6775 = vmul.f32 %v5768, %v5768
      %v6776 = vmul.f32 %v5773, %v5773
      %v6777 = vmul.f32 %v5776, %v5776
      %v6778 = vmul.f32 %v5781, %v5781
      %v6779 = vmul.f32 %v5784, %v5784
      %v6780 = vmul.f32 %v5789, %v5789
      %v6781 = vmul.f32 %v5792, %v5792
      %v6782 = vmul.f32 %v5797, %v5797
      %v6783 = vmul.f32 %v5800, %v5800
      %v6784 = vmul.f32 %v5805, %v5805
      %v6785 = vmul.f32 %v5808, %v5808
      %v6786 = vmul.f32 %v5813, %v5813
      %v6787 = vmul.f32 %v5816, %v5816
      %v6788 = vmul.f32 %v5821, %v5821
      %v6789 = vmul.f32 %v5824, %v5824
      %v6790 = vmul.f32 %v5829, %v5829
      %v6791 = vmul.f32 %v5832, %v5832
      %v6792 = vmul.f32 %v5837, %v5837
      %v6793 = vmul.f32 %v5840, %v5840
      %v6794 = vmul.f32 %v5845, %v5845
      %v6795 = vmul.f32 %v5848, %v5848
      %v6796 = vmul.f32 %v5853, %v5853
      %v6797 = vmul.f32 %v5856, %v5856
      %v6798 = vmul.f32 %v5861, %v5861
      %v6799 = vmul.f32 %v5864, %v5864
      %v6800 = vmul.f32 %v5869, %v5869
      %v6801 = vmul.f32 %v5872, %v5872
      %v6802 = vmul.f32 %v5877, %v5877
      %v6803 = vmul.f32 %v5880, %v5880
      %v6804 = vmul.f32 %v5885, %v5885
      %v6805 = vmul.f32 %v5888, %v5888
      %v6806 = vmul.f32 %v5893, %v5893
      %v6807 = vmul.f32 %v5896, %v5896
      %v6808 = vmul.f32 %v5901, %v5901
      %v6809 = vmul.f32 %v5904, %v5904
      %v6810 = vadd.f32 %v6682, %v6683
      %v6811 = vadd.f32 %v6810, %v6684
      %v6812 = vadd.f32 %v6811, %v6685
      %v6813 = vadd.f32 %v6812, %v6686
      %v6814 = vadd.f32 %v6813, %v6687
      %v6815 = vadd.f32 %v6814, %v6688
      %v6816 = vadd.f32 %v6815, %v6689
      %v6817 = vadd.f32 %v6816, %v6690
      %v6818 = vadd.f32 %v6817, %v6691
      %v6819 = vadd.f32 %v6818, %v6692
      %v6820 = vadd.f32 %v6819, %v6693
      %v6821 = vadd.f32 %v6820, %v6694
      %v6822 = vadd.f32 %v6821, %v6695
      %v6823 = vadd.f32 %v6822, %v6696
      %v6824 = vadd.f32 %v6823, %v6697
      %v6825 = vadd.f32 %v6824, %v6698
      %v6826 = vadd.f32 %v6825, %v6699
      %v6827 = vadd.f32 %v6826, %v6700
      %v6828 = vadd.f32 %v6827, %v6701
      %v6829 = vadd.f32 %v6828, %v6702
      %v6830 = vadd.f32 %v6829, %v6703
      %v6831 = vadd.f32 %v6830, %v6704
      %v6832 = vadd.f32 %v6831, %v6705
      %v6833 = vadd.f32 %v6832, %v6706
      %v6834 = vadd.f32 %v6833, %v6707
      %v6835 = vadd.f32 %v6834, %v6708
      %v6836 = vadd.f32 %v6835, %v6709
      %v6837 = vadd.f32 %v6836, %v6710
      %v6838 = vadd.f32 %v6837, %v6711
      %v6839 = vadd.f32 %v6838, %v6712
      %v6840 = vadd.f32 %v6839, %v6713
      %v6841 = vadd.f32 %v6840, %v6714
      %v6842 = vadd.f32 %v6841, %v6715
      %v6843 = vadd.f32 %v6842, %v6716
      %v6844 = vadd.f32 %v6843, %v6717
      %v6845 = vadd.f32 %v6844, %v6718
      %v6846 = vadd.f32 %v6845, %v6719
      %v6847 = vadd.f32 %v6846, %v6720
      %v6848 = vadd.f32 %v6847, %v6721
      %v6849 = vadd.f32 %v6848, %v6722
      %v6850 = vadd.f32 %v6849, %v6723
      %v6851 = vadd.f32 %v6850, %v6724
      %v6852 = vadd.f32 %v6851, %v6725
      %v6853 = vadd.f32 %v6852, %v6726
      %v6854 = vadd.f32 %v6853, %v6727
      %v6855 = vadd.f32 %v6854, %v6728
      %v6856 = vadd.f32 %v6855, %v6729
      %v6857 = vadd.f32 %v6856, %v6730
      %v6858 = vadd.f32 %v6857, %v6731
      %v6859 = vadd.f32 %v6858, %v6732
      %v6860 = vadd.f32 %v6859, %v6733
      %v6861 = vadd.f32 %v6860, %v6734
      %v6862 = vadd.f32 %v6861, %v6735
      %v6863 = vadd.f32 %v6862, %v6736
      %v6864 = vadd.f32 %v6863, %v6737
      %v6865 = vadd.f32 %v6864, %v6738
      %v6866 = vadd.f32 %v6865, %v6739
      %v6867 = vadd.f32 %v6866, %v6740
      %v6868 = vadd.f32 %v6867, %v6741
      %v6869 = vadd.f32 %v6868, %v6742
      %v6870 = vadd.f32 %v6869, %v6743
      %v6871 = vadd.f32 %v6870, %v6744
      %v6872 = vadd.f32 %v6871, %v6745
      %v6873 = vadd.f32 %v6872, %v6746
      %v6874 = vadd.f32 %v6873, %v6747
      %v6875 = vadd.f32 %v6874, %v6748
      %v6876 = vadd.f32 %v6875, %v6749
      %v6877 = vadd.f32 %v6876, %v6750
      %v6878 = vadd.f32 %v6877, %v6751
      %v6879 = vadd.f32 %v6878, %v6752
      %v6880 = vadd.f32 %v6879, %v6753
      %v6881 = vadd.f32 %v6880, %v6754
      %v6882 = vadd.f32 %v6881, %v6755
      %v6883 = vadd.f32 %v6882, %v6756
      %v6884 = vadd.f32 %v6883, %v6757
      %v6885 = vadd.f32 %v6884, %v6758
      %v6886 = vadd.f32 %v6885, %v6759
      %v6887 = vadd.f32 %v6886, %v6760
      %v6888 = vadd.f32 %v6887, %v6761
      %v6889 = vadd.f32 %v6888, %v6762
      %v6890 = vadd.f32 %v6889, %v6763
      %v6891 = vadd.f32 %v6890, %v6764
      %v6892 = vadd.f32 %v6891, %v6765
      %v6893 = vadd.f32 %v6892, %v6766
      %v6894 = vadd.f32 %v6893, %v6767
      %v6895 = vadd.f32 %v6894, %v6768
      %v6896 = vadd.f32 %v6895, %v6769
      %v6897 = vadd.f32 %v6896, %v6770
      %v6898 = vadd.f32 %v6897, %v6771
      %v6899 = vadd.f32 %v6898, %v6772
      %v6900 = vadd.f32 %v6899, %v6773
      %v6901 = vadd.f32 %v6900, %v6774
      %v6902 = vadd.f32 %v6901, %v6775
      %v6903 = vadd.f32 %v6902, %v6776
      %v6904 = vadd.f32 %v6903, %v6777
      %v6905 = vadd.f32 %v6904, %v6778
      %v6906 = vadd.f32 %v6905, %v6779
      %v6907 = vadd.f32 %v6906, %v6780
      %v6908 = vadd.f32 %v6907, %v6781
      %v6909 = vadd.f32 %v6908, %v6782
      %v6910 = vadd.f32 %v6909, %v6783
      %v6911 = vadd.f32 %v6910, %v6784
      %v6912 = vadd.f32 %v6911, %v6785
      %v6913 = vadd.f32 %v6912, %v6786
      %v6914 = vadd.f32 %v6913, %v6787
      %v6915 = vadd.f32 %v6914, %v6788
      %v6916 = vadd.f32 %v6915, %v6789
      %v6917 = vadd.f32 %v6916, %v6790
      %v6918 = vadd.f32 %v6917, %v6791
      %v6919 = vadd.f32 %v6918, %v6792
      %v6920 = vadd.f32 %v6919, %v6793
      %v6921 = vadd.f32 %v6920, %v6794
      %v6922 = vadd.f32 %v6921, %v6795
      %v6923 = vadd.f32 %v6922, %v6796
      %v6924 = vadd.f32 %v6923, %v6797
      %v6925 = vadd.f32 %v6924, %v6798
      %v6926 = vadd.f32 %v6925, %v6799
      %v6927 = vadd.f32 %v6926, %v6800
      %v6928 = vadd.f32 %v6927, %v6801
      %v6929 = vadd.f32 %v6928, %v6802
      %v6930 = vadd.f32 %v6929, %v6803
      %v6931 = vadd.f32 %v6930, %v6804
      %v6932 = vadd.f32 %v6931, %v6805
      %v6933 = vadd.f32 %v6932, %v6806
      %v6934 = vadd.f32 %v6933, %v6807
      %v6935 = vadd.f32 %v6934, %v6808
      %v6936 = vadd.f32 %v6935, %v6809
      %v6937 = vrot.slane %v6936, 4
      %v6938 = vadd.f32 %v6936, %v6937
      %v6939 = vrot.slane %v6938, 2
      %v6940 = vadd.f32 %v6938, %v6939
      %v6941 = vrot.slane %v6940, 1
      %v6942 = vadd.f32 %v6940, %v6941
      %v6943 = vadd.f32 %v4704, %v6942
      %v6944 = vld [vmem:[%s2465 + $0x10] sm:$0xf]
      %v6945 = vld [vmem:[%s2465 + $0x14] sm:$0xf]
      %v6946 = vld [vmem:[%s2465 + $0x18] sm:$0xf]
      %v6947 = vld [vmem:[%s2465 + $0x1c] sm:$0xf]
      %v6948 = vld [vmem:[%s2465 + $0x20] sm:$0xf]
      %v6949 = vld [vmem:[%s2465 + $0x24] sm:$0xf]
      %v6950 = vld [vmem:[%s2465 + $0x28] sm:$0xf]
      %v6951 = vld [vmem:[%s2465 + $0x2c] sm:$0xf]
      %v6952 = vld [vmem:[%s2465 + $0x30] sm:$0xf]
      %v6953 = vld [vmem:[%s2465 + $0x34] sm:$0xf]
      %v6954 = vld [vmem:[%s2465 + $0x38] sm:$0xf]
      %v6955 = vld [vmem:[%s2465 + $0x3c] sm:$0xf]
      %v6956 = vld [vmem:[%s2465 + $0x40] sm:$0xf]
      %v6957 = vld [vmem:[%s2465 + $0x44] sm:$0xf]
      %v6958 = vld [vmem:[%s2465 + $0x48] sm:$0xf]
      %v6959 = vld [vmem:[%s2465 + $0x4c] sm:$0xf]
      %v6960 = vld [vmem:[%s2465 + $0x50] sm:$0xf]
      %v6961 = vld [vmem:[%s2465 + $0x54] sm:$0xf]
      %v6962 = vld [vmem:[%s2465 + $0x58] sm:$0xf]
      %v6963 = vld [vmem:[%s2465 + $0x5c] sm:$0xf]
      %v6964 = vld [vmem:[%s2465 + $0x60] sm:$0xf]
      %v6965 = vld [vmem:[%s2465 + $0x64] sm:$0xf]
      %v6966 = vld [vmem:[%s2465 + $0x68] sm:$0xf]
      %v6967 = vld [vmem:[%s2465 + $0x6c] sm:$0xf]
      %v6968 = vld [vmem:[%s2465 + $0x70] sm:$0xf]
      %v6969 = vld [vmem:[%s2465 + $0x74] sm:$0xf]
      %v6970 = vld [vmem:[%s2465 + $0x78] sm:$0xf]
      %v6971 = vld [vmem:[%s2465 + $0x7c] sm:$0xf]
      %v6972 = vld [vmem:[%s2465 + $0x80] sm:$0xf]
      %v6973 = vld [vmem:[%s2465 + $0x84] sm:$0xf]
      %v6974 = vld [vmem:[%s2465 + $0x88] sm:$0xf]
      %v6975 = vld [vmem:[%s2465 + $0x8c] sm:$0xf]
      %v6976 = vld [vmem:[%s2465 + $0x90] sm:$0xf]
      %v6977 = vld [vmem:[%s2465 + $0x94] sm:$0xf]
      %v6978 = vld [vmem:[%s2465 + $0x98] sm:$0xf]
      %v6979 = vld [vmem:[%s2465 + $0x9c] sm:$0xf]
      %v6980 = vld [vmem:[%s2465 + $0xa0] sm:$0xf]
      %v6981 = vld [vmem:[%s2465 + $0xa4] sm:$0xf]
      %v6982 = vld [vmem:[%s2465 + $0xa8] sm:$0xf]
      %v6983 = vld [vmem:[%s2465 + $0xac] sm:$0xf]
      %v6984 = vld [vmem:[%s2465 + $0xb0] sm:$0xf]
      %v6985 = vld [vmem:[%s2465 + $0xb4] sm:$0xf]
      %v6986 = vld [vmem:[%s2465 + $0xb8] sm:$0xf]
      %v6987 = vld [vmem:[%s2465 + $0xbc] sm:$0xf]
      %v6988 = vld [vmem:[%s2465 + $0xc0] sm:$0xf]
      %v6989 = vld [vmem:[%s2465 + $0xc4] sm:$0xf]
      %v6990 = vld [vmem:[%s2465 + $0xc8] sm:$0xf]
      %v6991 = vld [vmem:[%s2465 + $0xcc] sm:$0xf]
      %v6992 = vld [vmem:[%s2465 + $0xd0] sm:$0xf]
      %v6993 = vld [vmem:[%s2465 + $0xd4] sm:$0xf]
      %v6994 = vld [vmem:[%s2465 + $0xd8] sm:$0xf]
      %v6995 = vld [vmem:[%s2465 + $0xdc] sm:$0xf]
      %v6996 = vld [vmem:[%s2465 + $0xe0] sm:$0xf]
      %v6997 = vld [vmem:[%s2465 + $0xe4] sm:$0xf]
      %v6998 = vld [vmem:[%s2465 + $0xe8] sm:$0xf]
      %v6999 = vld [vmem:[%s2465 + $0xec] sm:$0xf]
      %v7000 = vld [vmem:[%s2465 + $0xf0] sm:$0xf]
      %v7001 = vld [vmem:[%s2465 + $0xf4] sm:$0xf]
      %v7002 = vld [vmem:[%s2465 + $0xf8] sm:$0xf]
      %v7003 = vld [vmem:[%s2465 + $0xfc] sm:$0xf]
      %v7004 = vld [vmem:[%s2465 + $0x100] sm:$0xf]
      %v7005 = vld [vmem:[%s2465 + $0x104] sm:$0xf]
      %v7006 = vld [vmem:[%s2465 + $0x108] sm:$0xf]
      %v7007 = vld [vmem:[%s2465 + $0x10c] sm:$0xf]
      %v7008 = vld [vmem:[%s2465 + $0x110] sm:$0xf]
      %v7009 = vld [vmem:[%s2465 + $0x114] sm:$0xf]
      %v7010 = vld [vmem:[%s2465 + $0x118] sm:$0xf]
      %v7011 = vld [vmem:[%s2465 + $0x11c] sm:$0xf]
      %v7012 = vld [vmem:[%s2465 + $0x120] sm:$0xf]
      %v7013 = vld [vmem:[%s2465 + $0x124] sm:$0xf]
      %v7014 = vld [vmem:[%s2465 + $0x128] sm:$0xf]
      %v7015 = vld [vmem:[%s2465 + $0x12c] sm:$0xf]
      %v7016 = vld [vmem:[%s2465 + $0x130] sm:$0xf]
      %v7017 = vld [vmem:[%s2465 + $0x134] sm:$0xf]
      %v7018 = vld [vmem:[%s2465 + $0x138] sm:$0xf]
      %v7019 = vld [vmem:[%s2465 + $0x13c] sm:$0xf]
      %v7020 = vld [vmem:[%s2465 + $0x140] sm:$0xf]
      %v7021 = vld [vmem:[%s2465 + $0x144] sm:$0xf]
      %v7022 = vld [vmem:[%s2465 + $0x148] sm:$0xf]
      %v7023 = vld [vmem:[%s2465 + $0x14c] sm:$0xf]
      %v7024 = vld [vmem:[%s2465 + $0x150] sm:$0xf]
      %v7025 = vld [vmem:[%s2465 + $0x154] sm:$0xf]
      %v7026 = vld [vmem:[%s2465 + $0x158] sm:$0xf]
      %v7027 = vld [vmem:[%s2465 + $0x15c] sm:$0xf]
      %v7028 = vld [vmem:[%s2465 + $0x160] sm:$0xf]
      %v7029 = vld [vmem:[%s2465 + $0x164] sm:$0xf]
      %v7030 = vld [vmem:[%s2465 + $0x168] sm:$0xf]
      %v7031 = vld [vmem:[%s2465 + $0x16c] sm:$0xf]
      %v7032 = vld [vmem:[%s2465 + $0x170] sm:$0xf]
      %v7033 = vld [vmem:[%s2465 + $0x174] sm:$0xf]
      %v7034 = vld [vmem:[%s2465 + $0x178] sm:$0xf]
      %v7035 = vld [vmem:[%s2465 + $0x17c] sm:$0xf]
      %v7036 = vld [vmem:[%s2465 + $0x180] sm:$0xf]
      %v7037 = vld [vmem:[%s2465 + $0x184] sm:$0xf]
      %v7038 = vld [vmem:[%s2465 + $0x188] sm:$0xf]
      %v7039 = vld [vmem:[%s2465 + $0x18c] sm:$0xf]
      %v7040 = vld [vmem:[%s2465 + $0x190] sm:$0xf]
      %v7041 = vld [vmem:[%s2465 + $0x194] sm:$0xf]
      %v7042 = vld [vmem:[%s2465 + $0x198] sm:$0xf]
      %v7043 = vld [vmem:[%s2465 + $0x19c] sm:$0xf]
      %v7044 = vld [vmem:[%s2465 + $0x1a0] sm:$0xf]
      %v7045 = vld [vmem:[%s2465 + $0x1a4] sm:$0xf]
      %v7046 = vld [vmem:[%s2465 + $0x1a8] sm:$0xf]
      %v7047 = vld [vmem:[%s2465 + $0x1ac] sm:$0xf]
      %v7048 = vld [vmem:[%s2465 + $0x1b0] sm:$0xf]
      %v7049 = vld [vmem:[%s2465 + $0x1b4] sm:$0xf]
      %v7050 = vld [vmem:[%s2465 + $0x1b8] sm:$0xf]
      %v7051 = vld [vmem:[%s2465 + $0x1bc] sm:$0xf]
      %v7052 = vld [vmem:[%s2465 + $0x1c0] sm:$0xf]
      %v7053 = vld [vmem:[%s2465 + $0x1c4] sm:$0xf]
      %v7054 = vld [vmem:[%s2465 + $0x1c8] sm:$0xf]
      %v7055 = vld [vmem:[%s2465 + $0x1cc] sm:$0xf]
      %v7056 = vld [vmem:[%s2465 + $0x1d0] sm:$0xf]
      %v7057 = vld [vmem:[%s2465 + $0x1d4] sm:$0xf]
      %v7058 = vld [vmem:[%s2465 + $0x1d8] sm:$0xf]
      %v7059 = vld [vmem:[%s2465 + $0x1dc] sm:$0xf]
      %v7060 = vld [vmem:[%s2465 + $0x1e0] sm:$0xf]
      %v7061 = vld [vmem:[%s2465 + $0x1e4] sm:$0xf]
      %v7062 = vld [vmem:[%s2465 + $0x1e8] sm:$0xf]
      %v7063 = vld [vmem:[%s2465 + $0x1ec] sm:$0xf]
      %v7064 = vld [vmem:[%s2465 + $0x1f0] sm:$0xf]
      %v7065 = vld [vmem:[%s2465 + $0x1f4] sm:$0xf]
      %v7066 = vld [vmem:[%s2465 + $0x1f8] sm:$0xf]
      %v7067 = vld [vmem:[%s2465 + $0x1fc] sm:$0xf]
      %v7068 = vld [vmem:[%s2465 + $0x200] sm:$0xf]
      %v7069 = vld [vmem:[%s2465 + $0x204] sm:$0xf]
      %v7070 = vld [vmem:[%s2465 + $0x208] sm:$0xf]
      %v7071 = vld [vmem:[%s2465 + $0x20c] sm:$0xf]
      %s7072 = scalar_lea.vmem %s1, 48
      %v7073 = vld [vmem:[%s7072] sm:$0xf]
      %v7074 = vld [vmem:[%s7072 + $0x4] sm:$0xf]
      %v7075 = vld [vmem:[%s7072 + $0x8] sm:$0xf]
      %v7076 = vld [vmem:[%s7072 + $0xc] sm:$0xf]
      %v7205 = vunpack.c.l.b16 %v6944
      %v7206 = vunpack.c.l.b16 %v6945
      %v7207 = vunpack.c.l.b16 %v6946
      %v7208 = vunpack.c.l.b16 %v6947
      %v7209 = vunpack.c.l.b16 %v6948
      %v7210 = vunpack.c.l.b16 %v6949
      %v7211 = vunpack.c.l.b16 %v6950
      %v7212 = vunpack.c.l.b16 %v6951
      %v7213 = vunpack.c.l.b16 %v6952
      %v7214 = vunpack.c.l.b16 %v6953
      %v7215 = vunpack.c.l.b16 %v6954
      %v7216 = vunpack.c.l.b16 %v6955
      %v7217 = vunpack.c.l.b16 %v6956
      %v7218 = vunpack.c.l.b16 %v6957
      %v7219 = vunpack.c.l.b16 %v6958
      %v7220 = vunpack.c.l.b16 %v6959
      %v7221 = vunpack.c.l.b16 %v6960
      %v7222 = vunpack.c.l.b16 %v6961
      %v7223 = vunpack.c.l.b16 %v6962
      %v7224 = vunpack.c.l.b16 %v6963
      %v7225 = vunpack.c.l.b16 %v6964
      %v7226 = vunpack.c.l.b16 %v6965
      %v7227 = vunpack.c.l.b16 %v6966
      %v7228 = vunpack.c.l.b16 %v6967
      %v7229 = vunpack.c.l.b16 %v6968
      %v7230 = vunpack.c.l.b16 %v6969
      %v7231 = vunpack.c.l.b16 %v6970
      %v7232 = vunpack.c.l.b16 %v6971
      %v7233 = vunpack.c.l.b16 %v6972
      %v7234 = vunpack.c.l.b16 %v6973
      %v7235 = vunpack.c.l.b16 %v6974
      %v7236 = vunpack.c.l.b16 %v6975
      %v7237 = vunpack.c.l.b16 %v6976
      %v7238 = vunpack.c.l.b16 %v6977
      %v7239 = vunpack.c.l.b16 %v6978
      %v7240 = vunpack.c.l.b16 %v6979
      %v7241 = vunpack.c.l.b16 %v6980
      %v7242 = vunpack.c.l.b16 %v6981
      %v7243 = vunpack.c.l.b16 %v6982
      %v7244 = vunpack.c.l.b16 %v6983
      %v7245 = vunpack.c.l.b16 %v6984
      %v7246 = vunpack.c.l.b16 %v6985
      %v7247 = vunpack.c.l.b16 %v6986
      %v7248 = vunpack.c.l.b16 %v6987
      %v7249 = vunpack.c.l.b16 %v6988
      %v7250 = vunpack.c.l.b16 %v6989
      %v7251 = vunpack.c.l.b16 %v6990
      %v7252 = vunpack.c.l.b16 %v6991
      %v7253 = vunpack.c.l.b16 %v6992
      %v7254 = vunpack.c.l.b16 %v6993
      %v7255 = vunpack.c.l.b16 %v6994
      %v7256 = vunpack.c.l.b16 %v6995
      %v7257 = vunpack.c.l.b16 %v6996
      %v7258 = vunpack.c.l.b16 %v6997
      %v7259 = vunpack.c.l.b16 %v6998
      %v7260 = vunpack.c.l.b16 %v6999
      %v7261 = vunpack.c.l.b16 %v7000
      %v7262 = vunpack.c.l.b16 %v7001
      %v7263 = vunpack.c.l.b16 %v7002
      %v7264 = vunpack.c.l.b16 %v7003
      %v7265 = vunpack.c.l.b16 %v7004
      %v7266 = vunpack.c.l.b16 %v7005
      %v7267 = vunpack.c.l.b16 %v7006
      %v7268 = vunpack.c.l.b16 %v7007
      %v7269 = vunpack.c.l.b16 %v7008
      %v7270 = vunpack.c.l.b16 %v7009
      %v7271 = vunpack.c.l.b16 %v7010
      %v7272 = vunpack.c.l.b16 %v7011
      %v7273 = vunpack.c.l.b16 %v7012
      %v7274 = vunpack.c.l.b16 %v7013
      %v7275 = vunpack.c.l.b16 %v7014
      %v7276 = vunpack.c.l.b16 %v7015
      %v7277 = vunpack.c.l.b16 %v7016
      %v7278 = vunpack.c.l.b16 %v7017
      %v7279 = vunpack.c.l.b16 %v7018
      %v7280 = vunpack.c.l.b16 %v7019
      %v7281 = vunpack.c.l.b16 %v7020
      %v7282 = vunpack.c.l.b16 %v7021
      %v7283 = vunpack.c.l.b16 %v7022
      %v7284 = vunpack.c.l.b16 %v7023
      %v7285 = vunpack.c.l.b16 %v7024
      %v7286 = vunpack.c.l.b16 %v7025
      %v7287 = vunpack.c.l.b16 %v7026
      %v7288 = vunpack.c.l.b16 %v7027
      %v7289 = vunpack.c.l.b16 %v7028
      %v7290 = vunpack.c.l.b16 %v7029
      %v7291 = vunpack.c.l.b16 %v7030
      %v7292 = vunpack.c.l.b16 %v7031
      %v7293 = vunpack.c.l.b16 %v7032
      %v7294 = vunpack.c.l.b16 %v7033
      %v7295 = vunpack.c.l.b16 %v7034
      %v7296 = vunpack.c.l.b16 %v7035
      %v7297 = vunpack.c.l.b16 %v7036
      %v7298 = vunpack.c.l.b16 %v7037
      %v7299 = vunpack.c.l.b16 %v7038
      %v7300 = vunpack.c.l.b16 %v7039
      %v7301 = vunpack.c.l.b16 %v7040
      %v7302 = vunpack.c.l.b16 %v7041
      %v7303 = vunpack.c.l.b16 %v7042
      %v7304 = vunpack.c.l.b16 %v7043
      %v7305 = vunpack.c.l.b16 %v7044
      %v7306 = vunpack.c.l.b16 %v7045
      %v7307 = vunpack.c.l.b16 %v7046
      %v7308 = vunpack.c.l.b16 %v7047
      %v7309 = vunpack.c.l.b16 %v7048
      %v7310 = vunpack.c.l.b16 %v7049
      %v7311 = vunpack.c.l.b16 %v7050
      %v7312 = vunpack.c.l.b16 %v7051
      %v7313 = vunpack.c.l.b16 %v7052
      %v7314 = vunpack.c.l.b16 %v7053
      %v7315 = vunpack.c.l.b16 %v7054
      %v7316 = vunpack.c.l.b16 %v7055
      %v7317 = vunpack.c.l.b16 %v7056
      %v7318 = vunpack.c.l.b16 %v7057
      %v7319 = vunpack.c.l.b16 %v7058
      %v7320 = vunpack.c.l.b16 %v7059
      %v7321 = vunpack.c.l.b16 %v7060
      %v7322 = vunpack.c.l.b16 %v7061
      %v7323 = vunpack.c.l.b16 %v7062
      %v7324 = vunpack.c.l.b16 %v7063
      %v7325 = vunpack.c.l.b16 %v7064
      %v7326 = vunpack.c.l.b16 %v7065
      %v7327 = vunpack.c.l.b16 %v7066
      %v7328 = vunpack.c.l.b16 %v7067
      %v7329 = vunpack.c.l.b16 %v7068
      %v7330 = vunpack.c.l.b16 %v7069
      %v7331 = vunpack.c.l.b16 %v7070
      %v7332 = vunpack.c.l.b16 %v7071
      %v7333 = vpack.c.b16 %v7206, %v7205
      %v7334 = vpack.c.b16 %v7208, %v7207
      %v7335 = vpack.c.b16 %v7210, %v7209
      %v7336 = vpack.c.b16 %v7212, %v7211
      %v7337 = vpack.c.b16 %v7214, %v7213
      %v7338 = vpack.c.b16 %v7216, %v7215
      %v7339 = vpack.c.b16 %v7218, %v7217
      %v7340 = vpack.c.b16 %v7220, %v7219
      %v7341 = vpack.c.b16 %v7222, %v7221
      %v7342 = vpack.c.b16 %v7224, %v7223
      %v7343 = vpack.c.b16 %v7226, %v7225
      %v7344 = vpack.c.b16 %v7228, %v7227
      %v7345 = vpack.c.b16 %v7230, %v7229
      %v7346 = vpack.c.b16 %v7232, %v7231
      %v7347 = vpack.c.b16 %v7234, %v7233
      %v7348 = vpack.c.b16 %v7236, %v7235
      %v7349 = vpack.c.b16 %v7238, %v7237
      %v7350 = vpack.c.b16 %v7240, %v7239
      %v7351 = vpack.c.b16 %v7242, %v7241
      %v7352 = vpack.c.b16 %v7244, %v7243
      %v7353 = vpack.c.b16 %v7246, %v7245
      %v7354 = vpack.c.b16 %v7248, %v7247
      %v7355 = vpack.c.b16 %v7250, %v7249
      %v7356 = vpack.c.b16 %v7252, %v7251
      %v7357 = vpack.c.b16 %v7254, %v7253
      %v7358 = vpack.c.b16 %v7256, %v7255
      %v7359 = vpack.c.b16 %v7258, %v7257
      %v7360 = vpack.c.b16 %v7260, %v7259
      %v7361 = vpack.c.b16 %v7262, %v7261
      %v7362 = vpack.c.b16 %v7264, %v7263
      %v7363 = vpack.c.b16 %v7266, %v7265
      %v7364 = vpack.c.b16 %v7268, %v7267
      %v7365 = vpack.c.b16 %v7270, %v7269
      %v7366 = vpack.c.b16 %v7272, %v7271
      %v7367 = vpack.c.b16 %v7274, %v7273
      %v7368 = vpack.c.b16 %v7276, %v7275
      %v7369 = vpack.c.b16 %v7278, %v7277
      %v7370 = vpack.c.b16 %v7280, %v7279
      %v7371 = vpack.c.b16 %v7282, %v7281
      %v7372 = vpack.c.b16 %v7284, %v7283
      %v7373 = vpack.c.b16 %v7286, %v7285
      %v7374 = vpack.c.b16 %v7288, %v7287
      %v7375 = vpack.c.b16 %v7290, %v7289
      %v7376 = vpack.c.b16 %v7292, %v7291
      %v7377 = vpack.c.b16 %v7294, %v7293
      %v7378 = vpack.c.b16 %v7296, %v7295
      %v7379 = vpack.c.b16 %v7298, %v7297
      %v7380 = vpack.c.b16 %v7300, %v7299
      %v7381 = vpack.c.b16 %v7302, %v7301
      %v7382 = vpack.c.b16 %v7304, %v7303
      %v7383 = vpack.c.b16 %v7306, %v7305
      %v7384 = vpack.c.b16 %v7308, %v7307
      %v7385 = vpack.c.b16 %v7310, %v7309
      %v7386 = vpack.c.b16 %v7312, %v7311
      %v7387 = vpack.c.b16 %v7314, %v7313
      %v7388 = vpack.c.b16 %v7316, %v7315
      %v7389 = vpack.c.b16 %v7318, %v7317
      %v7390 = vpack.c.b16 %v7320, %v7319
      %v7391 = vpack.c.b16 %v7322, %v7321
      %v7392 = vpack.c.b16 %v7324, %v7323
      %v7393 = vpack.c.b16 %v7326, %v7325
      %v7394 = vpack.c.b16 %v7328, %v7327
      %v7395 = vpack.c.b16 %v7330, %v7329
      %v7396 = vpack.c.b16 %v7332, %v7331
      %v7401 = vunpack.c.l.b16 %v7073
      %v7402 = vunpack.c.l.b16 %v7074
      %v7403 = vunpack.c.l.b16 %v7075
      %v7404 = vunpack.c.l.b16 %v7076
      %v7405 = vpack.c.b16 %v7402, %v7401
      %v7406 = vpack.c.b16 %v7404, %v7403
      %v7410 = vsel %vm691, %v7333, 0
      %v7413 = vsel %vm691, %v7334, 0
      %v7416 = vsel %vm691, %v7335, 0
      %v7419 = vsel %vm691, %v7336, 0
      %v7422 = vsel %vm691, %v7337, 0
      %v7425 = vsel %vm691, %v7338, 0
      %v7428 = vsel %vm691, %v7339, 0
      %v7431 = vsel %vm691, %v7340, 0
      %v7434 = vsel %vm691, %v7341, 0
      %v7437 = vsel %vm691, %v7342, 0
      %v7440 = vsel %vm691, %v7343, 0
      %v7443 = vsel %vm691, %v7344, 0
      %v7446 = vsel %vm691, %v7345, 0
      %v7449 = vsel %vm691, %v7346, 0
      %v7452 = vsel %vm691, %v7347, 0
      %v7455 = vsel %vm691, %v7348, 0
      %v7458 = vsel %vm691, %v7349, 0
      %v7461 = vsel %vm691, %v7350, 0
      %v7464 = vsel %vm691, %v7351, 0
      %v7467 = vsel %vm691, %v7352, 0
      %v7470 = vsel %vm691, %v7353, 0
      %v7473 = vsel %vm691, %v7354, 0
      %v7476 = vsel %vm691, %v7355, 0
      %v7479 = vsel %vm691, %v7356, 0
      %v7482 = vsel %vm691, %v7357, 0
      %v7485 = vsel %vm691, %v7358, 0
      %v7488 = vsel %vm691, %v7359, 0
      %v7491 = vsel %vm691, %v7360, 0
      %v7494 = vsel %vm691, %v7361, 0
      %v7497 = vsel %vm691, %v7362, 0
      %v7500 = vsel %vm691, %v7363, 0
      %v7503 = vsel %vm691, %v7364, 0
      %v7506 = vsel %vm691, %v7365, 0
      %v7509 = vsel %vm691, %v7366, 0
      %v7512 = vsel %vm691, %v7367, 0
      %v7515 = vsel %vm691, %v7368, 0
      %v7518 = vsel %vm691, %v7369, 0
      %v7521 = vsel %vm691, %v7370, 0
      %v7524 = vsel %vm691, %v7371, 0
      %v7527 = vsel %vm691, %v7372, 0
      %v7530 = vsel %vm691, %v7373, 0
      %v7533 = vsel %vm691, %v7374, 0
      %v7536 = vsel %vm691, %v7375, 0
      %v7539 = vsel %vm691, %v7376, 0
      %v7542 = vsel %vm691, %v7377, 0
      %v7545 = vsel %vm691, %v7378, 0
      %v7548 = vsel %vm691, %v7379, 0
      %v7551 = vsel %vm691, %v7380, 0
      %v7554 = vsel %vm691, %v7381, 0
      %v7557 = vsel %vm691, %v7382, 0
      %v7560 = vsel %vm691, %v7383, 0
      %v7563 = vsel %vm691, %v7384, 0
      %v7566 = vsel %vm691, %v7385, 0
      %v7569 = vsel %vm691, %v7386, 0
      %v7572 = vsel %vm691, %v7387, 0
      %v7575 = vsel %vm691, %v7388, 0
      %v7578 = vsel %vm691, %v7389, 0
      %v7581 = vsel %vm691, %v7390, 0
      %v7584 = vsel %vm691, %v7391, 0
      %v7587 = vsel %vm691, %v7392, 0
      %v7590 = vsel %vm691, %v7393, 0
      %v7593 = vsel %vm691, %v7394, 0
      %v7596 = vsel %vm691, %v7395, 0
      %v7599 = vsel %vm691, %v7396, 0
      %7601 = vmatprep.subr.bf16.mxu0 0
      %7602 = vmatpush1.bf16.msra.mxu0 %v7405
      %7603 = vmatprep.subr.bf16.mxu0 0
      %7604 = vmatpush1.bf16.msra.mxu0 %v7406
      %7605 = vmatprep.subr.bf16.mxu0 0
      %7606 = vmatpush1.bf16.msra.mxu0 0
      %7607 = vmatprep.subr.bf16.mxu0 0
      %7608 = vmatpush1.bf16.msra.mxu0 0
      %7609 = vmatprep.subr.bf16.mxu0 0
      %7610 = vmatpush1.bf16.msra.mxu0 0
      %7611 = vmatprep.subr.bf16.mxu0 0
      %7612 = vmatpush1.bf16.msra.mxu0 0
      %7613 = vmatprep.subr.bf16.mxu0 0
      %7614 = vmatpush1.bf16.msra.mxu0 0
      %7615 = vmatprep.subr.bf16.mxu0 0
      %7616 = vmatpush1.bf16.msra.mxu0 0
      %7617 = vmatprep.subr.bf16.mxu0 0
      %7618 = vmatpush1.bf16.msra.mxu0 0
      %7619 = vmatprep.subr.bf16.mxu0 0
      %7620 = vmatpush1.bf16.msra.mxu0 0
      %7621 = vmatprep.subr.bf16.mxu0 0
      %7622 = vmatpush1.bf16.msra.mxu0 0
      %7623 = vmatprep.subr.bf16.mxu0 0
      %7624 = vmatpush1.bf16.msra.mxu0 0
      %7625 = vmatprep.subr.bf16.mxu0 0
      %7626 = vmatpush1.bf16.msra.mxu0 0
      %7627 = vmatprep.subr.bf16.mxu0 0
      %7628 = vmatpush1.bf16.msra.mxu0 0
      %7629 = vmatprep.subr.bf16.mxu0 0
      %7630 = vmatpush1.bf16.msra.mxu0 0
      %7631 = vmatprep.subr.bf16.mxu0 0
      %7632 = vmatpush1.bf16.msra.mxu0 0
      %7633 = vmatprep.mubr.bf16.mxu0 0
      %7634 = vmatmul.mubr.bf16.gmra.mrb[0].mxu0 %v7410
      %v7635 = vpop.f32.mrb[0].mxu0
      %v7636 = vadd.f32 0.0, %v7635
      %v7637 = vpop.f32.mrb[0].mxu0
      %v7638 = vpop.f32.mrb[0].mxu0
      %v7639 = vadd.f32 0.0, %v7638
      %v7640 = vpop.f32.mrb[0].mxu0
      %7641 = vmatprep.mubr.bf16.mxu0 0
      %7642 = vmatmul.mubr.bf16.gmra.mrb[0].mxu0 %v7413
      %v7643 = vpop.f32.mrb[0].mxu0
      %v7644 = vadd.f32 0.0, %v7643
      %v7645 = vpop.f32.mrb[0].mxu0
      %v7646 = vpop.f32.mrb[0].mxu0
      %v7647 = vadd.f32 0.0, %v7646
      %v7648 = vpop.f32.mrb[0].mxu0
      %7649 = vmatprep.mubr.bf16.mxu0 0
      %7650 = vmatmul.mubr.bf16.gmra.mrb[0].mxu0 %v7416
      %v7651 = vpop.f32.mrb[0].mxu0
      %v7652 = vadd.f32 0.0, %v7651
      %v7653 = vpop.f32.mrb[0].mxu0
      %v7654 = vpop.f32.mrb[0].mxu0
      %v7655 = vadd.f32 0.0, %v7654
      %v7656 = vpop.f32.mrb[0].mxu0
      %7657 = vmatprep.mubr.bf16.mxu0 0
      %7658 = vmatmul.mubr.bf16.gmra.mrb[0].mxu0 %v7419
      %v7659 = vpop.f32.mrb[0].mxu0
      %v7660 = vadd.f32 0.0, %v7659
      %v7661 = vpop.f32.mrb[0].mxu0
      %v7662 = vpop.f32.mrb[0].mxu0
      %v7663 = vadd.f32 0.0, %v7662
      %v7664 = vpop.f32.mrb[0].mxu0
      %7665 = vmatprep.mubr.bf16.mxu0 0
      %7666 = vmatmul.mubr.bf16.gmra.mrb[0].mxu0 %v7422
      %v7667 = vpop.f32.mrb[0].mxu0
      %v7668 = vadd.f32 0.0, %v7667
      %v7669 = vpop.f32.mrb[0].mxu0
      %v7670 = vpop.f32.mrb[0].mxu0
      %v7671 = vadd.f32 0.0, %v7670
      %v7672 = vpop.f32.mrb[0].mxu0
      %7673 = vmatprep.mubr.bf16.mxu0 0
      %7674 = vmatmul.mubr.bf16.gmra.mrb[0].mxu0 %v7425
      %v7675 = vpop.f32.mrb[0].mxu0
      %v7676 = vadd.f32 0.0, %v7675
      %v7677 = vpop.f32.mrb[0].mxu0
      %v7678 = vpop.f32.mrb[0].mxu0
      %v7679 = vadd.f32 0.0, %v7678
      %v7680 = vpop.f32.mrb[0].mxu0
      %7681 = vmatprep.mubr.bf16.mxu0 0
      %7682 = vmatmul.mubr.bf16.gmra.mrb[0].mxu0 %v7428
      %v7683 = vpop.f32.mrb[0].mxu0
      %v7684 = vadd.f32 0.0, %v7683
      %v7685 = vpop.f32.mrb[0].mxu0
      %v7686 = vpop.f32.mrb[0].mxu0
      %v7687 = vadd.f32 0.0, %v7686
      %v7688 = vpop.f32.mrb[0].mxu0
      %7689 = vmatprep.mubr.bf16.mxu0 0
      %7690 = vmatmul.mubr.bf16.gmra.mrb[0].mxu0 %v7431
      %v7691 = vpop.f32.mrb[0].mxu0
      %v7692 = vadd.f32 0.0, %v7691
      %v7693 = vpop.f32.mrb[0].mxu0
      %v7694 = vpop.f32.mrb[0].mxu0
      %v7695 = vadd.f32 0.0, %v7694
      %v7696 = vpop.f32.mrb[0].mxu0
      %7697 = vmatprep.mubr.bf16.mxu0 0
      %7698 = vmatmul.mubr.bf16.gmra.mrb[0].mxu0 %v7434
      %v7699 = vpop.f32.mrb[0].mxu0
      %v7700 = vadd.f32 0.0, %v7699
      %v7701 = vpop.f32.mrb[0].mxu0
      %v7702 = vpop.f32.mrb[0].mxu0
      %v7703 = vadd.f32 0.0, %v7702
      %v7704 = vpop.f32.mrb[0].mxu0
      %7705 = vmatprep.mubr.bf16.mxu0 0
      %7706 = vmatmul.mubr.bf16.gmra.mrb[0].mxu0 %v7437
      %v7707 = vpop.f32.mrb[0].mxu0
      %v7708 = vadd.f32 0.0, %v7707
      %v7709 = vpop.f32.mrb[0].mxu0
      %v7710 = vpop.f32.mrb[0].mxu0
      %v7711 = vadd.f32 0.0, %v7710
      %v7712 = vpop.f32.mrb[0].mxu0
      %7713 = vmatprep.mubr.bf16.mxu0 0
      %7714 = vmatmul.mubr.bf16.gmra.mrb[0].mxu0 %v7440
      %v7715 = vpop.f32.mrb[0].mxu0
      %v7716 = vadd.f32 0.0, %v7715
      %v7717 = vpop.f32.mrb[0].mxu0
      %v7718 = vpop.f32.mrb[0].mxu0
      %v7719 = vadd.f32 0.0, %v7718
      %v7720 = vpop.f32.mrb[0].mxu0
      %7721 = vmatprep.mubr.bf16.mxu0 0
      %7722 = vmatmul.mubr.bf16.gmra.mrb[0].mxu0 %v7443
      %v7723 = vpop.f32.mrb[0].mxu0
      %v7724 = vadd.f32 0.0, %v7723
      %v7725 = vpop.f32.mrb[0].mxu0
      %v7726 = vpop.f32.mrb[0].mxu0
      %v7727 = vadd.f32 0.0, %v7726
      %v7728 = vpop.f32.mrb[0].mxu0
      %7729 = vmatprep.mubr.bf16.mxu0 0
      %7730 = vmatmul.mubr.bf16.gmra.mrb[0].mxu0 %v7446
      %v7731 = vpop.f32.mrb[0].mxu0
      %v7732 = vadd.f32 0.0, %v7731
      %v7733 = vpop.f32.mrb[0].mxu0
      %v7734 = vpop.f32.mrb[0].mxu0
      %v7735 = vadd.f32 0.0, %v7734
      %v7736 = vpop.f32.mrb[0].mxu0
      %7737 = vmatprep.mubr.bf16.mxu0 0
      %7738 = vmatmul.mubr.bf16.gmra.mrb[0].mxu0 %v7449
      %v7739 = vpop.f32.mrb[0].mxu0
      %v7740 = vadd.f32 0.0, %v7739
      %v7741 = vpop.f32.mrb[0].mxu0
      %v7742 = vpop.f32.mrb[0].mxu0
      %v7743 = vadd.f32 0.0, %v7742
      %v7744 = vpop.f32.mrb[0].mxu0
      %7745 = vmatprep.mubr.bf16.mxu0 0
      %7746 = vmatmul.mubr.bf16.gmra.mrb[0].mxu0 %v7452
      %v7747 = vpop.f32.mrb[0].mxu0
      %v7748 = vadd.f32 0.0, %v7747
      %v7749 = vpop.f32.mrb[0].mxu0
      %v7750 = vpop.f32.mrb[0].mxu0
      %v7751 = vadd.f32 0.0, %v7750
      %v7752 = vpop.f32.mrb[0].mxu0
      %7753 = vmatprep.mubr.bf16.mxu0 0
      %7754 = vmatmul.mubr.bf16.gmra.mrb[0].mxu0 %v7455
      %v7755 = vpop.f32.mrb[0].mxu0
      %v7756 = vadd.f32 0.0, %v7755
      %v7757 = vpop.f32.mrb[0].mxu0
      %v7758 = vpop.f32.mrb[0].mxu0
      %v7759 = vadd.f32 0.0, %v7758
      %v7760 = vpop.f32.mrb[0].mxu0
      %7761 = vmatprep.mubr.bf16.mxu0 0
      %7762 = vmatmul.mubr.bf16.gmra.mrb[0].mxu0 %v7458
      %v7763 = vpop.f32.mrb[0].mxu0
      %v7764 = vadd.f32 0.0, %v7763
      %v7765 = vpop.f32.mrb[0].mxu0
      %v7766 = vpop.f32.mrb[0].mxu0
      %v7767 = vadd.f32 0.0, %v7766
      %v7768 = vpop.f32.mrb[0].mxu0
      %7769 = vmatprep.mubr.bf16.mxu0 0
      %7770 = vmatmul.mubr.bf16.gmra.mrb[0].mxu0 %v7461
      %v7771 = vpop.f32.mrb[0].mxu0
      %v7772 = vadd.f32 0.0, %v7771
      %v7773 = vpop.f32.mrb[0].mxu0
      %v7774 = vpop.f32.mrb[0].mxu0
      %v7775 = vadd.f32 0.0, %v7774
      %v7776 = vpop.f32.mrb[0].mxu0
      %7777 = vmatprep.mubr.bf16.mxu0 0
      %7778 = vmatmul.mubr.bf16.gmra.mrb[0].mxu0 %v7464
      %v7779 = vpop.f32.mrb[0].mxu0
      %v7780 = vadd.f32 0.0, %v7779
      %v7781 = vpop.f32.mrb[0].mxu0
      %v7782 = vpop.f32.mrb[0].mxu0
      %v7783 = vadd.f32 0.0, %v7782
      %v7784 = vpop.f32.mrb[0].mxu0
      %7785 = vmatprep.mubr.bf16.mxu0 0
      %7786 = vmatmul.mubr.bf16.gmra.mrb[0].mxu0 %v7467
      %v7787 = vpop.f32.mrb[0].mxu0
      %v7788 = vadd.f32 0.0, %v7787
      %v7789 = vpop.f32.mrb[0].mxu0
      %v7790 = vpop.f32.mrb[0].mxu0
      %v7791 = vadd.f32 0.0, %v7790
      %v7792 = vpop.f32.mrb[0].mxu0
      %7793 = vmatprep.mubr.bf16.mxu0 0
      %7794 = vmatmul.mubr.bf16.gmra.mrb[0].mxu0 %v7470
      %v7795 = vpop.f32.mrb[0].mxu0
      %v7796 = vadd.f32 0.0, %v7795
      %v7797 = vpop.f32.mrb[0].mxu0
      %v7798 = vpop.f32.mrb[0].mxu0
      %v7799 = vadd.f32 0.0, %v7798
      %v7800 = vpop.f32.mrb[0].mxu0
      %7801 = vmatprep.mubr.bf16.mxu0 0
      %7802 = vmatmul.mubr.bf16.gmra.mrb[0].mxu0 %v7473
      %v7803 = vpop.f32.mrb[0].mxu0
      %v7804 = vadd.f32 0.0, %v7803
      %v7805 = vpop.f32.mrb[0].mxu0
      %v7806 = vpop.f32.mrb[0].mxu0
      %v7807 = vadd.f32 0.0, %v7806
      %v7808 = vpop.f32.mrb[0].mxu0
      %7809 = vmatprep.mubr.bf16.mxu0 0
      %7810 = vmatmul.mubr.bf16.gmra.mrb[0].mxu0 %v7476
      %v7811 = vpop.f32.mrb[0].mxu0
      %v7812 = vadd.f32 0.0, %v7811
      %v7813 = vpop.f32.mrb[0].mxu0
      %v7814 = vpop.f32.mrb[0].mxu0
      %v7815 = vadd.f32 0.0, %v7814
      %v7816 = vpop.f32.mrb[0].mxu0
      %7817 = vmatprep.mubr.bf16.mxu0 0
      %7818 = vmatmul.mubr.bf16.gmra.mrb[0].mxu0 %v7479
      %v7819 = vpop.f32.mrb[0].mxu0
      %v7820 = vadd.f32 0.0, %v7819
      %v7821 = vpop.f32.mrb[0].mxu0
      %v7822 = vpop.f32.mrb[0].mxu0
      %v7823 = vadd.f32 0.0, %v7822
      %v7824 = vpop.f32.mrb[0].mxu0
      %7825 = vmatprep.mubr.bf16.mxu0 0
      %7826 = vmatmul.mubr.bf16.gmra.mrb[0].mxu0 %v7482
      %v7827 = vpop.f32.mrb[0].mxu0
      %v7828 = vadd.f32 0.0, %v7827
      %v7829 = vpop.f32.mrb[0].mxu0
      %v7830 = vpop.f32.mrb[0].mxu0
      %v7831 = vadd.f32 0.0, %v7830
      %v7832 = vpop.f32.mrb[0].mxu0
      %7833 = vmatprep.mubr.bf16.mxu0 0
      %7834 = vmatmul.mubr.bf16.gmra.mrb[0].mxu0 %v7485
      %v7835 = vpop.f32.mrb[0].mxu0
      %v7836 = vadd.f32 0.0, %v7835
      %v7837 = vpop.f32.mrb[0].mxu0
      %v7838 = vpop.f32.mrb[0].mxu0
      %v7839 = vadd.f32 0.0, %v7838
      %v7840 = vpop.f32.mrb[0].mxu0
      %7841 = vmatprep.mubr.bf16.mxu0 0
      %7842 = vmatmul.mubr.bf16.gmra.mrb[0].mxu0 %v7488
      %v7843 = vpop.f32.mrb[0].mxu0
      %v7844 = vadd.f32 0.0, %v7843
      %v7845 = vpop.f32.mrb[0].mxu0
      %v7846 = vpop.f32.mrb[0].mxu0
      %v7847 = vadd.f32 0.0, %v7846
      %v7848 = vpop.f32.mrb[0].mxu0
      %7849 = vmatprep.mubr.bf16.mxu0 0
      %7850 = vmatmul.mubr.bf16.gmra.mrb[0].mxu0 %v7491
      %v7851 = vpop.f32.mrb[0].mxu0
      %v7852 = vadd.f32 0.0, %v7851
      %v7853 = vpop.f32.mrb[0].mxu0
      %v7854 = vpop.f32.mrb[0].mxu0
      %v7855 = vadd.f32 0.0, %v7854
      %v7856 = vpop.f32.mrb[0].mxu0
      %7857 = vmatprep.mubr.bf16.mxu0 0
      %7858 = vmatmul.mubr.bf16.gmra.mrb[0].mxu0 %v7494
      %v7859 = vpop.f32.mrb[0].mxu0
      %v7860 = vadd.f32 0.0, %v7859
      %v7861 = vpop.f32.mrb[0].mxu0
      %v7862 = vpop.f32.mrb[0].mxu0
      %v7863 = vadd.f32 0.0, %v7862
      %v7864 = vpop.f32.mrb[0].mxu0
      %7865 = vmatprep.mubr.bf16.mxu0 0
      %7866 = vmatmul.mubr.bf16.gmra.mrb[0].mxu0 %v7497
      %v7867 = vpop.f32.mrb[0].mxu0
      %v7868 = vadd.f32 0.0, %v7867
      %v7869 = vpop.f32.mrb[0].mxu0
      %v7870 = vpop.f32.mrb[0].mxu0
      %v7871 = vadd.f32 0.0, %v7870
      %v7872 = vpop.f32.mrb[0].mxu0
      %7873 = vmatprep.mubr.bf16.mxu0 0
      %7874 = vmatmul.mubr.bf16.gmra.mrb[0].mxu0 %v7500
      %v7875 = vpop.f32.mrb[0].mxu0
      %v7876 = vadd.f32 0.0, %v7875
      %v7877 = vpop.f32.mrb[0].mxu0
      %v7878 = vpop.f32.mrb[0].mxu0
      %v7879 = vadd.f32 0.0, %v7878
      %v7880 = vpop.f32.mrb[0].mxu0
      %7881 = vmatprep.mubr.bf16.mxu0 0
      %7882 = vmatmul.mubr.bf16.gmra.mrb[0].mxu0 %v7503
      %v7883 = vpop.f32.mrb[0].mxu0
      %v7884 = vadd.f32 0.0, %v7883
      %v7885 = vpop.f32.mrb[0].mxu0
      %v7886 = vpop.f32.mrb[0].mxu0
      %v7887 = vadd.f32 0.0, %v7886
      %v7888 = vpop.f32.mrb[0].mxu0
      %7889 = vmatprep.mubr.bf16.mxu0 0
      %7890 = vmatmul.mubr.bf16.gmra.mrb[0].mxu0 %v7506
      %v7891 = vpop.f32.mrb[0].mxu0
      %v7892 = vadd.f32 0.0, %v7891
      %v7893 = vpop.f32.mrb[0].mxu0
      %v7894 = vpop.f32.mrb[0].mxu0
      %v7895 = vadd.f32 0.0, %v7894
      %v7896 = vpop.f32.mrb[0].mxu0
      %7897 = vmatprep.mubr.bf16.mxu0 0
      %7898 = vmatmul.mubr.bf16.gmra.mrb[0].mxu0 %v7509
      %v7899 = vpop.f32.mrb[0].mxu0
      %v7900 = vadd.f32 0.0, %v7899
      %v7901 = vpop.f32.mrb[0].mxu0
      %v7902 = vpop.f32.mrb[0].mxu0
      %v7903 = vadd.f32 0.0, %v7902
      %v7904 = vpop.f32.mrb[0].mxu0
      %7905 = vmatprep.mubr.bf16.mxu0 0
      %7906 = vmatmul.mubr.bf16.gmra.mrb[0].mxu0 %v7512
      %v7907 = vpop.f32.mrb[0].mxu0
      %v7908 = vadd.f32 0.0, %v7907
      %v7909 = vpop.f32.mrb[0].mxu0
      %v7910 = vpop.f32.mrb[0].mxu0
      %v7911 = vadd.f32 0.0, %v7910
      %v7912 = vpop.f32.mrb[0].mxu0
      %7913 = vmatprep.mubr.bf16.mxu0 0
      %7914 = vmatmul.mubr.bf16.gmra.mrb[0].mxu0 %v7515
      %v7915 = vpop.f32.mrb[0].mxu0
      %v7916 = vadd.f32 0.0, %v7915
      %v7917 = vpop.f32.mrb[0].mxu0
      %v7918 = vpop.f32.mrb[0].mxu0
      %v7919 = vadd.f32 0.0, %v7918
      %v7920 = vpop.f32.mrb[0].mxu0
      %7921 = vmatprep.mubr.bf16.mxu0 0
      %7922 = vmatmul.mubr.bf16.gmra.mrb[0].mxu0 %v7518
      %v7923 = vpop.f32.mrb[0].mxu0
      %v7924 = vadd.f32 0.0, %v7923
      %v7925 = vpop.f32.mrb[0].mxu0
      %v7926 = vpop.f32.mrb[0].mxu0
      %v7927 = vadd.f32 0.0, %v7926
      %v7928 = vpop.f32.mrb[0].mxu0
      %7929 = vmatprep.mubr.bf16.mxu0 0
      %7930 = vmatmul.mubr.bf16.gmra.mrb[0].mxu0 %v7521
      %v7931 = vpop.f32.mrb[0].mxu0
      %v7932 = vadd.f32 0.0, %v7931
      %v7933 = vpop.f32.mrb[0].mxu0
      %v7934 = vpop.f32.mrb[0].mxu0
      %v7935 = vadd.f32 0.0, %v7934
      %v7936 = vpop.f32.mrb[0].mxu0
      %7937 = vmatprep.mubr.bf16.mxu0 0
      %7938 = vmatmul.mubr.bf16.gmra.mrb[0].mxu0 %v7524
      %v7939 = vpop.f32.mrb[0].mxu0
      %v7940 = vadd.f32 0.0, %v7939
      %v7941 = vpop.f32.mrb[0].mxu0
      %v7942 = vpop.f32.mrb[0].mxu0
      %v7943 = vadd.f32 0.0, %v7942
      %v7944 = vpop.f32.mrb[0].mxu0
      %7945 = vmatprep.mubr.bf16.mxu0 0
      %7946 = vmatmul.mubr.bf16.gmra.mrb[0].mxu0 %v7527
      %v7947 = vpop.f32.mrb[0].mxu0
      %v7948 = vadd.f32 0.0, %v7947
      %v7949 = vpop.f32.mrb[0].mxu0
      %v7950 = vpop.f32.mrb[0].mxu0
      %v7951 = vadd.f32 0.0, %v7950
      %v7952 = vpop.f32.mrb[0].mxu0
      %7953 = vmatprep.mubr.bf16.mxu0 0
      %7954 = vmatmul.mubr.bf16.gmra.mrb[0].mxu0 %v7530
      %v7955 = vpop.f32.mrb[0].mxu0
      %v7956 = vadd.f32 0.0, %v7955
      %v7957 = vpop.f32.mrb[0].mxu0
      %v7958 = vpop.f32.mrb[0].mxu0
      %v7959 = vadd.f32 0.0, %v7958
      %v7960 = vpop.f32.mrb[0].mxu0
      %7961 = vmatprep.mubr.bf16.mxu0 0
      %7962 = vmatmul.mubr.bf16.gmra.mrb[0].mxu0 %v7533
      %v7963 = vpop.f32.mrb[0].mxu0
      %v7964 = vadd.f32 0.0, %v7963
      %v7965 = vpop.f32.mrb[0].mxu0
      %v7966 = vpop.f32.mrb[0].mxu0
      %v7967 = vadd.f32 0.0, %v7966
      %v7968 = vpop.f32.mrb[0].mxu0
      %7969 = vmatprep.mubr.bf16.mxu0 0
      %7970 = vmatmul.mubr.bf16.gmra.mrb[0].mxu0 %v7536
      %v7971 = vpop.f32.mrb[0].mxu0
      %v7972 = vadd.f32 0.0, %v7971
      %v7973 = vpop.f32.mrb[0].mxu0
      %v7974 = vpop.f32.mrb[0].mxu0
      %v7975 = vadd.f32 0.0, %v7974
      %v7976 = vpop.f32.mrb[0].mxu0
      %7977 = vmatprep.mubr.bf16.mxu0 0
      %7978 = vmatmul.mubr.bf16.gmra.mrb[0].mxu0 %v7539
      %v7979 = vpop.f32.mrb[0].mxu0
      %v7980 = vadd.f32 0.0, %v7979
      %v7981 = vpop.f32.mrb[0].mxu0
      %v7982 = vpop.f32.mrb[0].mxu0
      %v7983 = vadd.f32 0.0, %v7982
      %v7984 = vpop.f32.mrb[0].mxu0
      %7985 = vmatprep.mubr.bf16.mxu0 0
      %7986 = vmatmul.mubr.bf16.gmra.mrb[0].mxu0 %v7542
      %v7987 = vpop.f32.mrb[0].mxu0
      %v7988 = vadd.f32 0.0, %v7987
      %v7989 = vpop.f32.mrb[0].mxu0
      %v7990 = vpop.f32.mrb[0].mxu0
      %v7991 = vadd.f32 0.0, %v7990
      %v7992 = vpop.f32.mrb[0].mxu0
      %7993 = vmatprep.mubr.bf16.mxu0 0
      %7994 = vmatmul.mubr.bf16.gmra.mrb[0].mxu0 %v7545
      %v7995 = vpop.f32.mrb[0].mxu0
      %v7996 = vadd.f32 0.0, %v7995
      %v7997 = vpop.f32.mrb[0].mxu0
      %v7998 = vpop.f32.mrb[0].mxu0
      %v7999 = vadd.f32 0.0, %v7998
      %v8000 = vpop.f32.mrb[0].mxu0
      %8001 = vmatprep.mubr.bf16.mxu0 0
      %8002 = vmatmul.mubr.bf16.gmra.mrb[0].mxu0 %v7548
      %v8003 = vpop.f32.mrb[0].mxu0
      %v8004 = vadd.f32 0.0, %v8003
      %v8005 = vpop.f32.mrb[0].mxu0
      %v8006 = vpop.f32.mrb[0].mxu0
      %v8007 = vadd.f32 0.0, %v8006
      %v8008 = vpop.f32.mrb[0].mxu0
      %8009 = vmatprep.mubr.bf16.mxu0 0
      %8010 = vmatmul.mubr.bf16.gmra.mrb[0].mxu0 %v7551
      %v8011 = vpop.f32.mrb[0].mxu0
      %v8012 = vadd.f32 0.0, %v8011
      %v8013 = vpop.f32.mrb[0].mxu0
      %v8014 = vpop.f32.mrb[0].mxu0
      %v8015 = vadd.f32 0.0, %v8014
      %v8016 = vpop.f32.mrb[0].mxu0
      %8017 = vmatprep.mubr.bf16.mxu0 0
      %8018 = vmatmul.mubr.bf16.gmra.mrb[0].mxu0 %v7554
      %v8019 = vpop.f32.mrb[0].mxu0
      %v8020 = vadd.f32 0.0, %v8019
      %v8021 = vpop.f32.mrb[0].mxu0
      %v8022 = vpop.f32.mrb[0].mxu0
      %v8023 = vadd.f32 0.0, %v8022
      %v8024 = vpop.f32.mrb[0].mxu0
      %8025 = vmatprep.mubr.bf16.mxu0 0
      %8026 = vmatmul.mubr.bf16.gmra.mrb[0].mxu0 %v7557
      %v8027 = vpop.f32.mrb[0].mxu0
      %v8028 = vadd.f32 0.0, %v8027
      %v8029 = vpop.f32.mrb[0].mxu0
      %v8030 = vpop.f32.mrb[0].mxu0
      %v8031 = vadd.f32 0.0, %v8030
      %v8032 = vpop.f32.mrb[0].mxu0
      %8033 = vmatprep.mubr.bf16.mxu0 0
      %8034 = vmatmul.mubr.bf16.gmra.mrb[0].mxu0 %v7560
      %v8035 = vpop.f32.mrb[0].mxu0
      %v8036 = vadd.f32 0.0, %v8035
      %v8037 = vpop.f32.mrb[0].mxu0
      %v8038 = vpop.f32.mrb[0].mxu0
      %v8039 = vadd.f32 0.0, %v8038
      %v8040 = vpop.f32.mrb[0].mxu0
      %8041 = vmatprep.mubr.bf16.mxu0 0
      %8042 = vmatmul.mubr.bf16.gmra.mrb[0].mxu0 %v7563
      %v8043 = vpop.f32.mrb[0].mxu0
      %v8044 = vadd.f32 0.0, %v8043
      %v8045 = vpop.f32.mrb[0].mxu0
      %v8046 = vpop.f32.mrb[0].mxu0
      %v8047 = vadd.f32 0.0, %v8046
      %v8048 = vpop.f32.mrb[0].mxu0
      %8049 = vmatprep.mubr.bf16.mxu0 0
      %8050 = vmatmul.mubr.bf16.gmra.mrb[0].mxu0 %v7566
      %v8051 = vpop.f32.mrb[0].mxu0
      %v8052 = vadd.f32 0.0, %v8051
      %v8053 = vpop.f32.mrb[0].mxu0
      %v8054 = vpop.f32.mrb[0].mxu0
      %v8055 = vadd.f32 0.0, %v8054
      %v8056 = vpop.f32.mrb[0].mxu0
      %8057 = vmatprep.mubr.bf16.mxu0 0
      %8058 = vmatmul.mubr.bf16.gmra.mrb[0].mxu0 %v7569
      %v8059 = vpop.f32.mrb[0].mxu0
      %v8060 = vadd.f32 0.0, %v8059
      %v8061 = vpop.f32.mrb[0].mxu0
      %v8062 = vpop.f32.mrb[0].mxu0
      %v8063 = vadd.f32 0.0, %v8062
      %v8064 = vpop.f32.mrb[0].mxu0
      %8065 = vmatprep.mubr.bf16.mxu0 0
      %8066 = vmatmul.mubr.bf16.gmra.mrb[0].mxu0 %v7572
      %v8067 = vpop.f32.mrb[0].mxu0
      %v8068 = vadd.f32 0.0, %v8067
      %v8069 = vpop.f32.mrb[0].mxu0
      %v8070 = vpop.f32.mrb[0].mxu0
      %v8071 = vadd.f32 0.0, %v8070
      %v8072 = vpop.f32.mrb[0].mxu0
      %8073 = vmatprep.mubr.bf16.mxu0 0
      %8074 = vmatmul.mubr.bf16.gmra.mrb[0].mxu0 %v7575
      %v8075 = vpop.f32.mrb[0].mxu0
      %v8076 = vadd.f32 0.0, %v8075
      %v8077 = vpop.f32.mrb[0].mxu0
      %v8078 = vpop.f32.mrb[0].mxu0
      %v8079 = vadd.f32 0.0, %v8078
      %v8080 = vpop.f32.mrb[0].mxu0
      %8081 = vmatprep.mubr.bf16.mxu0 0
      %8082 = vmatmul.mubr.bf16.gmra.mrb[0].mxu0 %v7578
      %v8083 = vpop.f32.mrb[0].mxu0
      %v8084 = vadd.f32 0.0, %v8083
      %v8085 = vpop.f32.mrb[0].mxu0
      %v8086 = vpop.f32.mrb[0].mxu0
      %v8087 = vadd.f32 0.0, %v8086
      %v8088 = vpop.f32.mrb[0].mxu0
      %8089 = vmatprep.mubr.bf16.mxu0 0
      %8090 = vmatmul.mubr.bf16.gmra.mrb[0].mxu0 %v7581
      %v8091 = vpop.f32.mrb[0].mxu0
      %v8092 = vadd.f32 0.0, %v8091
      %v8093 = vpop.f32.mrb[0].mxu0
      %v8094 = vpop.f32.mrb[0].mxu0
      %v8095 = vadd.f32 0.0, %v8094
      %v8096 = vpop.f32.mrb[0].mxu0
      %8097 = vmatprep.mubr.bf16.mxu0 0
      %8098 = vmatmul.mubr.bf16.gmra.mrb[0].mxu0 %v7584
      %v8099 = vpop.f32.mrb[0].mxu0
      %v8100 = vadd.f32 0.0, %v8099
      %v8101 = vpop.f32.mrb[0].mxu0
      %v8102 = vpop.f32.mrb[0].mxu0
      %v8103 = vadd.f32 0.0, %v8102
      %v8104 = vpop.f32.mrb[0].mxu0
      %8105 = vmatprep.mubr.bf16.mxu0 0
      %8106 = vmatmul.mubr.bf16.gmra.mrb[0].mxu0 %v7587
      %v8107 = vpop.f32.mrb[0].mxu0
      %v8108 = vadd.f32 0.0, %v8107
      %v8109 = vpop.f32.mrb[0].mxu0
      %v8110 = vpop.f32.mrb[0].mxu0
      %v8111 = vadd.f32 0.0, %v8110
      %v8112 = vpop.f32.mrb[0].mxu0
      %8113 = vmatprep.mubr.bf16.mxu0 0
      %8114 = vmatmul.mubr.bf16.gmra.mrb[0].mxu0 %v7590
      %v8115 = vpop.f32.mrb[0].mxu0
      %v8116 = vadd.f32 0.0, %v8115
      %v8117 = vpop.f32.mrb[0].mxu0
      %v8118 = vpop.f32.mrb[0].mxu0
      %v8119 = vadd.f32 0.0, %v8118
      %v8120 = vpop.f32.mrb[0].mxu0
      %8121 = vmatprep.mubr.bf16.mxu0 0
      %8122 = vmatmul.mubr.bf16.gmra.mrb[0].mxu0 %v7593
      %v8123 = vpop.f32.mrb[0].mxu0
      %v8124 = vadd.f32 0.0, %v8123
      %v8125 = vpop.f32.mrb[0].mxu0
      %v8126 = vpop.f32.mrb[0].mxu0
      %v8127 = vadd.f32 0.0, %v8126
      %v8128 = vpop.f32.mrb[0].mxu0
      %8129 = vmatprep.mubr.bf16.mxu0 0
      %8130 = vmatmul.mubr.bf16.gmra.mrb[0].mxu0 %v7596
      %v8131 = vpop.f32.mrb[0].mxu0
      %v8132 = vadd.f32 0.0, %v8131
      %v8133 = vpop.f32.mrb[0].mxu0
      %v8134 = vpop.f32.mrb[0].mxu0
      %v8135 = vadd.f32 0.0, %v8134
      %v8136 = vpop.f32.mrb[0].mxu0
      %8137 = vmatprep.mubr.bf16.mxu0 0
      %8138 = vmatmul.mubr.bf16.gmra.mrb[0].mxu0 %v7599
      %v8139 = vpop.f32.mrb[0].mxu0
      %v8140 = vadd.f32 0.0, %v8139
      %v8141 = vpop.f32.mrb[0].mxu0
      %v8142 = vpop.f32.mrb[0].mxu0
      %v8143 = vadd.f32 0.0, %v8142
      %v8144 = vpop.f32.mrb[0].mxu0
      %8145 = vdwg.mxu0
      %v8146 = vpack.c.bf16 %v7639, %v7636
      %v8147 = vpack.c.bf16 %v7647, %v7644
      %v8148 = vpack.c.bf16 %v7655, %v7652
      %v8149 = vpack.c.bf16 %v7663, %v7660
      %v8150 = vpack.c.bf16 %v7671, %v7668
      %v8151 = vpack.c.bf16 %v7679, %v7676
      %v8152 = vpack.c.bf16 %v7687, %v7684
      %v8153 = vpack.c.bf16 %v7695, %v7692
      %v8154 = vpack.c.bf16 %v7703, %v7700
      %v8155 = vpack.c.bf16 %v7711, %v7708
      %v8156 = vpack.c.bf16 %v7719, %v7716
      %v8157 = vpack.c.bf16 %v7727, %v7724
      %v8158 = vpack.c.bf16 %v7735, %v7732
      %v8159 = vpack.c.bf16 %v7743, %v7740
      %v8160 = vpack.c.bf16 %v7751, %v7748
      %v8161 = vpack.c.bf16 %v7759, %v7756
      %v8162 = vpack.c.bf16 %v7767, %v7764
      %v8163 = vpack.c.bf16 %v7775, %v7772
      %v8164 = vpack.c.bf16 %v7783, %v7780
      %v8165 = vpack.c.bf16 %v7791, %v7788
      %v8166 = vpack.c.bf16 %v7799, %v7796
      %v8167 = vpack.c.bf16 %v7807, %v7804
      %v8168 = vpack.c.bf16 %v7815, %v7812
      %v8169 = vpack.c.bf16 %v7823, %v7820
      %v8170 = vpack.c.bf16 %v7831, %v7828
      %v8171 = vpack.c.bf16 %v7839, %v7836
      %v8172 = vpack.c.bf16 %v7847, %v7844
      %v8173 = vpack.c.bf16 %v7855, %v7852
      %v8174 = vpack.c.bf16 %v7863, %v7860
      %v8175 = vpack.c.bf16 %v7871, %v7868
      %v8176 = vpack.c.bf16 %v7879, %v7876
      %v8177 = vpack.c.bf16 %v7887, %v7884
      %v8178 = vpack.c.bf16 %v7895, %v7892
      %v8179 = vpack.c.bf16 %v7903, %v7900
      %v8180 = vpack.c.bf16 %v7911, %v7908
      %v8181 = vpack.c.bf16 %v7919, %v7916
      %v8182 = vpack.c.bf16 %v7927, %v7924
      %v8183 = vpack.c.bf16 %v7935, %v7932
      %v8184 = vpack.c.bf16 %v7943, %v7940
      %v8185 = vpack.c.bf16 %v7951, %v7948
      %v8186 = vpack.c.bf16 %v7959, %v7956
      %v8187 = vpack.c.bf16 %v7967, %v7964
      %v8188 = vpack.c.bf16 %v7975, %v7972
      %v8189 = vpack.c.bf16 %v7983, %v7980
      %v8190 = vpack.c.bf16 %v7991, %v7988
      %v8191 = vpack.c.bf16 %v7999, %v7996
      %v8192 = vpack.c.bf16 %v8007, %v8004
      %v8193 = vpack.c.bf16 %v8015, %v8012
      %v8194 = vpack.c.bf16 %v8023, %v8020
      %v8195 = vpack.c.bf16 %v8031, %v8028
      %v8196 = vpack.c.bf16 %v8039, %v8036
      %v8197 = vpack.c.bf16 %v8047, %v8044
      %v8198 = vpack.c.bf16 %v8055, %v8052
      %v8199 = vpack.c.bf16 %v8063, %v8060
      %v8200 = vpack.c.bf16 %v8071, %v8068
      %v8201 = vpack.c.bf16 %v8079, %v8076
      %v8202 = vpack.c.bf16 %v8087, %v8084
      %v8203 = vpack.c.bf16 %v8095, %v8092
      %v8204 = vpack.c.bf16 %v8103, %v8100
      %v8205 = vpack.c.bf16 %v8111, %v8108
      %v8206 = vpack.c.bf16 %v8119, %v8116
      %v8207 = vpack.c.bf16 %v8127, %v8124
      %v8208 = vpack.c.bf16 %v8135, %v8132
      %v8209 = vpack.c.bf16 %v8143, %v8140
      %v8274 = vunpack.c.l.b16 %v8146
      %v8275 = vunpack.c.h.b16 %v8146
      %v8276 = vunpack.c.l.b16 %v8147
      %v8277 = vunpack.c.h.b16 %v8147
      %v8278 = vunpack.c.l.b16 %v8148
      %v8279 = vunpack.c.h.b16 %v8148
      %v8280 = vunpack.c.l.b16 %v8149
      %v8281 = vunpack.c.h.b16 %v8149
      %v8282 = vunpack.c.l.b16 %v8150
      %v8283 = vunpack.c.h.b16 %v8150
      %v8284 = vunpack.c.l.b16 %v8151
      %v8285 = vunpack.c.h.b16 %v8151
      %v8286 = vunpack.c.l.b16 %v8152
      %v8287 = vunpack.c.h.b16 %v8152
      %v8288 = vunpack.c.l.b16 %v8153
      %v8289 = vunpack.c.h.b16 %v8153
      %v8290 = vunpack.c.l.b16 %v8154
      %v8291 = vunpack.c.h.b16 %v8154
      %v8292 = vunpack.c.l.b16 %v8155
      %v8293 = vunpack.c.h.b16 %v8155
      %v8294 = vunpack.c.l.b16 %v8156
      %v8295 = vunpack.c.h.b16 %v8156
      %v8296 = vunpack.c.l.b16 %v8157
      %v8297 = vunpack.c.h.b16 %v8157
      %v8298 = vunpack.c.l.b16 %v8158
      %v8299 = vunpack.c.h.b16 %v8158
      %v8300 = vunpack.c.l.b16 %v8159
      %v8301 = vunpack.c.h.b16 %v8159
      %v8302 = vunpack.c.l.b16 %v8160
      %v8303 = vunpack.c.h.b16 %v8160
      %v8304 = vunpack.c.l.b16 %v8161
      %v8305 = vunpack.c.h.b16 %v8161
      %v8306 = vunpack.c.l.b16 %v8162
      %v8307 = vunpack.c.h.b16 %v8162
      %v8308 = vunpack.c.l.b16 %v8163
      %v8309 = vunpack.c.h.b16 %v8163
      %v8310 = vunpack.c.l.b16 %v8164
      %v8311 = vunpack.c.h.b16 %v8164
      %v8312 = vunpack.c.l.b16 %v8165
      %v8313 = vunpack.c.h.b16 %v8165
      %v8314 = vunpack.c.l.b16 %v8166
      %v8315 = vunpack.c.h.b16 %v8166
      %v8316 = vunpack.c.l.b16 %v8167
      %v8317 = vunpack.c.h.b16 %v8167
      %v8318 = vunpack.c.l.b16 %v8168
      %v8319 = vunpack.c.h.b16 %v8168
      %v8320 = vunpack.c.l.b16 %v8169
      %v8321 = vunpack.c.h.b16 %v8169
      %v8322 = vunpack.c.l.b16 %v8170
      %v8323 = vunpack.c.h.b16 %v8170
      %v8324 = vunpack.c.l.b16 %v8171
      %v8325 = vunpack.c.h.b16 %v8171
      %v8326 = vunpack.c.l.b16 %v8172
      %v8327 = vunpack.c.h.b16 %v8172
      %v8328 = vunpack.c.l.b16 %v8173
      %v8329 = vunpack.c.h.b16 %v8173
      %v8330 = vunpack.c.l.b16 %v8174
      %v8331 = vunpack.c.h.b16 %v8174
      %v8332 = vunpack.c.l.b16 %v8175
      %v8333 = vunpack.c.h.b16 %v8175
      %v8334 = vunpack.c.l.b16 %v8176
      %v8335 = vunpack.c.h.b16 %v8176
      %v8336 = vunpack.c.l.b16 %v8177
      %v8337 = vunpack.c.h.b16 %v8177
      %v8338 = vunpack.c.l.b16 %v8178
      %v8339 = vunpack.c.h.b16 %v8178
      %v8340 = vunpack.c.l.b16 %v8179
      %v8341 = vunpack.c.h.b16 %v8179
      %v8342 = vunpack.c.l.b16 %v8180
      %v8343 = vunpack.c.h.b16 %v8180
      %v8344 = vunpack.c.l.b16 %v8181
      %v8345 = vunpack.c.h.b16 %v8181
      %v8346 = vunpack.c.l.b16 %v8182
      %v8347 = vunpack.c.h.b16 %v8182
      %v8348 = vunpack.c.l.b16 %v8183
      %v8349 = vunpack.c.h.b16 %v8183
      %v8350 = vunpack.c.l.b16 %v8184
      %v8351 = vunpack.c.h.b16 %v8184
      %v8352 = vunpack.c.l.b16 %v8185
      %v8353 = vunpack.c.h.b16 %v8185
      %v8354 = vunpack.c.l.b16 %v8186
      %v8355 = vunpack.c.h.b16 %v8186
      %v8356 = vunpack.c.l.b16 %v8187
      %v8357 = vunpack.c.h.b16 %v8187
      %v8358 = vunpack.c.l.b16 %v8188
      %v8359 = vunpack.c.h.b16 %v8188
      %v8360 = vunpack.c.l.b16 %v8189
      %v8361 = vunpack.c.h.b16 %v8189
      %v8362 = vunpack.c.l.b16 %v8190
      %v8363 = vunpack.c.h.b16 %v8190
      %v8364 = vunpack.c.l.b16 %v8191
      %v8365 = vunpack.c.h.b16 %v8191
      %v8366 = vunpack.c.l.b16 %v8192
      %v8367 = vunpack.c.h.b16 %v8192
      %v8368 = vunpack.c.l.b16 %v8193
      %v8369 = vunpack.c.h.b16 %v8193
      %v8370 = vunpack.c.l.b16 %v8194
      %v8371 = vunpack.c.h.b16 %v8194
      %v8372 = vunpack.c.l.b16 %v8195
      %v8373 = vunpack.c.h.b16 %v8195
      %v8374 = vunpack.c.l.b16 %v8196
      %v8375 = vunpack.c.h.b16 %v8196
      %v8376 = vunpack.c.l.b16 %v8197
      %v8377 = vunpack.c.h.b16 %v8197
      %v8378 = vunpack.c.l.b16 %v8198
      %v8379 = vunpack.c.h.b16 %v8198
      %v8380 = vunpack.c.l.b16 %v8199
      %v8381 = vunpack.c.h.b16 %v8199
      %v8382 = vunpack.c.l.b16 %v8200
      %v8383 = vunpack.c.h.b16 %v8200
      %v8384 = vunpack.c.l.b16 %v8201
      %v8385 = vunpack.c.h.b16 %v8201
      %v8386 = vunpack.c.l.b16 %v8202
      %v8387 = vunpack.c.h.b16 %v8202
      %v8388 = vunpack.c.l.b16 %v8203
      %v8389 = vunpack.c.h.b16 %v8203
      %v8390 = vunpack.c.l.b16 %v8204
      %v8391 = vunpack.c.h.b16 %v8204
      %v8392 = vunpack.c.l.b16 %v8205
      %v8393 = vunpack.c.h.b16 %v8205
      %v8394 = vunpack.c.l.b16 %v8206
      %v8395 = vunpack.c.h.b16 %v8206
      %v8396 = vunpack.c.l.b16 %v8207
      %v8397 = vunpack.c.h.b16 %v8207
      %v8398 = vunpack.c.l.b16 %v8208
      %v8399 = vunpack.c.h.b16 %v8208
      %v8400 = vunpack.c.l.b16 %v8209
      %v8401 = vunpack.c.h.b16 %v8209
      %v8402 = vpack.c.b16 %v8274, %v8274
      %v8403 = vpack.c.b16 %v8275, %v8275
      %v8404 = vpack.c.b16 %v8276, %v8276
      %v8405 = vpack.c.b16 %v8277, %v8277
      %v8406 = vpack.c.b16 %v8278, %v8278
      %v8407 = vpack.c.b16 %v8279, %v8279
      %v8408 = vpack.c.b16 %v8280, %v8280
      %v8409 = vpack.c.b16 %v8281, %v8281
      %v8410 = vpack.c.b16 %v8282, %v8282
      %v8411 = vpack.c.b16 %v8283, %v8283
      %v8412 = vpack.c.b16 %v8284, %v8284
      %v8413 = vpack.c.b16 %v8285, %v8285
      %v8414 = vpack.c.b16 %v8286, %v8286
      %v8415 = vpack.c.b16 %v8287, %v8287
      %v8416 = vpack.c.b16 %v8288, %v8288
      %v8417 = vpack.c.b16 %v8289, %v8289
      %v8418 = vpack.c.b16 %v8290, %v8290
      %v8419 = vpack.c.b16 %v8291, %v8291
      %v8420 = vpack.c.b16 %v8292, %v8292
      %v8421 = vpack.c.b16 %v8293, %v8293
      %v8422 = vpack.c.b16 %v8294, %v8294
      %v8423 = vpack.c.b16 %v8295, %v8295
      %v8424 = vpack.c.b16 %v8296, %v8296
      %v8425 = vpack.c.b16 %v8297, %v8297
      %v8426 = vpack.c.b16 %v8298, %v8298
      %v8427 = vpack.c.b16 %v8299, %v8299
      %v8428 = vpack.c.b16 %v8300, %v8300
      %v8429 = vpack.c.b16 %v8301, %v8301
      %v8430 = vpack.c.b16 %v8302, %v8302
      %v8431 = vpack.c.b16 %v8303, %v8303
      %v8432 = vpack.c.b16 %v8304, %v8304
      %v8433 = vpack.c.b16 %v8305, %v8305
      %v8434 = vpack.c.b16 %v8306, %v8306
      %v8435 = vpack.c.b16 %v8307, %v8307
      %v8436 = vpack.c.b16 %v8308, %v8308
      %v8437 = vpack.c.b16 %v8309, %v8309
      %v8438 = vpack.c.b16 %v8310, %v8310
      %v8439 = vpack.c.b16 %v8311, %v8311
      %v8440 = vpack.c.b16 %v8312, %v8312
      %v8441 = vpack.c.b16 %v8313, %v8313
      %v8442 = vpack.c.b16 %v8314, %v8314
      %v8443 = vpack.c.b16 %v8315, %v8315
      %v8444 = vpack.c.b16 %v8316, %v8316
      %v8445 = vpack.c.b16 %v8317, %v8317
      %v8446 = vpack.c.b16 %v8318, %v8318
      %v8447 = vpack.c.b16 %v8319, %v8319
      %v8448 = vpack.c.b16 %v8320, %v8320
      %v8449 = vpack.c.b16 %v8321, %v8321
      %v8450 = vpack.c.b16 %v8322, %v8322
      %v8451 = vpack.c.b16 %v8323, %v8323
      %v8452 = vpack.c.b16 %v8324, %v8324
      %v8453 = vpack.c.b16 %v8325, %v8325
      %v8454 = vpack.c.b16 %v8326, %v8326
      %v8455 = vpack.c.b16 %v8327, %v8327
      %v8456 = vpack.c.b16 %v8328, %v8328
      %v8457 = vpack.c.b16 %v8329, %v8329
      %v8458 = vpack.c.b16 %v8330, %v8330
      %v8459 = vpack.c.b16 %v8331, %v8331
      %v8460 = vpack.c.b16 %v8332, %v8332
      %v8461 = vpack.c.b16 %v8333, %v8333
      %v8462 = vpack.c.b16 %v8334, %v8334
      %v8463 = vpack.c.b16 %v8335, %v8335
      %v8464 = vpack.c.b16 %v8336, %v8336
      %v8465 = vpack.c.b16 %v8337, %v8337
      %v8466 = vpack.c.b16 %v8338, %v8338
      %v8467 = vpack.c.b16 %v8339, %v8339
      %v8468 = vpack.c.b16 %v8340, %v8340
      %v8469 = vpack.c.b16 %v8341, %v8341
      %v8470 = vpack.c.b16 %v8342, %v8342
      %v8471 = vpack.c.b16 %v8343, %v8343
      %v8472 = vpack.c.b16 %v8344, %v8344
      %v8473 = vpack.c.b16 %v8345, %v8345
      %v8474 = vpack.c.b16 %v8346, %v8346
      %v8475 = vpack.c.b16 %v8347, %v8347
      %v8476 = vpack.c.b16 %v8348, %v8348
      %v8477 = vpack.c.b16 %v8349, %v8349
      %v8478 = vpack.c.b16 %v8350, %v8350
      %v8479 = vpack.c.b16 %v8351, %v8351
      %v8480 = vpack.c.b16 %v8352, %v8352
      %v8481 = vpack.c.b16 %v8353, %v8353
      %v8482 = vpack.c.b16 %v8354, %v8354
      %v8483 = vpack.c.b16 %v8355, %v8355
      %v8484 = vpack.c.b16 %v8356, %v8356
      %v8485 = vpack.c.b16 %v8357, %v8357
      %v8486 = vpack.c.b16 %v8358, %v8358
      %v8487 = vpack.c.b16 %v8359, %v8359
      %v8488 = vpack.c.b16 %v8360, %v8360
      %v8489 = vpack.c.b16 %v8361, %v8361
      %v8490 = vpack.c.b16 %v8362, %v8362
      %v8491 = vpack.c.b16 %v8363, %v8363
      %v8492 = vpack.c.b16 %v8364, %v8364
      %v8493 = vpack.c.b16 %v8365, %v8365
      %v8494 = vpack.c.b16 %v8366, %v8366
      %v8495 = vpack.c.b16 %v8367, %v8367
      %v8496 = vpack.c.b16 %v8368, %v8368
      %v8497 = vpack.c.b16 %v8369, %v8369
      %v8498 = vpack.c.b16 %v8370, %v8370
      %v8499 = vpack.c.b16 %v8371, %v8371
      %v8500 = vpack.c.b16 %v8372, %v8372
      %v8501 = vpack.c.b16 %v8373, %v8373
      %v8502 = vpack.c.b16 %v8374, %v8374
      %v8503 = vpack.c.b16 %v8375, %v8375
      %v8504 = vpack.c.b16 %v8376, %v8376
      %v8505 = vpack.c.b16 %v8377, %v8377
      %v8506 = vpack.c.b16 %v8378, %v8378
      %v8507 = vpack.c.b16 %v8379, %v8379
      %v8508 = vpack.c.b16 %v8380, %v8380
      %v8509 = vpack.c.b16 %v8381, %v8381
      %v8510 = vpack.c.b16 %v8382, %v8382
      %v8511 = vpack.c.b16 %v8383, %v8383
      %v8512 = vpack.c.b16 %v8384, %v8384
      %v8513 = vpack.c.b16 %v8385, %v8385
      %v8514 = vpack.c.b16 %v8386, %v8386
      %v8515 = vpack.c.b16 %v8387, %v8387
      %v8516 = vpack.c.b16 %v8388, %v8388
      %v8517 = vpack.c.b16 %v8389, %v8389
      %v8518 = vpack.c.b16 %v8390, %v8390
      %v8519 = vpack.c.b16 %v8391, %v8391
      %v8520 = vpack.c.b16 %v8392, %v8392
      %v8521 = vpack.c.b16 %v8393, %v8393
      %v8522 = vpack.c.b16 %v8394, %v8394
      %v8523 = vpack.c.b16 %v8395, %v8395
      %v8524 = vpack.c.b16 %v8396, %v8396
      %v8525 = vpack.c.b16 %v8397, %v8397
      %v8526 = vpack.c.b16 %v8398, %v8398
      %v8527 = vpack.c.b16 %v8399, %v8399
      %v8528 = vpack.c.b16 %v8400, %v8400
      %v8529 = vpack.c.b16 %v8401, %v8401
      %s8658 = scalar_lea.vmem %s218, 1536
      %8659 = vst [vmem:[%s8658] sm:$0xf] %v8402
      %8660 = vst [vmem:[%s8658 + $0x4] sm:$0xf] %v8403
      %8661 = vst [vmem:[%s8658 + $0x8] sm:$0xf] %v8404
      %8662 = vst [vmem:[%s8658 + $0xc] sm:$0xf] %v8405
      %8663 = vst [vmem:[%s8658 + $0x10] sm:$0xf] %v8406
      %8664 = vst [vmem:[%s8658 + $0x14] sm:$0xf] %v8407
      %8665 = vst [vmem:[%s8658 + $0x18] sm:$0xf] %v8408
      %8666 = vst [vmem:[%s8658 + $0x1c] sm:$0xf] %v8409
      %8667 = vst [vmem:[%s8658 + $0x20] sm:$0xf] %v8410
      %8668 = vst [vmem:[%s8658 + $0x24] sm:$0xf] %v8411
      %8669 = vst [vmem:[%s8658 + $0x28] sm:$0xf] %v8412
      %8670 = vst [vmem:[%s8658 + $0x2c] sm:$0xf] %v8413
      %8671 = vst [vmem:[%s8658 + $0x30] sm:$0xf] %v8414
      %8672 = vst [vmem:[%s8658 + $0x34] sm:$0xf] %v8415
      %8673 = vst [vmem:[%s8658 + $0x38] sm:$0xf] %v8416
      %8674 = vst [vmem:[%s8658 + $0x3c] sm:$0xf] %v8417
      %8675 = vst [vmem:[%s8658 + $0x40] sm:$0xf] %v8418
      %8676 = vst [vmem:[%s8658 + $0x44] sm:$0xf] %v8419
      %8677 = vst [vmem:[%s8658 + $0x48] sm:$0xf] %v8420
      %8678 = vst [vmem:[%s8658 + $0x4c] sm:$0xf] %v8421
      %8679 = vst [vmem:[%s8658 + $0x50] sm:$0xf] %v8422
      %8680 = vst [vmem:[%s8658 + $0x54] sm:$0xf] %v8423
      %8681 = vst [vmem:[%s8658 + $0x58] sm:$0xf] %v8424
      %8682 = vst [vmem:[%s8658 + $0x5c] sm:$0xf] %v8425
      %8683 = vst [vmem:[%s8658 + $0x60] sm:$0xf] %v8426
      %8684 = vst [vmem:[%s8658 + $0x64] sm:$0xf] %v8427
      %8685 = vst [vmem:[%s8658 + $0x68] sm:$0xf] %v8428
      %8686 = vst [vmem:[%s8658 + $0x6c] sm:$0xf] %v8429
      %8687 = vst [vmem:[%s8658 + $0x70] sm:$0xf] %v8430
      %8688 = vst [vmem:[%s8658 + $0x74] sm:$0xf] %v8431
      %8689 = vst [vmem:[%s8658 + $0x78] sm:$0xf] %v8432
      %8690 = vst [vmem:[%s8658 + $0x7c] sm:$0xf] %v8433
      %8691 = vst [vmem:[%s8658 + $0x80] sm:$0xf] %v8434
      %8692 = vst [vmem:[%s8658 + $0x84] sm:$0xf] %v8435
      %8693 = vst [vmem:[%s8658 + $0x88] sm:$0xf] %v8436
      %8694 = vst [vmem:[%s8658 + $0x8c] sm:$0xf] %v8437
      %8695 = vst [vmem:[%s8658 + $0x90] sm:$0xf] %v8438
      %8696 = vst [vmem:[%s8658 + $0x94] sm:$0xf] %v8439
      %8697 = vst [vmem:[%s8658 + $0x98] sm:$0xf] %v8440
      %8698 = vst [vmem:[%s8658 + $0x9c] sm:$0xf] %v8441
      %8699 = vst [vmem:[%s8658 + $0xa0] sm:$0xf] %v8442
      %8700 = vst [vmem:[%s8658 + $0xa4] sm:$0xf] %v8443
      %8701 = vst [vmem:[%s8658 + $0xa8] sm:$0xf] %v8444
      %8702 = vst [vmem:[%s8658 + $0xac] sm:$0xf] %v8445
      %8703 = vst [vmem:[%s8658 + $0xb0] sm:$0xf] %v8446
      %8704 = vst [vmem:[%s8658 + $0xb4] sm:$0xf] %v8447
      %8705 = vst [vmem:[%s8658 + $0xb8] sm:$0xf] %v8448
      %8706 = vst [vmem:[%s8658 + $0xbc] sm:$0xf] %v8449
      %8707 = vst [vmem:[%s8658 + $0xc0] sm:$0xf] %v8450
      %8708 = vst [vmem:[%s8658 + $0xc4] sm:$0xf] %v8451
      %8709 = vst [vmem:[%s8658 + $0xc8] sm:$0xf] %v8452
      %8710 = vst [vmem:[%s8658 + $0xcc] sm:$0xf] %v8453
      %8711 = vst [vmem:[%s8658 + $0xd0] sm:$0xf] %v8454
      %8712 = vst [vmem:[%s8658 + $0xd4] sm:$0xf] %v8455
      %8713 = vst [vmem:[%s8658 + $0xd8] sm:$0xf] %v8456
      %8714 = vst [vmem:[%s8658 + $0xdc] sm:$0xf] %v8457
      %8715 = vst [vmem:[%s8658 + $0xe0] sm:$0xf] %v8458
      %8716 = vst [vmem:[%s8658 + $0xe4] sm:$0xf] %v8459
      %8717 = vst [vmem:[%s8658 + $0xe8] sm:$0xf] %v8460
      %8718 = vst [vmem:[%s8658 + $0xec] sm:$0xf] %v8461
      %8719 = vst [vmem:[%s8658 + $0xf0] sm:$0xf] %v8462
      %8720 = vst [vmem:[%s8658 + $0xf4] sm:$0xf] %v8463
      %8721 = vst [vmem:[%s8658 + $0xf8] sm:$0xf] %v8464
      %8722 = vst [vmem:[%s8658 + $0xfc] sm:$0xf] %v8465
      %8723 = vst [vmem:[%s8658 + $0x100] sm:$0xf] %v8466
      %8724 = vst [vmem:[%s8658 + $0x104] sm:$0xf] %v8467
      %8725 = vst [vmem:[%s8658 + $0x108] sm:$0xf] %v8468
      %8726 = vst [vmem:[%s8658 + $0x10c] sm:$0xf] %v8469
      %8727 = vst [vmem:[%s8658 + $0x110] sm:$0xf] %v8470
      %8728 = vst [vmem:[%s8658 + $0x114] sm:$0xf] %v8471
      %8729 = vst [vmem:[%s8658 + $0x118] sm:$0xf] %v8472
      %8730 = vst [vmem:[%s8658 + $0x11c] sm:$0xf] %v8473
      %8731 = vst [vmem:[%s8658 + $0x120] sm:$0xf] %v8474
      %8732 = vst [vmem:[%s8658 + $0x124] sm:$0xf] %v8475
      %8733 = vst [vmem:[%s8658 + $0x128] sm:$0xf] %v8476
      %8734 = vst [vmem:[%s8658 + $0x12c] sm:$0xf] %v8477
      %8735 = vst [vmem:[%s8658 + $0x130] sm:$0xf] %v8478
      %8736 = vst [vmem:[%s8658 + $0x134] sm:$0xf] %v8479
      %8737 = vst [vmem:[%s8658 + $0x138] sm:$0xf] %v8480
      %8738 = vst [vmem:[%s8658 + $0x13c] sm:$0xf] %v8481
      %8739 = vst [vmem:[%s8658 + $0x140] sm:$0xf] %v8482
      %8740 = vst [vmem:[%s8658 + $0x144] sm:$0xf] %v8483
      %8741 = vst [vmem:[%s8658 + $0x148] sm:$0xf] %v8484
      %8742 = vst [vmem:[%s8658 + $0x14c] sm:$0xf] %v8485
      %8743 = vst [vmem:[%s8658 + $0x150] sm:$0xf] %v8486
      %8744 = vst [vmem:[%s8658 + $0x154] sm:$0xf] %v8487
      %8745 = vst [vmem:[%s8658 + $0x158] sm:$0xf] %v8488
      %8746 = vst [vmem:[%s8658 + $0x15c] sm:$0xf] %v8489
      %8747 = vst [vmem:[%s8658 + $0x160] sm:$0xf] %v8490
      %8748 = vst [vmem:[%s8658 + $0x164] sm:$0xf] %v8491
      %8749 = vst [vmem:[%s8658 + $0x168] sm:$0xf] %v8492
      %8750 = vst [vmem:[%s8658 + $0x16c] sm:$0xf] %v8493
      %8751 = vst [vmem:[%s8658 + $0x170] sm:$0xf] %v8494
      %8752 = vst [vmem:[%s8658 + $0x174] sm:$0xf] %v8495
      %8753 = vst [vmem:[%s8658 + $0x178] sm:$0xf] %v8496
      %8754 = vst [vmem:[%s8658 + $0x17c] sm:$0xf] %v8497
      %8755 = vst [vmem:[%s8658 + $0x180] sm:$0xf] %v8498
      %8756 = vst [vmem:[%s8658 + $0x184] sm:$0xf] %v8499
      %8757 = vst [vmem:[%s8658 + $0x188] sm:$0xf] %v8500
      %8758 = vst [vmem:[%s8658 + $0x18c] sm:$0xf] %v8501
      %8759 = vst [vmem:[%s8658 + $0x190] sm:$0xf] %v8502
      %8760 = vst [vmem:[%s8658 + $0x194] sm:$0xf] %v8503
      %8761 = vst [vmem:[%s8658 + $0x198] sm:$0xf] %v8504
      %8762 = vst [vmem:[%s8658 + $0x19c] sm:$0xf] %v8505
      %8763 = vst [vmem:[%s8658 + $0x1a0] sm:$0xf] %v8506
      %8764 = vst [vmem:[%s8658 + $0x1a4] sm:$0xf] %v8507
      %8765 = vst [vmem:[%s8658 + $0x1a8] sm:$0xf] %v8508
      %8766 = vst [vmem:[%s8658 + $0x1ac] sm:$0xf] %v8509
      %8767 = vst [vmem:[%s8658 + $0x1b0] sm:$0xf] %v8510
      %8768 = vst [vmem:[%s8658 + $0x1b4] sm:$0xf] %v8511
      %8769 = vst [vmem:[%s8658 + $0x1b8] sm:$0xf] %v8512
      %8770 = vst [vmem:[%s8658 + $0x1bc] sm:$0xf] %v8513
      %8771 = vst [vmem:[%s8658 + $0x1c0] sm:$0xf] %v8514
      %8772 = vst [vmem:[%s8658 + $0x1c4] sm:$0xf] %v8515
      %8773 = vst [vmem:[%s8658 + $0x1c8] sm:$0xf] %v8516
      %8774 = vst [vmem:[%s8658 + $0x1cc] sm:$0xf] %v8517
      %8775 = vst [vmem:[%s8658 + $0x1d0] sm:$0xf] %v8518
      %8776 = vst [vmem:[%s8658 + $0x1d4] sm:$0xf] %v8519
      %8777 = vst [vmem:[%s8658 + $0x1d8] sm:$0xf] %v8520
      %8778 = vst [vmem:[%s8658 + $0x1dc] sm:$0xf] %v8521
      %8779 = vst [vmem:[%s8658 + $0x1e0] sm:$0xf] %v8522
      %8780 = vst [vmem:[%s8658 + $0x1e4] sm:$0xf] %v8523
      %8781 = vst [vmem:[%s8658 + $0x1e8] sm:$0xf] %v8524
      %8782 = vst [vmem:[%s8658 + $0x1ec] sm:$0xf] %v8525
      %8783 = vst [vmem:[%s8658 + $0x1f0] sm:$0xf] %v8526
      %8784 = vst [vmem:[%s8658 + $0x1f4] sm:$0xf] %v8527
      %8785 = vst [vmem:[%s8658 + $0x1f8] sm:$0xf] %v8528
      %8786 = vst [vmem:[%s8658 + $0x1fc] sm:$0xf] %v8529
      %v8787 = vadd.f32 %v7636, %v7639
      %v8788 = vadd.f32 %v8787, %v7644
      %v8789 = vadd.f32 %v8788, %v7647
      %v8790 = vadd.f32 %v8789, %v7652
      %v8791 = vadd.f32 %v8790, %v7655
      %v8792 = vadd.f32 %v8791, %v7660
      %v8793 = vadd.f32 %v8792, %v7663
      %v8794 = vadd.f32 %v8793, %v7668
      %v8795 = vadd.f32 %v8794, %v7671
      %v8796 = vadd.f32 %v8795, %v7676
      %v8797 = vadd.f32 %v8796, %v7679
      %v8798 = vadd.f32 %v8797, %v7684
      %v8799 = vadd.f32 %v8798, %v7687
      %v8800 = vadd.f32 %v8799, %v7692
      %v8801 = vadd.f32 %v8800, %v7695
      %v8802 = vadd.f32 %v8801, %v7700
      %v8803 = vadd.f32 %v8802, %v7703
      %v8804 = vadd.f32 %v8803, %v7708
      %v8805 = vadd.f32 %v8804, %v7711
      %v8806 = vadd.f32 %v8805, %v7716
      %v8807 = vadd.f32 %v8806, %v7719
      %v8808 = vadd.f32 %v8807, %v7724
      %v8809 = vadd.f32 %v8808, %v7727
      %v8810 = vadd.f32 %v8809, %v7732
      %v8811 = vadd.f32 %v8810, %v7735
      %v8812 = vadd.f32 %v8811, %v7740
      %v8813 = vadd.f32 %v8812, %v7743
      %v8814 = vadd.f32 %v8813, %v7748
      %v8815 = vadd.f32 %v8814, %v7751
      %v8816 = vadd.f32 %v8815, %v7756
      %v8817 = vadd.f32 %v8816, %v7759
      %v8818 = vadd.f32 %v8817, %v7764
      %v8819 = vadd.f32 %v8818, %v7767
      %v8820 = vadd.f32 %v8819, %v7772
      %v8821 = vadd.f32 %v8820, %v7775
      %v8822 = vadd.f32 %v8821, %v7780
      %v8823 = vadd.f32 %v8822, %v7783
      %v8824 = vadd.f32 %v8823, %v7788
      %v8825 = vadd.f32 %v8824, %v7791
      %v8826 = vadd.f32 %v8825, %v7796
      %v8827 = vadd.f32 %v8826, %v7799
      %v8828 = vadd.f32 %v8827, %v7804
      %v8829 = vadd.f32 %v8828, %v7807
      %v8830 = vadd.f32 %v8829, %v7812
      %v8831 = vadd.f32 %v8830, %v7815
      %v8832 = vadd.f32 %v8831, %v7820
      %v8833 = vadd.f32 %v8832, %v7823
      %v8834 = vadd.f32 %v8833, %v7828
      %v8835 = vadd.f32 %v8834, %v7831
      %v8836 = vadd.f32 %v8835, %v7836
      %v8837 = vadd.f32 %v8836, %v7839
      %v8838 = vadd.f32 %v8837, %v7844
      %v8839 = vadd.f32 %v8838, %v7847
      %v8840 = vadd.f32 %v8839, %v7852
      %v8841 = vadd.f32 %v8840, %v7855
      %v8842 = vadd.f32 %v8841, %v7860
      %v8843 = vadd.f32 %v8842, %v7863
      %v8844 = vadd.f32 %v8843, %v7868
      %v8845 = vadd.f32 %v8844, %v7871
      %v8846 = vadd.f32 %v8845, %v7876
      %v8847 = vadd.f32 %v8846, %v7879
      %v8848 = vadd.f32 %v8847, %v7884
      %v8849 = vadd.f32 %v8848, %v7887
      %v8850 = vadd.f32 %v8849, %v7892
      %v8851 = vadd.f32 %v8850, %v7895
      %v8852 = vadd.f32 %v8851, %v7900
      %v8853 = vadd.f32 %v8852, %v7903
      %v8854 = vadd.f32 %v8853, %v7908
      %v8855 = vadd.f32 %v8854, %v7911
      %v8856 = vadd.f32 %v8855, %v7916
      %v8857 = vadd.f32 %v8856, %v7919
      %v8858 = vadd.f32 %v8857, %v7924
      %v8859 = vadd.f32 %v8858, %v7927
      %v8860 = vadd.f32 %v8859, %v7932
      %v8861 = vadd.f32 %v8860, %v7935
      %v8862 = vadd.f32 %v8861, %v7940
      %v8863 = vadd.f32 %v8862, %v7943
      %v8864 = vadd.f32 %v8863, %v7948
      %v8865 = vadd.f32 %v8864, %v7951
      %v8866 = vadd.f32 %v8865, %v7956
      %v8867 = vadd.f32 %v8866, %v7959
      %v8868 = vadd.f32 %v8867, %v7964
      %v8869 = vadd.f32 %v8868, %v7967
      %v8870 = vadd.f32 %v8869, %v7972
      %v8871 = vadd.f32 %v8870, %v7975
      %v8872 = vadd.f32 %v8871, %v7980
      %v8873 = vadd.f32 %v8872, %v7983
      %v8874 = vadd.f32 %v8873, %v7988
      %v8875 = vadd.f32 %v8874, %v7991
      %v8876 = vadd.f32 %v8875, %v7996
      %v8877 = vadd.f32 %v8876, %v7999
      %v8878 = vadd.f32 %v8877, %v8004
      %v8879 = vadd.f32 %v8878, %v8007
      %v8880 = vadd.f32 %v8879, %v8012
      %v8881 = vadd.f32 %v8880, %v8015
      %v8882 = vadd.f32 %v8881, %v8020
      %v8883 = vadd.f32 %v8882, %v8023
      %v8884 = vadd.f32 %v8883, %v8028
      %v8885 = vadd.f32 %v8884, %v8031
      %v8886 = vadd.f32 %v8885, %v8036
      %v8887 = vadd.f32 %v8886, %v8039
      %v8888 = vadd.f32 %v8887, %v8044
      %v8889 = vadd.f32 %v8888, %v8047
      %v8890 = vadd.f32 %v8889, %v8052
      %v8891 = vadd.f32 %v8890, %v8055
      %v8892 = vadd.f32 %v8891, %v8060
      %v8893 = vadd.f32 %v8892, %v8063
      %v8894 = vadd.f32 %v8893, %v8068
      %v8895 = vadd.f32 %v8894, %v8071
      %v8896 = vadd.f32 %v8895, %v8076
      %v8897 = vadd.f32 %v8896, %v8079
      %v8898 = vadd.f32 %v8897, %v8084
      %v8899 = vadd.f32 %v8898, %v8087
      %v8900 = vadd.f32 %v8899, %v8092
      %v8901 = vadd.f32 %v8900, %v8095
      %v8902 = vadd.f32 %v8901, %v8100
      %v8903 = vadd.f32 %v8902, %v8103
      %v8904 = vadd.f32 %v8903, %v8108
      %v8905 = vadd.f32 %v8904, %v8111
      %v8906 = vadd.f32 %v8905, %v8116
      %v8907 = vadd.f32 %v8906, %v8119
      %v8908 = vadd.f32 %v8907, %v8124
      %v8909 = vadd.f32 %v8908, %v8127
      %v8910 = vadd.f32 %v8909, %v8132
      %v8911 = vadd.f32 %v8910, %v8135
      %v8912 = vadd.f32 %v8911, %v8140
      %v8913 = vadd.f32 %v8912, %v8143
      %v8914 = vrot.slane %v8913, 4
      %v8915 = vadd.f32 %v8913, %v8914
      %v8916 = vrot.slane %v8915, 2
      %v8917 = vadd.f32 %v8915, %v8916
      %v8918 = vrot.slane %v8917, 1
      %v8919 = vadd.f32 %v8917, %v8918
      %v8920 = vadd.f32 %v6681, %v8919
      %v8921 = vmul.f32 %v7636, %v7636
      %v8922 = vmul.f32 %v7639, %v7639
      %v8923 = vmul.f32 %v7644, %v7644
      %v8924 = vmul.f32 %v7647, %v7647
      %v8925 = vmul.f32 %v7652, %v7652
      %v8926 = vmul.f32 %v7655, %v7655
      %v8927 = vmul.f32 %v7660, %v7660
      %v8928 = vmul.f32 %v7663, %v7663
      %v8929 = vmul.f32 %v7668, %v7668
      %v8930 = vmul.f32 %v7671, %v7671
      %v8931 = vmul.f32 %v7676, %v7676
      %v8932 = vmul.f32 %v7679, %v7679
      %v8933 = vmul.f32 %v7684, %v7684
      %v8934 = vmul.f32 %v7687, %v7687
      %v8935 = vmul.f32 %v7692, %v7692
      %v8936 = vmul.f32 %v7695, %v7695
      %v8937 = vmul.f32 %v7700, %v7700
      %v8938 = vmul.f32 %v7703, %v7703
      %v8939 = vmul.f32 %v7708, %v7708
      %v8940 = vmul.f32 %v7711, %v7711
      %v8941 = vmul.f32 %v7716, %v7716
      %v8942 = vmul.f32 %v7719, %v7719
      %v8943 = vmul.f32 %v7724, %v7724
      %v8944 = vmul.f32 %v7727, %v7727
      %v8945 = vmul.f32 %v7732, %v7732
      %v8946 = vmul.f32 %v7735, %v7735
      %v8947 = vmul.f32 %v7740, %v7740
      %v8948 = vmul.f32 %v7743, %v7743
      %v8949 = vmul.f32 %v7748, %v7748
      %v8950 = vmul.f32 %v7751, %v7751
      %v8951 = vmul.f32 %v7756, %v7756
      %v8952 = vmul.f32 %v7759, %v7759
      %v8953 = vmul.f32 %v7764, %v7764
      %v8954 = vmul.f32 %v7767, %v7767
      %v8955 = vmul.f32 %v7772, %v7772
      %v8956 = vmul.f32 %v7775, %v7775
      %v8957 = vmul.f32 %v7780, %v7780
      %v8958 = vmul.f32 %v7783, %v7783
      %v8959 = vmul.f32 %v7788, %v7788
      %v8960 = vmul.f32 %v7791, %v7791
      %v8961 = vmul.f32 %v7796, %v7796
      %v8962 = vmul.f32 %v7799, %v7799
      %v8963 = vmul.f32 %v7804, %v7804
      %v8964 = vmul.f32 %v7807, %v7807
      %v8965 = vmul.f32 %v7812, %v7812
      %v8966 = vmul.f32 %v7815, %v7815
      %v8967 = vmul.f32 %v7820, %v7820
      %v8968 = vmul.f32 %v7823, %v7823
      %v8969 = vmul.f32 %v7828, %v7828
      %v8970 = vmul.f32 %v7831, %v7831
      %v8971 = vmul.f32 %v7836, %v7836
      %v8972 = vmul.f32 %v7839, %v7839
      %v8973 = vmul.f32 %v7844, %v7844
      %v8974 = vmul.f32 %v7847, %v7847
      %v8975 = vmul.f32 %v7852, %v7852
      %v8976 = vmul.f32 %v7855, %v7855
      %v8977 = vmul.f32 %v7860, %v7860
      %v8978 = vmul.f32 %v7863, %v7863
      %v8979 = vmul.f32 %v7868, %v7868
      %v8980 = vmul.f32 %v7871, %v7871
      %v8981 = vmul.f32 %v7876, %v7876
      %v8982 = vmul.f32 %v7879, %v7879
      %v8983 = vmul.f32 %v7884, %v7884
      %v8984 = vmul.f32 %v7887, %v7887
      %v8985 = vmul.f32 %v7892, %v7892
      %v8986 = vmul.f32 %v7895, %v7895
      %v8987 = vmul.f32 %v7900, %v7900
      %v8988 = vmul.f32 %v7903, %v7903
      %v8989 = vmul.f32 %v7908, %v7908
      %v8990 = vmul.f32 %v7911, %v7911
      %v8991 = vmul.f32 %v7916, %v7916
      %v8992 = vmul.f32 %v7919, %v7919
      %v8993 = vmul.f32 %v7924, %v7924
      %v8994 = vmul.f32 %v7927, %v7927
      %v8995 = vmul.f32 %v7932, %v7932
      %v8996 = vmul.f32 %v7935, %v7935
      %v8997 = vmul.f32 %v7940, %v7940
      %v8998 = vmul.f32 %v7943, %v7943
      %v8999 = vmul.f32 %v7948, %v7948
      %v9000 = vmul.f32 %v7951, %v7951
      %v9001 = vmul.f32 %v7956, %v7956
      %v9002 = vmul.f32 %v7959, %v7959
      %v9003 = vmul.f32 %v7964, %v7964
      %v9004 = vmul.f32 %v7967, %v7967
      %v9005 = vmul.f32 %v7972, %v7972
      %v9006 = vmul.f32 %v7975, %v7975
      %v9007 = vmul.f32 %v7980, %v7980
      %v9008 = vmul.f32 %v7983, %v7983
      %v9009 = vmul.f32 %v7988, %v7988
      %v9010 = vmul.f32 %v7991, %v7991
      %v9011 = vmul.f32 %v7996, %v7996
      %v9012 = vmul.f32 %v7999, %v7999
      %v9013 = vmul.f32 %v8004, %v8004
      %v9014 = vmul.f32 %v8007, %v8007
      %v9015 = vmul.f32 %v8012, %v8012
      %v9016 = vmul.f32 %v8015, %v8015
      %v9017 = vmul.f32 %v8020, %v8020
      %v9018 = vmul.f32 %v8023, %v8023
      %v9019 = vmul.f32 %v8028, %v8028
      %v9020 = vmul.f32 %v8031, %v8031
      %v9021 = vmul.f32 %v8036, %v8036
      %v9022 = vmul.f32 %v8039, %v8039
      %v9023 = vmul.f32 %v8044, %v8044
      %v9024 = vmul.f32 %v8047, %v8047
      %v9025 = vmul.f32 %v8052, %v8052
      %v9026 = vmul.f32 %v8055, %v8055
      %v9027 = vmul.f32 %v8060, %v8060
      %v9028 = vmul.f32 %v8063, %v8063
      %v9029 = vmul.f32 %v8068, %v8068
      %v9030 = vmul.f32 %v8071, %v8071
      %v9031 = vmul.f32 %v8076, %v8076
      %v9032 = vmul.f32 %v8079, %v8079
      %v9033 = vmul.f32 %v8084, %v8084
      %v9034 = vmul.f32 %v8087, %v8087
      %v9035 = vmul.f32 %v8092, %v8092
      %v9036 = vmul.f32 %v8095, %v8095
      %v9037 = vmul.f32 %v8100, %v8100
      %v9038 = vmul.f32 %v8103, %v8103
      %v9039 = vmul.f32 %v8108, %v8108
      %v9040 = vmul.f32 %v8111, %v8111
      %v9041 = vmul.f32 %v8116, %v8116
      %v9042 = vmul.f32 %v8119, %v8119
      %v9043 = vmul.f32 %v8124, %v8124
      %v9044 = vmul.f32 %v8127, %v8127
      %v9045 = vmul.f32 %v8132, %v8132
      %v9046 = vmul.f32 %v8135, %v8135
      %v9047 = vmul.f32 %v8140, %v8140
      %v9048 = vmul.f32 %v8143, %v8143
      %v9049 = vadd.f32 %v8921, %v8922
      %v9050 = vadd.f32 %v9049, %v8923
      %v9051 = vadd.f32 %v9050, %v8924
      %v9052 = vadd.f32 %v9051, %v8925
      %v9053 = vadd.f32 %v9052, %v8926
      %v9054 = vadd.f32 %v9053, %v8927
      %v9055 = vadd.f32 %v9054, %v8928
      %v9056 = vadd.f32 %v9055, %v8929
      %v9057 = vadd.f32 %v9056, %v8930
      %v9058 = vadd.f32 %v9057, %v8931
      %v9059 = vadd.f32 %v9058, %v8932
      %v9060 = vadd.f32 %v9059, %v8933
      %v9061 = vadd.f32 %v9060, %v8934
      %v9062 = vadd.f32 %v9061, %v8935
      %v9063 = vadd.f32 %v9062, %v8936
      %v9064 = vadd.f32 %v9063, %v8937
      %v9065 = vadd.f32 %v9064, %v8938
      %v9066 = vadd.f32 %v9065, %v8939
      %v9067 = vadd.f32 %v9066, %v8940
      %v9068 = vadd.f32 %v9067, %v8941
      %v9069 = vadd.f32 %v9068, %v8942
      %v9070 = vadd.f32 %v9069, %v8943
      %v9071 = vadd.f32 %v9070, %v8944
      %v9072 = vadd.f32 %v9071, %v8945
      %v9073 = vadd.f32 %v9072, %v8946
      %v9074 = vadd.f32 %v9073, %v8947
      %v9075 = vadd.f32 %v9074, %v8948
      %v9076 = vadd.f32 %v9075, %v8949
      %v9077 = vadd.f32 %v9076, %v8950
      %v9078 = vadd.f32 %v9077, %v8951
      %v9079 = vadd.f32 %v9078, %v8952
      %v9080 = vadd.f32 %v9079, %v8953
      %v9081 = vadd.f32 %v9080, %v8954
      %v9082 = vadd.f32 %v9081, %v8955
      %v9083 = vadd.f32 %v9082, %v8956
      %v9084 = vadd.f32 %v9083, %v8957
      %v9085 = vadd.f32 %v9084, %v8958
      %v9086 = vadd.f32 %v9085, %v8959
      %v9087 = vadd.f32 %v9086, %v8960
      %v9088 = vadd.f32 %v9087, %v8961
      %v9089 = vadd.f32 %v9088, %v8962
      %v9090 = vadd.f32 %v9089, %v8963
      %v9091 = vadd.f32 %v9090, %v8964
      %v9092 = vadd.f32 %v9091, %v8965
      %v9093 = vadd.f32 %v9092, %v8966
      %v9094 = vadd.f32 %v9093, %v8967
      %v9095 = vadd.f32 %v9094, %v8968
      %v9096 = vadd.f32 %v9095, %v8969
      %v9097 = vadd.f32 %v9096, %v8970
      %v9098 = vadd.f32 %v9097, %v8971
      %v9099 = vadd.f32 %v9098, %v8972
      %v9100 = vadd.f32 %v9099, %v8973
      %v9101 = vadd.f32 %v9100, %v8974
      %v9102 = vadd.f32 %v9101, %v8975
      %v9103 = vadd.f32 %v9102, %v8976
      %v9104 = vadd.f32 %v9103, %v8977
      %v9105 = vadd.f32 %v9104, %v8978
      %v9106 = vadd.f32 %v9105, %v8979
      %v9107 = vadd.f32 %v9106, %v8980
      %v9108 = vadd.f32 %v9107, %v8981
      %v9109 = vadd.f32 %v9108, %v8982
      %v9110 = vadd.f32 %v9109, %v8983
      %v9111 = vadd.f32 %v9110, %v8984
      %v9112 = vadd.f32 %v9111, %v8985
      %v9113 = vadd.f32 %v9112, %v8986
      %v9114 = vadd.f32 %v9113, %v8987
      %v9115 = vadd.f32 %v9114, %v8988
      %v9116 = vadd.f32 %v9115, %v8989
      %v9117 = vadd.f32 %v9116, %v8990
      %v9118 = vadd.f32 %v9117, %v8991
      %v9119 = vadd.f32 %v9118, %v8992
      %v9120 = vadd.f32 %v9119, %v8993
      %v9121 = vadd.f32 %v9120, %v8994
      %v9122 = vadd.f32 %v9121, %v8995
      %v9123 = vadd.f32 %v9122, %v8996
      %v9124 = vadd.f32 %v9123, %v8997
      %v9125 = vadd.f32 %v9124, %v8998
      %v9126 = vadd.f32 %v9125, %v8999
      %v9127 = vadd.f32 %v9126, %v9000
      %v9128 = vadd.f32 %v9127, %v9001
      %v9129 = vadd.f32 %v9128, %v9002
      %v9130 = vadd.f32 %v9129, %v9003
      %v9131 = vadd.f32 %v9130, %v9004
      %v9132 = vadd.f32 %v9131, %v9005
      %v9133 = vadd.f32 %v9132, %v9006
      %v9134 = vadd.f32 %v9133, %v9007
      %v9135 = vadd.f32 %v9134, %v9008
      %v9136 = vadd.f32 %v9135, %v9009
      %v9137 = vadd.f32 %v9136, %v9010
      %v9138 = vadd.f32 %v9137, %v9011
      %v9139 = vadd.f32 %v9138, %v9012
      %v9140 = vadd.f32 %v9139, %v9013
      %v9141 = vadd.f32 %v9140, %v9014
      %v9142 = vadd.f32 %v9141, %v9015
      %v9143 = vadd.f32 %v9142, %v9016
      %v9144 = vadd.f32 %v9143, %v9017
      %v9145 = vadd.f32 %v9144, %v9018
      %v9146 = vadd.f32 %v9145, %v9019
      %v9147 = vadd.f32 %v9146, %v9020
      %v9148 = vadd.f32 %v9147, %v9021
      %v9149 = vadd.f32 %v9148, %v9022
      %v9150 = vadd.f32 %v9149, %v9023
      %v9151 = vadd.f32 %v9150, %v9024
      %v9152 = vadd.f32 %v9151, %v9025
      %v9153 = vadd.f32 %v9152, %v9026
      %v9154 = vadd.f32 %v9153, %v9027
      %v9155 = vadd.f32 %v9154, %v9028
      %v9156 = vadd.f32 %v9155, %v9029
      %v9157 = vadd.f32 %v9156, %v9030
      %v9158 = vadd.f32 %v9157, %v9031
      %v9159 = vadd.f32 %v9158, %v9032
      %v9160 = vadd.f32 %v9159, %v9033
      %v9161 = vadd.f32 %v9160, %v9034
      %v9162 = vadd.f32 %v9161, %v9035
      %v9163 = vadd.f32 %v9162, %v9036
      %v9164 = vadd.f32 %v9163, %v9037
      %v9165 = vadd.f32 %v9164, %v9038
      %v9166 = vadd.f32 %v9165, %v9039
      %v9167 = vadd.f32 %v9166, %v9040
      %v9168 = vadd.f32 %v9167, %v9041
      %v9169 = vadd.f32 %v9168, %v9042
      %v9170 = vadd.f32 %v9169, %v9043
      %v9171 = vadd.f32 %v9170, %v9044
      %v9172 = vadd.f32 %v9171, %v9045
      %v9173 = vadd.f32 %v9172, %v9046
      %v9174 = vadd.f32 %v9173, %v9047
      %v9175 = vadd.f32 %v9174, %v9048
      %v9176 = vrot.slane %v9175, 4
      %v9177 = vadd.f32 %v9175, %v9176
      %v9178 = vrot.slane %v9177, 2
      %v9179 = vadd.f32 %v9177, %v9178
      %v9180 = vrot.slane %v9179, 1
      %v9181 = vadd.f32 %v9179, %v9180
      %v9182 = vadd.f32 %v6943, %v9181
      %9183 = vst [vmem:[%s225] sm:$0x1] %v8920
      %9184 = vst [vmem:[%s225 + $0x1] sm:$0x1] %v9182
      %p9185 = scmp.lt.s32.totalorder %s19, 1
      %s9186 = scalar_select %p9185, %s19, 1
      %p9187 = scmp.lt.s32.totalorder %s20, 0
      %s9188 = scalar_select %p9187, %s20, 0
      %s9189 = smul.addr %s9188, 512
      %s9190 = smul.addr %s9186, 512
      %s9191 = sadd.s32 %s9189, %s9190
      %s9192 = smul.addr %s9191, 4
      %s9193 = scalar_lea.vmem %s2, %s9192
      %p9194 = scmp.lt.s32.totalorder %s19, 1
      %s9195 = scalar_select %p9194, %s19, 1
      %p9196 = scmp.lt.s32.totalorder %s20, 0
      %s9197 = scalar_select %p9196, %s20, 0
      %s9198 = sadd.s32 %s9197, %s9195
      %s9199 = smul.addr %s9198, 2
      %s9200 = scalar_lea.vmem %s3, %s9199
      // Predicated region
      $region29: #{deconv4x4_forward.2} parent=27 // pred_check
        %p9201 = pneg %p96
      $region30: #{deconv4x4_forward.2} parent=27 // pred_check_branch
        %9203 = sbr.rel (%p9201) target = $region32
      $region31: #{deconv4x4_forward.2} parent=27 // pred_region
        _
      $region32: #{deconv4x4_forward.2} parent=27 // pred_fallthru
        _
      // Predicated region
      $region33: #{deconv4x4_forward.2} parent=27 // pred_check
        %p9204 = pneg %p124
      $region34: #{deconv4x4_forward.2} parent=27 // pred_check_branch
        %9206 = sbr.rel (%p9204) target = $region36
      $region35: #{deconv4x4_forward.2} parent=27 // pred_region
        _
      $region36: #{deconv4x4_forward.2} parent=27 // pred_fallthru
        _
    $region28: #{deconv4x4_forward.2} parent=5 // pred_fallthru
      _
    %p9207 = scmp.le.s32.totalorder 2, %s10
    // Predicated region
    $region37: #{deconv4x4_forward.2} parent=5 // pred_check
      %p9208 = pneg %p9207
    $region38: #{deconv4x4_forward.2} parent=5 // pred_check_branch
      %9210 = sbr.rel (%p9208) target = $region40
    $region39: #{deconv4x4_forward.2} parent=5 // pred_region
      %s9211 = ssub.s32 %s10, 2
      // Predicated region
      $region41: #{deconv4x4_forward.2} parent=39 // pred_check
        %p9212 = pneg %p102
      $region42: #{deconv4x4_forward.2} parent=39 // pred_check_branch
        %9214 = sbr.rel (%p9212) target = $region44
      $region43: #{deconv4x4_forward.2} parent=39 // pred_region
        %p9215 = scmp.lt.s32.totalorder %s21, 1
        %s9216 = scalar_select %p9215, %s21, 1
        %p9217 = scmp.lt.s32.totalorder %s22, 0
        %s9218 = scalar_select %p9217, %s22, 0
        %s9219 = smul.addr %s9218, 512
        %s9220 = smul.addr %s9216, 512
        %s9221 = sadd.s32 %s9219, %s9220
        %s9222 = smul.addr %s9221, 4
        %s9223 = scalar_lea.vmem %s2, %s9222
      $region44: #{deconv4x4_forward.2} parent=39 // pred_fallthru
        _
      // Predicated region
      $region45: #{deconv4x4_forward.2} parent=39 // pred_check
        %p9224 = pneg %p130
      $region46: #{deconv4x4_forward.2} parent=39 // pred_check_branch
        %9226 = sbr.rel (%p9224) target = $region48
      $region47: #{deconv4x4_forward.2} parent=39 // pred_region
        %p9227 = scmp.lt.s32.totalorder %s21, 1
        %s9228 = scalar_select %p9227, %s21, 1
        %p9229 = scmp.lt.s32.totalorder %s22, 0
        %s9230 = scalar_select %p9229, %s22, 0
        %s9231 = sadd.s32 %s9230, %s9228
        %s9232 = smul.addr %s9231, 2
        %s9233 = scalar_lea.vmem %s3, %s9232
      $region48: #{deconv4x4_forward.2} parent=39 // pred_fallthru
        _
    $region40: #{deconv4x4_forward.2} parent=5 // pred_fallthru
      _
  $region6: #{deconv4x4_forward.2} parent=0 // loop_footer
    %s14 = sadd.s32 1, %s10
  $region7: #{deconv4x4_forward.2} parent=0 // loop_footer_branch
    %9 = sbr.rel target = $region3
  $region8: #{deconv4x4_forward.2} parent=0 // loop_exit
    _

</llo_original>
